<compile_context>
chip_gen: v7x
topology: tpu7x:2x2x1
jax: 0.10.0
libtpu: 0.0.40
codegen_flags: <defaults>
</compile_context>

<pallas_src>
import jax
import jax.numpy as jnp
from jax.experimental import pallas as pl
from jax.experimental.pallas import tpu as pltpu


# ----------------------------- fixed geometry ------------------------------ #
H_IN = W_IN = 12      # conv1 spatial size (12x12 -> pool -> 6x6 -> pool -> 3x3)
NPIX = 64             # padded 8x8 pooled (conv2-input) map, flattened per image
NPIX2 = 46            # conv2 output rows kept per image: max pixel 5*8+5 = 45
C1 = 32               # conv1 channels
C2 = 64               # conv2 channels
HID = 512             # linear1 width
NA_PAD = 128          # fc output padded to a full 128-lane register


def _chunks(total, size):
    out, p = [], 0
    while p < total:
        out.append((p, min(size, total - p)))
        p += size
    return out


# ------------------------------- the kernel -------------------------------- #

def _make_kernel(tb, cin):
    """One grid step = `tb` images, fully processed in VMEM."""
    f32 = jnp.float32
    k1 = 9 * cin + 1            # conv1 im2col width (+1 border-killer feature)
    qr = NPIX * tb              # rows per pool-quadrant block of the input
    ch1 = _chunks(NPIX, max(1, 128 // tb))    # conv1/pool1 pixel chunks
    ch2 = _chunks(NPIX2, max(1, 96 // tb))    # conv2 pixel chunks

    def kernel(x1_ref, w1_ref, b1_ref, w2_ref, b2_ref,
               wl1_ref, bl1_ref, wfc_ref, bfc_ref,
               out_ref, x2p_ref, x2s_ref, y2_ref, feat_ref):
        # ---- conv1 + ReLU + maxpool1 (+ conv2 zero padding), tap-fused.
        # x1 holds 4 quadrant blocks of im2col rows laid out (pixel, image); the
        # 2x2/stride-2 pool is the elementwise max over the 4 quadrants.  Border
        # rows of the padded 8x8 map come out exactly 0 via the extra feature.
        for (p0, npx) in ch1:
            rows = npx * tb
            r0 = p0 * tb
            m = None
            for q in range(4):
                xq = x1_ref[pl.ds(q * qr + r0, rows), :]           # (rows, k1)
                yq = jnp.dot(xq, w1_ref[...],
                             preferred_element_type=f32) + b1_ref[...]
                yq = jnp.maximum(yq, 0.0)
                m = yq if m is None else jnp.maximum(m, yq)
            x2p_ref[pl.ds(r0, rows), :] = m                        # (rows, 32)

        # ---- conv2 + ReLU, K-fused: build 288-wide im2col rows in a staging
        #      buffer (9 shifted row-spans -> lane blocks), one fat matmul/chunk.
        for (p0, npx) in ch2:
            rows = npx * tb
            for kh in range(3):
                for kw in range(3):
                    t = kh * 3 + kw
                    x2s_ref[pl.ds(0, rows), pl.ds(t * C1, C1)] = (
                        x2p_ref[pl.ds((p0 + kh * 8 + kw) * tb, rows), :])
            y = jnp.dot(x2s_ref[pl.ds(0, rows), :], w2_ref[...],
                        preferred_element_type=f32) + b2_ref[...]
            y2_ref[pl.ds(p0 * tb, rows), :] = jnp.maximum(y, 0.0)  # (rows, 64)

        # ---- maxpool2 + flatten: 9 pooled (tb,64) tiles -> (tb,576) features.
        for po in range(3):
            for qo in range(3):
                base = (16 * po + 2 * qo) * tb
                t0 = y2_ref[pl.ds(base, tb), :]
                t1 = y2_ref[pl.ds(base + tb, tb), :]
                t2 = y2_ref[pl.ds(base + 8 * tb, tb), :]
                t3 = y2_ref[pl.ds(base + 9 * tb, tb), :]
                p = po * 3 + qo
                feat_ref[pl.ds(0, tb), pl.ds(p * C2, C2)] = jnp.maximum(
                    jnp.maximum(t0, t1), jnp.maximum(t2, t3))

        # ---- linear1 + ReLU + fc: one (tb,576)x(576,512) and one (tb,512)x(512,128)
        h = jnp.dot(feat_ref[...], wl1_ref[...],
                    preferred_element_type=f32) + bl1_ref[...]
        h = jnp.maximum(h, 0.0)
        out_ref[...] = jnp.dot(h, wfc_ref[...],
                               preferred_element_type=f32) + bfc_ref[...]

    return kernel


# ------------------------------ input prep --------------------------------- #

def _prep_inputs(x_nchw, tb):
    """Quadrant-ordered conv1 im2col (with border-killer feature) in HBM."""
    B, cin, h, w = x_nchw.shape
    assert (h, w) == (H_IN, W_IN), "linear1(576) requires a 12x12 spatial input"
    bp = ((B + tb - 1) // tb) * tb
    x = jnp.transpose(x_nchw, (0, 2, 3, 1)).astype(jnp.float32)    # (B,12,12,C)
    if bp != B:
        x = jnp.pad(x, ((0, bp - B), (0, 0), (0, 0), (0, 0)))
    xp = jnp.pad(x, ((0, 0), (1, 1), (1, 1), (0, 0)))              # (Bp,14,14,C)
    # full conv1 im2col: patch vector (kh,kw,ci) per output pixel
    pat = jnp.stack([xp[:, kh:kh + 12, kw:kw + 12, :]
                     for kh in range(3) for kw in range(3)], axis=3)
    pat = pat.reshape(bp, 12, 12, 9 * cin)                         # (Bp,12,12,36)
    # 2x2-pool quadrants, zero-padded to the 8x8 conv2-input raster
    quads = jnp.stack([pat[:, dh::2, dw::2, :]
                       for dh in (0, 1) for dw in (0, 1)], axis=1) # (Bp,4,6,6,36)
    quads = jnp.pad(quads, ((0, 0), (0, 0), (1, 1), (1, 1), (0, 0)))
    # extra feature = 1 on the zero-pad border; its weight row is -conv1_b so
    # border rows come out of conv1+bias+ReLU as exact zeros.
    border = jnp.ones((8, 8), jnp.float32).at[1:7, 1:7].set(0.0)
    border = jnp.broadcast_to(border[None, None, :, :, None], (bp, 4, 8, 8, 1))
    quads = jnp.concatenate([quads, border], axis=-1)              # (Bp,4,8,8,k1)
    k1 = 9 * cin + 1
    g = bp // tb
    qx = quads.reshape(g, tb, 4, NPIX, k1)
    qx = jnp.transpose(qx, (0, 2, 3, 1, 4))                        # (g,4,64,tb,k1)
    return qx.reshape(g * 4 * NPIX * tb, k1), bp


# ------------------------------ forward wrapper ----------------------------- #

def convnet_forward(kp, x_nchw, n_actions=5, tb=8):
    assert tb % 8 == 0
    B = x_nchw.shape[0]
    cin = x_nchw.shape[1]
    k1 = 9 * cin + 1
    x1, bp = _prep_inputs(x_nchw, tb)
    g = bp // tb
    ch2_rows = _chunks(NPIX2, max(1, 96 // tb))[0][1] * tb

    grid_spec = pltpu.PrefetchScalarGridSpec(
        num_scalar_prefetch=0,
        grid=(g,),
        in_specs=[
            # activation: one tb-image quadrant-im2col block per grid step
            pl.BlockSpec((4 * NPIX * tb, k1), lambda i: (i, 0)),
            # weights: constant block index -> DMA'd once, resident in VMEM
            pl.BlockSpec(kp["w1"].shape, lambda i: (0, 0)),
            pl.BlockSpec(kp["b1"].shape, lambda i: (0, 0)),
            pl.BlockSpec(kp["w2"].shape, lambda i: (0, 0)),
            pl.BlockSpec(kp["b2"].shape, lambda i: (0, 0)),
            pl.BlockSpec(kp["wl1"].shape, lambda i: (0, 0)),
            pl.BlockSpec(kp["bl1"].shape, lambda i: (0, 0)),
            pl.BlockSpec(kp["wfc"].shape, lambda i: (0, 0)),
            pl.BlockSpec(kp["bfc"].shape, lambda i: (0, 0)),
        ],
        out_specs=pl.BlockSpec((tb, NA_PAD), lambda i: (i, 0)),
        scratch_shapes=[
            pltpu.VMEM((NPIX * tb, C1), jnp.float32),     # pooled / padded 8x8 map
            pltpu.VMEM((ch2_rows, 9 * C1), jnp.float32),  # conv2 im2col staging
            pltpu.VMEM((NPIX2 * tb, C2), jnp.float32),    # conv2 output
            pltpu.VMEM((tb, 9 * C2), jnp.float32),        # pooled+flattened features
        ],
    )
    out = pl.pallas_call(
        _make_kernel(tb, cin),
        out_shape=jax.ShapeDtypeStruct((bp, NA_PAD), jnp.float32),
        grid_spec=grid_spec,
        compiler_params=pltpu.CompilerParams(
            dimension_semantics=("parallel",)),
    )(x1, kp["w1"], kp["b1"], kp["w2"], kp["b2"],
      kp["wl1"], kp["bl1"], kp["wfc"], kp["bfc"])
    return out[:B, :n_actions]


# ------------------------------ parameters --------------------------------- #

def init_params(key, n_actions=5, state_dim=4):
    """PyTorch-layout parameters (conv: OIHW, linear: (out, in))."""
    def uni(k, shape, fan_in):
        bound = 1.0 / jnp.sqrt(jnp.float32(fan_in))
        return jax.random.uniform(k, shape, jnp.float32, -bound, bound)

    ks = jax.random.split(key, 8)
    return {
        "conv1_w": uni(ks[0], (C1, state_dim, 3, 3), state_dim * 9),
        "conv1_b": uni(ks[1], (C1,), state_dim * 9),
        "conv2_w": uni(ks[2], (C2, C1, 3, 3), C1 * 9),
        "conv2_b": uni(ks[3], (C2,), C1 * 9),
        "lin1_w":  uni(ks[4], (HID, 576), 576),
        "lin1_b":  uni(ks[5], (HID,), 576),
        "fc_w":    uni(ks[6], (n_actions, HID), HID),
        "fc_b":    uni(ks[7], (n_actions,), HID),
    }


def pack_params(params):
    """One-time repack of torch-layout params into the layouts the kernel wants."""
    cin = params["conv1_w"].shape[1]
    na = params["fc_w"].shape[0]
    assert na <= NA_PAD

    b1 = params["conv1_b"].reshape(1, C1)
    # conv1: (Cout,Cin,kh,kw) -> ((kh*3+kw)*Cin+ci, Cout), plus the border-killer
    # row (-b1) matching the extra im2col feature.
    w1 = jnp.transpose(params["conv1_w"], (2, 3, 1, 0)).reshape(9 * cin, C1)
    w1 = jnp.concatenate([w1, -b1], axis=0)                        # (9*cin+1, 32)

    # conv2: (Cout,Cin,kh,kw) -> ((kh*3+kw)*32+ci, Cout)
    w2 = jnp.transpose(params["conv2_w"], (2, 3, 1, 0)).reshape(9 * C1, C2)

    # linear1: torch flattens NCHW (index = c*9 + p); kernel features are laid
    # out p*64 + c, so repack rows accordingly.
    wl1 = jnp.transpose(params["lin1_w"].reshape(HID, C2, 9),
                        (2, 1, 0)).reshape(9 * C2, HID)

    # fc: pad the output dim to 128 lanes (extra columns are exact zeros).
    wfc = jnp.zeros((HID, NA_PAD), jnp.float32).at[:, :na].set(params["fc_w"].T)
    bfc = jnp.zeros((1, NA_PAD), jnp.float32).at[0, :na].set(params["fc_b"])

    return {
        "w1": w1, "b1": b1,
        "w2": w2, "b2": params["conv2_b"].reshape(1, C2),
        "wl1": wl1, "bl1": params["lin1_b"].reshape(1, HID),
        "wfc": wfc, "bfc": bfc,
    }


# ------------------------------ pure-JAX reference -------------------------- #

def convnet_reference(params, x_nchw):
    x = x_nchw.astype(jnp.float32)

    def conv(x, w, b):
        y = jax.lax.conv_general_dilated(
            x, w, window_strides=(1, 1), padding=((1, 1), (1, 1)),
            dimension_numbers=("NCHW", "OIHW", "NCHW"))
        return jax.nn.relu(y + b[None, :, None, None])

    def pool(x):
        return jax.lax.reduce_window(x, -jnp.inf, jax.lax.max,
                                     (1, 1, 2, 2), (1, 1, 2, 2), "VALID")

    y = pool(conv(x, params["conv1_w"], params["conv1_b"]))
    y = pool(conv(y, params["conv2_w"], params["conv2_b"]))
    flat = y.reshape(y.shape[0], -1)
    h = jax.nn.relu(flat @ params["lin1_w"].T + params["lin1_b"])
    return h @ params["fc_w"].T + params["fc_b"]


# ----------------------------------- main ----------------------------------- #

if __name__ == "__main__":
    key = jax.random.PRNGKey(0)
    kparam, kx = jax.random.split(key)
    params = init_params(kparam, n_actions=5, state_dim=4)
    kparams = pack_params(params)

    # 12x12 input -> pool -> 6x6 -> pool -> 3x3, so 64*3*3 = 576 matches linear1.
    x = jax.random.normal(kx, (2, 4, 12, 12), jnp.float32)

    fwd = jax.jit(convnet_forward, static_argnames=("n_actions", "tb"))
    out = jax.block_until_ready(fwd(kparams, x, n_actions=5, tb=8))
    ref = jax.block_until_ready(convnet_reference(params, x))

    assert out.shape == (2, 5), out.shape
    assert bool(jnp.allclose(out, ref, rtol=2e-2, atol=2e-2)), (out, ref)
    print("KERNEL_OK")
</pallas_src>

<mosaic_0001>
module attributes {stable_mosaic.version = 11 : i64} {
  func.func @kernel(%arg0: i32, %arg1: memref<2048x37xf32, #tpu.memory_space<vmem>>, %arg2: memref<37x32xf32, #tpu.memory_space<vmem>>, %arg3: memref<1x32xf32, #tpu.memory_space<vmem>>, %arg4: memref<288x64xf32, #tpu.memory_space<vmem>>, %arg5: memref<1x64xf32, #tpu.memory_space<vmem>>, %arg6: memref<576x512xf32, #tpu.memory_space<vmem>>, %arg7: memref<1x512xf32, #tpu.memory_space<vmem>>, %arg8: memref<512x128xf32, #tpu.memory_space<vmem>>, %arg9: memref<1x128xf32, #tpu.memory_space<vmem>>, %arg10: memref<8x128xf32, #tpu.memory_space<vmem>>, %arg11: memref<512x32xf32, #tpu.memory_space<vmem>>, %arg12: memref<96x288xf32, #tpu.memory_space<vmem>>, %arg13: memref<368x64xf32, #tpu.memory_space<vmem>>, %arg14: memref<8x576xf32, #tpu.memory_space<vmem>>) attributes {dimension_semantics = [#tpu.dimension_semantics<parallel>], iteration_bounds = array<i64: 1>, scalar_prefetch = 0 : i64, scratch_operands = 4 : i64, tpu.core_type = #tpu.core_type<tc>, window_params = [{transform_indices = @transform_0, window_bounds = array<i64: 2048, 37>}, {pipeline_mode = #tpu.pipeline_mode<synchronous>, transform_indices = @transform_1, window_bounds = array<i64: 37, 32>}, {pipeline_mode = #tpu.pipeline_mode<synchronous>, transform_indices = @transform_2, window_bounds = array<i64: 1, 32>}, {pipeline_mode = #tpu.pipeline_mode<synchronous>, transform_indices = @transform_3, window_bounds = array<i64: 288, 64>}, {pipeline_mode = #tpu.pipeline_mode<synchronous>, transform_indices = @transform_4, window_bounds = array<i64: 1, 64>}, {pipeline_mode = #tpu.pipeline_mode<synchronous>, transform_indices = @transform_5, window_bounds = array<i64: 576, 512>}, {pipeline_mode = #tpu.pipeline_mode<synchronous>, transform_indices = @transform_6, window_bounds = array<i64: 1, 512>}, {pipeline_mode = #tpu.pipeline_mode<synchronous>, transform_indices = @transform_7, window_bounds = array<i64: 512, 128>}, {pipeline_mode = #tpu.pipeline_mode<synchronous>, transform_indices = @transform_8, window_bounds = array<i64: 1, 128>}, {transform_indices = @transform_9, window_bounds = array<i64: 8, 128>}]} {
    %c0 = arith.constant 0 : index
    %c0_0 = arith.constant 0 : index
    %0 = vector.load %arg1[%c0, %c0_0] : memref<2048x37xf32, #tpu.memory_space<vmem>>, vector<128x37xf32>
    %c0_1 = arith.constant 0 : index
    %c0_2 = arith.constant 0 : index
    %1 = vector.load %arg2[%c0_1, %c0_2] : memref<37x32xf32, #tpu.memory_space<vmem>>, vector<37x32xf32>
    %cst = arith.constant dense<0.000000e+00> : vector<128x32xf32>
    %2 = tpu.matmul %0, %1, %cst {dimension_numbers = #tpu.dot_dimension_numbers<[1], [0], [0], [1], [0, 0, 1, 1], [], []>} : vector<128x37xf32>, vector<37x32xf32>, vector<128x32xf32> -> vector<128x32xf32>
    %c0_3 = arith.constant 0 : index
    %c0_4 = arith.constant 0 : index
    %3 = vector.load %arg3[%c0_3, %c0_4] : memref<1x32xf32, #tpu.memory_space<vmem>>, vector<1x32xf32>
    %4 = vector.broadcast %3 : vector<1x32xf32> to vector<128x32xf32>
    %5 = arith.addf %2, %4 : vector<128x32xf32>
    %cst_5 = arith.constant 0.000000e+00 : f32
    %6 = vector.broadcast %cst_5 : f32 to vector<128x32xf32>
    %7 = arith.maximumf %5, %6 : vector<128x32xf32>
    %c512 = arith.constant 512 : index
    %c0_6 = arith.constant 0 : index
    %8 = vector.load %arg1[%c512, %c0_6] : memref<2048x37xf32, #tpu.memory_space<vmem>>, vector<128x37xf32>
    %c0_7 = arith.constant 0 : index
    %c0_8 = arith.constant 0 : index
    %9 = vector.load %arg2[%c0_7, %c0_8] : memref<37x32xf32, #tpu.memory_space<vmem>>, vector<37x32xf32>
    %cst_9 = arith.constant dense<0.000000e+00> : vector<128x32xf32>
    %10 = tpu.matmul %8, %9, %cst_9 {dimension_numbers = #tpu.dot_dimension_numbers<[1], [0], [0], [1], [0, 0, 1, 1], [], []>} : vector<128x37xf32>, vector<37x32xf32>, vector<128x32xf32> -> vector<128x32xf32>
    %c0_10 = arith.constant 0 : index
    %c0_11 = arith.constant 0 : index
    %11 = vector.load %arg3[%c0_10, %c0_11] : memref<1x32xf32, #tpu.memory_space<vmem>>, vector<1x32xf32>
    %12 = vector.broadcast %11 : vector<1x32xf32> to vector<128x32xf32>
    %13 = arith.addf %10, %12 : vector<128x32xf32>
    %cst_12 = arith.constant 0.000000e+00 : f32
    %14 = vector.broadcast %cst_12 : f32 to vector<128x32xf32>
    %15 = arith.maximumf %13, %14 : vector<128x32xf32>
    %16 = arith.maximumf %7, %15 : vector<128x32xf32>
    %c1024 = arith.constant 1024 : index
    %c0_13 = arith.constant 0 : index
    %17 = vector.load %arg1[%c1024, %c0_13] : memref<2048x37xf32, #tpu.memory_space<vmem>>, vector<128x37xf32>
    %c0_14 = arith.constant 0 : index
    %c0_15 = arith.constant 0 : index
    %18 = vector.load %arg2[%c0_14, %c0_15] : memref<37x32xf32, #tpu.memory_space<vmem>>, vector<37x32xf32>
    %cst_16 = arith.constant dense<0.000000e+00> : vector<128x32xf32>
    %19 = tpu.matmul %17, %18, %cst_16 {dimension_numbers = #tpu.dot_dimension_numbers<[1], [0], [0], [1], [0, 0, 1, 1], [], []>} : vector<128x37xf32>, vector<37x32xf32>, vector<128x32xf32> -> vector<128x32xf32>
    %c0_17 = arith.constant 0 : index
    %c0_18 = arith.constant 0 : index
    %20 = vector.load %arg3[%c0_17, %c0_18] : memref<1x32xf32, #tpu.memory_space<vmem>>, vector<1x32xf32>
    %21 = vector.broadcast %20 : vector<1x32xf32> to vector<128x32xf32>
    %22 = arith.addf %19, %21 : vector<128x32xf32>
    %cst_19 = arith.constant 0.000000e+00 : f32
    %23 = vector.broadcast %cst_19 : f32 to vector<128x32xf32>
    %24 = arith.maximumf %22, %23 : vector<128x32xf32>
    %25 = arith.maximumf %16, %24 : vector<128x32xf32>
    %c1536 = arith.constant 1536 : index
    %c0_20 = arith.constant 0 : index
    %26 = vector.load %arg1[%c1536, %c0_20] : memref<2048x37xf32, #tpu.memory_space<vmem>>, vector<128x37xf32>
    %c0_21 = arith.constant 0 : index
    %c0_22 = arith.constant 0 : index
    %27 = vector.load %arg2[%c0_21, %c0_22] : memref<37x32xf32, #tpu.memory_space<vmem>>, vector<37x32xf32>
    %cst_23 = arith.constant dense<0.000000e+00> : vector<128x32xf32>
    %28 = tpu.matmul %26, %27, %cst_23 {dimension_numbers = #tpu.dot_dimension_numbers<[1], [0], [0], [1], [0, 0, 1, 1], [], []>} : vector<128x37xf32>, vector<37x32xf32>, vector<128x32xf32> -> vector<128x32xf32>
    %c0_24 = arith.constant 0 : index
    %c0_25 = arith.constant 0 : index
    %29 = vector.load %arg3[%c0_24, %c0_25] : memref<1x32xf32, #tpu.memory_space<vmem>>, vector<1x32xf32>
    %30 = vector.broadcast %29 : vector<1x32xf32> to vector<128x32xf32>
    %31 = arith.addf %28, %30 : vector<128x32xf32>
    %cst_26 = arith.constant 0.000000e+00 : f32
    %32 = vector.broadcast %cst_26 : f32 to vector<128x32xf32>
    %33 = arith.maximumf %31, %32 : vector<128x32xf32>
    %34 = arith.maximumf %25, %33 : vector<128x32xf32>
    %c0_27 = arith.constant 0 : index
    %c0_28 = arith.constant 0 : index
    %35 = vector.load %arg11[%c0_27, %c0_28] : memref<512x32xf32, #tpu.memory_space<vmem>>, vector<128x32xf32>
    tpu.vector_store %arg11[%c0_27, %c0_28], %34 {strides = array<i32>} : memref<512x32xf32, #tpu.memory_space<vmem>>, vector<128x32xf32>,
    %c128 = arith.constant 128 : index
    %c0_29 = arith.constant 0 : index
    %36 = vector.load %arg1[%c128, %c0_29] : memref<2048x37xf32, #tpu.memory_space<vmem>>, vector<128x37xf32>
    %c0_30 = arith.constant 0 : index
    %c0_31 = arith.constant 0 : index
    %37 = vector.load %arg2[%c0_30, %c0_31] : memref<37x32xf32, #tpu.memory_space<vmem>>, vector<37x32xf32>
    %cst_32 = arith.constant dense<0.000000e+00> : vector<128x32xf32>
    %38 = tpu.matmul %36, %37, %cst_32 {dimension_numbers = #tpu.dot_dimension_numbers<[1], [0], [0], [1], [0, 0, 1, 1], [], []>} : vector<128x37xf32>, vector<37x32xf32>, vector<128x32xf32> -> vector<128x32xf32>
    %c0_33 = arith.constant 0 : index
    %c0_34 = arith.constant 0 : index
    %39 = vector.load %arg3[%c0_33, %c0_34] : memref<1x32xf32, #tpu.memory_space<vmem>>, vector<1x32xf32>
    %40 = vector.broadcast %39 : vector<1x32xf32> to vector<128x32xf32>
    %41 = arith.addf %38, %40 : vector<128x32xf32>
    %cst_35 = arith.constant 0.000000e+00 : f32
    %42 = vector.broadcast %cst_35 : f32 to vector<128x32xf32>
    %43 = arith.maximumf %41, %42 : vector<128x32xf32>
    %c640 = arith.constant 640 : index
    %c0_36 = arith.constant 0 : index
    %44 = vector.load %arg1[%c640, %c0_36] : memref<2048x37xf32, #tpu.memory_space<vmem>>, vector<128x37xf32>
    %c0_37 = arith.constant 0 : index
    %c0_38 = arith.constant 0 : index
    %45 = vector.load %arg2[%c0_37, %c0_38] : memref<37x32xf32, #tpu.memory_space<vmem>>, vector<37x32xf32>
    %cst_39 = arith.constant dense<0.000000e+00> : vector<128x32xf32>
    %46 = tpu.matmul %44, %45, %cst_39 {dimension_numbers = #tpu.dot_dimension_numbers<[1], [0], [0], [1], [0, 0, 1, 1], [], []>} : vector<128x37xf32>, vector<37x32xf32>, vector<128x32xf32> -> vector<128x32xf32>
    %c0_40 = arith.constant 0 : index
    %c0_41 = arith.constant 0 : index
    %47 = vector.load %arg3[%c0_40, %c0_41] : memref<1x32xf32, #tpu.memory_space<vmem>>, vector<1x32xf32>
    %48 = vector.broadcast %47 : vector<1x32xf32> to vector<128x32xf32>
    %49 = arith.addf %46, %48 : vector<128x32xf32>
    %cst_42 = arith.constant 0.000000e+00 : f32
    %50 = vector.broadcast %cst_42 : f32 to vector<128x32xf32>
    %51 = arith.maximumf %49, %50 : vector<128x32xf32>
    %52 = arith.maximumf %43, %51 : vector<128x32xf32>
    %c1152 = arith.constant 1152 : index
    %c0_43 = arith.constant 0 : index
    %53 = vector.load %arg1[%c1152, %c0_43] : memref<2048x37xf32, #tpu.memory_space<vmem>>, vector<128x37xf32>
    %c0_44 = arith.constant 0 : index
    %c0_45 = arith.constant 0 : index
    %54 = vector.load %arg2[%c0_44, %c0_45] : memref<37x32xf32, #tpu.memory_space<vmem>>, vector<37x32xf32>
    %cst_46 = arith.constant dense<0.000000e+00> : vector<128x32xf32>
    %55 = tpu.matmul %53, %54, %cst_46 {dimension_numbers = #tpu.dot_dimension_numbers<[1], [0], [0], [1], [0, 0, 1, 1], [], []>} : vector<128x37xf32>, vector<37x32xf32>, vector<128x32xf32> -> vector<128x32xf32>
    %c0_47 = arith.constant 0 : index
    %c0_48 = arith.constant 0 : index
    %56 = vector.load %arg3[%c0_47, %c0_48] : memref<1x32xf32, #tpu.memory_space<vmem>>, vector<1x32xf32>
    %57 = vector.broadcast %56 : vector<1x32xf32> to vector<128x32xf32>
    %58 = arith.addf %55, %57 : vector<128x32xf32>
    %cst_49 = arith.constant 0.000000e+00 : f32
    %59 = vector.broadcast %cst_49 : f32 to vector<128x32xf32>
    %60 = arith.maximumf %58, %59 : vector<128x32xf32>
    %61 = arith.maximumf %52, %60 : vector<128x32xf32>
    %c1664 = arith.constant 1664 : index
    %c0_50 = arith.constant 0 : index
    %62 = vector.load %arg1[%c1664, %c0_50] : memref<2048x37xf32, #tpu.memory_space<vmem>>, vector<128x37xf32>
    %c0_51 = arith.constant 0 : index
    %c0_52 = arith.constant 0 : index
    %63 = vector.load %arg2[%c0_51, %c0_52] : memref<37x32xf32, #tpu.memory_space<vmem>>, vector<37x32xf32>
    %cst_53 = arith.constant dense<0.000000e+00> : vector<128x32xf32>
    %64 = tpu.matmul %62, %63, %cst_53 {dimension_numbers = #tpu.dot_dimension_numbers<[1], [0], [0], [1], [0, 0, 1, 1], [], []>} : vector<128x37xf32>, vector<37x32xf32>, vector<128x32xf32> -> vector<128x32xf32>
    %c0_54 = arith.constant 0 : index
    %c0_55 = arith.constant 0 : index
    %65 = vector.load %arg3[%c0_54, %c0_55] : memref<1x32xf32, #tpu.memory_space<vmem>>, vector<1x32xf32>
    %66 = vector.broadcast %65 : vector<1x32xf32> to vector<128x32xf32>
    %67 = arith.addf %64, %66 : vector<128x32xf32>
    %cst_56 = arith.constant 0.000000e+00 : f32
    %68 = vector.broadcast %cst_56 : f32 to vector<128x32xf32>
    %69 = arith.maximumf %67, %68 : vector<128x32xf32>
    %70 = arith.maximumf %61, %69 : vector<128x32xf32>
    %c128_57 = arith.constant 128 : index
    %c0_58 = arith.constant 0 : index
    %71 = vector.load %arg11[%c128_57, %c0_58] : memref<512x32xf32, #tpu.memory_space<vmem>>, vector<128x32xf32>
    tpu.vector_store %arg11[%c128_57, %c0_58], %70 {strides = array<i32>} : memref<512x32xf32, #tpu.memory_space<vmem>>, vector<128x32xf32>,
    %c256 = arith.constant 256 : index
    %c0_59 = arith.constant 0 : index
    %72 = vector.load %arg1[%c256, %c0_59] : memref<2048x37xf32, #tpu.memory_space<vmem>>, vector<128x37xf32>
    %c0_60 = arith.constant 0 : index
    %c0_61 = arith.constant 0 : index
    %73 = vector.load %arg2[%c0_60, %c0_61] : memref<37x32xf32, #tpu.memory_space<vmem>>, vector<37x32xf32>
    %cst_62 = arith.constant dense<0.000000e+00> : vector<128x32xf32>
    %74 = tpu.matmul %72, %73, %cst_62 {dimension_numbers = #tpu.dot_dimension_numbers<[1], [0], [0], [1], [0, 0, 1, 1], [], []>} : vector<128x37xf32>, vector<37x32xf32>, vector<128x32xf32> -> vector<128x32xf32>
    %c0_63 = arith.constant 0 : index
    %c0_64 = arith.constant 0 : index
    %75 = vector.load %arg3[%c0_63, %c0_64] : memref<1x32xf32, #tpu.memory_space<vmem>>, vector<1x32xf32>
    %76 = vector.broadcast %75 : vector<1x32xf32> to vector<128x32xf32>
    %77 = arith.addf %74, %76 : vector<128x32xf32>
    %cst_65 = arith.constant 0.000000e+00 : f32
    %78 = vector.broadcast %cst_65 : f32 to vector<128x32xf32>
    %79 = arith.maximumf %77, %78 : vector<128x32xf32>
    %c768 = arith.constant 768 : index
    %c0_66 = arith.constant 0 : index
    %80 = vector.load %arg1[%c768, %c0_66] : memref<2048x37xf32, #tpu.memory_space<vmem>>, vector<128x37xf32>
    %c0_67 = arith.constant 0 : index
    %c0_68 = arith.constant 0 : index
    %81 = vector.load %arg2[%c0_67, %c0_68] : memref<37x32xf32, #tpu.memory_space<vmem>>, vector<37x32xf32>
    %cst_69 = arith.constant dense<0.000000e+00> : vector<128x32xf32>
    %82 = tpu.matmul %80, %81, %cst_69 {dimension_numbers = #tpu.dot_dimension_numbers<[1], [0], [0], [1], [0, 0, 1, 1], [], []>} : vector<128x37xf32>, vector<37x32xf32>, vector<128x32xf32> -> vector<128x32xf32>
    %c0_70 = arith.constant 0 : index
    %c0_71 = arith.constant 0 : index
    %83 = vector.load %arg3[%c0_70, %c0_71] : memref<1x32xf32, #tpu.memory_space<vmem>>, vector<1x32xf32>
    %84 = vector.broadcast %83 : vector<1x32xf32> to vector<128x32xf32>
    %85 = arith.addf %82, %84 : vector<128x32xf32>
    %cst_72 = arith.constant 0.000000e+00 : f32
    %86 = vector.broadcast %cst_72 : f32 to vector<128x32xf32>
    %87 = arith.maximumf %85, %86 : vector<128x32xf32>
    %88 = arith.maximumf %79, %87 : vector<128x32xf32>
    %c1280 = arith.constant 1280 : index
    %c0_73 = arith.constant 0 : index
    %89 = vector.load %arg1[%c1280, %c0_73] : memref<2048x37xf32, #tpu.memory_space<vmem>>, vector<128x37xf32>
    %c0_74 = arith.constant 0 : index
    %c0_75 = arith.constant 0 : index
    %90 = vector.load %arg2[%c0_74, %c0_75] : memref<37x32xf32, #tpu.memory_space<vmem>>, vector<37x32xf32>
    %cst_76 = arith.constant dense<0.000000e+00> : vector<128x32xf32>
    %91 = tpu.matmul %89, %90, %cst_76 {dimension_numbers = #tpu.dot_dimension_numbers<[1], [0], [0], [1], [0, 0, 1, 1], [], []>} : vector<128x37xf32>, vector<37x32xf32>, vector<128x32xf32> -> vector<128x32xf32>
    %c0_77 = arith.constant 0 : index
    %c0_78 = arith.constant 0 : index
    %92 = vector.load %arg3[%c0_77, %c0_78] : memref<1x32xf32, #tpu.memory_space<vmem>>, vector<1x32xf32>
    %93 = vector.broadcast %92 : vector<1x32xf32> to vector<128x32xf32>
    %94 = arith.addf %91, %93 : vector<128x32xf32>
    %cst_79 = arith.constant 0.000000e+00 : f32
    %95 = vector.broadcast %cst_79 : f32 to vector<128x32xf32>
    %96 = arith.maximumf %94, %95 : vector<128x32xf32>
    %97 = arith.maximumf %88, %96 : vector<128x32xf32>
    %c1792 = arith.constant 1792 : index
    %c0_80 = arith.constant 0 : index
    %98 = vector.load %arg1[%c1792, %c0_80] : memref<2048x37xf32, #tpu.memory_space<vmem>>, vector<128x37xf32>
    %c0_81 = arith.constant 0 : index
    %c0_82 = arith.constant 0 : index
    %99 = vector.load %arg2[%c0_81, %c0_82] : memref<37x32xf32, #tpu.memory_space<vmem>>, vector<37x32xf32>
    %cst_83 = arith.constant dense<0.000000e+00> : vector<128x32xf32>
    %100 = tpu.matmul %98, %99, %cst_83 {dimension_numbers = #tpu.dot_dimension_numbers<[1], [0], [0], [1], [0, 0, 1, 1], [], []>} : vector<128x37xf32>, vector<37x32xf32>, vector<128x32xf32> -> vector<128x32xf32>
    %c0_84 = arith.constant 0 : index
    %c0_85 = arith.constant 0 : index
    %101 = vector.load %arg3[%c0_84, %c0_85] : memref<1x32xf32, #tpu.memory_space<vmem>>, vector<1x32xf32>
    %102 = vector.broadcast %101 : vector<1x32xf32> to vector<128x32xf32>
    %103 = arith.addf %100, %102 : vector<128x32xf32>
    %cst_86 = arith.constant 0.000000e+00 : f32
    %104 = vector.broadcast %cst_86 : f32 to vector<128x32xf32>
    %105 = arith.maximumf %103, %104 : vector<128x32xf32>
    %106 = arith.maximumf %97, %105 : vector<128x32xf32>
    %c256_87 = arith.constant 256 : index
    %c0_88 = arith.constant 0 : index
    %107 = vector.load %arg11[%c256_87, %c0_88] : memref<512x32xf32, #tpu.memory_space<vmem>>, vector<128x32xf32>
    tpu.vector_store %arg11[%c256_87, %c0_88], %106 {strides = array<i32>} : memref<512x32xf32, #tpu.memory_space<vmem>>, vector<128x32xf32>,
    %c384 = arith.constant 384 : index
    %c0_89 = arith.constant 0 : index
    %108 = vector.load %arg1[%c384, %c0_89] : memref<2048x37xf32, #tpu.memory_space<vmem>>, vector<128x37xf32>
    %c0_90 = arith.constant 0 : index
    %c0_91 = arith.constant 0 : index
    %109 = vector.load %arg2[%c0_90, %c0_91] : memref<37x32xf32, #tpu.memory_space<vmem>>, vector<37x32xf32>
    %cst_92 = arith.constant dense<0.000000e+00> : vector<128x32xf32>
    %110 = tpu.matmul %108, %109, %cst_92 {dimension_numbers = #tpu.dot_dimension_numbers<[1], [0], [0], [1], [0, 0, 1, 1], [], []>} : vector<128x37xf32>, vector<37x32xf32>, vector<128x32xf32> -> vector<128x32xf32>
    %c0_93 = arith.constant 0 : index
    %c0_94 = arith.constant 0 : index
    %111 = vector.load %arg3[%c0_93, %c0_94] : memref<1x32xf32, #tpu.memory_space<vmem>>, vector<1x32xf32>
    %112 = vector.broadcast %111 : vector<1x32xf32> to vector<128x32xf32>
    %113 = arith.addf %110, %112 : vector<128x32xf32>
    %cst_95 = arith.constant 0.000000e+00 : f32
    %114 = vector.broadcast %cst_95 : f32 to vector<128x32xf32>
    %115 = arith.maximumf %113, %114 : vector<128x32xf32>
    %c896 = arith.constant 896 : index
    %c0_96 = arith.constant 0 : index
    %116 = vector.load %arg1[%c896, %c0_96] : memref<2048x37xf32, #tpu.memory_space<vmem>>, vector<128x37xf32>
    %c0_97 = arith.constant 0 : index
    %c0_98 = arith.constant 0 : index
    %117 = vector.load %arg2[%c0_97, %c0_98] : memref<37x32xf32, #tpu.memory_space<vmem>>, vector<37x32xf32>
    %cst_99 = arith.constant dense<0.000000e+00> : vector<128x32xf32>
    %118 = tpu.matmul %116, %117, %cst_99 {dimension_numbers = #tpu.dot_dimension_numbers<[1], [0], [0], [1], [0, 0, 1, 1], [], []>} : vector<128x37xf32>, vector<37x32xf32>, vector<128x32xf32> -> vector<128x32xf32>
    %c0_100 = arith.constant 0 : index
    %c0_101 = arith.constant 0 : index
    %119 = vector.load %arg3[%c0_100, %c0_101] : memref<1x32xf32, #tpu.memory_space<vmem>>, vector<1x32xf32>
    %120 = vector.broadcast %119 : vector<1x32xf32> to vector<128x32xf32>
    %121 = arith.addf %118, %120 : vector<128x32xf32>
    %cst_102 = arith.constant 0.000000e+00 : f32
    %122 = vector.broadcast %cst_102 : f32 to vector<128x32xf32>
    %123 = arith.maximumf %121, %122 : vector<128x32xf32>
    %124 = arith.maximumf %115, %123 : vector<128x32xf32>
    %c1408 = arith.constant 1408 : index
    %c0_103 = arith.constant 0 : index
    %125 = vector.load %arg1[%c1408, %c0_103] : memref<2048x37xf32, #tpu.memory_space<vmem>>, vector<128x37xf32>
    %c0_104 = arith.constant 0 : index
    %c0_105 = arith.constant 0 : index
    %126 = vector.load %arg2[%c0_104, %c0_105] : memref<37x32xf32, #tpu.memory_space<vmem>>, vector<37x32xf32>
    %cst_106 = arith.constant dense<0.000000e+00> : vector<128x32xf32>
    %127 = tpu.matmul %125, %126, %cst_106 {dimension_numbers = #tpu.dot_dimension_numbers<[1], [0], [0], [1], [0, 0, 1, 1], [], []>} : vector<128x37xf32>, vector<37x32xf32>, vector<128x32xf32> -> vector<128x32xf32>
    %c0_107 = arith.constant 0 : index
    %c0_108 = arith.constant 0 : index
    %128 = vector.load %arg3[%c0_107, %c0_108] : memref<1x32xf32, #tpu.memory_space<vmem>>, vector<1x32xf32>
    %129 = vector.broadcast %128 : vector<1x32xf32> to vector<128x32xf32>
    %130 = arith.addf %127, %129 : vector<128x32xf32>
    %cst_109 = arith.constant 0.000000e+00 : f32
    %131 = vector.broadcast %cst_109 : f32 to vector<128x32xf32>
    %132 = arith.maximumf %130, %131 : vector<128x32xf32>
    %133 = arith.maximumf %124, %132 : vector<128x32xf32>
    %c1920 = arith.constant 1920 : index
    %c0_110 = arith.constant 0 : index
    %134 = vector.load %arg1[%c1920, %c0_110] : memref<2048x37xf32, #tpu.memory_space<vmem>>, vector<128x37xf32>
    %c0_111 = arith.constant 0 : index
    %c0_112 = arith.constant 0 : index
    %135 = vector.load %arg2[%c0_111, %c0_112] : memref<37x32xf32, #tpu.memory_space<vmem>>, vector<37x32xf32>
    %cst_113 = arith.constant dense<0.000000e+00> : vector<128x32xf32>
    %136 = tpu.matmul %134, %135, %cst_113 {dimension_numbers = #tpu.dot_dimension_numbers<[1], [0], [0], [1], [0, 0, 1, 1], [], []>} : vector<128x37xf32>, vector<37x32xf32>, vector<128x32xf32> -> vector<128x32xf32>
    %c0_114 = arith.constant 0 : index
    %c0_115 = arith.constant 0 : index
    %137 = vector.load %arg3[%c0_114, %c0_115] : memref<1x32xf32, #tpu.memory_space<vmem>>, vector<1x32xf32>
    %138 = vector.broadcast %137 : vector<1x32xf32> to vector<128x32xf32>
    %139 = arith.addf %136, %138 : vector<128x32xf32>
    %cst_116 = arith.constant 0.000000e+00 : f32
    %140 = vector.broadcast %cst_116 : f32 to vector<128x32xf32>
    %141 = arith.maximumf %139, %140 : vector<128x32xf32>
    %142 = arith.maximumf %133, %141 : vector<128x32xf32>
    %c384_117 = arith.constant 384 : index
    %c0_118 = arith.constant 0 : index
    %143 = vector.load %arg11[%c384_117, %c0_118] : memref<512x32xf32, #tpu.memory_space<vmem>>, vector<128x32xf32>
    tpu.vector_store %arg11[%c384_117, %c0_118], %142 {strides = array<i32>} : memref<512x32xf32, #tpu.memory_space<vmem>>, vector<128x32xf32>,
    %c0_119 = arith.constant 0 : index
    %c0_120 = arith.constant 0 : index
    %144 = vector.load %arg11[%c0_119, %c0_120] : memref<512x32xf32, #tpu.memory_space<vmem>>, vector<96x32xf32>
    %c0_121 = arith.constant 0 : index
    %c0_122 = arith.constant 0 : index
    %145 = vector.load %arg12[%c0_121, %c0_122] : memref<96x288xf32, #tpu.memory_space<vmem>>, vector<96x32xf32>
    tpu.vector_store %arg12[%c0_121, %c0_122], %144 {strides = array<i32>} : memref<96x288xf32, #tpu.memory_space<vmem>>, vector<96x32xf32>,
    %c8 = arith.constant 8 : index
    %c0_123 = arith.constant 0 : index
    %146 = vector.load %arg11[%c8, %c0_123] : memref<512x32xf32, #tpu.memory_space<vmem>>, vector<96x32xf32>
    %c0_124 = arith.constant 0 : index
    %c32 = arith.constant 32 : index
    %147 = vector.load %arg12[%c0_124, %c32] : memref<96x288xf32, #tpu.memory_space<vmem>>, vector<96x32xf32>
    tpu.vector_store %arg12[%c0_124, %c32], %146 {strides = array<i32>} : memref<96x288xf32, #tpu.memory_space<vmem>>, vector<96x32xf32>,
    %c16 = arith.constant 16 : index
    %c0_125 = arith.constant 0 : index
    %148 = vector.load %arg11[%c16, %c0_125] : memref<512x32xf32, #tpu.memory_space<vmem>>, vector<96x32xf32>
    %c0_126 = arith.constant 0 : index
    %c64 = arith.constant 64 : index
    %149 = vector.load %arg12[%c0_126, %c64] : memref<96x288xf32, #tpu.memory_space<vmem>>, vector<96x32xf32>
    tpu.vector_store %arg12[%c0_126, %c64], %148 {strides = array<i32>} : memref<96x288xf32, #tpu.memory_space<vmem>>, vector<96x32xf32>,
    %c64_127 = arith.constant 64 : index
    %c0_128 = arith.constant 0 : index
    %150 = vector.load %arg11[%c64_127, %c0_128] : memref<512x32xf32, #tpu.memory_space<vmem>>, vector<96x32xf32>
    %c0_129 = arith.constant 0 : index
    %c96 = arith.constant 96 : index
    %151 = vector.load %arg12[%c0_129, %c96] : memref<96x288xf32, #tpu.memory_space<vmem>>, vector<96x32xf32>
    tpu.vector_store %arg12[%c0_129, %c96], %150 {strides = array<i32>} : memref<96x288xf32, #tpu.memory_space<vmem>>, vector<96x32xf32>,
    %c72 = arith.constant 72 : index
    %c0_130 = arith.constant 0 : index
    %152 = vector.load %arg11[%c72, %c0_130] : memref<512x32xf32, #tpu.memory_space<vmem>>, vector<96x32xf32>
    %c0_131 = arith.constant 0 : index
    %c128_132 = arith.constant 128 : index
    %153 = vector.load %arg12[%c0_131, %c128_132] : memref<96x288xf32, #tpu.memory_space<vmem>>, vector<96x32xf32>
    tpu.vector_store %arg12[%c0_131, %c128_132], %152 {strides = array<i32>} : memref<96x288xf32, #tpu.memory_space<vmem>>, vector<96x32xf32>,
    %c80 = arith.constant 80 : index
    %c0_133 = arith.constant 0 : index
    %154 = vector.load %arg11[%c80, %c0_133] : memref<512x32xf32, #tpu.memory_space<vmem>>, vector<96x32xf32>
    %c0_134 = arith.constant 0 : index
    %c160 = arith.constant 160 : index
    %155 = vector.load %arg12[%c0_134, %c160] : memref<96x288xf32, #tpu.memory_space<vmem>>, vector<96x32xf32>
    tpu.vector_store %arg12[%c0_134, %c160], %154 {strides = array<i32>} : memref<96x288xf32, #tpu.memory_space<vmem>>, vector<96x32xf32>,
    %c128_135 = arith.constant 128 : index
    %c0_136 = arith.constant 0 : index
    %156 = vector.load %arg11[%c128_135, %c0_136] : memref<512x32xf32, #tpu.memory_space<vmem>>, vector<96x32xf32>
    %c0_137 = arith.constant 0 : index
    %c192 = arith.constant 192 : index
    %157 = vector.load %arg12[%c0_137, %c192] : memref<96x288xf32, #tpu.memory_space<vmem>>, vector<96x32xf32>
    tpu.vector_store %arg12[%c0_137, %c192], %156 {strides = array<i32>} : memref<96x288xf32, #tpu.memory_space<vmem>>, vector<96x32xf32>,
    %c136 = arith.constant 136 : index
    %c0_138 = arith.constant 0 : index
    %158 = vector.load %arg11[%c136, %c0_138] : memref<512x32xf32, #tpu.memory_space<vmem>>, vector<96x32xf32>
    %c0_139 = arith.constant 0 : index
    %c224 = arith.constant 224 : index
    %159 = vector.load %arg12[%c0_139, %c224] : memref<96x288xf32, #tpu.memory_space<vmem>>, vector<96x32xf32>
    tpu.vector_store %arg12[%c0_139, %c224], %158 {strides = array<i32>} : memref<96x288xf32, #tpu.memory_space<vmem>>, vector<96x32xf32>,
    %c144 = arith.constant 144 : index
    %c0_140 = arith.constant 0 : index
    %160 = vector.load %arg11[%c144, %c0_140] : memref<512x32xf32, #tpu.memory_space<vmem>>, vector<96x32xf32>
    %c0_141 = arith.constant 0 : index
    %c256_142 = arith.constant 256 : index
    %161 = vector.load %arg12[%c0_141, %c256_142] : memref<96x288xf32, #tpu.memory_space<vmem>>, vector<96x32xf32>
    tpu.vector_store %arg12[%c0_141, %c256_142], %160 {strides = array<i32>} : memref<96x288xf32, #tpu.memory_space<vmem>>, vector<96x32xf32>,
    %c0_143 = arith.constant 0 : index
    %c0_144 = arith.constant 0 : index
    %162 = vector.load %arg12[%c0_143, %c0_144] : memref<96x288xf32, #tpu.memory_space<vmem>>, vector<96x288xf32>
    %c0_145 = arith.constant 0 : index
    %c0_146 = arith.constant 0 : index
    %163 = vector.load %arg4[%c0_145, %c0_146] : memref<288x64xf32, #tpu.memory_space<vmem>>, vector<288x64xf32>
    %cst_147 = arith.constant dense<0.000000e+00> : vector<96x64xf32>
    %164 = tpu.matmul %162, %163, %cst_147 {dimension_numbers = #tpu.dot_dimension_numbers<[1], [0], [0], [1], [0, 0, 1, 1], [], []>} : vector<96x288xf32>, vector<288x64xf32>, vector<96x64xf32> -> vector<96x64xf32>
    %c0_148 = arith.constant 0 : index
    %c0_149 = arith.constant 0 : index
    %165 = vector.load %arg5[%c0_148, %c0_149] : memref<1x64xf32, #tpu.memory_space<vmem>>, vector<1x64xf32>
    %166 = vector.broadcast %165 : vector<1x64xf32> to vector<96x64xf32>
    %167 = arith.addf %164, %166 : vector<96x64xf32>
    %cst_150 = arith.constant 0.000000e+00 : f32
    %168 = vector.broadcast %cst_150 : f32 to vector<96x64xf32>
    %169 = arith.maximumf %167, %168 : vector<96x64xf32>
    %c0_151 = arith.constant 0 : index
    %c0_152 = arith.constant 0 : index
    %170 = vector.load %arg13[%c0_151, %c0_152] : memref<368x64xf32, #tpu.memory_space<vmem>>, vector<96x64xf32>
    tpu.vector_store %arg13[%c0_151, %c0_152], %169 {strides = array<i32>} : memref<368x64xf32, #tpu.memory_space<vmem>>, vector<96x64xf32>,
    %c96_153 = arith.constant 96 : index
    %c0_154 = arith.constant 0 : index
    %171 = vector.load %arg11[%c96_153, %c0_154] : memref<512x32xf32, #tpu.memory_space<vmem>>, vector<96x32xf32>
    %c0_155 = arith.constant 0 : index
    %c0_156 = arith.constant 0 : index
    %172 = vector.load %arg12[%c0_155, %c0_156] : memref<96x288xf32, #tpu.memory_space<vmem>>, vector<96x32xf32>
    tpu.vector_store %arg12[%c0_155, %c0_156], %171 {strides = array<i32>} : memref<96x288xf32, #tpu.memory_space<vmem>>, vector<96x32xf32>,
    %c104 = arith.constant 104 : index
    %c0_157 = arith.constant 0 : index
    %173 = vector.load %arg11[%c104, %c0_157] : memref<512x32xf32, #tpu.memory_space<vmem>>, vector<96x32xf32>
    %c0_158 = arith.constant 0 : index
    %c32_159 = arith.constant 32 : index
    %174 = vector.load %arg12[%c0_158, %c32_159] : memref<96x288xf32, #tpu.memory_space<vmem>>, vector<96x32xf32>
    tpu.vector_store %arg12[%c0_158, %c32_159], %173 {strides = array<i32>} : memref<96x288xf32, #tpu.memory_space<vmem>>, vector<96x32xf32>,
    %c112 = arith.constant 112 : index
    %c0_160 = arith.constant 0 : index
    %175 = vector.load %arg11[%c112, %c0_160] : memref<512x32xf32, #tpu.memory_space<vmem>>, vector<96x32xf32>
    %c0_161 = arith.constant 0 : index
    %c64_162 = arith.constant 64 : index
    %176 = vector.load %arg12[%c0_161, %c64_162] : memref<96x288xf32, #tpu.memory_space<vmem>>, vector<96x32xf32>
    tpu.vector_store %arg12[%c0_161, %c64_162], %175 {strides = array<i32>} : memref<96x288xf32, #tpu.memory_space<vmem>>, vector<96x32xf32>,
    %c160_163 = arith.constant 160 : index
    %c0_164 = arith.constant 0 : index
    %177 = vector.load %arg11[%c160_163, %c0_164] : memref<512x32xf32, #tpu.memory_space<vmem>>, vector<96x32xf32>
    %c0_165 = arith.constant 0 : index
    %c96_166 = arith.constant 96 : index
    %178 = vector.load %arg12[%c0_165, %c96_166] : memref<96x288xf32, #tpu.memory_space<vmem>>, vector<96x32xf32>
    tpu.vector_store %arg12[%c0_165, %c96_166], %177 {strides = array<i32>} : memref<96x288xf32, #tpu.memory_space<vmem>>, vector<96x32xf32>,
    %c168 = arith.constant 168 : index
    %c0_167 = arith.constant 0 : index
    %179 = vector.load %arg11[%c168, %c0_167] : memref<512x32xf32, #tpu.memory_space<vmem>>, vector<96x32xf32>
    %c0_168 = arith.constant 0 : index
    %c128_169 = arith.constant 128 : index
    %180 = vector.load %arg12[%c0_168, %c128_169] : memref<96x288xf32, #tpu.memory_space<vmem>>, vector<96x32xf32>
    tpu.vector_store %arg12[%c0_168, %c128_169], %179 {strides = array<i32>} : memref<96x288xf32, #tpu.memory_space<vmem>>, vector<96x32xf32>,
    %c176 = arith.constant 176 : index
    %c0_170 = arith.constant 0 : index
    %181 = vector.load %arg11[%c176, %c0_170] : memref<512x32xf32, #tpu.memory_space<vmem>>, vector<96x32xf32>
    %c0_171 = arith.constant 0 : index
    %c160_172 = arith.constant 160 : index
    %182 = vector.load %arg12[%c0_171, %c160_172] : memref<96x288xf32, #tpu.memory_space<vmem>>, vector<96x32xf32>
    tpu.vector_store %arg12[%c0_171, %c160_172], %181 {strides = array<i32>} : memref<96x288xf32, #tpu.memory_space<vmem>>, vector<96x32xf32>,
    %c224_173 = arith.constant 224 : index
    %c0_174 = arith.constant 0 : index
    %183 = vector.load %arg11[%c224_173, %c0_174] : memref<512x32xf32, #tpu.memory_space<vmem>>, vector<96x32xf32>
    %c0_175 = arith.constant 0 : index
    %c192_176 = arith.constant 192 : index
    %184 = vector.load %arg12[%c0_175, %c192_176] : memref<96x288xf32, #tpu.memory_space<vmem>>, vector<96x32xf32>
    tpu.vector_store %arg12[%c0_175, %c192_176], %183 {strides = array<i32>} : memref<96x288xf32, #tpu.memory_space<vmem>>, vector<96x32xf32>,
    %c232 = arith.constant 232 : index
    %c0_177 = arith.constant 0 : index
    %185 = vector.load %arg11[%c232, %c0_177] : memref<512x32xf32, #tpu.memory_space<vmem>>, vector<96x32xf32>
    %c0_178 = arith.constant 0 : index
    %c224_179 = arith.constant 224 : index
    %186 = vector.load %arg12[%c0_178, %c224_179] : memref<96x288xf32, #tpu.memory_space<vmem>>, vector<96x32xf32>
    tpu.vector_store %arg12[%c0_178, %c224_179], %185 {strides = array<i32>} : memref<96x288xf32, #tpu.memory_space<vmem>>, vector<96x32xf32>,
    %c240 = arith.constant 240 : index
    %c0_180 = arith.constant 0 : index
    %187 = vector.load %arg11[%c240, %c0_180] : memref<512x32xf32, #tpu.memory_space<vmem>>, vector<96x32xf32>
    %c0_181 = arith.constant 0 : index
    %c256_182 = arith.constant 256 : index
    %188 = vector.load %arg12[%c0_181, %c256_182] : memref<96x288xf32, #tpu.memory_space<vmem>>, vector<96x32xf32>
    tpu.vector_store %arg12[%c0_181, %c256_182], %187 {strides = array<i32>} : memref<96x288xf32, #tpu.memory_space<vmem>>, vector<96x32xf32>,
    %c0_183 = arith.constant 0 : index
    %c0_184 = arith.constant 0 : index
    %189 = vector.load %arg12[%c0_183, %c0_184] : memref<96x288xf32, #tpu.memory_space<vmem>>, vector<96x288xf32>
    %c0_185 = arith.constant 0 : index
    %c0_186 = arith.constant 0 : index
    %190 = vector.load %arg4[%c0_185, %c0_186] : memref<288x64xf32, #tpu.memory_space<vmem>>, vector<288x64xf32>
    %cst_187 = arith.constant dense<0.000000e+00> : vector<96x64xf32>
    %191 = tpu.matmul %189, %190, %cst_187 {dimension_numbers = #tpu.dot_dimension_numbers<[1], [0], [0], [1], [0, 0, 1, 1], [], []>} : vector<96x288xf32>, vector<288x64xf32>, vector<96x64xf32> -> vector<96x64xf32>
    %c0_188 = arith.constant 0 : index
    %c0_189 = arith.constant 0 : index
    %192 = vector.load %arg5[%c0_188, %c0_189] : memref<1x64xf32, #tpu.memory_space<vmem>>, vector<1x64xf32>
    %193 = vector.broadcast %192 : vector<1x64xf32> to vector<96x64xf32>
    %194 = arith.addf %191, %193 : vector<96x64xf32>
    %cst_190 = arith.constant 0.000000e+00 : f32
    %195 = vector.broadcast %cst_190 : f32 to vector<96x64xf32>
    %196 = arith.maximumf %194, %195 : vector<96x64xf32>
    %c96_191 = arith.constant 96 : index
    %c0_192 = arith.constant 0 : index
    %197 = vector.load %arg13[%c96_191, %c0_192] : memref<368x64xf32, #tpu.memory_space<vmem>>, vector<96x64xf32>
    tpu.vector_store %arg13[%c96_191, %c0_192], %196 {strides = array<i32>} : memref<368x64xf32, #tpu.memory_space<vmem>>, vector<96x64xf32>,
    %c192_193 = arith.constant 192 : index
    %c0_194 = arith.constant 0 : index
    %198 = vector.load %arg11[%c192_193, %c0_194] : memref<512x32xf32, #tpu.memory_space<vmem>>, vector<96x32xf32>
    %c0_195 = arith.constant 0 : index
    %c0_196 = arith.constant 0 : index
    %199 = vector.load %arg12[%c0_195, %c0_196] : memref<96x288xf32, #tpu.memory_space<vmem>>, vector<96x32xf32>
    tpu.vector_store %arg12[%c0_195, %c0_196], %198 {strides = array<i32>} : memref<96x288xf32, #tpu.memory_space<vmem>>, vector<96x32xf32>,
    %c200 = arith.constant 200 : index
    %c0_197 = arith.constant 0 : index
    %200 = vector.load %arg11[%c200, %c0_197] : memref<512x32xf32, #tpu.memory_space<vmem>>, vector<96x32xf32>
    %c0_198 = arith.constant 0 : index
    %c32_199 = arith.constant 32 : index
    %201 = vector.load %arg12[%c0_198, %c32_199] : memref<96x288xf32, #tpu.memory_space<vmem>>, vector<96x32xf32>
    tpu.vector_store %arg12[%c0_198, %c32_199], %200 {strides = array<i32>} : memref<96x288xf32, #tpu.memory_space<vmem>>, vector<96x32xf32>,
    %c208 = arith.constant 208 : index
    %c0_200 = arith.constant 0 : index
    %202 = vector.load %arg11[%c208, %c0_200] : memref<512x32xf32, #tpu.memory_space<vmem>>, vector<96x32xf32>
    %c0_201 = arith.constant 0 : index
    %c64_202 = arith.constant 64 : index
    %203 = vector.load %arg12[%c0_201, %c64_202] : memref<96x288xf32, #tpu.memory_space<vmem>>, vector<96x32xf32>
    tpu.vector_store %arg12[%c0_201, %c64_202], %202 {strides = array<i32>} : memref<96x288xf32, #tpu.memory_space<vmem>>, vector<96x32xf32>,
    %c256_203 = arith.constant 256 : index
    %c0_204 = arith.constant 0 : index
    %204 = vector.load %arg11[%c256_203, %c0_204] : memref<512x32xf32, #tpu.memory_space<vmem>>, vector<96x32xf32>
    %c0_205 = arith.constant 0 : index
    %c96_206 = arith.constant 96 : index
    %205 = vector.load %arg12[%c0_205, %c96_206] : memref<96x288xf32, #tpu.memory_space<vmem>>, vector<96x32xf32>
    tpu.vector_store %arg12[%c0_205, %c96_206], %204 {strides = array<i32>} : memref<96x288xf32, #tpu.memory_space<vmem>>, vector<96x32xf32>,
    %c264 = arith.constant 264 : index
    %c0_207 = arith.constant 0 : index
    %206 = vector.load %arg11[%c264, %c0_207] : memref<512x32xf32, #tpu.memory_space<vmem>>, vector<96x32xf32>
    %c0_208 = arith.constant 0 : index
    %c128_209 = arith.constant 128 : index
    %207 = vector.load %arg12[%c0_208, %c128_209] : memref<96x288xf32, #tpu.memory_space<vmem>>, vector<96x32xf32>
    tpu.vector_store %arg12[%c0_208, %c128_209], %206 {strides = array<i32>} : memref<96x288xf32, #tpu.memory_space<vmem>>, vector<96x32xf32>,
    %c272 = arith.constant 272 : index
    %c0_210 = arith.constant 0 : index
    %208 = vector.load %arg11[%c272, %c0_210] : memref<512x32xf32, #tpu.memory_space<vmem>>, vector<96x32xf32>
    %c0_211 = arith.constant 0 : index
    %c160_212 = arith.constant 160 : index
    %209 = vector.load %arg12[%c0_211, %c160_212] : memref<96x288xf32, #tpu.memory_space<vmem>>, vector<96x32xf32>
    tpu.vector_store %arg12[%c0_211, %c160_212], %208 {strides = array<i32>} : memref<96x288xf32, #tpu.memory_space<vmem>>, vector<96x32xf32>,
    %c320 = arith.constant 320 : index
    %c0_213 = arith.constant 0 : index
    %210 = vector.load %arg11[%c320, %c0_213] : memref<512x32xf32, #tpu.memory_space<vmem>>, vector<96x32xf32>
    %c0_214 = arith.constant 0 : index
    %c192_215 = arith.constant 192 : index
    %211 = vector.load %arg12[%c0_214, %c192_215] : memref<96x288xf32, #tpu.memory_space<vmem>>, vector<96x32xf32>
    tpu.vector_store %arg12[%c0_214, %c192_215], %210 {strides = array<i32>} : memref<96x288xf32, #tpu.memory_space<vmem>>, vector<96x32xf32>,
    %c328 = arith.constant 328 : index
    %c0_216 = arith.constant 0 : index
    %212 = vector.load %arg11[%c328, %c0_216] : memref<512x32xf32, #tpu.memory_space<vmem>>, vector<96x32xf32>
    %c0_217 = arith.constant 0 : index
    %c224_218 = arith.constant 224 : index
    %213 = vector.load %arg12[%c0_217, %c224_218] : memref<96x288xf32, #tpu.memory_space<vmem>>, vector<96x32xf32>
    tpu.vector_store %arg12[%c0_217, %c224_218], %212 {strides = array<i32>} : memref<96x288xf32, #tpu.memory_space<vmem>>, vector<96x32xf32>,
    %c336 = arith.constant 336 : index
    %c0_219 = arith.constant 0 : index
    %214 = vector.load %arg11[%c336, %c0_219] : memref<512x32xf32, #tpu.memory_space<vmem>>, vector<96x32xf32>
    %c0_220 = arith.constant 0 : index
    %c256_221 = arith.constant 256 : index
    %215 = vector.load %arg12[%c0_220, %c256_221] : memref<96x288xf32, #tpu.memory_space<vmem>>, vector<96x32xf32>
    tpu.vector_store %arg12[%c0_220, %c256_221], %214 {strides = array<i32>} : memref<96x288xf32, #tpu.memory_space<vmem>>, vector<96x32xf32>,
    %c0_222 = arith.constant 0 : index
    %c0_223 = arith.constant 0 : index
    %216 = vector.load %arg12[%c0_222, %c0_223] : memref<96x288xf32, #tpu.memory_space<vmem>>, vector<96x288xf32>
    %c0_224 = arith.constant 0 : index
    %c0_225 = arith.constant 0 : index
    %217 = vector.load %arg4[%c0_224, %c0_225] : memref<288x64xf32, #tpu.memory_space<vmem>>, vector<288x64xf32>
    %cst_226 = arith.constant dense<0.000000e+00> : vector<96x64xf32>
    %218 = tpu.matmul %216, %217, %cst_226 {dimension_numbers = #tpu.dot_dimension_numbers<[1], [0], [0], [1], [0, 0, 1, 1], [], []>} : vector<96x288xf32>, vector<288x64xf32>, vector<96x64xf32> -> vector<96x64xf32>
    %c0_227 = arith.constant 0 : index
    %c0_228 = arith.constant 0 : index
    %219 = vector.load %arg5[%c0_227, %c0_228] : memref<1x64xf32, #tpu.memory_space<vmem>>, vector<1x64xf32>
    %220 = vector.broadcast %219 : vector<1x64xf32> to vector<96x64xf32>
    %221 = arith.addf %218, %220 : vector<96x64xf32>
    %cst_229 = arith.constant 0.000000e+00 : f32
    %222 = vector.broadcast %cst_229 : f32 to vector<96x64xf32>
    %223 = arith.maximumf %221, %222 : vector<96x64xf32>
    %c192_230 = arith.constant 192 : index
    %c0_231 = arith.constant 0 : index
    %224 = vector.load %arg13[%c192_230, %c0_231] : memref<368x64xf32, #tpu.memory_space<vmem>>, vector<96x64xf32>
    tpu.vector_store %arg13[%c192_230, %c0_231], %223 {strides = array<i32>} : memref<368x64xf32, #tpu.memory_space<vmem>>, vector<96x64xf32>,
    %c288 = arith.constant 288 : index
    %c0_232 = arith.constant 0 : index
    %225 = vector.load %arg11[%c288, %c0_232] : memref<512x32xf32, #tpu.memory_space<vmem>>, vector<80x32xf32>
    %c0_233 = arith.constant 0 : index
    %c0_234 = arith.constant 0 : index
    %226 = vector.load %arg12[%c0_233, %c0_234] : memref<96x288xf32, #tpu.memory_space<vmem>>, vector<80x32xf32>
    tpu.vector_store %arg12[%c0_233, %c0_234], %225 {strides = array<i32>} : memref<96x288xf32, #tpu.memory_space<vmem>>, vector<80x32xf32>,
    %c296 = arith.constant 296 : index
    %c0_235 = arith.constant 0 : index
    %227 = vector.load %arg11[%c296, %c0_235] : memref<512x32xf32, #tpu.memory_space<vmem>>, vector<80x32xf32>
    %c0_236 = arith.constant 0 : index
    %c32_237 = arith.constant 32 : index
    %228 = vector.load %arg12[%c0_236, %c32_237] : memref<96x288xf32, #tpu.memory_space<vmem>>, vector<80x32xf32>
    tpu.vector_store %arg12[%c0_236, %c32_237], %227 {strides = array<i32>} : memref<96x288xf32, #tpu.memory_space<vmem>>, vector<80x32xf32>,
    %c304 = arith.constant 304 : index
    %c0_238 = arith.constant 0 : index
    %229 = vector.load %arg11[%c304, %c0_238] : memref<512x32xf32, #tpu.memory_space<vmem>>, vector<80x32xf32>
    %c0_239 = arith.constant 0 : index
    %c64_240 = arith.constant 64 : index
    %230 = vector.load %arg12[%c0_239, %c64_240] : memref<96x288xf32, #tpu.memory_space<vmem>>, vector<80x32xf32>
    tpu.vector_store %arg12[%c0_239, %c64_240], %229 {strides = array<i32>} : memref<96x288xf32, #tpu.memory_space<vmem>>, vector<80x32xf32>,
    %c352 = arith.constant 352 : index
    %c0_241 = arith.constant 0 : index
    %231 = vector.load %arg11[%c352, %c0_241] : memref<512x32xf32, #tpu.memory_space<vmem>>, vector<80x32xf32>
    %c0_242 = arith.constant 0 : index
    %c96_243 = arith.constant 96 : index
    %232 = vector.load %arg12[%c0_242, %c96_243] : memref<96x288xf32, #tpu.memory_space<vmem>>, vector<80x32xf32>
    tpu.vector_store %arg12[%c0_242, %c96_243], %231 {strides = array<i32>} : memref<96x288xf32, #tpu.memory_space<vmem>>, vector<80x32xf32>,
    %c360 = arith.constant 360 : index
    %c0_244 = arith.constant 0 : index
    %233 = vector.load %arg11[%c360, %c0_244] : memref<512x32xf32, #tpu.memory_space<vmem>>, vector<80x32xf32>
    %c0_245 = arith.constant 0 : index
    %c128_246 = arith.constant 128 : index
    %234 = vector.load %arg12[%c0_245, %c128_246] : memref<96x288xf32, #tpu.memory_space<vmem>>, vector<80x32xf32>
    tpu.vector_store %arg12[%c0_245, %c128_246], %233 {strides = array<i32>} : memref<96x288xf32, #tpu.memory_space<vmem>>, vector<80x32xf32>,
    %c368 = arith.constant 368 : index
    %c0_247 = arith.constant 0 : index
    %235 = vector.load %arg11[%c368, %c0_247] : memref<512x32xf32, #tpu.memory_space<vmem>>, vector<80x32xf32>
    %c0_248 = arith.constant 0 : index
    %c160_249 = arith.constant 160 : index
    %236 = vector.load %arg12[%c0_248, %c160_249] : memref<96x288xf32, #tpu.memory_space<vmem>>, vector<80x32xf32>
    tpu.vector_store %arg12[%c0_248, %c160_249], %235 {strides = array<i32>} : memref<96x288xf32, #tpu.memory_space<vmem>>, vector<80x32xf32>,
    %c416 = arith.constant 416 : index
    %c0_250 = arith.constant 0 : index
    %237 = vector.load %arg11[%c416, %c0_250] : memref<512x32xf32, #tpu.memory_space<vmem>>, vector<80x32xf32>
    %c0_251 = arith.constant 0 : index
    %c192_252 = arith.constant 192 : index
    %238 = vector.load %arg12[%c0_251, %c192_252] : memref<96x288xf32, #tpu.memory_space<vmem>>, vector<80x32xf32>
    tpu.vector_store %arg12[%c0_251, %c192_252], %237 {strides = array<i32>} : memref<96x288xf32, #tpu.memory_space<vmem>>, vector<80x32xf32>,
    %c424 = arith.constant 424 : index
    %c0_253 = arith.constant 0 : index
    %239 = vector.load %arg11[%c424, %c0_253] : memref<512x32xf32, #tpu.memory_space<vmem>>, vector<80x32xf32>
    %c0_254 = arith.constant 0 : index
    %c224_255 = arith.constant 224 : index
    %240 = vector.load %arg12[%c0_254, %c224_255] : memref<96x288xf32, #tpu.memory_space<vmem>>, vector<80x32xf32>
    tpu.vector_store %arg12[%c0_254, %c224_255], %239 {strides = array<i32>} : memref<96x288xf32, #tpu.memory_space<vmem>>, vector<80x32xf32>,
    %c432 = arith.constant 432 : index
    %c0_256 = arith.constant 0 : index
    %241 = vector.load %arg11[%c432, %c0_256] : memref<512x32xf32, #tpu.memory_space<vmem>>, vector<80x32xf32>
    %c0_257 = arith.constant 0 : index
    %c256_258 = arith.constant 256 : index
    %242 = vector.load %arg12[%c0_257, %c256_258] : memref<96x288xf32, #tpu.memory_space<vmem>>, vector<80x32xf32>
    tpu.vector_store %arg12[%c0_257, %c256_258], %241 {strides = array<i32>} : memref<96x288xf32, #tpu.memory_space<vmem>>, vector<80x32xf32>,
    %c0_259 = arith.constant 0 : index
    %c0_260 = arith.constant 0 : index
    %243 = vector.load %arg12[%c0_259, %c0_260] : memref<96x288xf32, #tpu.memory_space<vmem>>, vector<80x288xf32>
    %c0_261 = arith.constant 0 : index
    %c0_262 = arith.constant 0 : index
    %244 = vector.load %arg4[%c0_261, %c0_262] : memref<288x64xf32, #tpu.memory_space<vmem>>, vector<288x64xf32>
    %cst_263 = arith.constant dense<0.000000e+00> : vector<80x64xf32>
    %245 = tpu.matmul %243, %244, %cst_263 {dimension_numbers = #tpu.dot_dimension_numbers<[1], [0], [0], [1], [0, 0, 1, 1], [], []>} : vector<80x288xf32>, vector<288x64xf32>, vector<80x64xf32> -> vector<80x64xf32>
    %c0_264 = arith.constant 0 : index
    %c0_265 = arith.constant 0 : index
    %246 = vector.load %arg5[%c0_264, %c0_265] : memref<1x64xf32, #tpu.memory_space<vmem>>, vector<1x64xf32>
    %247 = vector.broadcast %246 : vector<1x64xf32> to vector<80x64xf32>
    %248 = arith.addf %245, %247 : vector<80x64xf32>
    %cst_266 = arith.constant 0.000000e+00 : f32
    %249 = vector.broadcast %cst_266 : f32 to vector<80x64xf32>
    %250 = arith.maximumf %248, %249 : vector<80x64xf32>
    %c288_267 = arith.constant 288 : index
    %c0_268 = arith.constant 0 : index
    %251 = vector.load %arg13[%c288_267, %c0_268] : memref<368x64xf32, #tpu.memory_space<vmem>>, vector<80x64xf32>
    tpu.vector_store %arg13[%c288_267, %c0_268], %250 {strides = array<i32>} : memref<368x64xf32, #tpu.memory_space<vmem>>, vector<80x64xf32>,
    %c0_269 = arith.constant 0 : index
    %c0_270 = arith.constant 0 : index
    %252 = vector.load %arg13[%c0_269, %c0_270] : memref<368x64xf32, #tpu.memory_space<vmem>>, vector<8x64xf32>
    %c8_271 = arith.constant 8 : index
    %c0_272 = arith.constant 0 : index
    %253 = vector.load %arg13[%c8_271, %c0_272] : memref<368x64xf32, #tpu.memory_space<vmem>>, vector<8x64xf32>
    %c64_273 = arith.constant 64 : index
    %c0_274 = arith.constant 0 : index
    %254 = vector.load %arg13[%c64_273, %c0_274] : memref<368x64xf32, #tpu.memory_space<vmem>>, vector<8x64xf32>
    %c72_275 = arith.constant 72 : index
    %c0_276 = arith.constant 0 : index
    %255 = vector.load %arg13[%c72_275, %c0_276] : memref<368x64xf32, #tpu.memory_space<vmem>>, vector<8x64xf32>
    %256 = arith.maximumf %252, %253 : vector<8x64xf32>
    %257 = arith.maximumf %254, %255 : vector<8x64xf32>
    %258 = arith.maximumf %256, %257 : vector<8x64xf32>
    %c0_277 = arith.constant 0 : index
    %c0_278 = arith.constant 0 : index
    %259 = vector.load %arg14[%c0_277, %c0_278] : memref<8x576xf32, #tpu.memory_space<vmem>>, vector<8x64xf32>
    tpu.vector_store %arg14[%c0_277, %c0_278], %258 {strides = array<i32>} : memref<8x576xf32, #tpu.memory_space<vmem>>, vector<8x64xf32>,
    %c16_279 = arith.constant 16 : index
    %c0_280 = arith.constant 0 : index
    %260 = vector.load %arg13[%c16_279, %c0_280] : memref<368x64xf32, #tpu.memory_space<vmem>>, vector<8x64xf32>
    %c24 = arith.constant 24 : index
    %c0_281 = arith.constant 0 : index
    %261 = vector.load %arg13[%c24, %c0_281] : memref<368x64xf32, #tpu.memory_space<vmem>>, vector<8x64xf32>
    %c80_282 = arith.constant 80 : index
    %c0_283 = arith.constant 0 : index
    %262 = vector.load %arg13[%c80_282, %c0_283] : memref<368x64xf32, #tpu.memory_space<vmem>>, vector<8x64xf32>
    %c88 = arith.constant 88 : index
    %c0_284 = arith.constant 0 : index
    %263 = vector.load %arg13[%c88, %c0_284] : memref<368x64xf32, #tpu.memory_space<vmem>>, vector<8x64xf32>
    %264 = arith.maximumf %260, %261 : vector<8x64xf32>
    %265 = arith.maximumf %262, %263 : vector<8x64xf32>
    %266 = arith.maximumf %264, %265 : vector<8x64xf32>
    %c0_285 = arith.constant 0 : index
    %c64_286 = arith.constant 64 : index
    %267 = vector.load %arg14[%c0_285, %c64_286] : memref<8x576xf32, #tpu.memory_space<vmem>>, vector<8x64xf32>
    tpu.vector_store %arg14[%c0_285, %c64_286], %266 {strides = array<i32>} : memref<8x576xf32, #tpu.memory_space<vmem>>, vector<8x64xf32>,
    %c32_287 = arith.constant 32 : index
    %c0_288 = arith.constant 0 : index
    %268 = vector.load %arg13[%c32_287, %c0_288] : memref<368x64xf32, #tpu.memory_space<vmem>>, vector<8x64xf32>
    %c40 = arith.constant 40 : index
    %c0_289 = arith.constant 0 : index
    %269 = vector.load %arg13[%c40, %c0_289] : memref<368x64xf32, #tpu.memory_space<vmem>>, vector<8x64xf32>
    %c96_290 = arith.constant 96 : index
    %c0_291 = arith.constant 0 : index
    %270 = vector.load %arg13[%c96_290, %c0_291] : memref<368x64xf32, #tpu.memory_space<vmem>>, vector<8x64xf32>
    %c104_292 = arith.constant 104 : index
    %c0_293 = arith.constant 0 : index
    %271 = vector.load %arg13[%c104_292, %c0_293] : memref<368x64xf32, #tpu.memory_space<vmem>>, vector<8x64xf32>
    %272 = arith.maximumf %268, %269 : vector<8x64xf32>
    %273 = arith.maximumf %270, %271 : vector<8x64xf32>
    %274 = arith.maximumf %272, %273 : vector<8x64xf32>
    %c0_294 = arith.constant 0 : index
    %c128_295 = arith.constant 128 : index
    %275 = vector.load %arg14[%c0_294, %c128_295] : memref<8x576xf32, #tpu.memory_space<vmem>>, vector<8x64xf32>
    tpu.vector_store %arg14[%c0_294, %c128_295], %274 {strides = array<i32>} : memref<8x576xf32, #tpu.memory_space<vmem>>, vector<8x64xf32>,
    %c128_296 = arith.constant 128 : index
    %c0_297 = arith.constant 0 : index
    %276 = vector.load %arg13[%c128_296, %c0_297] : memref<368x64xf32, #tpu.memory_space<vmem>>, vector<8x64xf32>
    %c136_298 = arith.constant 136 : index
    %c0_299 = arith.constant 0 : index
    %277 = vector.load %arg13[%c136_298, %c0_299] : memref<368x64xf32, #tpu.memory_space<vmem>>, vector<8x64xf32>
    %c192_300 = arith.constant 192 : index
    %c0_301 = arith.constant 0 : index
    %278 = vector.load %arg13[%c192_300, %c0_301] : memref<368x64xf32, #tpu.memory_space<vmem>>, vector<8x64xf32>
    %c200_302 = arith.constant 200 : index
    %c0_303 = arith.constant 0 : index
    %279 = vector.load %arg13[%c200_302, %c0_303] : memref<368x64xf32, #tpu.memory_space<vmem>>, vector<8x64xf32>
    %280 = arith.maximumf %276, %277 : vector<8x64xf32>
    %281 = arith.maximumf %278, %279 : vector<8x64xf32>
    %282 = arith.maximumf %280, %281 : vector<8x64xf32>
    %c0_304 = arith.constant 0 : index
    %c192_305 = arith.constant 192 : index
    %283 = vector.load %arg14[%c0_304, %c192_305] : memref<8x576xf32, #tpu.memory_space<vmem>>, vector<8x64xf32>
    tpu.vector_store %arg14[%c0_304, %c192_305], %282 {strides = array<i32>} : memref<8x576xf32, #tpu.memory_space<vmem>>, vector<8x64xf32>,
    %c144_306 = arith.constant 144 : index
    %c0_307 = arith.constant 0 : index
    %284 = vector.load %arg13[%c144_306, %c0_307] : memref<368x64xf32, #tpu.memory_space<vmem>>, vector<8x64xf32>
    %c152 = arith.constant 152 : index
    %c0_308 = arith.constant 0 : index
    %285 = vector.load %arg13[%c152, %c0_308] : memref<368x64xf32, #tpu.memory_space<vmem>>, vector<8x64xf32>
    %c208_309 = arith.constant 208 : index
    %c0_310 = arith.constant 0 : index
    %286 = vector.load %arg13[%c208_309, %c0_310] : memref<368x64xf32, #tpu.memory_space<vmem>>, vector<8x64xf32>
    %c216 = arith.constant 216 : index
    %c0_311 = arith.constant 0 : index
    %287 = vector.load %arg13[%c216, %c0_311] : memref<368x64xf32, #tpu.memory_space<vmem>>, vector<8x64xf32>
    %288 = arith.maximumf %284, %285 : vector<8x64xf32>
    %289 = arith.maximumf %286, %287 : vector<8x64xf32>
    %290 = arith.maximumf %288, %289 : vector<8x64xf32>
    %c0_312 = arith.constant 0 : index
    %c256_313 = arith.constant 256 : index
    %291 = vector.load %arg14[%c0_312, %c256_313] : memref<8x576xf32, #tpu.memory_space<vmem>>, vector<8x64xf32>
    tpu.vector_store %arg14[%c0_312, %c256_313], %290 {strides = array<i32>} : memref<8x576xf32, #tpu.memory_space<vmem>>, vector<8x64xf32>,
    %c160_314 = arith.constant 160 : index
    %c0_315 = arith.constant 0 : index
    %292 = vector.load %arg13[%c160_314, %c0_315] : memref<368x64xf32, #tpu.memory_space<vmem>>, vector<8x64xf32>
    %c168_316 = arith.constant 168 : index
    %c0_317 = arith.constant 0 : index
    %293 = vector.load %arg13[%c168_316, %c0_317] : memref<368x64xf32, #tpu.memory_space<vmem>>, vector<8x64xf32>
    %c224_318 = arith.constant 224 : index
    %c0_319 = arith.constant 0 : index
    %294 = vector.load %arg13[%c224_318, %c0_319] : memref<368x64xf32, #tpu.memory_space<vmem>>, vector<8x64xf32>
    %c232_320 = arith.constant 232 : index
    %c0_321 = arith.constant 0 : index
    %295 = vector.load %arg13[%c232_320, %c0_321] : memref<368x64xf32, #tpu.memory_space<vmem>>, vector<8x64xf32>
    %296 = arith.maximumf %292, %293 : vector<8x64xf32>
    %297 = arith.maximumf %294, %295 : vector<8x64xf32>
    %298 = arith.maximumf %296, %297 : vector<8x64xf32>
    %c0_322 = arith.constant 0 : index
    %c320_323 = arith.constant 320 : index
    %299 = vector.load %arg14[%c0_322, %c320_323] : memref<8x576xf32, #tpu.memory_space<vmem>>, vector<8x64xf32>
    tpu.vector_store %arg14[%c0_322, %c320_323], %298 {strides = array<i32>} : memref<8x576xf32, #tpu.memory_space<vmem>>, vector<8x64xf32>,
    %c256_324 = arith.constant 256 : index
    %c0_325 = arith.constant 0 : index
    %300 = vector.load %arg13[%c256_324, %c0_325] : memref<368x64xf32, #tpu.memory_space<vmem>>, vector<8x64xf32>
    %c264_326 = arith.constant 264 : index
    %c0_327 = arith.constant 0 : index
    %301 = vector.load %arg13[%c264_326, %c0_327] : memref<368x64xf32, #tpu.memory_space<vmem>>, vector<8x64xf32>
    %c320_328 = arith.constant 320 : index
    %c0_329 = arith.constant 0 : index
    %302 = vector.load %arg13[%c320_328, %c0_329] : memref<368x64xf32, #tpu.memory_space<vmem>>, vector<8x64xf32>
    %c328_330 = arith.constant 328 : index
    %c0_331 = arith.constant 0 : index
    %303 = vector.load %arg13[%c328_330, %c0_331] : memref<368x64xf32, #tpu.memory_space<vmem>>, vector<8x64xf32>
    %304 = arith.maximumf %300, %301 : vector<8x64xf32>
    %305 = arith.maximumf %302, %303 : vector<8x64xf32>
    %306 = arith.maximumf %304, %305 : vector<8x64xf32>
    %c0_332 = arith.constant 0 : index
    %c384_333 = arith.constant 384 : index
    %307 = vector.load %arg14[%c0_332, %c384_333] : memref<8x576xf32, #tpu.memory_space<vmem>>, vector<8x64xf32>
    tpu.vector_store %arg14[%c0_332, %c384_333], %306 {strides = array<i32>} : memref<8x576xf32, #tpu.memory_space<vmem>>, vector<8x64xf32>,
    %c272_334 = arith.constant 272 : index
    %c0_335 = arith.constant 0 : index
    %308 = vector.load %arg13[%c272_334, %c0_335] : memref<368x64xf32, #tpu.memory_space<vmem>>, vector<8x64xf32>
    %c280 = arith.constant 280 : index
    %c0_336 = arith.constant 0 : index
    %309 = vector.load %arg13[%c280, %c0_336] : memref<368x64xf32, #tpu.memory_space<vmem>>, vector<8x64xf32>
    %c336_337 = arith.constant 336 : index
    %c0_338 = arith.constant 0 : index
    %310 = vector.load %arg13[%c336_337, %c0_338] : memref<368x64xf32, #tpu.memory_space<vmem>>, vector<8x64xf32>
    %c344 = arith.constant 344 : index
    %c0_339 = arith.constant 0 : index
    %311 = vector.load %arg13[%c344, %c0_339] : memref<368x64xf32, #tpu.memory_space<vmem>>, vector<8x64xf32>
    %312 = arith.maximumf %308, %309 : vector<8x64xf32>
    %313 = arith.maximumf %310, %311 : vector<8x64xf32>
    %314 = arith.maximumf %312, %313 : vector<8x64xf32>
    %c0_340 = arith.constant 0 : index
    %c448 = arith.constant 448 : index
    %315 = vector.load %arg14[%c0_340, %c448] : memref<8x576xf32, #tpu.memory_space<vmem>>, vector<8x64xf32>
    tpu.vector_store %arg14[%c0_340, %c448], %314 {strides = array<i32>} : memref<8x576xf32, #tpu.memory_space<vmem>>, vector<8x64xf32>,
    %c288_341 = arith.constant 288 : index
    %c0_342 = arith.constant 0 : index
    %316 = vector.load %arg13[%c288_341, %c0_342] : memref<368x64xf32, #tpu.memory_space<vmem>>, vector<8x64xf32>
    %c296_343 = arith.constant 296 : index
    %c0_344 = arith.constant 0 : index
    %317 = vector.load %arg13[%c296_343, %c0_344] : memref<368x64xf32, #tpu.memory_space<vmem>>, vector<8x64xf32>
    %c352_345 = arith.constant 352 : index
    %c0_346 = arith.constant 0 : index
    %318 = vector.load %arg13[%c352_345, %c0_346] : memref<368x64xf32, #tpu.memory_space<vmem>>, vector<8x64xf32>
    %c360_347 = arith.constant 360 : index
    %c0_348 = arith.constant 0 : index
    %319 = vector.load %arg13[%c360_347, %c0_348] : memref<368x64xf32, #tpu.memory_space<vmem>>, vector<8x64xf32>
    %320 = arith.maximumf %316, %317 : vector<8x64xf32>
    %321 = arith.maximumf %318, %319 : vector<8x64xf32>
    %322 = arith.maximumf %320, %321 : vector<8x64xf32>
    %c0_349 = arith.constant 0 : index
    %c512_350 = arith.constant 512 : index
    %323 = vector.load %arg14[%c0_349, %c512_350] : memref<8x576xf32, #tpu.memory_space<vmem>>, vector<8x64xf32>
    tpu.vector_store %arg14[%c0_349, %c512_350], %322 {strides = array<i32>} : memref<8x576xf32, #tpu.memory_space<vmem>>, vector<8x64xf32>,
    %c0_351 = arith.constant 0 : index
    %c0_352 = arith.constant 0 : index
    %324 = vector.load %arg14[%c0_351, %c0_352] : memref<8x576xf32, #tpu.memory_space<vmem>>, vector<8x576xf32>
    %c0_353 = arith.constant 0 : index
    %c0_354 = arith.constant 0 : index
    %325 = vector.load %arg6[%c0_353, %c0_354] : memref<576x512xf32, #tpu.memory_space<vmem>>, vector<576x512xf32>
    %cst_355 = arith.constant dense<0.000000e+00> : vector<8x512xf32>
    %326 = tpu.matmul %324, %325, %cst_355 {dimension_numbers = #tpu.dot_dimension_numbers<[1], [0], [0], [1], [0, 0, 1, 1], [], []>} : vector<8x576xf32>, vector<576x512xf32>, vector<8x512xf32> -> vector<8x512xf32>
    %c0_356 = arith.constant 0 : index
    %c0_357 = arith.constant 0 : index
    %327 = vector.load %arg7[%c0_356, %c0_357] : memref<1x512xf32, #tpu.memory_space<vmem>>, vector<1x512xf32>
    %328 = vector.broadcast %327 : vector<1x512xf32> to vector<8x512xf32>
    %329 = arith.addf %326, %328 : vector<8x512xf32>
    %cst_358 = arith.constant 0.000000e+00 : f32
    %330 = vector.broadcast %cst_358 : f32 to vector<8x512xf32>
    %331 = arith.maximumf %329, %330 : vector<8x512xf32>
    %c0_359 = arith.constant 0 : index
    %c0_360 = arith.constant 0 : index
    %332 = vector.load %arg8[%c0_359, %c0_360] : memref<512x128xf32, #tpu.memory_space<vmem>>, vector<512x128xf32>
    %cst_361 = arith.constant dense<0.000000e+00> : vector<8x128xf32>
    %333 = tpu.matmul %331, %332, %cst_361 {dimension_numbers = #tpu.dot_dimension_numbers<[1], [0], [0], [1], [0, 0, 1, 1], [], []>} : vector<8x512xf32>, vector<512x128xf32>, vector<8x128xf32> -> vector<8x128xf32>
    %c0_362 = arith.constant 0 : index
    %c0_363 = arith.constant 0 : index
    %334 = vector.load %arg9[%c0_362, %c0_363] : memref<1x128xf32, #tpu.memory_space<vmem>>, vector<1x128xf32>
    %335 = vector.broadcast %334 : vector<1x128xf32> to vector<8x128xf32>
    %336 = arith.addf %333, %335 : vector<8x128xf32>
    %c0_364 = arith.constant 0 : index
    %c0_365 = arith.constant 0 : index
    %337 = vector.load %arg10[%c0_364, %c0_365] : memref<8x128xf32, #tpu.memory_space<vmem>>, vector<8x128xf32>
    tpu.vector_store %arg10[%c0_364, %c0_365], %336 {strides = array<i32>} : memref<8x128xf32, #tpu.memory_space<vmem>>, vector<8x128xf32>,
    return
  }
  func.func @transform_0(%arg0: i32) -> (i32, i32) {
    %c0_i32 = arith.constant 0 : i32
    %c0_i32_0 = arith.constant 0 : i32
    return %arg0, %c0_i32 : i32, i32
  }
  func.func @transform_1(%arg0: i32) -> (i32, i32) {
    %c0_i32 = arith.constant 0 : i32
    %c0_i32_0 = arith.constant 0 : i32
    %c0_i32_1 = arith.constant 0 : i32
    return %c0_i32, %c0_i32_0 : i32, i32
  }
  func.func @transform_2(%arg0: i32) -> (i32, i32) {
    %c0_i32 = arith.constant 0 : i32
    %c0_i32_0 = arith.constant 0 : i32
    %c0_i32_1 = arith.constant 0 : i32
    return %c0_i32, %c0_i32_0 : i32, i32
  }
  func.func @transform_3(%arg0: i32) -> (i32, i32) {
    %c0_i32 = arith.constant 0 : i32
    %c0_i32_0 = arith.constant 0 : i32
    %c0_i32_1 = arith.constant 0 : i32
    return %c0_i32, %c0_i32_0 : i32, i32
  }
  func.func @transform_4(%arg0: i32) -> (i32, i32) {
    %c0_i32 = arith.constant 0 : i32
    %c0_i32_0 = arith.constant 0 : i32
    %c0_i32_1 = arith.constant 0 : i32
    return %c0_i32, %c0_i32_0 : i32, i32
  }
  func.func @transform_5(%arg0: i32) -> (i32, i32) {
    %c0_i32 = arith.constant 0 : i32
    %c0_i32_0 = arith.constant 0 : i32
    %c0_i32_1 = arith.constant 0 : i32
    return %c0_i32, %c0_i32_0 : i32, i32
  }
  func.func @transform_6(%arg0: i32) -> (i32, i32) {
    %c0_i32 = arith.constant 0 : i32
    %c0_i32_0 = arith.constant 0 : i32
    %c0_i32_1 = arith.constant 0 : i32
    return %c0_i32, %c0_i32_0 : i32, i32
  }
  func.func @transform_7(%arg0: i32) -> (i32, i32) {
    %c0_i32 = arith.constant 0 : i32
    %c0_i32_0 = arith.constant 0 : i32
    %c0_i32_1 = arith.constant 0 : i32
    return %c0_i32, %c0_i32_0 : i32, i32
  }
  func.func @transform_8(%arg0: i32) -> (i32, i32) {
    %c0_i32 = arith.constant 0 : i32
    %c0_i32_0 = arith.constant 0 : i32
    %c0_i32_1 = arith.constant 0 : i32
    return %c0_i32, %c0_i32_0 : i32, i32
  }
  func.func @transform_9(%arg0: i32) -> (i32, i32) {
    %c0_i32 = arith.constant 0 : i32
    %c0_i32_0 = arith.constant 0 : i32
    return %arg0, %c0_i32 : i32, i32
  }
}

</mosaic_0001>

<llo_original>
// kernel: convnet_forward.1
$region0: #{convnet_forward.1}
  #allocation0 [shape = 'u32[]', space=smem, size = 0x4, offset = 0x4, fixed_abs, tag = 'smem constant byte address 0x4 - core index']
  #allocation1 [shape = 'u32[144,128]{1,0:T(1,128)}', space=vmem, size = 0x12000, scoped, tag = 'internal scratch']
  #allocation2 [shape = 'f32[512,32]{1,0:T(8,128)}', space=vmem, size = 0x40000, scoped, tag = 'scratch operand']
  #allocation3 [shape = 'f32[96,288]{1,0:T(8,128)}', space=vmem, size = 0x24000, scoped, tag = 'scratch operand']
  #allocation4 [shape = 'f32[368,64]{1,0:T(8,128)}', space=vmem, size = 0x2e000, scoped, tag = 'scratch operand']
  #allocation5 [shape = 'f32[8,576]{1,0:T(8,128)}', space=vmem, size = 0x5000, scoped, tag = 'scratch operand']
  %s0 = inlined_call_operand.vmem [shape: f32[2048,37], index: 0, kind: input, shape index: {}]
  %s1 = inlined_call_operand.vmem [shape: f32[37,32], index: 1, kind: input, shape index: {}]
  %s2 = inlined_call_operand.vmem [shape: f32[1,32], index: 2, kind: input, shape index: {}]
  %s3 = inlined_call_operand.vmem [shape: f32[288,64], index: 3, kind: input, shape index: {}]
  %s4 = inlined_call_operand.vmem [shape: f32[1,64], index: 4, kind: input, shape index: {}]
  %s5 = inlined_call_operand.vmem [shape: f32[576,512], index: 5, kind: input, shape index: {}]
  %s6 = inlined_call_operand.vmem [shape: f32[1,512], index: 6, kind: input, shape index: {}]
  %s7 = inlined_call_operand.vmem [shape: f32[512,128], index: 7, kind: input, shape index: {}]
  %s8 = inlined_call_operand.vmem [shape: f32[1,128], index: 8, kind: input, shape index: {}]
  %s9 = inlined_call_operand.vmem [shape: f32[8,128], index: 9, kind: output, shape index: {}]
  %s10 = sld [smem:[#allocation0]]
  $region46: #{convnet_forward.1} parent=0
    _
  %s12 = ssub.s32 1, %s10
  %s13 = scalar_select 0, %s12, %s10
  // Predicated region
  $region2: #{convnet_forward.1} parent=0 // pred_check
    _
  $region3: #{convnet_forward.1} parent=0 // pred_check_branch
    %15 = sbr.rel (0) target = $region5
  $region4: #{convnet_forward.1} parent=0 // pred_region
    _
  $region5: #{convnet_forward.1} parent=0 // pred_fallthru
    _
  // Predicated region
  $region6: #{convnet_forward.1} parent=0 // pred_check
    _
  $region7: #{convnet_forward.1} parent=0 // pred_check_branch
    %17 = sbr.rel (0) target = $region9
  $region8: #{convnet_forward.1} parent=0 // pred_region
    _
  $region9: #{convnet_forward.1} parent=0 // pred_fallthru
    _
  // Predicated region
  $region10: #{convnet_forward.1} parent=0 // pred_check
    _
  $region11: #{convnet_forward.1} parent=0 // pred_check_branch
    %19 = sbr.rel (0) target = $region13
  $region12: #{convnet_forward.1} parent=0 // pred_region
    _
  $region13: #{convnet_forward.1} parent=0 // pred_fallthru
    _
  // Predicated region
  $region14: #{convnet_forward.1} parent=0 // pred_check
    _
  $region15: #{convnet_forward.1} parent=0 // pred_check_branch
    %21 = sbr.rel (0) target = $region17
  $region16: #{convnet_forward.1} parent=0 // pred_region
    _
  $region17: #{convnet_forward.1} parent=0 // pred_fallthru
    _
  // Predicated region
  $region18: #{convnet_forward.1} parent=0 // pred_check
    _
  $region19: #{convnet_forward.1} parent=0 // pred_check_branch
    %23 = sbr.rel (0) target = $region21
  $region20: #{convnet_forward.1} parent=0 // pred_region
    _
  $region21: #{convnet_forward.1} parent=0 // pred_fallthru
    _
  // Predicated region
  $region22: #{convnet_forward.1} parent=0 // pred_check
    _
  $region23: #{convnet_forward.1} parent=0 // pred_check_branch
    %25 = sbr.rel (0) target = $region25
  $region24: #{convnet_forward.1} parent=0 // pred_region
    _
  $region25: #{convnet_forward.1} parent=0 // pred_fallthru
    _
  // Predicated region
  $region26: #{convnet_forward.1} parent=0 // pred_check
    _
  $region27: #{convnet_forward.1} parent=0 // pred_check_branch
    %27 = sbr.rel (0) target = $region29
  $region28: #{convnet_forward.1} parent=0 // pred_region
    _
  $region29: #{convnet_forward.1} parent=0 // pred_fallthru
    _
  // Predicated region
  $region30: #{convnet_forward.1} parent=0 // pred_check
    _
  $region31: #{convnet_forward.1} parent=0 // pred_check_branch
    %29 = sbr.rel (0) target = $region33
  $region32: #{convnet_forward.1} parent=0 // pred_region
    _
  $region33: #{convnet_forward.1} parent=0 // pred_fallthru
    _
  // Predicated region
  $region34: #{convnet_forward.1} parent=0 // pred_check
    _
  $region35: #{convnet_forward.1} parent=0 // pred_check_branch
    %31 = sbr.rel (0) target = $region37
  $region36: #{convnet_forward.1} parent=0 // pred_region
    _
  $region37: #{convnet_forward.1} parent=0 // pred_fallthru
    _
  %v32 = vld [vmem:[%s0] sm:$0xff]
  %v33 = vld [vmem:[%s0 + $0x8] sm:$0xff]
  %v34 = vld [vmem:[%s0 + $0x10] sm:$0xff]
  %v35 = vld [vmem:[%s0 + $0x18] sm:$0xff]
  %v36 = vld [vmem:[%s0 + $0x20] sm:$0xff]
  %v37 = vld [vmem:[%s0 + $0x28] sm:$0xff]
  %v38 = vld [vmem:[%s0 + $0x30] sm:$0xff]
  %v39 = vld [vmem:[%s0 + $0x38] sm:$0xff]
  %v40 = vld [vmem:[%s0 + $0x40] sm:$0xff]
  %v41 = vld [vmem:[%s0 + $0x48] sm:$0xff]
  %v42 = vld [vmem:[%s0 + $0x50] sm:$0xff]
  %v43 = vld [vmem:[%s0 + $0x58] sm:$0xff]
  %v44 = vld [vmem:[%s0 + $0x60] sm:$0xff]
  %v45 = vld [vmem:[%s0 + $0x68] sm:$0xff]
  %v46 = vld [vmem:[%s0 + $0x70] sm:$0xff]
  %v47 = vld [vmem:[%s0 + $0x78] sm:$0xff]
  %v48 = vld [vmem:[%s1] sm:$0xff]
  %v49 = vld [vmem:[%s1 + $0x8] sm:$0xff]
  %v50 = vld [vmem:[%s1 + $0x10] sm:$0xff]
  %v51 = vld [vmem:[%s1 + $0x18] sm:$0xff]
  %v52 = vld [vmem:[%s1 + $0x20] sm:$0x1f]
  %v53 = vld [vmem:[%s2] sm:$0x1]
  %v55 = vlaneseq
  %v56 = vshrl.u32 %v55, 7
  %v57 = vsub.s32 0, %v56
  %v58 = vrot.slane %v53, %v57
  %vm60 = vcmask 302080
  %v62 = vsel %vm60, %v32, 0
  %v65 = vsel %vm60, %v33, 0
  %v68 = vsel %vm60, %v34, 0
  %v71 = vsel %vm60, %v35, 0
  %v74 = vsel %vm60, %v36, 0
  %v77 = vsel %vm60, %v37, 0
  %v80 = vsel %vm60, %v38, 0
  %v83 = vsel %vm60, %v39, 0
  %v86 = vsel %vm60, %v40, 0
  %v89 = vsel %vm60, %v41, 0
  %v92 = vsel %vm60, %v42, 0
  %v95 = vsel %vm60, %v43, 0
  %v98 = vsel %vm60, %v44, 0
  %v101 = vsel %vm60, %v45, 0
  %v104 = vsel %vm60, %v46, 0
  %v107 = vsel %vm60, %v47, 0
  %vm109 = vcmask 1044480
  %v111 = vsel %vm109, %v52, 0
  %113 = vmatprep.subr.mxu0 0.0
  %114 = vmatpush1.msra.mxu0 %v48
  %115 = vmatprep.subr.mxu0 0.0
  %116 = vmatpush1.msra.mxu0 %v49
  %117 = vmatprep.subr.mxu0 0.0
  %118 = vmatpush1.msra.mxu0 %v50
  %119 = vmatprep.subr.mxu0 0.0
  %120 = vmatpush1.msra.mxu0 %v51
  %121 = vmatprep.subr.mxu0 0.0
  %122 = vmatpush1.msra.mxu0 %v111
  %123 = vmatprep.subr.mxu0 0.0
  %124 = vmatpush1.msra.mxu0 0.0
  %125 = vmatprep.subr.mxu0 0.0
  %126 = vmatpush1.msra.mxu0 0.0
  %127 = vmatprep.subr.mxu0 0.0
  %128 = vmatpush1.msra.mxu0 0.0
  %129 = vmatprep.subr.mxu0 0.0
  %130 = vmatpush1.msra.mxu0 0.0
  %131 = vmatprep.subr.mxu0 0.0
  %132 = vmatpush1.msra.mxu0 0.0
  %133 = vmatprep.subr.mxu0 0.0
  %134 = vmatpush1.msra.mxu0 0.0
  %135 = vmatprep.subr.mxu0 0.0
  %136 = vmatpush1.msra.mxu0 0.0
  %137 = vmatprep.subr.mxu0 0.0
  %138 = vmatpush1.msra.mxu0 0.0
  %139 = vmatprep.subr.mxu0 0.0
  %140 = vmatpush1.msra.mxu0 0.0
  %141 = vmatprep.subr.mxu0 0.0
  %142 = vmatpush1.msra.mxu0 0.0
  %143 = vmatprep.subr.mxu0 0.0
  %144 = vmatpush1.msra.mxu0 0.0
  %145 = vmatprep.subr.mxu0 0.0
  %146 = vmatpush1.msra.mxu0 0.0
  %147 = vmatprep.subr.mxu0 0.0
  %148 = vmatpush1.msra.mxu0 0.0
  %149 = vmatprep.subr.mxu0 0.0
  %150 = vmatpush1.msra.mxu0 0.0
  %151 = vmatprep.subr.mxu0 0.0
  %152 = vmatpush1.msra.mxu0 0.0
  %153 = vmatprep.subr.mxu0 0.0
  %154 = vmatpush1.msra.mxu0 0.0
  %155 = vmatprep.subr.mxu0 0.0
  %156 = vmatpush1.msra.mxu0 0.0
  %157 = vmatprep.subr.mxu0 0.0
  %158 = vmatpush1.msra.mxu0 0.0
  %159 = vmatprep.subr.mxu0 0.0
  %160 = vmatpush1.msra.mxu0 0.0
  %161 = vmatprep.subr.mxu0 0.0
  %162 = vmatpush1.msra.mxu0 0.0
  %163 = vmatprep.subr.mxu0 0.0
  %164 = vmatpush1.msra.mxu0 0.0
  %165 = vmatprep.subr.mxu0 0.0
  %166 = vmatpush1.msra.mxu0 0.0
  %167 = vmatprep.subr.mxu0 0.0
  %168 = vmatpush1.msra.mxu0 0.0
  %169 = vmatprep.subr.mxu0 0.0
  %170 = vmatpush1.msra.mxu0 0.0
  %171 = vmatprep.subr.mxu0 0.0
  %172 = vmatpush1.msra.mxu0 0.0
  %173 = vmatprep.subr.mxu0 0.0
  %174 = vmatpush1.msra.mxu0 0.0
  %175 = vmatprep.subr.mxu0 0.0
  %176 = vmatpush1.msra.mxu0 0.0
  %177 = vmatprep.mubr.f32.mxu0 0.0
  %178 = vmatmul.mubr.f32.gmra.mrb[0].mxu0 %v62
  %v179 = vpop.f32.mrb[0].mxu0
  %v180 = vadd.f32 %v58, %v179
  %v181 = vpop.f32.mrb[0].mxu0
  %182 = vmatprep.mubr.f32.mxu0 0.0
  %183 = vmatmul.mubr.f32.gmra.mrb[0].mxu0 %v65
  %v184 = vpop.f32.mrb[0].mxu0
  %v185 = vadd.f32 %v58, %v184
  %v186 = vpop.f32.mrb[0].mxu0
  %187 = vmatprep.mubr.f32.mxu0 0.0
  %188 = vmatmul.mubr.f32.gmra.mrb[0].mxu0 %v68
  %v189 = vpop.f32.mrb[0].mxu0
  %v190 = vadd.f32 %v58, %v189
  %v191 = vpop.f32.mrb[0].mxu0
  %192 = vmatprep.mubr.f32.mxu0 0.0
  %193 = vmatmul.mubr.f32.gmra.mrb[0].mxu0 %v71
  %v194 = vpop.f32.mrb[0].mxu0
  %v195 = vadd.f32 %v58, %v194
  %v196 = vpop.f32.mrb[0].mxu0
  %197 = vmatprep.mubr.f32.mxu0 0.0
  %198 = vmatmul.mubr.f32.gmra.mrb[0].mxu0 %v74
  %v199 = vpop.f32.mrb[0].mxu0
  %v200 = vadd.f32 %v58, %v199
  %v201 = vpop.f32.mrb[0].mxu0
  %202 = vmatprep.mubr.f32.mxu0 0.0
  %203 = vmatmul.mubr.f32.gmra.mrb[0].mxu0 %v77
  %v204 = vpop.f32.mrb[0].mxu0
  %v205 = vadd.f32 %v58, %v204
  %v206 = vpop.f32.mrb[0].mxu0
  %207 = vmatprep.mubr.f32.mxu0 0.0
  %208 = vmatmul.mubr.f32.gmra.mrb[0].mxu0 %v80
  %v209 = vpop.f32.mrb[0].mxu0
  %v210 = vadd.f32 %v58, %v209
  %v211 = vpop.f32.mrb[0].mxu0
  %212 = vmatprep.mubr.f32.mxu0 0.0
  %213 = vmatmul.mubr.f32.gmra.mrb[0].mxu0 %v83
  %v214 = vpop.f32.mrb[0].mxu0
  %v215 = vadd.f32 %v58, %v214
  %v216 = vpop.f32.mrb[0].mxu0
  %217 = vmatprep.mubr.f32.mxu0 0.0
  %218 = vmatmul.mubr.f32.gmra.mrb[0].mxu0 %v86
  %v219 = vpop.f32.mrb[0].mxu0
  %v220 = vadd.f32 %v58, %v219
  %v221 = vpop.f32.mrb[0].mxu0
  %222 = vmatprep.mubr.f32.mxu0 0.0
  %223 = vmatmul.mubr.f32.gmra.mrb[0].mxu0 %v89
  %v224 = vpop.f32.mrb[0].mxu0
  %v225 = vadd.f32 %v58, %v224
  %v226 = vpop.f32.mrb[0].mxu0
  %227 = vmatprep.mubr.f32.mxu0 0.0
  %228 = vmatmul.mubr.f32.gmra.mrb[0].mxu0 %v92
  %v229 = vpop.f32.mrb[0].mxu0
  %v230 = vadd.f32 %v58, %v229
  %v231 = vpop.f32.mrb[0].mxu0
  %232 = vmatprep.mubr.f32.mxu0 0.0
  %233 = vmatmul.mubr.f32.gmra.mrb[0].mxu0 %v95
  %v234 = vpop.f32.mrb[0].mxu0
  %v235 = vadd.f32 %v58, %v234
  %v236 = vpop.f32.mrb[0].mxu0
  %237 = vmatprep.mubr.f32.mxu0 0.0
  %238 = vmatmul.mubr.f32.gmra.mrb[0].mxu0 %v98
  %v239 = vpop.f32.mrb[0].mxu0
  %v240 = vadd.f32 %v58, %v239
  %v241 = vpop.f32.mrb[0].mxu0
  %242 = vmatprep.mubr.f32.mxu0 0.0
  %243 = vmatmul.mubr.f32.gmra.mrb[0].mxu0 %v101
  %v244 = vpop.f32.mrb[0].mxu0
  %v245 = vadd.f32 %v58, %v244
  %v246 = vpop.f32.mrb[0].mxu0
  %247 = vmatprep.mubr.f32.mxu0 0.0
  %248 = vmatmul.mubr.f32.gmra.mrb[0].mxu0 %v104
  %v249 = vpop.f32.mrb[0].mxu0
  %v250 = vadd.f32 %v58, %v249
  %v251 = vpop.f32.mrb[0].mxu0
  %252 = vmatprep.mubr.f32.mxu0 0.0
  %253 = vmatmul.mubr.f32.gmra.mrb[0].mxu0 %v107
  %v254 = vpop.f32.mrb[0].mxu0
  %v255 = vadd.f32 %v58, %v254
  %v256 = vpop.f32.mrb[0].mxu0
  %257 = vdwg.mxu0
  %v258 = vmax.f32 %v180, 0.0
  %v259 = vmax.f32 %v185, 0.0
  %v260 = vmax.f32 %v190, 0.0
  %v261 = vmax.f32 %v195, 0.0
  %v262 = vmax.f32 %v200, 0.0
  %v263 = vmax.f32 %v205, 0.0
  %v264 = vmax.f32 %v210, 0.0
  %v265 = vmax.f32 %v215, 0.0
  %v266 = vmax.f32 %v220, 0.0
  %v267 = vmax.f32 %v225, 0.0
  %v268 = vmax.f32 %v230, 0.0
  %v269 = vmax.f32 %v235, 0.0
  %v270 = vmax.f32 %v240, 0.0
  %v271 = vmax.f32 %v245, 0.0
  %v272 = vmax.f32 %v250, 0.0
  %v273 = vmax.f32 %v255, 0.0
  %v274 = vld [vmem:[%s0 + $0x200] sm:$0xff]
  %v275 = vld [vmem:[%s0 + $0x208] sm:$0xff]
  %v276 = vld [vmem:[%s0 + $0x210] sm:$0xff]
  %v277 = vld [vmem:[%s0 + $0x218] sm:$0xff]
  %v278 = vld [vmem:[%s0 + $0x220] sm:$0xff]
  %v279 = vld [vmem:[%s0 + $0x228] sm:$0xff]
  %v280 = vld [vmem:[%s0 + $0x230] sm:$0xff]
  %v281 = vld [vmem:[%s0 + $0x238] sm:$0xff]
  %v282 = vld [vmem:[%s0 + $0x240] sm:$0xff]
  %v283 = vld [vmem:[%s0 + $0x248] sm:$0xff]
  %v284 = vld [vmem:[%s0 + $0x250] sm:$0xff]
  %v285 = vld [vmem:[%s0 + $0x258] sm:$0xff]
  %v286 = vld [vmem:[%s0 + $0x260] sm:$0xff]
  %v287 = vld [vmem:[%s0 + $0x268] sm:$0xff]
  %v288 = vld [vmem:[%s0 + $0x270] sm:$0xff]
  %v289 = vld [vmem:[%s0 + $0x278] sm:$0xff]
  %v291 = vsel %vm60, %v274, 0
  %v294 = vsel %vm60, %v275, 0
  %v297 = vsel %vm60, %v276, 0
  %v300 = vsel %vm60, %v277, 0
  %v303 = vsel %vm60, %v278, 0
  %v306 = vsel %vm60, %v279, 0
  %v309 = vsel %vm60, %v280, 0
  %v312 = vsel %vm60, %v281, 0
  %v315 = vsel %vm60, %v282, 0
  %v318 = vsel %vm60, %v283, 0
  %v321 = vsel %vm60, %v284, 0
  %v324 = vsel %vm60, %v285, 0
  %v327 = vsel %vm60, %v286, 0
  %v330 = vsel %vm60, %v287, 0
  %v333 = vsel %vm60, %v288, 0
  %v336 = vsel %vm60, %v289, 0
  %338 = vmatprep.subr.mxu0 0.0
  %339 = vmatpush1.msra.mxu0 %v48
  %340 = vmatprep.subr.mxu0 0.0
  %341 = vmatpush1.msra.mxu0 %v49
  %342 = vmatprep.subr.mxu0 0.0
  %343 = vmatpush1.msra.mxu0 %v50
  %344 = vmatprep.subr.mxu0 0.0
  %345 = vmatpush1.msra.mxu0 %v51
  %346 = vmatprep.subr.mxu0 0.0
  %347 = vmatpush1.msra.mxu0 %v111
  %348 = vmatprep.subr.mxu0 0.0
  %349 = vmatpush1.msra.mxu0 0.0
  %350 = vmatprep.subr.mxu0 0.0
  %351 = vmatpush1.msra.mxu0 0.0
  %352 = vmatprep.subr.mxu0 0.0
  %353 = vmatpush1.msra.mxu0 0.0
  %354 = vmatprep.subr.mxu0 0.0
  %355 = vmatpush1.msra.mxu0 0.0
  %356 = vmatprep.subr.mxu0 0.0
  %357 = vmatpush1.msra.mxu0 0.0
  %358 = vmatprep.subr.mxu0 0.0
  %359 = vmatpush1.msra.mxu0 0.0
  %360 = vmatprep.subr.mxu0 0.0
  %361 = vmatpush1.msra.mxu0 0.0
  %362 = vmatprep.subr.mxu0 0.0
  %363 = vmatpush1.msra.mxu0 0.0
  %364 = vmatprep.subr.mxu0 0.0
  %365 = vmatpush1.msra.mxu0 0.0
  %366 = vmatprep.subr.mxu0 0.0
  %367 = vmatpush1.msra.mxu0 0.0
  %368 = vmatprep.subr.mxu0 0.0
  %369 = vmatpush1.msra.mxu0 0.0
  %370 = vmatprep.subr.mxu0 0.0
  %371 = vmatpush1.msra.mxu0 0.0
  %372 = vmatprep.subr.mxu0 0.0
  %373 = vmatpush1.msra.mxu0 0.0
  %374 = vmatprep.subr.mxu0 0.0
  %375 = vmatpush1.msra.mxu0 0.0
  %376 = vmatprep.subr.mxu0 0.0
  %377 = vmatpush1.msra.mxu0 0.0
  %378 = vmatprep.subr.mxu0 0.0
  %379 = vmatpush1.msra.mxu0 0.0
  %380 = vmatprep.subr.mxu0 0.0
  %381 = vmatpush1.msra.mxu0 0.0
  %382 = vmatprep.subr.mxu0 0.0
  %383 = vmatpush1.msra.mxu0 0.0
  %384 = vmatprep.subr.mxu0 0.0
  %385 = vmatpush1.msra.mxu0 0.0
  %386 = vmatprep.subr.mxu0 0.0
  %387 = vmatpush1.msra.mxu0 0.0
  %388 = vmatprep.subr.mxu0 0.0
  %389 = vmatpush1.msra.mxu0 0.0
  %390 = vmatprep.subr.mxu0 0.0
  %391 = vmatpush1.msra.mxu0 0.0
  %392 = vmatprep.subr.mxu0 0.0
  %393 = vmatpush1.msra.mxu0 0.0
  %394 = vmatprep.subr.mxu0 0.0
  %395 = vmatpush1.msra.mxu0 0.0
  %396 = vmatprep.subr.mxu0 0.0
  %397 = vmatpush1.msra.mxu0 0.0
  %398 = vmatprep.subr.mxu0 0.0
  %399 = vmatpush1.msra.mxu0 0.0
  %400 = vmatprep.subr.mxu0 0.0
  %401 = vmatpush1.msra.mxu0 0.0
  %402 = vmatprep.mubr.f32.mxu0 0.0
  %403 = vmatmul.mubr.f32.gmra.mrb[0].mxu0 %v291
  %v404 = vpop.f32.mrb[0].mxu0
  %v405 = vadd.f32 %v58, %v404
  %v406 = vpop.f32.mrb[0].mxu0
  %407 = vmatprep.mubr.f32.mxu0 0.0
  %408 = vmatmul.mubr.f32.gmra.mrb[0].mxu0 %v294
  %v409 = vpop.f32.mrb[0].mxu0
  %v410 = vadd.f32 %v58, %v409
  %v411 = vpop.f32.mrb[0].mxu0
  %412 = vmatprep.mubr.f32.mxu0 0.0
  %413 = vmatmul.mubr.f32.gmra.mrb[0].mxu0 %v297
  %v414 = vpop.f32.mrb[0].mxu0
  %v415 = vadd.f32 %v58, %v414
  %v416 = vpop.f32.mrb[0].mxu0
  %417 = vmatprep.mubr.f32.mxu0 0.0
  %418 = vmatmul.mubr.f32.gmra.mrb[0].mxu0 %v300
  %v419 = vpop.f32.mrb[0].mxu0
  %v420 = vadd.f32 %v58, %v419
  %v421 = vpop.f32.mrb[0].mxu0
  %422 = vmatprep.mubr.f32.mxu0 0.0
  %423 = vmatmul.mubr.f32.gmra.mrb[0].mxu0 %v303
  %v424 = vpop.f32.mrb[0].mxu0
  %v425 = vadd.f32 %v58, %v424
  %v426 = vpop.f32.mrb[0].mxu0
  %427 = vmatprep.mubr.f32.mxu0 0.0
  %428 = vmatmul.mubr.f32.gmra.mrb[0].mxu0 %v306
  %v429 = vpop.f32.mrb[0].mxu0
  %v430 = vadd.f32 %v58, %v429
  %v431 = vpop.f32.mrb[0].mxu0
  %432 = vmatprep.mubr.f32.mxu0 0.0
  %433 = vmatmul.mubr.f32.gmra.mrb[0].mxu0 %v309
  %v434 = vpop.f32.mrb[0].mxu0
  %v435 = vadd.f32 %v58, %v434
  %v436 = vpop.f32.mrb[0].mxu0
  %437 = vmatprep.mubr.f32.mxu0 0.0
  %438 = vmatmul.mubr.f32.gmra.mrb[0].mxu0 %v312
  %v439 = vpop.f32.mrb[0].mxu0
  %v440 = vadd.f32 %v58, %v439
  %v441 = vpop.f32.mrb[0].mxu0
  %442 = vmatprep.mubr.f32.mxu0 0.0
  %443 = vmatmul.mubr.f32.gmra.mrb[0].mxu0 %v315
  %v444 = vpop.f32.mrb[0].mxu0
  %v445 = vadd.f32 %v58, %v444
  %v446 = vpop.f32.mrb[0].mxu0
  %447 = vmatprep.mubr.f32.mxu0 0.0
  %448 = vmatmul.mubr.f32.gmra.mrb[0].mxu0 %v318
  %v449 = vpop.f32.mrb[0].mxu0
  %v450 = vadd.f32 %v58, %v449
  %v451 = vpop.f32.mrb[0].mxu0
  %452 = vmatprep.mubr.f32.mxu0 0.0
  %453 = vmatmul.mubr.f32.gmra.mrb[0].mxu0 %v321
  %v454 = vpop.f32.mrb[0].mxu0
  %v455 = vadd.f32 %v58, %v454
  %v456 = vpop.f32.mrb[0].mxu0
  %457 = vmatprep.mubr.f32.mxu0 0.0
  %458 = vmatmul.mubr.f32.gmra.mrb[0].mxu0 %v324
  %v459 = vpop.f32.mrb[0].mxu0
  %v460 = vadd.f32 %v58, %v459
  %v461 = vpop.f32.mrb[0].mxu0
  %462 = vmatprep.mubr.f32.mxu0 0.0
  %463 = vmatmul.mubr.f32.gmra.mrb[0].mxu0 %v327
  %v464 = vpop.f32.mrb[0].mxu0
  %v465 = vadd.f32 %v58, %v464
  %v466 = vpop.f32.mrb[0].mxu0
  %467 = vmatprep.mubr.f32.mxu0 0.0
  %468 = vmatmul.mubr.f32.gmra.mrb[0].mxu0 %v330
  %v469 = vpop.f32.mrb[0].mxu0
  %v470 = vadd.f32 %v58, %v469
  %v471 = vpop.f32.mrb[0].mxu0
  %472 = vmatprep.mubr.f32.mxu0 0.0
  %473 = vmatmul.mubr.f32.gmra.mrb[0].mxu0 %v333
  %v474 = vpop.f32.mrb[0].mxu0
  %v475 = vadd.f32 %v58, %v474
  %v476 = vpop.f32.mrb[0].mxu0
  %477 = vmatprep.mubr.f32.mxu0 0.0
  %478 = vmatmul.mubr.f32.gmra.mrb[0].mxu0 %v336
  %v479 = vpop.f32.mrb[0].mxu0
  %v480 = vadd.f32 %v58, %v479
  %v481 = vpop.f32.mrb[0].mxu0
  %482 = vdwg.mxu0
  %v483 = vmax.f32 %v405, 0.0
  %v484 = vmax.f32 %v410, 0.0
  %v485 = vmax.f32 %v415, 0.0
  %v486 = vmax.f32 %v420, 0.0
  %v487 = vmax.f32 %v425, 0.0
  %v488 = vmax.f32 %v430, 0.0
  %v489 = vmax.f32 %v435, 0.0
  %v490 = vmax.f32 %v440, 0.0
  %v491 = vmax.f32 %v445, 0.0
  %v492 = vmax.f32 %v450, 0.0
  %v493 = vmax.f32 %v455, 0.0
  %v494 = vmax.f32 %v460, 0.0
  %v495 = vmax.f32 %v465, 0.0
  %v496 = vmax.f32 %v470, 0.0
  %v497 = vmax.f32 %v475, 0.0
  %v498 = vmax.f32 %v480, 0.0
  %v499 = vmax.f32 %v258, %v483
  %v500 = vmax.f32 %v259, %v484
  %v501 = vmax.f32 %v260, %v485
  %v502 = vmax.f32 %v261, %v486
  %v503 = vmax.f32 %v262, %v487
  %v504 = vmax.f32 %v263, %v488
  %v505 = vmax.f32 %v264, %v489
  %v506 = vmax.f32 %v265, %v490
  %v507 = vmax.f32 %v266, %v491
  %v508 = vmax.f32 %v267, %v492
  %v509 = vmax.f32 %v268, %v493
  %v510 = vmax.f32 %v269, %v494
  %v511 = vmax.f32 %v270, %v495
  %v512 = vmax.f32 %v271, %v496
  %v513 = vmax.f32 %v272, %v497
  %v514 = vmax.f32 %v273, %v498
  %v515 = vld [vmem:[%s0 + $0x400] sm:$0xff]
  %v516 = vld [vmem:[%s0 + $0x408] sm:$0xff]
  %v517 = vld [vmem:[%s0 + $0x410] sm:$0xff]
  %v518 = vld [vmem:[%s0 + $0x418] sm:$0xff]
  %v519 = vld [vmem:[%s0 + $0x420] sm:$0xff]
  %v520 = vld [vmem:[%s0 + $0x428] sm:$0xff]
  %v521 = vld [vmem:[%s0 + $0x430] sm:$0xff]
  %v522 = vld [vmem:[%s0 + $0x438] sm:$0xff]
  %v523 = vld [vmem:[%s0 + $0x440] sm:$0xff]
  %v524 = vld [vmem:[%s0 + $0x448] sm:$0xff]
  %v525 = vld [vmem:[%s0 + $0x450] sm:$0xff]
  %v526 = vld [vmem:[%s0 + $0x458] sm:$0xff]
  %v527 = vld [vmem:[%s0 + $0x460] sm:$0xff]
  %v528 = vld [vmem:[%s0 + $0x468] sm:$0xff]
  %v529 = vld [vmem:[%s0 + $0x470] sm:$0xff]
  %v530 = vld [vmem:[%s0 + $0x478] sm:$0xff]
  %v532 = vsel %vm60, %v515, 0
  %v535 = vsel %vm60, %v516, 0
  %v538 = vsel %vm60, %v517, 0
  %v541 = vsel %vm60, %v518, 0
  %v544 = vsel %vm60, %v519, 0
  %v547 = vsel %vm60, %v520, 0
  %v550 = vsel %vm60, %v521, 0
  %v553 = vsel %vm60, %v522, 0
  %v556 = vsel %vm60, %v523, 0
  %v559 = vsel %vm60, %v524, 0
  %v562 = vsel %vm60, %v525, 0
  %v565 = vsel %vm60, %v526, 0
  %v568 = vsel %vm60, %v527, 0
  %v571 = vsel %vm60, %v528, 0
  %v574 = vsel %vm60, %v529, 0
  %v577 = vsel %vm60, %v530, 0
  %579 = vmatprep.subr.mxu0 0.0
  %580 = vmatpush1.msra.mxu0 %v48
  %581 = vmatprep.subr.mxu0 0.0
  %582 = vmatpush1.msra.mxu0 %v49
  %583 = vmatprep.subr.mxu0 0.0
  %584 = vmatpush1.msra.mxu0 %v50
  %585 = vmatprep.subr.mxu0 0.0
  %586 = vmatpush1.msra.mxu0 %v51
  %587 = vmatprep.subr.mxu0 0.0
  %588 = vmatpush1.msra.mxu0 %v111
  %589 = vmatprep.subr.mxu0 0.0
  %590 = vmatpush1.msra.mxu0 0.0
  %591 = vmatprep.subr.mxu0 0.0
  %592 = vmatpush1.msra.mxu0 0.0
  %593 = vmatprep.subr.mxu0 0.0
  %594 = vmatpush1.msra.mxu0 0.0
  %595 = vmatprep.subr.mxu0 0.0
  %596 = vmatpush1.msra.mxu0 0.0
  %597 = vmatprep.subr.mxu0 0.0
  %598 = vmatpush1.msra.mxu0 0.0
  %599 = vmatprep.subr.mxu0 0.0
  %600 = vmatpush1.msra.mxu0 0.0
  %601 = vmatprep.subr.mxu0 0.0
  %602 = vmatpush1.msra.mxu0 0.0
  %603 = vmatprep.subr.mxu0 0.0
  %604 = vmatpush1.msra.mxu0 0.0
  %605 = vmatprep.subr.mxu0 0.0
  %606 = vmatpush1.msra.mxu0 0.0
  %607 = vmatprep.subr.mxu0 0.0
  %608 = vmatpush1.msra.mxu0 0.0
  %609 = vmatprep.subr.mxu0 0.0
  %610 = vmatpush1.msra.mxu0 0.0
  %611 = vmatprep.subr.mxu0 0.0
  %612 = vmatpush1.msra.mxu0 0.0
  %613 = vmatprep.subr.mxu0 0.0
  %614 = vmatpush1.msra.mxu0 0.0
  %615 = vmatprep.subr.mxu0 0.0
  %616 = vmatpush1.msra.mxu0 0.0
  %617 = vmatprep.subr.mxu0 0.0
  %618 = vmatpush1.msra.mxu0 0.0
  %619 = vmatprep.subr.mxu0 0.0
  %620 = vmatpush1.msra.mxu0 0.0
  %621 = vmatprep.subr.mxu0 0.0
  %622 = vmatpush1.msra.mxu0 0.0
  %623 = vmatprep.subr.mxu0 0.0
  %624 = vmatpush1.msra.mxu0 0.0
  %625 = vmatprep.subr.mxu0 0.0
  %626 = vmatpush1.msra.mxu0 0.0
  %627 = vmatprep.subr.mxu0 0.0
  %628 = vmatpush1.msra.mxu0 0.0
  %629 = vmatprep.subr.mxu0 0.0
  %630 = vmatpush1.msra.mxu0 0.0
  %631 = vmatprep.subr.mxu0 0.0
  %632 = vmatpush1.msra.mxu0 0.0
  %633 = vmatprep.subr.mxu0 0.0
  %634 = vmatpush1.msra.mxu0 0.0
  %635 = vmatprep.subr.mxu0 0.0
  %636 = vmatpush1.msra.mxu0 0.0
  %637 = vmatprep.subr.mxu0 0.0
  %638 = vmatpush1.msra.mxu0 0.0
  %639 = vmatprep.subr.mxu0 0.0
  %640 = vmatpush1.msra.mxu0 0.0
  %641 = vmatprep.subr.mxu0 0.0
  %642 = vmatpush1.msra.mxu0 0.0
  %643 = vmatprep.mubr.f32.mxu0 0.0
  %644 = vmatmul.mubr.f32.gmra.mrb[0].mxu0 %v532
  %v645 = vpop.f32.mrb[0].mxu0
  %v646 = vadd.f32 %v58, %v645
  %v647 = vpop.f32.mrb[0].mxu0
  %648 = vmatprep.mubr.f32.mxu0 0.0
  %649 = vmatmul.mubr.f32.gmra.mrb[0].mxu0 %v535
  %v650 = vpop.f32.mrb[0].mxu0
  %v651 = vadd.f32 %v58, %v650
  %v652 = vpop.f32.mrb[0].mxu0
  %653 = vmatprep.mubr.f32.mxu0 0.0
  %654 = vmatmul.mubr.f32.gmra.mrb[0].mxu0 %v538
  %v655 = vpop.f32.mrb[0].mxu0
  %v656 = vadd.f32 %v58, %v655
  %v657 = vpop.f32.mrb[0].mxu0
  %658 = vmatprep.mubr.f32.mxu0 0.0
  %659 = vmatmul.mubr.f32.gmra.mrb[0].mxu0 %v541
  %v660 = vpop.f32.mrb[0].mxu0
  %v661 = vadd.f32 %v58, %v660
  %v662 = vpop.f32.mrb[0].mxu0
  %663 = vmatprep.mubr.f32.mxu0 0.0
  %664 = vmatmul.mubr.f32.gmra.mrb[0].mxu0 %v544
  %v665 = vpop.f32.mrb[0].mxu0
  %v666 = vadd.f32 %v58, %v665
  %v667 = vpop.f32.mrb[0].mxu0
  %668 = vmatprep.mubr.f32.mxu0 0.0
  %669 = vmatmul.mubr.f32.gmra.mrb[0].mxu0 %v547
  %v670 = vpop.f32.mrb[0].mxu0
  %v671 = vadd.f32 %v58, %v670
  %v672 = vpop.f32.mrb[0].mxu0
  %673 = vmatprep.mubr.f32.mxu0 0.0
  %674 = vmatmul.mubr.f32.gmra.mrb[0].mxu0 %v550
  %v675 = vpop.f32.mrb[0].mxu0
  %v676 = vadd.f32 %v58, %v675
  %v677 = vpop.f32.mrb[0].mxu0
  %678 = vmatprep.mubr.f32.mxu0 0.0
  %679 = vmatmul.mubr.f32.gmra.mrb[0].mxu0 %v553
  %v680 = vpop.f32.mrb[0].mxu0
  %v681 = vadd.f32 %v58, %v680
  %v682 = vpop.f32.mrb[0].mxu0
  %683 = vmatprep.mubr.f32.mxu0 0.0
  %684 = vmatmul.mubr.f32.gmra.mrb[0].mxu0 %v556
  %v685 = vpop.f32.mrb[0].mxu0
  %v686 = vadd.f32 %v58, %v685
  %v687 = vpop.f32.mrb[0].mxu0
  %688 = vmatprep.mubr.f32.mxu0 0.0
  %689 = vmatmul.mubr.f32.gmra.mrb[0].mxu0 %v559
  %v690 = vpop.f32.mrb[0].mxu0
  %v691 = vadd.f32 %v58, %v690
  %v692 = vpop.f32.mrb[0].mxu0
  %693 = vmatprep.mubr.f32.mxu0 0.0
  %694 = vmatmul.mubr.f32.gmra.mrb[0].mxu0 %v562
  %v695 = vpop.f32.mrb[0].mxu0
  %v696 = vadd.f32 %v58, %v695
  %v697 = vpop.f32.mrb[0].mxu0
  %698 = vmatprep.mubr.f32.mxu0 0.0
  %699 = vmatmul.mubr.f32.gmra.mrb[0].mxu0 %v565
  %v700 = vpop.f32.mrb[0].mxu0
  %v701 = vadd.f32 %v58, %v700
  %v702 = vpop.f32.mrb[0].mxu0
  %703 = vmatprep.mubr.f32.mxu0 0.0
  %704 = vmatmul.mubr.f32.gmra.mrb[0].mxu0 %v568
  %v705 = vpop.f32.mrb[0].mxu0
  %v706 = vadd.f32 %v58, %v705
  %v707 = vpop.f32.mrb[0].mxu0
  %708 = vmatprep.mubr.f32.mxu0 0.0
  %709 = vmatmul.mubr.f32.gmra.mrb[0].mxu0 %v571
  %v710 = vpop.f32.mrb[0].mxu0
  %v711 = vadd.f32 %v58, %v710
  %v712 = vpop.f32.mrb[0].mxu0
  %713 = vmatprep.mubr.f32.mxu0 0.0
  %714 = vmatmul.mubr.f32.gmra.mrb[0].mxu0 %v574
  %v715 = vpop.f32.mrb[0].mxu0
  %v716 = vadd.f32 %v58, %v715
  %v717 = vpop.f32.mrb[0].mxu0
  %718 = vmatprep.mubr.f32.mxu0 0.0
  %719 = vmatmul.mubr.f32.gmra.mrb[0].mxu0 %v577
  %v720 = vpop.f32.mrb[0].mxu0
  %v721 = vadd.f32 %v58, %v720
  %v722 = vpop.f32.mrb[0].mxu0
  %723 = vdwg.mxu0
  %v724 = vmax.f32 %v646, 0.0
  %v725 = vmax.f32 %v651, 0.0
  %v726 = vmax.f32 %v656, 0.0
  %v727 = vmax.f32 %v661, 0.0
  %v728 = vmax.f32 %v666, 0.0
  %v729 = vmax.f32 %v671, 0.0
  %v730 = vmax.f32 %v676, 0.0
  %v731 = vmax.f32 %v681, 0.0
  %v732 = vmax.f32 %v686, 0.0
  %v733 = vmax.f32 %v691, 0.0
  %v734 = vmax.f32 %v696, 0.0
  %v735 = vmax.f32 %v701, 0.0
  %v736 = vmax.f32 %v706, 0.0
  %v737 = vmax.f32 %v711, 0.0
  %v738 = vmax.f32 %v716, 0.0
  %v739 = vmax.f32 %v721, 0.0
  %v740 = vmax.f32 %v499, %v724
  %v741 = vmax.f32 %v500, %v725
  %v742 = vmax.f32 %v501, %v726
  %v743 = vmax.f32 %v502, %v727
  %v744 = vmax.f32 %v503, %v728
  %v745 = vmax.f32 %v504, %v729
  %v746 = vmax.f32 %v505, %v730
  %v747 = vmax.f32 %v506, %v731
  %v748 = vmax.f32 %v507, %v732
  %v749 = vmax.f32 %v508, %v733
  %v750 = vmax.f32 %v509, %v734
  %v751 = vmax.f32 %v510, %v735
  %v752 = vmax.f32 %v511, %v736
  %v753 = vmax.f32 %v512, %v737
  %v754 = vmax.f32 %v513, %v738
  %v755 = vmax.f32 %v514, %v739
  %v756 = vld [vmem:[%s0 + $0x600] sm:$0xff]
  %v757 = vld [vmem:[%s0 + $0x608] sm:$0xff]
  %v758 = vld [vmem:[%s0 + $0x610] sm:$0xff]
  %v759 = vld [vmem:[%s0 + $0x618] sm:$0xff]
  %v760 = vld [vmem:[%s0 + $0x620] sm:$0xff]
  %v761 = vld [vmem:[%s0 + $0x628] sm:$0xff]
  %v762 = vld [vmem:[%s0 + $0x630] sm:$0xff]
  %v763 = vld [vmem:[%s0 + $0x638] sm:$0xff]
  %v764 = vld [vmem:[%s0 + $0x640] sm:$0xff]
  %v765 = vld [vmem:[%s0 + $0x648] sm:$0xff]
  %v766 = vld [vmem:[%s0 + $0x650] sm:$0xff]
  %v767 = vld [vmem:[%s0 + $0x658] sm:$0xff]
  %v768 = vld [vmem:[%s0 + $0x660] sm:$0xff]
  %v769 = vld [vmem:[%s0 + $0x668] sm:$0xff]
  %v770 = vld [vmem:[%s0 + $0x670] sm:$0xff]
  %v771 = vld [vmem:[%s0 + $0x678] sm:$0xff]
  %v773 = vsel %vm60, %v756, 0
  %v776 = vsel %vm60, %v757, 0
  %v779 = vsel %vm60, %v758, 0
  %v782 = vsel %vm60, %v759, 0
  %v785 = vsel %vm60, %v760, 0
  %v788 = vsel %vm60, %v761, 0
  %v791 = vsel %vm60, %v762, 0
  %v794 = vsel %vm60, %v763, 0
  %v797 = vsel %vm60, %v764, 0
  %v800 = vsel %vm60, %v765, 0
  %v803 = vsel %vm60, %v766, 0
  %v806 = vsel %vm60, %v767, 0
  %v809 = vsel %vm60, %v768, 0
  %v812 = vsel %vm60, %v769, 0
  %v815 = vsel %vm60, %v770, 0
  %v818 = vsel %vm60, %v771, 0
  %820 = vmatprep.subr.mxu0 0.0
  %821 = vmatpush1.msra.mxu0 %v48
  %822 = vmatprep.subr.mxu0 0.0
  %823 = vmatpush1.msra.mxu0 %v49
  %824 = vmatprep.subr.mxu0 0.0
  %825 = vmatpush1.msra.mxu0 %v50
  %826 = vmatprep.subr.mxu0 0.0
  %827 = vmatpush1.msra.mxu0 %v51
  %828 = vmatprep.subr.mxu0 0.0
  %829 = vmatpush1.msra.mxu0 %v111
  %830 = vmatprep.subr.mxu0 0.0
  %831 = vmatpush1.msra.mxu0 0.0
  %832 = vmatprep.subr.mxu0 0.0
  %833 = vmatpush1.msra.mxu0 0.0
  %834 = vmatprep.subr.mxu0 0.0
  %835 = vmatpush1.msra.mxu0 0.0
  %836 = vmatprep.subr.mxu0 0.0
  %837 = vmatpush1.msra.mxu0 0.0
  %838 = vmatprep.subr.mxu0 0.0
  %839 = vmatpush1.msra.mxu0 0.0
  %840 = vmatprep.subr.mxu0 0.0
  %841 = vmatpush1.msra.mxu0 0.0
  %842 = vmatprep.subr.mxu0 0.0
  %843 = vmatpush1.msra.mxu0 0.0
  %844 = vmatprep.subr.mxu0 0.0
  %845 = vmatpush1.msra.mxu0 0.0
  %846 = vmatprep.subr.mxu0 0.0
  %847 = vmatpush1.msra.mxu0 0.0
  %848 = vmatprep.subr.mxu0 0.0
  %849 = vmatpush1.msra.mxu0 0.0
  %850 = vmatprep.subr.mxu0 0.0
  %851 = vmatpush1.msra.mxu0 0.0
  %852 = vmatprep.subr.mxu0 0.0
  %853 = vmatpush1.msra.mxu0 0.0
  %854 = vmatprep.subr.mxu0 0.0
  %855 = vmatpush1.msra.mxu0 0.0
  %856 = vmatprep.subr.mxu0 0.0
  %857 = vmatpush1.msra.mxu0 0.0
  %858 = vmatprep.subr.mxu0 0.0
  %859 = vmatpush1.msra.mxu0 0.0
  %860 = vmatprep.subr.mxu0 0.0
  %861 = vmatpush1.msra.mxu0 0.0
  %862 = vmatprep.subr.mxu0 0.0
  %863 = vmatpush1.msra.mxu0 0.0
  %864 = vmatprep.subr.mxu0 0.0
  %865 = vmatpush1.msra.mxu0 0.0
  %866 = vmatprep.subr.mxu0 0.0
  %867 = vmatpush1.msra.mxu0 0.0
  %868 = vmatprep.subr.mxu0 0.0
  %869 = vmatpush1.msra.mxu0 0.0
  %870 = vmatprep.subr.mxu0 0.0
  %871 = vmatpush1.msra.mxu0 0.0
  %872 = vmatprep.subr.mxu0 0.0
  %873 = vmatpush1.msra.mxu0 0.0
  %874 = vmatprep.subr.mxu0 0.0
  %875 = vmatpush1.msra.mxu0 0.0
  %876 = vmatprep.subr.mxu0 0.0
  %877 = vmatpush1.msra.mxu0 0.0
  %878 = vmatprep.subr.mxu0 0.0
  %879 = vmatpush1.msra.mxu0 0.0
  %880 = vmatprep.subr.mxu0 0.0
  %881 = vmatpush1.msra.mxu0 0.0
  %882 = vmatprep.subr.mxu0 0.0
  %883 = vmatpush1.msra.mxu0 0.0
  %884 = vmatprep.mubr.f32.mxu0 0.0
  %885 = vmatmul.mubr.f32.gmra.mrb[0].mxu0 %v773
  %v886 = vpop.f32.mrb[0].mxu0
  %v887 = vadd.f32 %v58, %v886
  %v888 = vpop.f32.mrb[0].mxu0
  %889 = vmatprep.mubr.f32.mxu0 0.0
  %890 = vmatmul.mubr.f32.gmra.mrb[0].mxu0 %v776
  %v891 = vpop.f32.mrb[0].mxu0
  %v892 = vadd.f32 %v58, %v891
  %v893 = vpop.f32.mrb[0].mxu0
  %894 = vmatprep.mubr.f32.mxu0 0.0
  %895 = vmatmul.mubr.f32.gmra.mrb[0].mxu0 %v779
  %v896 = vpop.f32.mrb[0].mxu0
  %v897 = vadd.f32 %v58, %v896
  %v898 = vpop.f32.mrb[0].mxu0
  %899 = vmatprep.mubr.f32.mxu0 0.0
  %900 = vmatmul.mubr.f32.gmra.mrb[0].mxu0 %v782
  %v901 = vpop.f32.mrb[0].mxu0
  %v902 = vadd.f32 %v58, %v901
  %v903 = vpop.f32.mrb[0].mxu0
  %904 = vmatprep.mubr.f32.mxu0 0.0
  %905 = vmatmul.mubr.f32.gmra.mrb[0].mxu0 %v785
  %v906 = vpop.f32.mrb[0].mxu0
  %v907 = vadd.f32 %v58, %v906
  %v908 = vpop.f32.mrb[0].mxu0
  %909 = vmatprep.mubr.f32.mxu0 0.0
  %910 = vmatmul.mubr.f32.gmra.mrb[0].mxu0 %v788
  %v911 = vpop.f32.mrb[0].mxu0
  %v912 = vadd.f32 %v58, %v911
  %v913 = vpop.f32.mrb[0].mxu0
  %914 = vmatprep.mubr.f32.mxu0 0.0
  %915 = vmatmul.mubr.f32.gmra.mrb[0].mxu0 %v791
  %v916 = vpop.f32.mrb[0].mxu0
  %v917 = vadd.f32 %v58, %v916
  %v918 = vpop.f32.mrb[0].mxu0
  %919 = vmatprep.mubr.f32.mxu0 0.0
  %920 = vmatmul.mubr.f32.gmra.mrb[0].mxu0 %v794
  %v921 = vpop.f32.mrb[0].mxu0
  %v922 = vadd.f32 %v58, %v921
  %v923 = vpop.f32.mrb[0].mxu0
  %924 = vmatprep.mubr.f32.mxu0 0.0
  %925 = vmatmul.mubr.f32.gmra.mrb[0].mxu0 %v797
  %v926 = vpop.f32.mrb[0].mxu0
  %v927 = vadd.f32 %v58, %v926
  %v928 = vpop.f32.mrb[0].mxu0
  %929 = vmatprep.mubr.f32.mxu0 0.0
  %930 = vmatmul.mubr.f32.gmra.mrb[0].mxu0 %v800
  %v931 = vpop.f32.mrb[0].mxu0
  %v932 = vadd.f32 %v58, %v931
  %v933 = vpop.f32.mrb[0].mxu0
  %934 = vmatprep.mubr.f32.mxu0 0.0
  %935 = vmatmul.mubr.f32.gmra.mrb[0].mxu0 %v803
  %v936 = vpop.f32.mrb[0].mxu0
  %v937 = vadd.f32 %v58, %v936
  %v938 = vpop.f32.mrb[0].mxu0
  %939 = vmatprep.mubr.f32.mxu0 0.0
  %940 = vmatmul.mubr.f32.gmra.mrb[0].mxu0 %v806
  %v941 = vpop.f32.mrb[0].mxu0
  %v942 = vadd.f32 %v58, %v941
  %v943 = vpop.f32.mrb[0].mxu0
  %944 = vmatprep.mubr.f32.mxu0 0.0
  %945 = vmatmul.mubr.f32.gmra.mrb[0].mxu0 %v809
  %v946 = vpop.f32.mrb[0].mxu0
  %v947 = vadd.f32 %v58, %v946
  %v948 = vpop.f32.mrb[0].mxu0
  %949 = vmatprep.mubr.f32.mxu0 0.0
  %950 = vmatmul.mubr.f32.gmra.mrb[0].mxu0 %v812
  %v951 = vpop.f32.mrb[0].mxu0
  %v952 = vadd.f32 %v58, %v951
  %v953 = vpop.f32.mrb[0].mxu0
  %954 = vmatprep.mubr.f32.mxu0 0.0
  %955 = vmatmul.mubr.f32.gmra.mrb[0].mxu0 %v815
  %v956 = vpop.f32.mrb[0].mxu0
  %v957 = vadd.f32 %v58, %v956
  %v958 = vpop.f32.mrb[0].mxu0
  %959 = vmatprep.mubr.f32.mxu0 0.0
  %960 = vmatmul.mubr.f32.gmra.mrb[0].mxu0 %v818
  %v961 = vpop.f32.mrb[0].mxu0
  %v962 = vadd.f32 %v58, %v961
  %v963 = vpop.f32.mrb[0].mxu0
  %964 = vdwg.mxu0
  %v965 = vmax.f32 %v887, 0.0
  %v966 = vmax.f32 %v892, 0.0
  %v967 = vmax.f32 %v897, 0.0
  %v968 = vmax.f32 %v902, 0.0
  %v969 = vmax.f32 %v907, 0.0
  %v970 = vmax.f32 %v912, 0.0
  %v971 = vmax.f32 %v917, 0.0
  %v972 = vmax.f32 %v922, 0.0
  %v973 = vmax.f32 %v927, 0.0
  %v974 = vmax.f32 %v932, 0.0
  %v975 = vmax.f32 %v937, 0.0
  %v976 = vmax.f32 %v942, 0.0
  %v977 = vmax.f32 %v947, 0.0
  %v978 = vmax.f32 %v952, 0.0
  %v979 = vmax.f32 %v957, 0.0
  %v980 = vmax.f32 %v962, 0.0
  %v981 = vmax.f32 %v740, %v965
  %v982 = vmax.f32 %v741, %v966
  %v983 = vmax.f32 %v742, %v967
  %v984 = vmax.f32 %v743, %v968
  %v985 = vmax.f32 %v744, %v969
  %v986 = vmax.f32 %v745, %v970
  %v987 = vmax.f32 %v746, %v971
  %v988 = vmax.f32 %v747, %v972
  %v989 = vmax.f32 %v748, %v973
  %v990 = vmax.f32 %v749, %v974
  %v991 = vmax.f32 %v750, %v975
  %v992 = vmax.f32 %v751, %v976
  %v993 = vmax.f32 %v752, %v977
  %v994 = vmax.f32 %v753, %v978
  %v995 = vmax.f32 %v754, %v979
  %v996 = vmax.f32 %v755, %v980
  %vm997 = vcmask 261120
  %998 = vst.msk [vmem:[#allocation2] sm:$0xff] %vm997, %v981
  %999 = vst.msk [vmem:[#allocation2 + $0x8] sm:$0xff] %vm997, %v982
  %1000 = vst.msk [vmem:[#allocation2 + $0x10] sm:$0xff] %vm997, %v983
  %1001 = vst.msk [vmem:[#allocation2 + $0x18] sm:$0xff] %vm997, %v984
  %1002 = vst.msk [vmem:[#allocation2 + $0x20] sm:$0xff] %vm997, %v985
  %1003 = vst.msk [vmem:[#allocation2 + $0x28] sm:$0xff] %vm997, %v986
  %1004 = vst.msk [vmem:[#allocation2 + $0x30] sm:$0xff] %vm997, %v987
  %1005 = vst.msk [vmem:[#allocation2 + $0x38] sm:$0xff] %vm997, %v988
  %1006 = vst.msk [vmem:[#allocation2 + $0x40] sm:$0xff] %vm997, %v989
  %1007 = vst.msk [vmem:[#allocation2 + $0x48] sm:$0xff] %vm997, %v990
  %1008 = vst.msk [vmem:[#allocation2 + $0x50] sm:$0xff] %vm997, %v991
  %1009 = vst.msk [vmem:[#allocation2 + $0x58] sm:$0xff] %vm997, %v992
  %1010 = vst.msk [vmem:[#allocation2 + $0x60] sm:$0xff] %vm997, %v993
  %1011 = vst.msk [vmem:[#allocation2 + $0x68] sm:$0xff] %vm997, %v994
  %1012 = vst.msk [vmem:[#allocation2 + $0x70] sm:$0xff] %vm997, %v995
  %1013 = vst.msk [vmem:[#allocation2 + $0x78] sm:$0xff] %vm997, %v996
  %v1014 = vld [vmem:[%s0 + $0x80] sm:$0xff]
  %v1015 = vld [vmem:[%s0 + $0x88] sm:$0xff]
  %v1016 = vld [vmem:[%s0 + $0x90] sm:$0xff]
  %v1017 = vld [vmem:[%s0 + $0x98] sm:$0xff]
  %v1018 = vld [vmem:[%s0 + $0xa0] sm:$0xff]
  %v1019 = vld [vmem:[%s0 + $0xa8] sm:$0xff]
  %v1020 = vld [vmem:[%s0 + $0xb0] sm:$0xff]
  %v1021 = vld [vmem:[%s0 + $0xb8] sm:$0xff]
  %v1022 = vld [vmem:[%s0 + $0xc0] sm:$0xff]
  %v1023 = vld [vmem:[%s0 + $0xc8] sm:$0xff]
  %v1024 = vld [vmem:[%s0 + $0xd0] sm:$0xff]
  %v1025 = vld [vmem:[%s0 + $0xd8] sm:$0xff]
  %v1026 = vld [vmem:[%s0 + $0xe0] sm:$0xff]
  %v1027 = vld [vmem:[%s0 + $0xe8] sm:$0xff]
  %v1028 = vld [vmem:[%s0 + $0xf0] sm:$0xff]
  %v1029 = vld [vmem:[%s0 + $0xf8] sm:$0xff]
  %v1030 = vld [vmem:[%s1] sm:$0xff]
  %v1031 = vld [vmem:[%s1 + $0x8] sm:$0xff]
  %v1032 = vld [vmem:[%s1 + $0x10] sm:$0xff]
  %v1033 = vld [vmem:[%s1 + $0x18] sm:$0xff]
  %v1034 = vld [vmem:[%s1 + $0x20] sm:$0x1f]
  %v1035 = vld [vmem:[%s2] sm:$0x1]
  %v1037 = vlaneseq
  %v1038 = vshrl.u32 %v1037, 7
  %v1039 = vsub.s32 0, %v1038
  %v1040 = vrot.slane %v1035, %v1039
  %v1043 = vsel %vm60, %v1014, 0
  %v1046 = vsel %vm60, %v1015, 0
  %v1049 = vsel %vm60, %v1016, 0
  %v1052 = vsel %vm60, %v1017, 0
  %v1055 = vsel %vm60, %v1018, 0
  %v1058 = vsel %vm60, %v1019, 0
  %v1061 = vsel %vm60, %v1020, 0
  %v1064 = vsel %vm60, %v1021, 0
  %v1067 = vsel %vm60, %v1022, 0
  %v1070 = vsel %vm60, %v1023, 0
  %v1073 = vsel %vm60, %v1024, 0
  %v1076 = vsel %vm60, %v1025, 0
  %v1079 = vsel %vm60, %v1026, 0
  %v1082 = vsel %vm60, %v1027, 0
  %v1085 = vsel %vm60, %v1028, 0
  %v1088 = vsel %vm60, %v1029, 0
  %v1091 = vsel %vm109, %v1034, 0
  %1093 = vmatprep.subr.mxu0 0.0
  %1094 = vmatpush1.msra.mxu0 %v1030
  %1095 = vmatprep.subr.mxu0 0.0
  %1096 = vmatpush1.msra.mxu0 %v1031
  %1097 = vmatprep.subr.mxu0 0.0
  %1098 = vmatpush1.msra.mxu0 %v1032
  %1099 = vmatprep.subr.mxu0 0.0
  %1100 = vmatpush1.msra.mxu0 %v1033
  %1101 = vmatprep.subr.mxu0 0.0
  %1102 = vmatpush1.msra.mxu0 %v1091
  %1103 = vmatprep.subr.mxu0 0.0
  %1104 = vmatpush1.msra.mxu0 0.0
  %1105 = vmatprep.subr.mxu0 0.0
  %1106 = vmatpush1.msra.mxu0 0.0
  %1107 = vmatprep.subr.mxu0 0.0
  %1108 = vmatpush1.msra.mxu0 0.0
  %1109 = vmatprep.subr.mxu0 0.0
  %1110 = vmatpush1.msra.mxu0 0.0
  %1111 = vmatprep.subr.mxu0 0.0
  %1112 = vmatpush1.msra.mxu0 0.0
  %1113 = vmatprep.subr.mxu0 0.0
  %1114 = vmatpush1.msra.mxu0 0.0
  %1115 = vmatprep.subr.mxu0 0.0
  %1116 = vmatpush1.msra.mxu0 0.0
  %1117 = vmatprep.subr.mxu0 0.0
  %1118 = vmatpush1.msra.mxu0 0.0
  %1119 = vmatprep.subr.mxu0 0.0
  %1120 = vmatpush1.msra.mxu0 0.0
  %1121 = vmatprep.subr.mxu0 0.0
  %1122 = vmatpush1.msra.mxu0 0.0
  %1123 = vmatprep.subr.mxu0 0.0
  %1124 = vmatpush1.msra.mxu0 0.0
  %1125 = vmatprep.subr.mxu0 0.0
  %1126 = vmatpush1.msra.mxu0 0.0
  %1127 = vmatprep.subr.mxu0 0.0
  %1128 = vmatpush1.msra.mxu0 0.0
  %1129 = vmatprep.subr.mxu0 0.0
  %1130 = vmatpush1.msra.mxu0 0.0
  %1131 = vmatprep.subr.mxu0 0.0
  %1132 = vmatpush1.msra.mxu0 0.0
  %1133 = vmatprep.subr.mxu0 0.0
  %1134 = vmatpush1.msra.mxu0 0.0
  %1135 = vmatprep.subr.mxu0 0.0
  %1136 = vmatpush1.msra.mxu0 0.0
  %1137 = vmatprep.subr.mxu0 0.0
  %1138 = vmatpush1.msra.mxu0 0.0
  %1139 = vmatprep.subr.mxu0 0.0
  %1140 = vmatpush1.msra.mxu0 0.0
  %1141 = vmatprep.subr.mxu0 0.0
  %1142 = vmatpush1.msra.mxu0 0.0
  %1143 = vmatprep.subr.mxu0 0.0
  %1144 = vmatpush1.msra.mxu0 0.0
  %1145 = vmatprep.subr.mxu0 0.0
  %1146 = vmatpush1.msra.mxu0 0.0
  %1147 = vmatprep.subr.mxu0 0.0
  %1148 = vmatpush1.msra.mxu0 0.0
  %1149 = vmatprep.subr.mxu0 0.0
  %1150 = vmatpush1.msra.mxu0 0.0
  %1151 = vmatprep.subr.mxu0 0.0
  %1152 = vmatpush1.msra.mxu0 0.0
  %1153 = vmatprep.subr.mxu0 0.0
  %1154 = vmatpush1.msra.mxu0 0.0
  %1155 = vmatprep.subr.mxu0 0.0
  %1156 = vmatpush1.msra.mxu0 0.0
  %1157 = vmatprep.mubr.f32.mxu0 0.0
  %1158 = vmatmul.mubr.f32.gmra.mrb[0].mxu0 %v1043
  %v1159 = vpop.f32.mrb[0].mxu0
  %v1160 = vadd.f32 %v1040, %v1159
  %v1161 = vpop.f32.mrb[0].mxu0
  %1162 = vmatprep.mubr.f32.mxu0 0.0
  %1163 = vmatmul.mubr.f32.gmra.mrb[0].mxu0 %v1046
  %v1164 = vpop.f32.mrb[0].mxu0
  %v1165 = vadd.f32 %v1040, %v1164
  %v1166 = vpop.f32.mrb[0].mxu0
  %1167 = vmatprep.mubr.f32.mxu0 0.0
  %1168 = vmatmul.mubr.f32.gmra.mrb[0].mxu0 %v1049
  %v1169 = vpop.f32.mrb[0].mxu0
  %v1170 = vadd.f32 %v1040, %v1169
  %v1171 = vpop.f32.mrb[0].mxu0
  %1172 = vmatprep.mubr.f32.mxu0 0.0
  %1173 = vmatmul.mubr.f32.gmra.mrb[0].mxu0 %v1052
  %v1174 = vpop.f32.mrb[0].mxu0
  %v1175 = vadd.f32 %v1040, %v1174
  %v1176 = vpop.f32.mrb[0].mxu0
  %1177 = vmatprep.mubr.f32.mxu0 0.0
  %1178 = vmatmul.mubr.f32.gmra.mrb[0].mxu0 %v1055
  %v1179 = vpop.f32.mrb[0].mxu0
  %v1180 = vadd.f32 %v1040, %v1179
  %v1181 = vpop.f32.mrb[0].mxu0
  %1182 = vmatprep.mubr.f32.mxu0 0.0
  %1183 = vmatmul.mubr.f32.gmra.mrb[0].mxu0 %v1058
  %v1184 = vpop.f32.mrb[0].mxu0
  %v1185 = vadd.f32 %v1040, %v1184
  %v1186 = vpop.f32.mrb[0].mxu0
  %1187 = vmatprep.mubr.f32.mxu0 0.0
  %1188 = vmatmul.mubr.f32.gmra.mrb[0].mxu0 %v1061
  %v1189 = vpop.f32.mrb[0].mxu0
  %v1190 = vadd.f32 %v1040, %v1189
  %v1191 = vpop.f32.mrb[0].mxu0
  %1192 = vmatprep.mubr.f32.mxu0 0.0
  %1193 = vmatmul.mubr.f32.gmra.mrb[0].mxu0 %v1064
  %v1194 = vpop.f32.mrb[0].mxu0
  %v1195 = vadd.f32 %v1040, %v1194
  %v1196 = vpop.f32.mrb[0].mxu0
  %1197 = vmatprep.mubr.f32.mxu0 0.0
  %1198 = vmatmul.mubr.f32.gmra.mrb[0].mxu0 %v1067
  %v1199 = vpop.f32.mrb[0].mxu0
  %v1200 = vadd.f32 %v1040, %v1199
  %v1201 = vpop.f32.mrb[0].mxu0
  %1202 = vmatprep.mubr.f32.mxu0 0.0
  %1203 = vmatmul.mubr.f32.gmra.mrb[0].mxu0 %v1070
  %v1204 = vpop.f32.mrb[0].mxu0
  %v1205 = vadd.f32 %v1040, %v1204
  %v1206 = vpop.f32.mrb[0].mxu0
  %1207 = vmatprep.mubr.f32.mxu0 0.0
  %1208 = vmatmul.mubr.f32.gmra.mrb[0].mxu0 %v1073
  %v1209 = vpop.f32.mrb[0].mxu0
  %v1210 = vadd.f32 %v1040, %v1209
  %v1211 = vpop.f32.mrb[0].mxu0
  %1212 = vmatprep.mubr.f32.mxu0 0.0
  %1213 = vmatmul.mubr.f32.gmra.mrb[0].mxu0 %v1076
  %v1214 = vpop.f32.mrb[0].mxu0
  %v1215 = vadd.f32 %v1040, %v1214
  %v1216 = vpop.f32.mrb[0].mxu0
  %1217 = vmatprep.mubr.f32.mxu0 0.0
  %1218 = vmatmul.mubr.f32.gmra.mrb[0].mxu0 %v1079
  %v1219 = vpop.f32.mrb[0].mxu0
  %v1220 = vadd.f32 %v1040, %v1219
  %v1221 = vpop.f32.mrb[0].mxu0
  %1222 = vmatprep.mubr.f32.mxu0 0.0
  %1223 = vmatmul.mubr.f32.gmra.mrb[0].mxu0 %v1082
  %v1224 = vpop.f32.mrb[0].mxu0
  %v1225 = vadd.f32 %v1040, %v1224
  %v1226 = vpop.f32.mrb[0].mxu0
  %1227 = vmatprep.mubr.f32.mxu0 0.0
  %1228 = vmatmul.mubr.f32.gmra.mrb[0].mxu0 %v1085
  %v1229 = vpop.f32.mrb[0].mxu0
  %v1230 = vadd.f32 %v1040, %v1229
  %v1231 = vpop.f32.mrb[0].mxu0
  %1232 = vmatprep.mubr.f32.mxu0 0.0
  %1233 = vmatmul.mubr.f32.gmra.mrb[0].mxu0 %v1088
  %v1234 = vpop.f32.mrb[0].mxu0
  %v1235 = vadd.f32 %v1040, %v1234
  %v1236 = vpop.f32.mrb[0].mxu0
  %1237 = vdwg.mxu0
  %v1238 = vmax.f32 %v1160, 0.0
  %v1239 = vmax.f32 %v1165, 0.0
  %v1240 = vmax.f32 %v1170, 0.0
  %v1241 = vmax.f32 %v1175, 0.0
  %v1242 = vmax.f32 %v1180, 0.0
  %v1243 = vmax.f32 %v1185, 0.0
  %v1244 = vmax.f32 %v1190, 0.0
  %v1245 = vmax.f32 %v1195, 0.0
  %v1246 = vmax.f32 %v1200, 0.0
  %v1247 = vmax.f32 %v1205, 0.0
  %v1248 = vmax.f32 %v1210, 0.0
  %v1249 = vmax.f32 %v1215, 0.0
  %v1250 = vmax.f32 %v1220, 0.0
  %v1251 = vmax.f32 %v1225, 0.0
  %v1252 = vmax.f32 %v1230, 0.0
  %v1253 = vmax.f32 %v1235, 0.0
  %v1254 = vld [vmem:[%s0 + $0x280] sm:$0xff]
  %v1255 = vld [vmem:[%s0 + $0x288] sm:$0xff]
  %v1256 = vld [vmem:[%s0 + $0x290] sm:$0xff]
  %v1257 = vld [vmem:[%s0 + $0x298] sm:$0xff]
  %v1258 = vld [vmem:[%s0 + $0x2a0] sm:$0xff]
  %v1259 = vld [vmem:[%s0 + $0x2a8] sm:$0xff]
  %v1260 = vld [vmem:[%s0 + $0x2b0] sm:$0xff]
  %v1261 = vld [vmem:[%s0 + $0x2b8] sm:$0xff]
  %v1262 = vld [vmem:[%s0 + $0x2c0] sm:$0xff]
  %v1263 = vld [vmem:[%s0 + $0x2c8] sm:$0xff]
  %v1264 = vld [vmem:[%s0 + $0x2d0] sm:$0xff]
  %v1265 = vld [vmem:[%s0 + $0x2d8] sm:$0xff]
  %v1266 = vld [vmem:[%s0 + $0x2e0] sm:$0xff]
  %v1267 = vld [vmem:[%s0 + $0x2e8] sm:$0xff]
  %v1268 = vld [vmem:[%s0 + $0x2f0] sm:$0xff]
  %v1269 = vld [vmem:[%s0 + $0x2f8] sm:$0xff]
  %v1271 = vsel %vm60, %v1254, 0
  %v1274 = vsel %vm60, %v1255, 0
  %v1277 = vsel %vm60, %v1256, 0
  %v1280 = vsel %vm60, %v1257, 0
  %v1283 = vsel %vm60, %v1258, 0
  %v1286 = vsel %vm60, %v1259, 0
  %v1289 = vsel %vm60, %v1260, 0
  %v1292 = vsel %vm60, %v1261, 0
  %v1295 = vsel %vm60, %v1262, 0
  %v1298 = vsel %vm60, %v1263, 0
  %v1301 = vsel %vm60, %v1264, 0
  %v1304 = vsel %vm60, %v1265, 0
  %v1307 = vsel %vm60, %v1266, 0
  %v1310 = vsel %vm60, %v1267, 0
  %v1313 = vsel %vm60, %v1268, 0
  %v1316 = vsel %vm60, %v1269, 0
  %1318 = vmatprep.subr.mxu0 0.0
  %1319 = vmatpush1.msra.mxu0 %v1030
  %1320 = vmatprep.subr.mxu0 0.0
  %1321 = vmatpush1.msra.mxu0 %v1031
  %1322 = vmatprep.subr.mxu0 0.0
  %1323 = vmatpush1.msra.mxu0 %v1032
  %1324 = vmatprep.subr.mxu0 0.0
  %1325 = vmatpush1.msra.mxu0 %v1033
  %1326 = vmatprep.subr.mxu0 0.0
  %1327 = vmatpush1.msra.mxu0 %v1091
  %1328 = vmatprep.subr.mxu0 0.0
  %1329 = vmatpush1.msra.mxu0 0.0
  %1330 = vmatprep.subr.mxu0 0.0
  %1331 = vmatpush1.msra.mxu0 0.0
  %1332 = vmatprep.subr.mxu0 0.0
  %1333 = vmatpush1.msra.mxu0 0.0
  %1334 = vmatprep.subr.mxu0 0.0
  %1335 = vmatpush1.msra.mxu0 0.0
  %1336 = vmatprep.subr.mxu0 0.0
  %1337 = vmatpush1.msra.mxu0 0.0
  %1338 = vmatprep.subr.mxu0 0.0
  %1339 = vmatpush1.msra.mxu0 0.0
  %1340 = vmatprep.subr.mxu0 0.0
  %1341 = vmatpush1.msra.mxu0 0.0
  %1342 = vmatprep.subr.mxu0 0.0
  %1343 = vmatpush1.msra.mxu0 0.0
  %1344 = vmatprep.subr.mxu0 0.0
  %1345 = vmatpush1.msra.mxu0 0.0
  %1346 = vmatprep.subr.mxu0 0.0
  %1347 = vmatpush1.msra.mxu0 0.0
  %1348 = vmatprep.subr.mxu0 0.0
  %1349 = vmatpush1.msra.mxu0 0.0
  %1350 = vmatprep.subr.mxu0 0.0
  %1351 = vmatpush1.msra.mxu0 0.0
  %1352 = vmatprep.subr.mxu0 0.0
  %1353 = vmatpush1.msra.mxu0 0.0
  %1354 = vmatprep.subr.mxu0 0.0
  %1355 = vmatpush1.msra.mxu0 0.0
  %1356 = vmatprep.subr.mxu0 0.0
  %1357 = vmatpush1.msra.mxu0 0.0
  %1358 = vmatprep.subr.mxu0 0.0
  %1359 = vmatpush1.msra.mxu0 0.0
  %1360 = vmatprep.subr.mxu0 0.0
  %1361 = vmatpush1.msra.mxu0 0.0
  %1362 = vmatprep.subr.mxu0 0.0
  %1363 = vmatpush1.msra.mxu0 0.0
  %1364 = vmatprep.subr.mxu0 0.0
  %1365 = vmatpush1.msra.mxu0 0.0
  %1366 = vmatprep.subr.mxu0 0.0
  %1367 = vmatpush1.msra.mxu0 0.0
  %1368 = vmatprep.subr.mxu0 0.0
  %1369 = vmatpush1.msra.mxu0 0.0
  %1370 = vmatprep.subr.mxu0 0.0
  %1371 = vmatpush1.msra.mxu0 0.0
  %1372 = vmatprep.subr.mxu0 0.0
  %1373 = vmatpush1.msra.mxu0 0.0
  %1374 = vmatprep.subr.mxu0 0.0
  %1375 = vmatpush1.msra.mxu0 0.0
  %1376 = vmatprep.subr.mxu0 0.0
  %1377 = vmatpush1.msra.mxu0 0.0
  %1378 = vmatprep.subr.mxu0 0.0
  %1379 = vmatpush1.msra.mxu0 0.0
  %1380 = vmatprep.subr.mxu0 0.0
  %1381 = vmatpush1.msra.mxu0 0.0
  %1382 = vmatprep.mubr.f32.mxu0 0.0
  %1383 = vmatmul.mubr.f32.gmra.mrb[0].mxu0 %v1271
  %v1384 = vpop.f32.mrb[0].mxu0
  %v1385 = vadd.f32 %v1040, %v1384
  %v1386 = vpop.f32.mrb[0].mxu0
  %1387 = vmatprep.mubr.f32.mxu0 0.0
  %1388 = vmatmul.mubr.f32.gmra.mrb[0].mxu0 %v1274
  %v1389 = vpop.f32.mrb[0].mxu0
  %v1390 = vadd.f32 %v1040, %v1389
  %v1391 = vpop.f32.mrb[0].mxu0
  %1392 = vmatprep.mubr.f32.mxu0 0.0
  %1393 = vmatmul.mubr.f32.gmra.mrb[0].mxu0 %v1277
  %v1394 = vpop.f32.mrb[0].mxu0
  %v1395 = vadd.f32 %v1040, %v1394
  %v1396 = vpop.f32.mrb[0].mxu0
  %1397 = vmatprep.mubr.f32.mxu0 0.0
  %1398 = vmatmul.mubr.f32.gmra.mrb[0].mxu0 %v1280
  %v1399 = vpop.f32.mrb[0].mxu0
  %v1400 = vadd.f32 %v1040, %v1399
  %v1401 = vpop.f32.mrb[0].mxu0
  %1402 = vmatprep.mubr.f32.mxu0 0.0
  %1403 = vmatmul.mubr.f32.gmra.mrb[0].mxu0 %v1283
  %v1404 = vpop.f32.mrb[0].mxu0
  %v1405 = vadd.f32 %v1040, %v1404
  %v1406 = vpop.f32.mrb[0].mxu0
  %1407 = vmatprep.mubr.f32.mxu0 0.0
  %1408 = vmatmul.mubr.f32.gmra.mrb[0].mxu0 %v1286
  %v1409 = vpop.f32.mrb[0].mxu0
  %v1410 = vadd.f32 %v1040, %v1409
  %v1411 = vpop.f32.mrb[0].mxu0
  %1412 = vmatprep.mubr.f32.mxu0 0.0
  %1413 = vmatmul.mubr.f32.gmra.mrb[0].mxu0 %v1289
  %v1414 = vpop.f32.mrb[0].mxu0
  %v1415 = vadd.f32 %v1040, %v1414
  %v1416 = vpop.f32.mrb[0].mxu0
  %1417 = vmatprep.mubr.f32.mxu0 0.0
  %1418 = vmatmul.mubr.f32.gmra.mrb[0].mxu0 %v1292
  %v1419 = vpop.f32.mrb[0].mxu0
  %v1420 = vadd.f32 %v1040, %v1419
  %v1421 = vpop.f32.mrb[0].mxu0
  %1422 = vmatprep.mubr.f32.mxu0 0.0
  %1423 = vmatmul.mubr.f32.gmra.mrb[0].mxu0 %v1295
  %v1424 = vpop.f32.mrb[0].mxu0
  %v1425 = vadd.f32 %v1040, %v1424
  %v1426 = vpop.f32.mrb[0].mxu0
  %1427 = vmatprep.mubr.f32.mxu0 0.0
  %1428 = vmatmul.mubr.f32.gmra.mrb[0].mxu0 %v1298
  %v1429 = vpop.f32.mrb[0].mxu0
  %v1430 = vadd.f32 %v1040, %v1429
  %v1431 = vpop.f32.mrb[0].mxu0
  %1432 = vmatprep.mubr.f32.mxu0 0.0
  %1433 = vmatmul.mubr.f32.gmra.mrb[0].mxu0 %v1301
  %v1434 = vpop.f32.mrb[0].mxu0
  %v1435 = vadd.f32 %v1040, %v1434
  %v1436 = vpop.f32.mrb[0].mxu0
  %1437 = vmatprep.mubr.f32.mxu0 0.0
  %1438 = vmatmul.mubr.f32.gmra.mrb[0].mxu0 %v1304
  %v1439 = vpop.f32.mrb[0].mxu0
  %v1440 = vadd.f32 %v1040, %v1439
  %v1441 = vpop.f32.mrb[0].mxu0
  %1442 = vmatprep.mubr.f32.mxu0 0.0
  %1443 = vmatmul.mubr.f32.gmra.mrb[0].mxu0 %v1307
  %v1444 = vpop.f32.mrb[0].mxu0
  %v1445 = vadd.f32 %v1040, %v1444
  %v1446 = vpop.f32.mrb[0].mxu0
  %1447 = vmatprep.mubr.f32.mxu0 0.0
  %1448 = vmatmul.mubr.f32.gmra.mrb[0].mxu0 %v1310
  %v1449 = vpop.f32.mrb[0].mxu0
  %v1450 = vadd.f32 %v1040, %v1449
  %v1451 = vpop.f32.mrb[0].mxu0
  %1452 = vmatprep.mubr.f32.mxu0 0.0
  %1453 = vmatmul.mubr.f32.gmra.mrb[0].mxu0 %v1313
  %v1454 = vpop.f32.mrb[0].mxu0
  %v1455 = vadd.f32 %v1040, %v1454
  %v1456 = vpop.f32.mrb[0].mxu0
  %1457 = vmatprep.mubr.f32.mxu0 0.0
  %1458 = vmatmul.mubr.f32.gmra.mrb[0].mxu0 %v1316
  %v1459 = vpop.f32.mrb[0].mxu0
  %v1460 = vadd.f32 %v1040, %v1459
  %v1461 = vpop.f32.mrb[0].mxu0
  %1462 = vdwg.mxu0
  %v1463 = vmax.f32 %v1385, 0.0
  %v1464 = vmax.f32 %v1390, 0.0
  %v1465 = vmax.f32 %v1395, 0.0
  %v1466 = vmax.f32 %v1400, 0.0
  %v1467 = vmax.f32 %v1405, 0.0
  %v1468 = vmax.f32 %v1410, 0.0
  %v1469 = vmax.f32 %v1415, 0.0
  %v1470 = vmax.f32 %v1420, 0.0
  %v1471 = vmax.f32 %v1425, 0.0
  %v1472 = vmax.f32 %v1430, 0.0
  %v1473 = vmax.f32 %v1435, 0.0
  %v1474 = vmax.f32 %v1440, 0.0
  %v1475 = vmax.f32 %v1445, 0.0
  %v1476 = vmax.f32 %v1450, 0.0
  %v1477 = vmax.f32 %v1455, 0.0
  %v1478 = vmax.f32 %v1460, 0.0
  %v1479 = vmax.f32 %v1238, %v1463
  %v1480 = vmax.f32 %v1239, %v1464
  %v1481 = vmax.f32 %v1240, %v1465
  %v1482 = vmax.f32 %v1241, %v1466
  %v1483 = vmax.f32 %v1242, %v1467
  %v1484 = vmax.f32 %v1243, %v1468
  %v1485 = vmax.f32 %v1244, %v1469
  %v1486 = vmax.f32 %v1245, %v1470
  %v1487 = vmax.f32 %v1246, %v1471
  %v1488 = vmax.f32 %v1247, %v1472
  %v1489 = vmax.f32 %v1248, %v1473
  %v1490 = vmax.f32 %v1249, %v1474
  %v1491 = vmax.f32 %v1250, %v1475
  %v1492 = vmax.f32 %v1251, %v1476
  %v1493 = vmax.f32 %v1252, %v1477
  %v1494 = vmax.f32 %v1253, %v1478
  %v1495 = vld [vmem:[%s0 + $0x480] sm:$0xff]
  %v1496 = vld [vmem:[%s0 + $0x488] sm:$0xff]
  %v1497 = vld [vmem:[%s0 + $0x490] sm:$0xff]
  %v1498 = vld [vmem:[%s0 + $0x498] sm:$0xff]
  %v1499 = vld [vmem:[%s0 + $0x4a0] sm:$0xff]
  %v1500 = vld [vmem:[%s0 + $0x4a8] sm:$0xff]
  %v1501 = vld [vmem:[%s0 + $0x4b0] sm:$0xff]
  %v1502 = vld [vmem:[%s0 + $0x4b8] sm:$0xff]
  %v1503 = vld [vmem:[%s0 + $0x4c0] sm:$0xff]
  %v1504 = vld [vmem:[%s0 + $0x4c8] sm:$0xff]
  %v1505 = vld [vmem:[%s0 + $0x4d0] sm:$0xff]
  %v1506 = vld [vmem:[%s0 + $0x4d8] sm:$0xff]
  %v1507 = vld [vmem:[%s0 + $0x4e0] sm:$0xff]
  %v1508 = vld [vmem:[%s0 + $0x4e8] sm:$0xff]
  %v1509 = vld [vmem:[%s0 + $0x4f0] sm:$0xff]
  %v1510 = vld [vmem:[%s0 + $0x4f8] sm:$0xff]
  %v1512 = vsel %vm60, %v1495, 0
  %v1515 = vsel %vm60, %v1496, 0
  %v1518 = vsel %vm60, %v1497, 0
  %v1521 = vsel %vm60, %v1498, 0
  %v1524 = vsel %vm60, %v1499, 0
  %v1527 = vsel %vm60, %v1500, 0
  %v1530 = vsel %vm60, %v1501, 0
  %v1533 = vsel %vm60, %v1502, 0
  %v1536 = vsel %vm60, %v1503, 0
  %v1539 = vsel %vm60, %v1504, 0
  %v1542 = vsel %vm60, %v1505, 0
  %v1545 = vsel %vm60, %v1506, 0
  %v1548 = vsel %vm60, %v1507, 0
  %v1551 = vsel %vm60, %v1508, 0
  %v1554 = vsel %vm60, %v1509, 0
  %v1557 = vsel %vm60, %v1510, 0
  %1559 = vmatprep.subr.mxu0 0.0
  %1560 = vmatpush1.msra.mxu0 %v1030
  %1561 = vmatprep.subr.mxu0 0.0
  %1562 = vmatpush1.msra.mxu0 %v1031
  %1563 = vmatprep.subr.mxu0 0.0
  %1564 = vmatpush1.msra.mxu0 %v1032
  %1565 = vmatprep.subr.mxu0 0.0
  %1566 = vmatpush1.msra.mxu0 %v1033
  %1567 = vmatprep.subr.mxu0 0.0
  %1568 = vmatpush1.msra.mxu0 %v1091
  %1569 = vmatprep.subr.mxu0 0.0
  %1570 = vmatpush1.msra.mxu0 0.0
  %1571 = vmatprep.subr.mxu0 0.0
  %1572 = vmatpush1.msra.mxu0 0.0
  %1573 = vmatprep.subr.mxu0 0.0
  %1574 = vmatpush1.msra.mxu0 0.0
  %1575 = vmatprep.subr.mxu0 0.0
  %1576 = vmatpush1.msra.mxu0 0.0
  %1577 = vmatprep.subr.mxu0 0.0
  %1578 = vmatpush1.msra.mxu0 0.0
  %1579 = vmatprep.subr.mxu0 0.0
  %1580 = vmatpush1.msra.mxu0 0.0
  %1581 = vmatprep.subr.mxu0 0.0
  %1582 = vmatpush1.msra.mxu0 0.0
  %1583 = vmatprep.subr.mxu0 0.0
  %1584 = vmatpush1.msra.mxu0 0.0
  %1585 = vmatprep.subr.mxu0 0.0
  %1586 = vmatpush1.msra.mxu0 0.0
  %1587 = vmatprep.subr.mxu0 0.0
  %1588 = vmatpush1.msra.mxu0 0.0
  %1589 = vmatprep.subr.mxu0 0.0
  %1590 = vmatpush1.msra.mxu0 0.0
  %1591 = vmatprep.subr.mxu0 0.0
  %1592 = vmatpush1.msra.mxu0 0.0
  %1593 = vmatprep.subr.mxu0 0.0
  %1594 = vmatpush1.msra.mxu0 0.0
  %1595 = vmatprep.subr.mxu0 0.0
  %1596 = vmatpush1.msra.mxu0 0.0
  %1597 = vmatprep.subr.mxu0 0.0
  %1598 = vmatpush1.msra.mxu0 0.0
  %1599 = vmatprep.subr.mxu0 0.0
  %1600 = vmatpush1.msra.mxu0 0.0
  %1601 = vmatprep.subr.mxu0 0.0
  %1602 = vmatpush1.msra.mxu0 0.0
  %1603 = vmatprep.subr.mxu0 0.0
  %1604 = vmatpush1.msra.mxu0 0.0
  %1605 = vmatprep.subr.mxu0 0.0
  %1606 = vmatpush1.msra.mxu0 0.0
  %1607 = vmatprep.subr.mxu0 0.0
  %1608 = vmatpush1.msra.mxu0 0.0
  %1609 = vmatprep.subr.mxu0 0.0
  %1610 = vmatpush1.msra.mxu0 0.0
  %1611 = vmatprep.subr.mxu0 0.0
  %1612 = vmatpush1.msra.mxu0 0.0
  %1613 = vmatprep.subr.mxu0 0.0
  %1614 = vmatpush1.msra.mxu0 0.0
  %1615 = vmatprep.subr.mxu0 0.0
  %1616 = vmatpush1.msra.mxu0 0.0
  %1617 = vmatprep.subr.mxu0 0.0
  %1618 = vmatpush1.msra.mxu0 0.0
  %1619 = vmatprep.subr.mxu0 0.0
  %1620 = vmatpush1.msra.mxu0 0.0
  %1621 = vmatprep.subr.mxu0 0.0
  %1622 = vmatpush1.msra.mxu0 0.0
  %1623 = vmatprep.mubr.f32.mxu0 0.0
  %1624 = vmatmul.mubr.f32.gmra.mrb[0].mxu0 %v1512
  %v1625 = vpop.f32.mrb[0].mxu0
  %v1626 = vadd.f32 %v1040, %v1625
  %v1627 = vpop.f32.mrb[0].mxu0
  %1628 = vmatprep.mubr.f32.mxu0 0.0
  %1629 = vmatmul.mubr.f32.gmra.mrb[0].mxu0 %v1515
  %v1630 = vpop.f32.mrb[0].mxu0
  %v1631 = vadd.f32 %v1040, %v1630
  %v1632 = vpop.f32.mrb[0].mxu0
  %1633 = vmatprep.mubr.f32.mxu0 0.0
  %1634 = vmatmul.mubr.f32.gmra.mrb[0].mxu0 %v1518
  %v1635 = vpop.f32.mrb[0].mxu0
  %v1636 = vadd.f32 %v1040, %v1635
  %v1637 = vpop.f32.mrb[0].mxu0
  %1638 = vmatprep.mubr.f32.mxu0 0.0
  %1639 = vmatmul.mubr.f32.gmra.mrb[0].mxu0 %v1521
  %v1640 = vpop.f32.mrb[0].mxu0
  %v1641 = vadd.f32 %v1040, %v1640
  %v1642 = vpop.f32.mrb[0].mxu0
  %1643 = vmatprep.mubr.f32.mxu0 0.0
  %1644 = vmatmul.mubr.f32.gmra.mrb[0].mxu0 %v1524
  %v1645 = vpop.f32.mrb[0].mxu0
  %v1646 = vadd.f32 %v1040, %v1645
  %v1647 = vpop.f32.mrb[0].mxu0
  %1648 = vmatprep.mubr.f32.mxu0 0.0
  %1649 = vmatmul.mubr.f32.gmra.mrb[0].mxu0 %v1527
  %v1650 = vpop.f32.mrb[0].mxu0
  %v1651 = vadd.f32 %v1040, %v1650
  %v1652 = vpop.f32.mrb[0].mxu0
  %1653 = vmatprep.mubr.f32.mxu0 0.0
  %1654 = vmatmul.mubr.f32.gmra.mrb[0].mxu0 %v1530
  %v1655 = vpop.f32.mrb[0].mxu0
  %v1656 = vadd.f32 %v1040, %v1655
  %v1657 = vpop.f32.mrb[0].mxu0
  %1658 = vmatprep.mubr.f32.mxu0 0.0
  %1659 = vmatmul.mubr.f32.gmra.mrb[0].mxu0 %v1533
  %v1660 = vpop.f32.mrb[0].mxu0
  %v1661 = vadd.f32 %v1040, %v1660
  %v1662 = vpop.f32.mrb[0].mxu0
  %1663 = vmatprep.mubr.f32.mxu0 0.0
  %1664 = vmatmul.mubr.f32.gmra.mrb[0].mxu0 %v1536
  %v1665 = vpop.f32.mrb[0].mxu0
  %v1666 = vadd.f32 %v1040, %v1665
  %v1667 = vpop.f32.mrb[0].mxu0
  %1668 = vmatprep.mubr.f32.mxu0 0.0
  %1669 = vmatmul.mubr.f32.gmra.mrb[0].mxu0 %v1539
  %v1670 = vpop.f32.mrb[0].mxu0
  %v1671 = vadd.f32 %v1040, %v1670
  %v1672 = vpop.f32.mrb[0].mxu0
  %1673 = vmatprep.mubr.f32.mxu0 0.0
  %1674 = vmatmul.mubr.f32.gmra.mrb[0].mxu0 %v1542
  %v1675 = vpop.f32.mrb[0].mxu0
  %v1676 = vadd.f32 %v1040, %v1675
  %v1677 = vpop.f32.mrb[0].mxu0
  %1678 = vmatprep.mubr.f32.mxu0 0.0
  %1679 = vmatmul.mubr.f32.gmra.mrb[0].mxu0 %v1545
  %v1680 = vpop.f32.mrb[0].mxu0
  %v1681 = vadd.f32 %v1040, %v1680
  %v1682 = vpop.f32.mrb[0].mxu0
  %1683 = vmatprep.mubr.f32.mxu0 0.0
  %1684 = vmatmul.mubr.f32.gmra.mrb[0].mxu0 %v1548
  %v1685 = vpop.f32.mrb[0].mxu0
  %v1686 = vadd.f32 %v1040, %v1685
  %v1687 = vpop.f32.mrb[0].mxu0
  %1688 = vmatprep.mubr.f32.mxu0 0.0
  %1689 = vmatmul.mubr.f32.gmra.mrb[0].mxu0 %v1551
  %v1690 = vpop.f32.mrb[0].mxu0
  %v1691 = vadd.f32 %v1040, %v1690
  %v1692 = vpop.f32.mrb[0].mxu0
  %1693 = vmatprep.mubr.f32.mxu0 0.0
  %1694 = vmatmul.mubr.f32.gmra.mrb[0].mxu0 %v1554
  %v1695 = vpop.f32.mrb[0].mxu0
  %v1696 = vadd.f32 %v1040, %v1695
  %v1697 = vpop.f32.mrb[0].mxu0
  %1698 = vmatprep.mubr.f32.mxu0 0.0
  %1699 = vmatmul.mubr.f32.gmra.mrb[0].mxu0 %v1557
  %v1700 = vpop.f32.mrb[0].mxu0
  %v1701 = vadd.f32 %v1040, %v1700
  %v1702 = vpop.f32.mrb[0].mxu0
  %1703 = vdwg.mxu0
  %v1704 = vmax.f32 %v1626, 0.0
  %v1705 = vmax.f32 %v1631, 0.0
  %v1706 = vmax.f32 %v1636, 0.0
  %v1707 = vmax.f32 %v1641, 0.0
  %v1708 = vmax.f32 %v1646, 0.0
  %v1709 = vmax.f32 %v1651, 0.0
  %v1710 = vmax.f32 %v1656, 0.0
  %v1711 = vmax.f32 %v1661, 0.0
  %v1712 = vmax.f32 %v1666, 0.0
  %v1713 = vmax.f32 %v1671, 0.0
  %v1714 = vmax.f32 %v1676, 0.0
  %v1715 = vmax.f32 %v1681, 0.0
  %v1716 = vmax.f32 %v1686, 0.0
  %v1717 = vmax.f32 %v1691, 0.0
  %v1718 = vmax.f32 %v1696, 0.0
  %v1719 = vmax.f32 %v1701, 0.0
  %v1720 = vmax.f32 %v1479, %v1704
  %v1721 = vmax.f32 %v1480, %v1705
  %v1722 = vmax.f32 %v1481, %v1706
  %v1723 = vmax.f32 %v1482, %v1707
  %v1724 = vmax.f32 %v1483, %v1708
  %v1725 = vmax.f32 %v1484, %v1709
  %v1726 = vmax.f32 %v1485, %v1710
  %v1727 = vmax.f32 %v1486, %v1711
  %v1728 = vmax.f32 %v1487, %v1712
  %v1729 = vmax.f32 %v1488, %v1713
  %v1730 = vmax.f32 %v1489, %v1714
  %v1731 = vmax.f32 %v1490, %v1715
  %v1732 = vmax.f32 %v1491, %v1716
  %v1733 = vmax.f32 %v1492, %v1717
  %v1734 = vmax.f32 %v1493, %v1718
  %v1735 = vmax.f32 %v1494, %v1719
  %v1736 = vld [vmem:[%s0 + $0x680] sm:$0xff]
  %v1737 = vld [vmem:[%s0 + $0x688] sm:$0xff]
  %v1738 = vld [vmem:[%s0 + $0x690] sm:$0xff]
  %v1739 = vld [vmem:[%s0 + $0x698] sm:$0xff]
  %v1740 = vld [vmem:[%s0 + $0x6a0] sm:$0xff]
  %v1741 = vld [vmem:[%s0 + $0x6a8] sm:$0xff]
  %v1742 = vld [vmem:[%s0 + $0x6b0] sm:$0xff]
  %v1743 = vld [vmem:[%s0 + $0x6b8] sm:$0xff]
  %v1744 = vld [vmem:[%s0 + $0x6c0] sm:$0xff]
  %v1745 = vld [vmem:[%s0 + $0x6c8] sm:$0xff]
  %v1746 = vld [vmem:[%s0 + $0x6d0] sm:$0xff]
  %v1747 = vld [vmem:[%s0 + $0x6d8] sm:$0xff]
  %v1748 = vld [vmem:[%s0 + $0x6e0] sm:$0xff]
  %v1749 = vld [vmem:[%s0 + $0x6e8] sm:$0xff]
  %v1750 = vld [vmem:[%s0 + $0x6f0] sm:$0xff]
  %v1751 = vld [vmem:[%s0 + $0x6f8] sm:$0xff]
  %v1753 = vsel %vm60, %v1736, 0
  %v1756 = vsel %vm60, %v1737, 0
  %v1759 = vsel %vm60, %v1738, 0
  %v1762 = vsel %vm60, %v1739, 0
  %v1765 = vsel %vm60, %v1740, 0
  %v1768 = vsel %vm60, %v1741, 0
  %v1771 = vsel %vm60, %v1742, 0
  %v1774 = vsel %vm60, %v1743, 0
  %v1777 = vsel %vm60, %v1744, 0
  %v1780 = vsel %vm60, %v1745, 0
  %v1783 = vsel %vm60, %v1746, 0
  %v1786 = vsel %vm60, %v1747, 0
  %v1789 = vsel %vm60, %v1748, 0
  %v1792 = vsel %vm60, %v1749, 0
  %v1795 = vsel %vm60, %v1750, 0
  %v1798 = vsel %vm60, %v1751, 0
  %1800 = vmatprep.subr.mxu0 0.0
  %1801 = vmatpush1.msra.mxu0 %v1030
  %1802 = vmatprep.subr.mxu0 0.0
  %1803 = vmatpush1.msra.mxu0 %v1031
  %1804 = vmatprep.subr.mxu0 0.0
  %1805 = vmatpush1.msra.mxu0 %v1032
  %1806 = vmatprep.subr.mxu0 0.0
  %1807 = vmatpush1.msra.mxu0 %v1033
  %1808 = vmatprep.subr.mxu0 0.0
  %1809 = vmatpush1.msra.mxu0 %v1091
  %1810 = vmatprep.subr.mxu0 0.0
  %1811 = vmatpush1.msra.mxu0 0.0
  %1812 = vmatprep.subr.mxu0 0.0
  %1813 = vmatpush1.msra.mxu0 0.0
  %1814 = vmatprep.subr.mxu0 0.0
  %1815 = vmatpush1.msra.mxu0 0.0
  %1816 = vmatprep.subr.mxu0 0.0
  %1817 = vmatpush1.msra.mxu0 0.0
  %1818 = vmatprep.subr.mxu0 0.0
  %1819 = vmatpush1.msra.mxu0 0.0
  %1820 = vmatprep.subr.mxu0 0.0
  %1821 = vmatpush1.msra.mxu0 0.0
  %1822 = vmatprep.subr.mxu0 0.0
  %1823 = vmatpush1.msra.mxu0 0.0
  %1824 = vmatprep.subr.mxu0 0.0
  %1825 = vmatpush1.msra.mxu0 0.0
  %1826 = vmatprep.subr.mxu0 0.0
  %1827 = vmatpush1.msra.mxu0 0.0
  %1828 = vmatprep.subr.mxu0 0.0
  %1829 = vmatpush1.msra.mxu0 0.0
  %1830 = vmatprep.subr.mxu0 0.0
  %1831 = vmatpush1.msra.mxu0 0.0
  %1832 = vmatprep.subr.mxu0 0.0
  %1833 = vmatpush1.msra.mxu0 0.0
  %1834 = vmatprep.subr.mxu0 0.0
  %1835 = vmatpush1.msra.mxu0 0.0
  %1836 = vmatprep.subr.mxu0 0.0
  %1837 = vmatpush1.msra.mxu0 0.0
  %1838 = vmatprep.subr.mxu0 0.0
  %1839 = vmatpush1.msra.mxu0 0.0
  %1840 = vmatprep.subr.mxu0 0.0
  %1841 = vmatpush1.msra.mxu0 0.0
  %1842 = vmatprep.subr.mxu0 0.0
  %1843 = vmatpush1.msra.mxu0 0.0
  %1844 = vmatprep.subr.mxu0 0.0
  %1845 = vmatpush1.msra.mxu0 0.0
  %1846 = vmatprep.subr.mxu0 0.0
  %1847 = vmatpush1.msra.mxu0 0.0
  %1848 = vmatprep.subr.mxu0 0.0
  %1849 = vmatpush1.msra.mxu0 0.0
  %1850 = vmatprep.subr.mxu0 0.0
  %1851 = vmatpush1.msra.mxu0 0.0
  %1852 = vmatprep.subr.mxu0 0.0
  %1853 = vmatpush1.msra.mxu0 0.0
  %1854 = vmatprep.subr.mxu0 0.0
  %1855 = vmatpush1.msra.mxu0 0.0
  %1856 = vmatprep.subr.mxu0 0.0
  %1857 = vmatpush1.msra.mxu0 0.0
  %1858 = vmatprep.subr.mxu0 0.0
  %1859 = vmatpush1.msra.mxu0 0.0
  %1860 = vmatprep.subr.mxu0 0.0
  %1861 = vmatpush1.msra.mxu0 0.0
  %1862 = vmatprep.subr.mxu0 0.0
  %1863 = vmatpush1.msra.mxu0 0.0
  %1864 = vmatprep.mubr.f32.mxu0 0.0
  %1865 = vmatmul.mubr.f32.gmra.mrb[0].mxu0 %v1753
  %v1866 = vpop.f32.mrb[0].mxu0
  %v1867 = vadd.f32 %v1040, %v1866
  %v1868 = vpop.f32.mrb[0].mxu0
  %1869 = vmatprep.mubr.f32.mxu0 0.0
  %1870 = vmatmul.mubr.f32.gmra.mrb[0].mxu0 %v1756
  %v1871 = vpop.f32.mrb[0].mxu0
  %v1872 = vadd.f32 %v1040, %v1871
  %v1873 = vpop.f32.mrb[0].mxu0
  %1874 = vmatprep.mubr.f32.mxu0 0.0
  %1875 = vmatmul.mubr.f32.gmra.mrb[0].mxu0 %v1759
  %v1876 = vpop.f32.mrb[0].mxu0
  %v1877 = vadd.f32 %v1040, %v1876
  %v1878 = vpop.f32.mrb[0].mxu0
  %1879 = vmatprep.mubr.f32.mxu0 0.0
  %1880 = vmatmul.mubr.f32.gmra.mrb[0].mxu0 %v1762
  %v1881 = vpop.f32.mrb[0].mxu0
  %v1882 = vadd.f32 %v1040, %v1881
  %v1883 = vpop.f32.mrb[0].mxu0
  %1884 = vmatprep.mubr.f32.mxu0 0.0
  %1885 = vmatmul.mubr.f32.gmra.mrb[0].mxu0 %v1765
  %v1886 = vpop.f32.mrb[0].mxu0
  %v1887 = vadd.f32 %v1040, %v1886
  %v1888 = vpop.f32.mrb[0].mxu0
  %1889 = vmatprep.mubr.f32.mxu0 0.0
  %1890 = vmatmul.mubr.f32.gmra.mrb[0].mxu0 %v1768
  %v1891 = vpop.f32.mrb[0].mxu0
  %v1892 = vadd.f32 %v1040, %v1891
  %v1893 = vpop.f32.mrb[0].mxu0
  %1894 = vmatprep.mubr.f32.mxu0 0.0
  %1895 = vmatmul.mubr.f32.gmra.mrb[0].mxu0 %v1771
  %v1896 = vpop.f32.mrb[0].mxu0
  %v1897 = vadd.f32 %v1040, %v1896
  %v1898 = vpop.f32.mrb[0].mxu0
  %1899 = vmatprep.mubr.f32.mxu0 0.0
  %1900 = vmatmul.mubr.f32.gmra.mrb[0].mxu0 %v1774
  %v1901 = vpop.f32.mrb[0].mxu0
  %v1902 = vadd.f32 %v1040, %v1901
  %v1903 = vpop.f32.mrb[0].mxu0
  %1904 = vmatprep.mubr.f32.mxu0 0.0
  %1905 = vmatmul.mubr.f32.gmra.mrb[0].mxu0 %v1777
  %v1906 = vpop.f32.mrb[0].mxu0
  %v1907 = vadd.f32 %v1040, %v1906
  %v1908 = vpop.f32.mrb[0].mxu0
  %1909 = vmatprep.mubr.f32.mxu0 0.0
  %1910 = vmatmul.mubr.f32.gmra.mrb[0].mxu0 %v1780
  %v1911 = vpop.f32.mrb[0].mxu0
  %v1912 = vadd.f32 %v1040, %v1911
  %v1913 = vpop.f32.mrb[0].mxu0
  %1914 = vmatprep.mubr.f32.mxu0 0.0
  %1915 = vmatmul.mubr.f32.gmra.mrb[0].mxu0 %v1783
  %v1916 = vpop.f32.mrb[0].mxu0
  %v1917 = vadd.f32 %v1040, %v1916
  %v1918 = vpop.f32.mrb[0].mxu0
  %1919 = vmatprep.mubr.f32.mxu0 0.0
  %1920 = vmatmul.mubr.f32.gmra.mrb[0].mxu0 %v1786
  %v1921 = vpop.f32.mrb[0].mxu0
  %v1922 = vadd.f32 %v1040, %v1921
  %v1923 = vpop.f32.mrb[0].mxu0
  %1924 = vmatprep.mubr.f32.mxu0 0.0
  %1925 = vmatmul.mubr.f32.gmra.mrb[0].mxu0 %v1789
  %v1926 = vpop.f32.mrb[0].mxu0
  %v1927 = vadd.f32 %v1040, %v1926
  %v1928 = vpop.f32.mrb[0].mxu0
  %1929 = vmatprep.mubr.f32.mxu0 0.0
  %1930 = vmatmul.mubr.f32.gmra.mrb[0].mxu0 %v1792
  %v1931 = vpop.f32.mrb[0].mxu0
  %v1932 = vadd.f32 %v1040, %v1931
  %v1933 = vpop.f32.mrb[0].mxu0
  %1934 = vmatprep.mubr.f32.mxu0 0.0
  %1935 = vmatmul.mubr.f32.gmra.mrb[0].mxu0 %v1795
  %v1936 = vpop.f32.mrb[0].mxu0
  %v1937 = vadd.f32 %v1040, %v1936
  %v1938 = vpop.f32.mrb[0].mxu0
  %1939 = vmatprep.mubr.f32.mxu0 0.0
  %1940 = vmatmul.mubr.f32.gmra.mrb[0].mxu0 %v1798
  %v1941 = vpop.f32.mrb[0].mxu0
  %v1942 = vadd.f32 %v1040, %v1941
  %v1943 = vpop.f32.mrb[0].mxu0
  %1944 = vdwg.mxu0
  %v1945 = vmax.f32 %v1867, 0.0
  %v1946 = vmax.f32 %v1872, 0.0
  %v1947 = vmax.f32 %v1877, 0.0
  %v1948 = vmax.f32 %v1882, 0.0
  %v1949 = vmax.f32 %v1887, 0.0
  %v1950 = vmax.f32 %v1892, 0.0
  %v1951 = vmax.f32 %v1897, 0.0
  %v1952 = vmax.f32 %v1902, 0.0
  %v1953 = vmax.f32 %v1907, 0.0
  %v1954 = vmax.f32 %v1912, 0.0
  %v1955 = vmax.f32 %v1917, 0.0
  %v1956 = vmax.f32 %v1922, 0.0
  %v1957 = vmax.f32 %v1927, 0.0
  %v1958 = vmax.f32 %v1932, 0.0
  %v1959 = vmax.f32 %v1937, 0.0
  %v1960 = vmax.f32 %v1942, 0.0
  %v1961 = vmax.f32 %v1720, %v1945
  %v1962 = vmax.f32 %v1721, %v1946
  %v1963 = vmax.f32 %v1722, %v1947
  %v1964 = vmax.f32 %v1723, %v1948
  %v1965 = vmax.f32 %v1724, %v1949
  %v1966 = vmax.f32 %v1725, %v1950
  %v1967 = vmax.f32 %v1726, %v1951
  %v1968 = vmax.f32 %v1727, %v1952
  %v1969 = vmax.f32 %v1728, %v1953
  %v1970 = vmax.f32 %v1729, %v1954
  %v1971 = vmax.f32 %v1730, %v1955
  %v1972 = vmax.f32 %v1731, %v1956
  %v1973 = vmax.f32 %v1732, %v1957
  %v1974 = vmax.f32 %v1733, %v1958
  %v1975 = vmax.f32 %v1734, %v1959
  %v1976 = vmax.f32 %v1735, %v1960
  %1977 = vst.msk [vmem:[#allocation2 + $0x80] sm:$0xff] %vm997, %v1961
  %1978 = vst.msk [vmem:[#allocation2 + $0x88] sm:$0xff] %vm997, %v1962
  %1979 = vst.msk [vmem:[#allocation2 + $0x90] sm:$0xff] %vm997, %v1963
  %1980 = vst.msk [vmem:[#allocation2 + $0x98] sm:$0xff] %vm997, %v1964
  %1981 = vst.msk [vmem:[#allocation2 + $0xa0] sm:$0xff] %vm997, %v1965
  %1982 = vst.msk [vmem:[#allocation2 + $0xa8] sm:$0xff] %vm997, %v1966
  %1983 = vst.msk [vmem:[#allocation2 + $0xb0] sm:$0xff] %vm997, %v1967
  %1984 = vst.msk [vmem:[#allocation2 + $0xb8] sm:$0xff] %vm997, %v1968
  %1985 = vst.msk [vmem:[#allocation2 + $0xc0] sm:$0xff] %vm997, %v1969
  %1986 = vst.msk [vmem:[#allocation2 + $0xc8] sm:$0xff] %vm997, %v1970
  %1987 = vst.msk [vmem:[#allocation2 + $0xd0] sm:$0xff] %vm997, %v1971
  %1988 = vst.msk [vmem:[#allocation2 + $0xd8] sm:$0xff] %vm997, %v1972
  %1989 = vst.msk [vmem:[#allocation2 + $0xe0] sm:$0xff] %vm997, %v1973
  %1990 = vst.msk [vmem:[#allocation2 + $0xe8] sm:$0xff] %vm997, %v1974
  %1991 = vst.msk [vmem:[#allocation2 + $0xf0] sm:$0xff] %vm997, %v1975
  %1992 = vst.msk [vmem:[#allocation2 + $0xf8] sm:$0xff] %vm997, %v1976
  %v1993 = vld [vmem:[%s0 + $0x100] sm:$0xff]
  %v1994 = vld [vmem:[%s0 + $0x108] sm:$0xff]
  %v1995 = vld [vmem:[%s0 + $0x110] sm:$0xff]
  %v1996 = vld [vmem:[%s0 + $0x118] sm:$0xff]
  %v1997 = vld [vmem:[%s0 + $0x120] sm:$0xff]
  %v1998 = vld [vmem:[%s0 + $0x128] sm:$0xff]
  %v1999 = vld [vmem:[%s0 + $0x130] sm:$0xff]
  %v2000 = vld [vmem:[%s0 + $0x138] sm:$0xff]
  %v2001 = vld [vmem:[%s0 + $0x140] sm:$0xff]
  %v2002 = vld [vmem:[%s0 + $0x148] sm:$0xff]
  %v2003 = vld [vmem:[%s0 + $0x150] sm:$0xff]
  %v2004 = vld [vmem:[%s0 + $0x158] sm:$0xff]
  %v2005 = vld [vmem:[%s0 + $0x160] sm:$0xff]
  %v2006 = vld [vmem:[%s0 + $0x168] sm:$0xff]
  %v2007 = vld [vmem:[%s0 + $0x170] sm:$0xff]
  %v2008 = vld [vmem:[%s0 + $0x178] sm:$0xff]
  %v2009 = vld [vmem:[%s1] sm:$0xff]
  %v2010 = vld [vmem:[%s1 + $0x8] sm:$0xff]
  %v2011 = vld [vmem:[%s1 + $0x10] sm:$0xff]
  %v2012 = vld [vmem:[%s1 + $0x18] sm:$0xff]
  %v2013 = vld [vmem:[%s1 + $0x20] sm:$0x1f]
  %v2014 = vld [vmem:[%s2] sm:$0x1]
  %v2016 = vlaneseq
  %v2017 = vshrl.u32 %v2016, 7
  %v2018 = vsub.s32 0, %v2017
  %v2019 = vrot.slane %v2014, %v2018
  %v2022 = vsel %vm60, %v1993, 0
  %v2025 = vsel %vm60, %v1994, 0
  %v2028 = vsel %vm60, %v1995, 0
  %v2031 = vsel %vm60, %v1996, 0
  %v2034 = vsel %vm60, %v1997, 0
  %v2037 = vsel %vm60, %v1998, 0
  %v2040 = vsel %vm60, %v1999, 0
  %v2043 = vsel %vm60, %v2000, 0
  %v2046 = vsel %vm60, %v2001, 0
  %v2049 = vsel %vm60, %v2002, 0
  %v2052 = vsel %vm60, %v2003, 0
  %v2055 = vsel %vm60, %v2004, 0
  %v2058 = vsel %vm60, %v2005, 0
  %v2061 = vsel %vm60, %v2006, 0
  %v2064 = vsel %vm60, %v2007, 0
  %v2067 = vsel %vm60, %v2008, 0
  %v2070 = vsel %vm109, %v2013, 0
  %2072 = vmatprep.subr.mxu0 0.0
  %2073 = vmatpush1.msra.mxu0 %v2009
  %2074 = vmatprep.subr.mxu0 0.0
  %2075 = vmatpush1.msra.mxu0 %v2010
  %2076 = vmatprep.subr.mxu0 0.0
  %2077 = vmatpush1.msra.mxu0 %v2011
  %2078 = vmatprep.subr.mxu0 0.0
  %2079 = vmatpush1.msra.mxu0 %v2012
  %2080 = vmatprep.subr.mxu0 0.0
  %2081 = vmatpush1.msra.mxu0 %v2070
  %2082 = vmatprep.subr.mxu0 0.0
  %2083 = vmatpush1.msra.mxu0 0.0
  %2084 = vmatprep.subr.mxu0 0.0
  %2085 = vmatpush1.msra.mxu0 0.0
  %2086 = vmatprep.subr.mxu0 0.0
  %2087 = vmatpush1.msra.mxu0 0.0
  %2088 = vmatprep.subr.mxu0 0.0
  %2089 = vmatpush1.msra.mxu0 0.0
  %2090 = vmatprep.subr.mxu0 0.0
  %2091 = vmatpush1.msra.mxu0 0.0
  %2092 = vmatprep.subr.mxu0 0.0
  %2093 = vmatpush1.msra.mxu0 0.0
  %2094 = vmatprep.subr.mxu0 0.0
  %2095 = vmatpush1.msra.mxu0 0.0
  %2096 = vmatprep.subr.mxu0 0.0
  %2097 = vmatpush1.msra.mxu0 0.0
  %2098 = vmatprep.subr.mxu0 0.0
  %2099 = vmatpush1.msra.mxu0 0.0
  %2100 = vmatprep.subr.mxu0 0.0
  %2101 = vmatpush1.msra.mxu0 0.0
  %2102 = vmatprep.subr.mxu0 0.0
  %2103 = vmatpush1.msra.mxu0 0.0
  %2104 = vmatprep.subr.mxu0 0.0
  %2105 = vmatpush1.msra.mxu0 0.0
  %2106 = vmatprep.subr.mxu0 0.0
  %2107 = vmatpush1.msra.mxu0 0.0
  %2108 = vmatprep.subr.mxu0 0.0
  %2109 = vmatpush1.msra.mxu0 0.0
  %2110 = vmatprep.subr.mxu0 0.0
  %2111 = vmatpush1.msra.mxu0 0.0
  %2112 = vmatprep.subr.mxu0 0.0
  %2113 = vmatpush1.msra.mxu0 0.0
  %2114 = vmatprep.subr.mxu0 0.0
  %2115 = vmatpush1.msra.mxu0 0.0
  %2116 = vmatprep.subr.mxu0 0.0
  %2117 = vmatpush1.msra.mxu0 0.0
  %2118 = vmatprep.subr.mxu0 0.0
  %2119 = vmatpush1.msra.mxu0 0.0
  %2120 = vmatprep.subr.mxu0 0.0
  %2121 = vmatpush1.msra.mxu0 0.0
  %2122 = vmatprep.subr.mxu0 0.0
  %2123 = vmatpush1.msra.mxu0 0.0
  %2124 = vmatprep.subr.mxu0 0.0
  %2125 = vmatpush1.msra.mxu0 0.0
  %2126 = vmatprep.subr.mxu0 0.0
  %2127 = vmatpush1.msra.mxu0 0.0
  %2128 = vmatprep.subr.mxu0 0.0
  %2129 = vmatpush1.msra.mxu0 0.0
  %2130 = vmatprep.subr.mxu0 0.0
  %2131 = vmatpush1.msra.mxu0 0.0
  %2132 = vmatprep.subr.mxu0 0.0
  %2133 = vmatpush1.msra.mxu0 0.0
  %2134 = vmatprep.subr.mxu0 0.0
  %2135 = vmatpush1.msra.mxu0 0.0
  %2136 = vmatprep.mubr.f32.mxu0 0.0
  %2137 = vmatmul.mubr.f32.gmra.mrb[0].mxu0 %v2022
  %v2138 = vpop.f32.mrb[0].mxu0
  %v2139 = vadd.f32 %v2019, %v2138
  %v2140 = vpop.f32.mrb[0].mxu0
  %2141 = vmatprep.mubr.f32.mxu0 0.0
  %2142 = vmatmul.mubr.f32.gmra.mrb[0].mxu0 %v2025
  %v2143 = vpop.f32.mrb[0].mxu0
  %v2144 = vadd.f32 %v2019, %v2143
  %v2145 = vpop.f32.mrb[0].mxu0
  %2146 = vmatprep.mubr.f32.mxu0 0.0
  %2147 = vmatmul.mubr.f32.gmra.mrb[0].mxu0 %v2028
  %v2148 = vpop.f32.mrb[0].mxu0
  %v2149 = vadd.f32 %v2019, %v2148
  %v2150 = vpop.f32.mrb[0].mxu0
  %2151 = vmatprep.mubr.f32.mxu0 0.0
  %2152 = vmatmul.mubr.f32.gmra.mrb[0].mxu0 %v2031
  %v2153 = vpop.f32.mrb[0].mxu0
  %v2154 = vadd.f32 %v2019, %v2153
  %v2155 = vpop.f32.mrb[0].mxu0
  %2156 = vmatprep.mubr.f32.mxu0 0.0
  %2157 = vmatmul.mubr.f32.gmra.mrb[0].mxu0 %v2034
  %v2158 = vpop.f32.mrb[0].mxu0
  %v2159 = vadd.f32 %v2019, %v2158
  %v2160 = vpop.f32.mrb[0].mxu0
  %2161 = vmatprep.mubr.f32.mxu0 0.0
  %2162 = vmatmul.mubr.f32.gmra.mrb[0].mxu0 %v2037
  %v2163 = vpop.f32.mrb[0].mxu0
  %v2164 = vadd.f32 %v2019, %v2163
  %v2165 = vpop.f32.mrb[0].mxu0
  %2166 = vmatprep.mubr.f32.mxu0 0.0
  %2167 = vmatmul.mubr.f32.gmra.mrb[0].mxu0 %v2040
  %v2168 = vpop.f32.mrb[0].mxu0
  %v2169 = vadd.f32 %v2019, %v2168
  %v2170 = vpop.f32.mrb[0].mxu0
  %2171 = vmatprep.mubr.f32.mxu0 0.0
  %2172 = vmatmul.mubr.f32.gmra.mrb[0].mxu0 %v2043
  %v2173 = vpop.f32.mrb[0].mxu0
  %v2174 = vadd.f32 %v2019, %v2173
  %v2175 = vpop.f32.mrb[0].mxu0
  %2176 = vmatprep.mubr.f32.mxu0 0.0
  %2177 = vmatmul.mubr.f32.gmra.mrb[0].mxu0 %v2046
  %v2178 = vpop.f32.mrb[0].mxu0
  %v2179 = vadd.f32 %v2019, %v2178
  %v2180 = vpop.f32.mrb[0].mxu0
  %2181 = vmatprep.mubr.f32.mxu0 0.0
  %2182 = vmatmul.mubr.f32.gmra.mrb[0].mxu0 %v2049
  %v2183 = vpop.f32.mrb[0].mxu0
  %v2184 = vadd.f32 %v2019, %v2183
  %v2185 = vpop.f32.mrb[0].mxu0
  %2186 = vmatprep.mubr.f32.mxu0 0.0
  %2187 = vmatmul.mubr.f32.gmra.mrb[0].mxu0 %v2052
  %v2188 = vpop.f32.mrb[0].mxu0
  %v2189 = vadd.f32 %v2019, %v2188
  %v2190 = vpop.f32.mrb[0].mxu0
  %2191 = vmatprep.mubr.f32.mxu0 0.0
  %2192 = vmatmul.mubr.f32.gmra.mrb[0].mxu0 %v2055
  %v2193 = vpop.f32.mrb[0].mxu0
  %v2194 = vadd.f32 %v2019, %v2193
  %v2195 = vpop.f32.mrb[0].mxu0
  %2196 = vmatprep.mubr.f32.mxu0 0.0
  %2197 = vmatmul.mubr.f32.gmra.mrb[0].mxu0 %v2058
  %v2198 = vpop.f32.mrb[0].mxu0
  %v2199 = vadd.f32 %v2019, %v2198
  %v2200 = vpop.f32.mrb[0].mxu0
  %2201 = vmatprep.mubr.f32.mxu0 0.0
  %2202 = vmatmul.mubr.f32.gmra.mrb[0].mxu0 %v2061
  %v2203 = vpop.f32.mrb[0].mxu0
  %v2204 = vadd.f32 %v2019, %v2203
  %v2205 = vpop.f32.mrb[0].mxu0
  %2206 = vmatprep.mubr.f32.mxu0 0.0
  %2207 = vmatmul.mubr.f32.gmra.mrb[0].mxu0 %v2064
  %v2208 = vpop.f32.mrb[0].mxu0
  %v2209 = vadd.f32 %v2019, %v2208
  %v2210 = vpop.f32.mrb[0].mxu0
  %2211 = vmatprep.mubr.f32.mxu0 0.0
  %2212 = vmatmul.mubr.f32.gmra.mrb[0].mxu0 %v2067
  %v2213 = vpop.f32.mrb[0].mxu0
  %v2214 = vadd.f32 %v2019, %v2213
  %v2215 = vpop.f32.mrb[0].mxu0
  %2216 = vdwg.mxu0
  %v2217 = vmax.f32 %v2139, 0.0
  %v2218 = vmax.f32 %v2144, 0.0
  %v2219 = vmax.f32 %v2149, 0.0
  %v2220 = vmax.f32 %v2154, 0.0
  %v2221 = vmax.f32 %v2159, 0.0
  %v2222 = vmax.f32 %v2164, 0.0
  %v2223 = vmax.f32 %v2169, 0.0
  %v2224 = vmax.f32 %v2174, 0.0
  %v2225 = vmax.f32 %v2179, 0.0
  %v2226 = vmax.f32 %v2184, 0.0
  %v2227 = vmax.f32 %v2189, 0.0
  %v2228 = vmax.f32 %v2194, 0.0
  %v2229 = vmax.f32 %v2199, 0.0
  %v2230 = vmax.f32 %v2204, 0.0
  %v2231 = vmax.f32 %v2209, 0.0
  %v2232 = vmax.f32 %v2214, 0.0
  %v2233 = vld [vmem:[%s0 + $0x300] sm:$0xff]
  %v2234 = vld [vmem:[%s0 + $0x308] sm:$0xff]
  %v2235 = vld [vmem:[%s0 + $0x310] sm:$0xff]
  %v2236 = vld [vmem:[%s0 + $0x318] sm:$0xff]
  %v2237 = vld [vmem:[%s0 + $0x320] sm:$0xff]
  %v2238 = vld [vmem:[%s0 + $0x328] sm:$0xff]
  %v2239 = vld [vmem:[%s0 + $0x330] sm:$0xff]
  %v2240 = vld [vmem:[%s0 + $0x338] sm:$0xff]
  %v2241 = vld [vmem:[%s0 + $0x340] sm:$0xff]
  %v2242 = vld [vmem:[%s0 + $0x348] sm:$0xff]
  %v2243 = vld [vmem:[%s0 + $0x350] sm:$0xff]
  %v2244 = vld [vmem:[%s0 + $0x358] sm:$0xff]
  %v2245 = vld [vmem:[%s0 + $0x360] sm:$0xff]
  %v2246 = vld [vmem:[%s0 + $0x368] sm:$0xff]
  %v2247 = vld [vmem:[%s0 + $0x370] sm:$0xff]
  %v2248 = vld [vmem:[%s0 + $0x378] sm:$0xff]
  %v2250 = vsel %vm60, %v2233, 0
  %v2253 = vsel %vm60, %v2234, 0
  %v2256 = vsel %vm60, %v2235, 0
  %v2259 = vsel %vm60, %v2236, 0
  %v2262 = vsel %vm60, %v2237, 0
  %v2265 = vsel %vm60, %v2238, 0
  %v2268 = vsel %vm60, %v2239, 0
  %v2271 = vsel %vm60, %v2240, 0
  %v2274 = vsel %vm60, %v2241, 0
  %v2277 = vsel %vm60, %v2242, 0
  %v2280 = vsel %vm60, %v2243, 0
  %v2283 = vsel %vm60, %v2244, 0
  %v2286 = vsel %vm60, %v2245, 0
  %v2289 = vsel %vm60, %v2246, 0
  %v2292 = vsel %vm60, %v2247, 0
  %v2295 = vsel %vm60, %v2248, 0
  %2297 = vmatprep.subr.mxu0 0.0
  %2298 = vmatpush1.msra.mxu0 %v2009
  %2299 = vmatprep.subr.mxu0 0.0
  %2300 = vmatpush1.msra.mxu0 %v2010
  %2301 = vmatprep.subr.mxu0 0.0
  %2302 = vmatpush1.msra.mxu0 %v2011
  %2303 = vmatprep.subr.mxu0 0.0
  %2304 = vmatpush1.msra.mxu0 %v2012
  %2305 = vmatprep.subr.mxu0 0.0
  %2306 = vmatpush1.msra.mxu0 %v2070
  %2307 = vmatprep.subr.mxu0 0.0
  %2308 = vmatpush1.msra.mxu0 0.0
  %2309 = vmatprep.subr.mxu0 0.0
  %2310 = vmatpush1.msra.mxu0 0.0
  %2311 = vmatprep.subr.mxu0 0.0
  %2312 = vmatpush1.msra.mxu0 0.0
  %2313 = vmatprep.subr.mxu0 0.0
  %2314 = vmatpush1.msra.mxu0 0.0
  %2315 = vmatprep.subr.mxu0 0.0
  %2316 = vmatpush1.msra.mxu0 0.0
  %2317 = vmatprep.subr.mxu0 0.0
  %2318 = vmatpush1.msra.mxu0 0.0
  %2319 = vmatprep.subr.mxu0 0.0
  %2320 = vmatpush1.msra.mxu0 0.0
  %2321 = vmatprep.subr.mxu0 0.0
  %2322 = vmatpush1.msra.mxu0 0.0
  %2323 = vmatprep.subr.mxu0 0.0
  %2324 = vmatpush1.msra.mxu0 0.0
  %2325 = vmatprep.subr.mxu0 0.0
  %2326 = vmatpush1.msra.mxu0 0.0
  %2327 = vmatprep.subr.mxu0 0.0
  %2328 = vmatpush1.msra.mxu0 0.0
  %2329 = vmatprep.subr.mxu0 0.0
  %2330 = vmatpush1.msra.mxu0 0.0
  %2331 = vmatprep.subr.mxu0 0.0
  %2332 = vmatpush1.msra.mxu0 0.0
  %2333 = vmatprep.subr.mxu0 0.0
  %2334 = vmatpush1.msra.mxu0 0.0
  %2335 = vmatprep.subr.mxu0 0.0
  %2336 = vmatpush1.msra.mxu0 0.0
  %2337 = vmatprep.subr.mxu0 0.0
  %2338 = vmatpush1.msra.mxu0 0.0
  %2339 = vmatprep.subr.mxu0 0.0
  %2340 = vmatpush1.msra.mxu0 0.0
  %2341 = vmatprep.subr.mxu0 0.0
  %2342 = vmatpush1.msra.mxu0 0.0
  %2343 = vmatprep.subr.mxu0 0.0
  %2344 = vmatpush1.msra.mxu0 0.0
  %2345 = vmatprep.subr.mxu0 0.0
  %2346 = vmatpush1.msra.mxu0 0.0
  %2347 = vmatprep.subr.mxu0 0.0
  %2348 = vmatpush1.msra.mxu0 0.0
  %2349 = vmatprep.subr.mxu0 0.0
  %2350 = vmatpush1.msra.mxu0 0.0
  %2351 = vmatprep.subr.mxu0 0.0
  %2352 = vmatpush1.msra.mxu0 0.0
  %2353 = vmatprep.subr.mxu0 0.0
  %2354 = vmatpush1.msra.mxu0 0.0
  %2355 = vmatprep.subr.mxu0 0.0
  %2356 = vmatpush1.msra.mxu0 0.0
  %2357 = vmatprep.subr.mxu0 0.0
  %2358 = vmatpush1.msra.mxu0 0.0
  %2359 = vmatprep.subr.mxu0 0.0
  %2360 = vmatpush1.msra.mxu0 0.0
  %2361 = vmatprep.mubr.f32.mxu0 0.0
  %2362 = vmatmul.mubr.f32.gmra.mrb[0].mxu0 %v2250
  %v2363 = vpop.f32.mrb[0].mxu0
  %v2364 = vadd.f32 %v2019, %v2363
  %v2365 = vpop.f32.mrb[0].mxu0
  %2366 = vmatprep.mubr.f32.mxu0 0.0
  %2367 = vmatmul.mubr.f32.gmra.mrb[0].mxu0 %v2253
  %v2368 = vpop.f32.mrb[0].mxu0
  %v2369 = vadd.f32 %v2019, %v2368
  %v2370 = vpop.f32.mrb[0].mxu0
  %2371 = vmatprep.mubr.f32.mxu0 0.0
  %2372 = vmatmul.mubr.f32.gmra.mrb[0].mxu0 %v2256
  %v2373 = vpop.f32.mrb[0].mxu0
  %v2374 = vadd.f32 %v2019, %v2373
  %v2375 = vpop.f32.mrb[0].mxu0
  %2376 = vmatprep.mubr.f32.mxu0 0.0
  %2377 = vmatmul.mubr.f32.gmra.mrb[0].mxu0 %v2259
  %v2378 = vpop.f32.mrb[0].mxu0
  %v2379 = vadd.f32 %v2019, %v2378
  %v2380 = vpop.f32.mrb[0].mxu0
  %2381 = vmatprep.mubr.f32.mxu0 0.0
  %2382 = vmatmul.mubr.f32.gmra.mrb[0].mxu0 %v2262
  %v2383 = vpop.f32.mrb[0].mxu0
  %v2384 = vadd.f32 %v2019, %v2383
  %v2385 = vpop.f32.mrb[0].mxu0
  %2386 = vmatprep.mubr.f32.mxu0 0.0
  %2387 = vmatmul.mubr.f32.gmra.mrb[0].mxu0 %v2265
  %v2388 = vpop.f32.mrb[0].mxu0
  %v2389 = vadd.f32 %v2019, %v2388
  %v2390 = vpop.f32.mrb[0].mxu0
  %2391 = vmatprep.mubr.f32.mxu0 0.0
  %2392 = vmatmul.mubr.f32.gmra.mrb[0].mxu0 %v2268
  %v2393 = vpop.f32.mrb[0].mxu0
  %v2394 = vadd.f32 %v2019, %v2393
  %v2395 = vpop.f32.mrb[0].mxu0
  %2396 = vmatprep.mubr.f32.mxu0 0.0
  %2397 = vmatmul.mubr.f32.gmra.mrb[0].mxu0 %v2271
  %v2398 = vpop.f32.mrb[0].mxu0
  %v2399 = vadd.f32 %v2019, %v2398
  %v2400 = vpop.f32.mrb[0].mxu0
  %2401 = vmatprep.mubr.f32.mxu0 0.0
  %2402 = vmatmul.mubr.f32.gmra.mrb[0].mxu0 %v2274
  %v2403 = vpop.f32.mrb[0].mxu0
  %v2404 = vadd.f32 %v2019, %v2403
  %v2405 = vpop.f32.mrb[0].mxu0
  %2406 = vmatprep.mubr.f32.mxu0 0.0
  %2407 = vmatmul.mubr.f32.gmra.mrb[0].mxu0 %v2277
  %v2408 = vpop.f32.mrb[0].mxu0
  %v2409 = vadd.f32 %v2019, %v2408
  %v2410 = vpop.f32.mrb[0].mxu0
  %2411 = vmatprep.mubr.f32.mxu0 0.0
  %2412 = vmatmul.mubr.f32.gmra.mrb[0].mxu0 %v2280
  %v2413 = vpop.f32.mrb[0].mxu0
  %v2414 = vadd.f32 %v2019, %v2413
  %v2415 = vpop.f32.mrb[0].mxu0
  %2416 = vmatprep.mubr.f32.mxu0 0.0
  %2417 = vmatmul.mubr.f32.gmra.mrb[0].mxu0 %v2283
  %v2418 = vpop.f32.mrb[0].mxu0
  %v2419 = vadd.f32 %v2019, %v2418
  %v2420 = vpop.f32.mrb[0].mxu0
  %2421 = vmatprep.mubr.f32.mxu0 0.0
  %2422 = vmatmul.mubr.f32.gmra.mrb[0].mxu0 %v2286
  %v2423 = vpop.f32.mrb[0].mxu0
  %v2424 = vadd.f32 %v2019, %v2423
  %v2425 = vpop.f32.mrb[0].mxu0
  %2426 = vmatprep.mubr.f32.mxu0 0.0
  %2427 = vmatmul.mubr.f32.gmra.mrb[0].mxu0 %v2289
  %v2428 = vpop.f32.mrb[0].mxu0
  %v2429 = vadd.f32 %v2019, %v2428
  %v2430 = vpop.f32.mrb[0].mxu0
  %2431 = vmatprep.mubr.f32.mxu0 0.0
  %2432 = vmatmul.mubr.f32.gmra.mrb[0].mxu0 %v2292
  %v2433 = vpop.f32.mrb[0].mxu0
  %v2434 = vadd.f32 %v2019, %v2433
  %v2435 = vpop.f32.mrb[0].mxu0
  %2436 = vmatprep.mubr.f32.mxu0 0.0
  %2437 = vmatmul.mubr.f32.gmra.mrb[0].mxu0 %v2295
  %v2438 = vpop.f32.mrb[0].mxu0
  %v2439 = vadd.f32 %v2019, %v2438
  %v2440 = vpop.f32.mrb[0].mxu0
  %2441 = vdwg.mxu0
  %v2442 = vmax.f32 %v2364, 0.0
  %v2443 = vmax.f32 %v2369, 0.0
  %v2444 = vmax.f32 %v2374, 0.0
  %v2445 = vmax.f32 %v2379, 0.0
  %v2446 = vmax.f32 %v2384, 0.0
  %v2447 = vmax.f32 %v2389, 0.0
  %v2448 = vmax.f32 %v2394, 0.0
  %v2449 = vmax.f32 %v2399, 0.0
  %v2450 = vmax.f32 %v2404, 0.0
  %v2451 = vmax.f32 %v2409, 0.0
  %v2452 = vmax.f32 %v2414, 0.0
  %v2453 = vmax.f32 %v2419, 0.0
  %v2454 = vmax.f32 %v2424, 0.0
  %v2455 = vmax.f32 %v2429, 0.0
  %v2456 = vmax.f32 %v2434, 0.0
  %v2457 = vmax.f32 %v2439, 0.0
  %v2458 = vmax.f32 %v2217, %v2442
  %v2459 = vmax.f32 %v2218, %v2443
  %v2460 = vmax.f32 %v2219, %v2444
  %v2461 = vmax.f32 %v2220, %v2445
  %v2462 = vmax.f32 %v2221, %v2446
  %v2463 = vmax.f32 %v2222, %v2447
  %v2464 = vmax.f32 %v2223, %v2448
  %v2465 = vmax.f32 %v2224, %v2449
  %v2466 = vmax.f32 %v2225, %v2450
  %v2467 = vmax.f32 %v2226, %v2451
  %v2468 = vmax.f32 %v2227, %v2452
  %v2469 = vmax.f32 %v2228, %v2453
  %v2470 = vmax.f32 %v2229, %v2454
  %v2471 = vmax.f32 %v2230, %v2455
  %v2472 = vmax.f32 %v2231, %v2456
  %v2473 = vmax.f32 %v2232, %v2457
  %v2474 = vld [vmem:[%s0 + $0x500] sm:$0xff]
  %v2475 = vld [vmem:[%s0 + $0x508] sm:$0xff]
  %v2476 = vld [vmem:[%s0 + $0x510] sm:$0xff]
  %v2477 = vld [vmem:[%s0 + $0x518] sm:$0xff]
  %v2478 = vld [vmem:[%s0 + $0x520] sm:$0xff]
  %v2479 = vld [vmem:[%s0 + $0x528] sm:$0xff]
  %v2480 = vld [vmem:[%s0 + $0x530] sm:$0xff]
  %v2481 = vld [vmem:[%s0 + $0x538] sm:$0xff]
  %v2482 = vld [vmem:[%s0 + $0x540] sm:$0xff]
  %v2483 = vld [vmem:[%s0 + $0x548] sm:$0xff]
  %v2484 = vld [vmem:[%s0 + $0x550] sm:$0xff]
  %v2485 = vld [vmem:[%s0 + $0x558] sm:$0xff]
  %v2486 = vld [vmem:[%s0 + $0x560] sm:$0xff]
  %v2487 = vld [vmem:[%s0 + $0x568] sm:$0xff]
  %v2488 = vld [vmem:[%s0 + $0x570] sm:$0xff]
  %v2489 = vld [vmem:[%s0 + $0x578] sm:$0xff]
  %v2491 = vsel %vm60, %v2474, 0
  %v2494 = vsel %vm60, %v2475, 0
  %v2497 = vsel %vm60, %v2476, 0
  %v2500 = vsel %vm60, %v2477, 0
  %v2503 = vsel %vm60, %v2478, 0
  %v2506 = vsel %vm60, %v2479, 0
  %v2509 = vsel %vm60, %v2480, 0
  %v2512 = vsel %vm60, %v2481, 0
  %v2515 = vsel %vm60, %v2482, 0
  %v2518 = vsel %vm60, %v2483, 0
  %v2521 = vsel %vm60, %v2484, 0
  %v2524 = vsel %vm60, %v2485, 0
  %v2527 = vsel %vm60, %v2486, 0
  %v2530 = vsel %vm60, %v2487, 0
  %v2533 = vsel %vm60, %v2488, 0
  %v2536 = vsel %vm60, %v2489, 0
  %2538 = vmatprep.subr.mxu0 0.0
  %2539 = vmatpush1.msra.mxu0 %v2009
  %2540 = vmatprep.subr.mxu0 0.0
  %2541 = vmatpush1.msra.mxu0 %v2010
  %2542 = vmatprep.subr.mxu0 0.0
  %2543 = vmatpush1.msra.mxu0 %v2011
  %2544 = vmatprep.subr.mxu0 0.0
  %2545 = vmatpush1.msra.mxu0 %v2012
  %2546 = vmatprep.subr.mxu0 0.0
  %2547 = vmatpush1.msra.mxu0 %v2070
  %2548 = vmatprep.subr.mxu0 0.0
  %2549 = vmatpush1.msra.mxu0 0.0
  %2550 = vmatprep.subr.mxu0 0.0
  %2551 = vmatpush1.msra.mxu0 0.0
  %2552 = vmatprep.subr.mxu0 0.0
  %2553 = vmatpush1.msra.mxu0 0.0
  %2554 = vmatprep.subr.mxu0 0.0
  %2555 = vmatpush1.msra.mxu0 0.0
  %2556 = vmatprep.subr.mxu0 0.0
  %2557 = vmatpush1.msra.mxu0 0.0
  %2558 = vmatprep.subr.mxu0 0.0
  %2559 = vmatpush1.msra.mxu0 0.0
  %2560 = vmatprep.subr.mxu0 0.0
  %2561 = vmatpush1.msra.mxu0 0.0
  %2562 = vmatprep.subr.mxu0 0.0
  %2563 = vmatpush1.msra.mxu0 0.0
  %2564 = vmatprep.subr.mxu0 0.0
  %2565 = vmatpush1.msra.mxu0 0.0
  %2566 = vmatprep.subr.mxu0 0.0
  %2567 = vmatpush1.msra.mxu0 0.0
  %2568 = vmatprep.subr.mxu0 0.0
  %2569 = vmatpush1.msra.mxu0 0.0
  %2570 = vmatprep.subr.mxu0 0.0
  %2571 = vmatpush1.msra.mxu0 0.0
  %2572 = vmatprep.subr.mxu0 0.0
  %2573 = vmatpush1.msra.mxu0 0.0
  %2574 = vmatprep.subr.mxu0 0.0
  %2575 = vmatpush1.msra.mxu0 0.0
  %2576 = vmatprep.subr.mxu0 0.0
  %2577 = vmatpush1.msra.mxu0 0.0
  %2578 = vmatprep.subr.mxu0 0.0
  %2579 = vmatpush1.msra.mxu0 0.0
  %2580 = vmatprep.subr.mxu0 0.0
  %2581 = vmatpush1.msra.mxu0 0.0
  %2582 = vmatprep.subr.mxu0 0.0
  %2583 = vmatpush1.msra.mxu0 0.0
  %2584 = vmatprep.subr.mxu0 0.0
  %2585 = vmatpush1.msra.mxu0 0.0
  %2586 = vmatprep.subr.mxu0 0.0
  %2587 = vmatpush1.msra.mxu0 0.0
  %2588 = vmatprep.subr.mxu0 0.0
  %2589 = vmatpush1.msra.mxu0 0.0
  %2590 = vmatprep.subr.mxu0 0.0
  %2591 = vmatpush1.msra.mxu0 0.0
  %2592 = vmatprep.subr.mxu0 0.0
  %2593 = vmatpush1.msra.mxu0 0.0
  %2594 = vmatprep.subr.mxu0 0.0
  %2595 = vmatpush1.msra.mxu0 0.0
  %2596 = vmatprep.subr.mxu0 0.0
  %2597 = vmatpush1.msra.mxu0 0.0
  %2598 = vmatprep.subr.mxu0 0.0
  %2599 = vmatpush1.msra.mxu0 0.0
  %2600 = vmatprep.subr.mxu0 0.0
  %2601 = vmatpush1.msra.mxu0 0.0
  %2602 = vmatprep.mubr.f32.mxu0 0.0
  %2603 = vmatmul.mubr.f32.gmra.mrb[0].mxu0 %v2491
  %v2604 = vpop.f32.mrb[0].mxu0
  %v2605 = vadd.f32 %v2019, %v2604
  %v2606 = vpop.f32.mrb[0].mxu0
  %2607 = vmatprep.mubr.f32.mxu0 0.0
  %2608 = vmatmul.mubr.f32.gmra.mrb[0].mxu0 %v2494
  %v2609 = vpop.f32.mrb[0].mxu0
  %v2610 = vadd.f32 %v2019, %v2609
  %v2611 = vpop.f32.mrb[0].mxu0
  %2612 = vmatprep.mubr.f32.mxu0 0.0
  %2613 = vmatmul.mubr.f32.gmra.mrb[0].mxu0 %v2497
  %v2614 = vpop.f32.mrb[0].mxu0
  %v2615 = vadd.f32 %v2019, %v2614
  %v2616 = vpop.f32.mrb[0].mxu0
  %2617 = vmatprep.mubr.f32.mxu0 0.0
  %2618 = vmatmul.mubr.f32.gmra.mrb[0].mxu0 %v2500
  %v2619 = vpop.f32.mrb[0].mxu0
  %v2620 = vadd.f32 %v2019, %v2619
  %v2621 = vpop.f32.mrb[0].mxu0
  %2622 = vmatprep.mubr.f32.mxu0 0.0
  %2623 = vmatmul.mubr.f32.gmra.mrb[0].mxu0 %v2503
  %v2624 = vpop.f32.mrb[0].mxu0
  %v2625 = vadd.f32 %v2019, %v2624
  %v2626 = vpop.f32.mrb[0].mxu0
  %2627 = vmatprep.mubr.f32.mxu0 0.0
  %2628 = vmatmul.mubr.f32.gmra.mrb[0].mxu0 %v2506
  %v2629 = vpop.f32.mrb[0].mxu0
  %v2630 = vadd.f32 %v2019, %v2629
  %v2631 = vpop.f32.mrb[0].mxu0
  %2632 = vmatprep.mubr.f32.mxu0 0.0
  %2633 = vmatmul.mubr.f32.gmra.mrb[0].mxu0 %v2509
  %v2634 = vpop.f32.mrb[0].mxu0
  %v2635 = vadd.f32 %v2019, %v2634
  %v2636 = vpop.f32.mrb[0].mxu0
  %2637 = vmatprep.mubr.f32.mxu0 0.0
  %2638 = vmatmul.mubr.f32.gmra.mrb[0].mxu0 %v2512
  %v2639 = vpop.f32.mrb[0].mxu0
  %v2640 = vadd.f32 %v2019, %v2639
  %v2641 = vpop.f32.mrb[0].mxu0
  %2642 = vmatprep.mubr.f32.mxu0 0.0
  %2643 = vmatmul.mubr.f32.gmra.mrb[0].mxu0 %v2515
  %v2644 = vpop.f32.mrb[0].mxu0
  %v2645 = vadd.f32 %v2019, %v2644
  %v2646 = vpop.f32.mrb[0].mxu0
  %2647 = vmatprep.mubr.f32.mxu0 0.0
  %2648 = vmatmul.mubr.f32.gmra.mrb[0].mxu0 %v2518
  %v2649 = vpop.f32.mrb[0].mxu0
  %v2650 = vadd.f32 %v2019, %v2649
  %v2651 = vpop.f32.mrb[0].mxu0
  %2652 = vmatprep.mubr.f32.mxu0 0.0
  %2653 = vmatmul.mubr.f32.gmra.mrb[0].mxu0 %v2521
  %v2654 = vpop.f32.mrb[0].mxu0
  %v2655 = vadd.f32 %v2019, %v2654
  %v2656 = vpop.f32.mrb[0].mxu0
  %2657 = vmatprep.mubr.f32.mxu0 0.0
  %2658 = vmatmul.mubr.f32.gmra.mrb[0].mxu0 %v2524
  %v2659 = vpop.f32.mrb[0].mxu0
  %v2660 = vadd.f32 %v2019, %v2659
  %v2661 = vpop.f32.mrb[0].mxu0
  %2662 = vmatprep.mubr.f32.mxu0 0.0
  %2663 = vmatmul.mubr.f32.gmra.mrb[0].mxu0 %v2527
  %v2664 = vpop.f32.mrb[0].mxu0
  %v2665 = vadd.f32 %v2019, %v2664
  %v2666 = vpop.f32.mrb[0].mxu0
  %2667 = vmatprep.mubr.f32.mxu0 0.0
  %2668 = vmatmul.mubr.f32.gmra.mrb[0].mxu0 %v2530
  %v2669 = vpop.f32.mrb[0].mxu0
  %v2670 = vadd.f32 %v2019, %v2669
  %v2671 = vpop.f32.mrb[0].mxu0
  %2672 = vmatprep.mubr.f32.mxu0 0.0
  %2673 = vmatmul.mubr.f32.gmra.mrb[0].mxu0 %v2533
  %v2674 = vpop.f32.mrb[0].mxu0
  %v2675 = vadd.f32 %v2019, %v2674
  %v2676 = vpop.f32.mrb[0].mxu0
  %2677 = vmatprep.mubr.f32.mxu0 0.0
  %2678 = vmatmul.mubr.f32.gmra.mrb[0].mxu0 %v2536
  %v2679 = vpop.f32.mrb[0].mxu0
  %v2680 = vadd.f32 %v2019, %v2679
  %v2681 = vpop.f32.mrb[0].mxu0
  %2682 = vdwg.mxu0
  %v2683 = vmax.f32 %v2605, 0.0
  %v2684 = vmax.f32 %v2610, 0.0
  %v2685 = vmax.f32 %v2615, 0.0
  %v2686 = vmax.f32 %v2620, 0.0
  %v2687 = vmax.f32 %v2625, 0.0
  %v2688 = vmax.f32 %v2630, 0.0
  %v2689 = vmax.f32 %v2635, 0.0
  %v2690 = vmax.f32 %v2640, 0.0
  %v2691 = vmax.f32 %v2645, 0.0
  %v2692 = vmax.f32 %v2650, 0.0
  %v2693 = vmax.f32 %v2655, 0.0
  %v2694 = vmax.f32 %v2660, 0.0
  %v2695 = vmax.f32 %v2665, 0.0
  %v2696 = vmax.f32 %v2670, 0.0
  %v2697 = vmax.f32 %v2675, 0.0
  %v2698 = vmax.f32 %v2680, 0.0
  %v2699 = vmax.f32 %v2458, %v2683
  %v2700 = vmax.f32 %v2459, %v2684
  %v2701 = vmax.f32 %v2460, %v2685
  %v2702 = vmax.f32 %v2461, %v2686
  %v2703 = vmax.f32 %v2462, %v2687
  %v2704 = vmax.f32 %v2463, %v2688
  %v2705 = vmax.f32 %v2464, %v2689
  %v2706 = vmax.f32 %v2465, %v2690
  %v2707 = vmax.f32 %v2466, %v2691
  %v2708 = vmax.f32 %v2467, %v2692
  %v2709 = vmax.f32 %v2468, %v2693
  %v2710 = vmax.f32 %v2469, %v2694
  %v2711 = vmax.f32 %v2470, %v2695
  %v2712 = vmax.f32 %v2471, %v2696
  %v2713 = vmax.f32 %v2472, %v2697
  %v2714 = vmax.f32 %v2473, %v2698
  %v2715 = vld [vmem:[%s0 + $0x700] sm:$0xff]
  %v2716 = vld [vmem:[%s0 + $0x708] sm:$0xff]
  %v2717 = vld [vmem:[%s0 + $0x710] sm:$0xff]
  %v2718 = vld [vmem:[%s0 + $0x718] sm:$0xff]
  %v2719 = vld [vmem:[%s0 + $0x720] sm:$0xff]
  %v2720 = vld [vmem:[%s0 + $0x728] sm:$0xff]
  %v2721 = vld [vmem:[%s0 + $0x730] sm:$0xff]
  %v2722 = vld [vmem:[%s0 + $0x738] sm:$0xff]
  %v2723 = vld [vmem:[%s0 + $0x740] sm:$0xff]
  %v2724 = vld [vmem:[%s0 + $0x748] sm:$0xff]
  %v2725 = vld [vmem:[%s0 + $0x750] sm:$0xff]
  %v2726 = vld [vmem:[%s0 + $0x758] sm:$0xff]
  %v2727 = vld [vmem:[%s0 + $0x760] sm:$0xff]
  %v2728 = vld [vmem:[%s0 + $0x768] sm:$0xff]
  %v2729 = vld [vmem:[%s0 + $0x770] sm:$0xff]
  %v2730 = vld [vmem:[%s0 + $0x778] sm:$0xff]
  %v2732 = vsel %vm60, %v2715, 0
  %v2735 = vsel %vm60, %v2716, 0
  %v2738 = vsel %vm60, %v2717, 0
  %v2741 = vsel %vm60, %v2718, 0
  %v2744 = vsel %vm60, %v2719, 0
  %v2747 = vsel %vm60, %v2720, 0
  %v2750 = vsel %vm60, %v2721, 0
  %v2753 = vsel %vm60, %v2722, 0
  %v2756 = vsel %vm60, %v2723, 0
  %v2759 = vsel %vm60, %v2724, 0
  %v2762 = vsel %vm60, %v2725, 0
  %v2765 = vsel %vm60, %v2726, 0
  %v2768 = vsel %vm60, %v2727, 0
  %v2771 = vsel %vm60, %v2728, 0
  %v2774 = vsel %vm60, %v2729, 0
  %v2777 = vsel %vm60, %v2730, 0
  %2779 = vmatprep.subr.mxu0 0.0
  %2780 = vmatpush1.msra.mxu0 %v2009
  %2781 = vmatprep.subr.mxu0 0.0
  %2782 = vmatpush1.msra.mxu0 %v2010
  %2783 = vmatprep.subr.mxu0 0.0
  %2784 = vmatpush1.msra.mxu0 %v2011
  %2785 = vmatprep.subr.mxu0 0.0
  %2786 = vmatpush1.msra.mxu0 %v2012
  %2787 = vmatprep.subr.mxu0 0.0
  %2788 = vmatpush1.msra.mxu0 %v2070
  %2789 = vmatprep.subr.mxu0 0.0
  %2790 = vmatpush1.msra.mxu0 0.0
  %2791 = vmatprep.subr.mxu0 0.0
  %2792 = vmatpush1.msra.mxu0 0.0
  %2793 = vmatprep.subr.mxu0 0.0
  %2794 = vmatpush1.msra.mxu0 0.0
  %2795 = vmatprep.subr.mxu0 0.0
  %2796 = vmatpush1.msra.mxu0 0.0
  %2797 = vmatprep.subr.mxu0 0.0
  %2798 = vmatpush1.msra.mxu0 0.0
  %2799 = vmatprep.subr.mxu0 0.0
  %2800 = vmatpush1.msra.mxu0 0.0
  %2801 = vmatprep.subr.mxu0 0.0
  %2802 = vmatpush1.msra.mxu0 0.0
  %2803 = vmatprep.subr.mxu0 0.0
  %2804 = vmatpush1.msra.mxu0 0.0
  %2805 = vmatprep.subr.mxu0 0.0
  %2806 = vmatpush1.msra.mxu0 0.0
  %2807 = vmatprep.subr.mxu0 0.0
  %2808 = vmatpush1.msra.mxu0 0.0
  %2809 = vmatprep.subr.mxu0 0.0
  %2810 = vmatpush1.msra.mxu0 0.0
  %2811 = vmatprep.subr.mxu0 0.0
  %2812 = vmatpush1.msra.mxu0 0.0
  %2813 = vmatprep.subr.mxu0 0.0
  %2814 = vmatpush1.msra.mxu0 0.0
  %2815 = vmatprep.subr.mxu0 0.0
  %2816 = vmatpush1.msra.mxu0 0.0
  %2817 = vmatprep.subr.mxu0 0.0
  %2818 = vmatpush1.msra.mxu0 0.0
  %2819 = vmatprep.subr.mxu0 0.0
  %2820 = vmatpush1.msra.mxu0 0.0
  %2821 = vmatprep.subr.mxu0 0.0
  %2822 = vmatpush1.msra.mxu0 0.0
  %2823 = vmatprep.subr.mxu0 0.0
  %2824 = vmatpush1.msra.mxu0 0.0
  %2825 = vmatprep.subr.mxu0 0.0
  %2826 = vmatpush1.msra.mxu0 0.0
  %2827 = vmatprep.subr.mxu0 0.0
  %2828 = vmatpush1.msra.mxu0 0.0
  %2829 = vmatprep.subr.mxu0 0.0
  %2830 = vmatpush1.msra.mxu0 0.0
  %2831 = vmatprep.subr.mxu0 0.0
  %2832 = vmatpush1.msra.mxu0 0.0
  %2833 = vmatprep.subr.mxu0 0.0
  %2834 = vmatpush1.msra.mxu0 0.0
  %2835 = vmatprep.subr.mxu0 0.0
  %2836 = vmatpush1.msra.mxu0 0.0
  %2837 = vmatprep.subr.mxu0 0.0
  %2838 = vmatpush1.msra.mxu0 0.0
  %2839 = vmatprep.subr.mxu0 0.0
  %2840 = vmatpush1.msra.mxu0 0.0
  %2841 = vmatprep.subr.mxu0 0.0
  %2842 = vmatpush1.msra.mxu0 0.0
  %2843 = vmatprep.mubr.f32.mxu0 0.0
  %2844 = vmatmul.mubr.f32.gmra.mrb[0].mxu0 %v2732
  %v2845 = vpop.f32.mrb[0].mxu0
  %v2846 = vadd.f32 %v2019, %v2845
  %v2847 = vpop.f32.mrb[0].mxu0
  %2848 = vmatprep.mubr.f32.mxu0 0.0
  %2849 = vmatmul.mubr.f32.gmra.mrb[0].mxu0 %v2735
  %v2850 = vpop.f32.mrb[0].mxu0
  %v2851 = vadd.f32 %v2019, %v2850
  %v2852 = vpop.f32.mrb[0].mxu0
  %2853 = vmatprep.mubr.f32.mxu0 0.0
  %2854 = vmatmul.mubr.f32.gmra.mrb[0].mxu0 %v2738
  %v2855 = vpop.f32.mrb[0].mxu0
  %v2856 = vadd.f32 %v2019, %v2855
  %v2857 = vpop.f32.mrb[0].mxu0
  %2858 = vmatprep.mubr.f32.mxu0 0.0
  %2859 = vmatmul.mubr.f32.gmra.mrb[0].mxu0 %v2741
  %v2860 = vpop.f32.mrb[0].mxu0
  %v2861 = vadd.f32 %v2019, %v2860
  %v2862 = vpop.f32.mrb[0].mxu0
  %2863 = vmatprep.mubr.f32.mxu0 0.0
  %2864 = vmatmul.mubr.f32.gmra.mrb[0].mxu0 %v2744
  %v2865 = vpop.f32.mrb[0].mxu0
  %v2866 = vadd.f32 %v2019, %v2865
  %v2867 = vpop.f32.mrb[0].mxu0
  %2868 = vmatprep.mubr.f32.mxu0 0.0
  %2869 = vmatmul.mubr.f32.gmra.mrb[0].mxu0 %v2747
  %v2870 = vpop.f32.mrb[0].mxu0
  %v2871 = vadd.f32 %v2019, %v2870
  %v2872 = vpop.f32.mrb[0].mxu0
  %2873 = vmatprep.mubr.f32.mxu0 0.0
  %2874 = vmatmul.mubr.f32.gmra.mrb[0].mxu0 %v2750
  %v2875 = vpop.f32.mrb[0].mxu0
  %v2876 = vadd.f32 %v2019, %v2875
  %v2877 = vpop.f32.mrb[0].mxu0
  %2878 = vmatprep.mubr.f32.mxu0 0.0
  %2879 = vmatmul.mubr.f32.gmra.mrb[0].mxu0 %v2753
  %v2880 = vpop.f32.mrb[0].mxu0
  %v2881 = vadd.f32 %v2019, %v2880
  %v2882 = vpop.f32.mrb[0].mxu0
  %2883 = vmatprep.mubr.f32.mxu0 0.0
  %2884 = vmatmul.mubr.f32.gmra.mrb[0].mxu0 %v2756
  %v2885 = vpop.f32.mrb[0].mxu0
  %v2886 = vadd.f32 %v2019, %v2885
  %v2887 = vpop.f32.mrb[0].mxu0
  %2888 = vmatprep.mubr.f32.mxu0 0.0
  %2889 = vmatmul.mubr.f32.gmra.mrb[0].mxu0 %v2759
  %v2890 = vpop.f32.mrb[0].mxu0
  %v2891 = vadd.f32 %v2019, %v2890
  %v2892 = vpop.f32.mrb[0].mxu0
  %2893 = vmatprep.mubr.f32.mxu0 0.0
  %2894 = vmatmul.mubr.f32.gmra.mrb[0].mxu0 %v2762
  %v2895 = vpop.f32.mrb[0].mxu0
  %v2896 = vadd.f32 %v2019, %v2895
  %v2897 = vpop.f32.mrb[0].mxu0
  %2898 = vmatprep.mubr.f32.mxu0 0.0
  %2899 = vmatmul.mubr.f32.gmra.mrb[0].mxu0 %v2765
  %v2900 = vpop.f32.mrb[0].mxu0
  %v2901 = vadd.f32 %v2019, %v2900
  %v2902 = vpop.f32.mrb[0].mxu0
  %2903 = vmatprep.mubr.f32.mxu0 0.0
  %2904 = vmatmul.mubr.f32.gmra.mrb[0].mxu0 %v2768
  %v2905 = vpop.f32.mrb[0].mxu0
  %v2906 = vadd.f32 %v2019, %v2905
  %v2907 = vpop.f32.mrb[0].mxu0
  %2908 = vmatprep.mubr.f32.mxu0 0.0
  %2909 = vmatmul.mubr.f32.gmra.mrb[0].mxu0 %v2771
  %v2910 = vpop.f32.mrb[0].mxu0
  %v2911 = vadd.f32 %v2019, %v2910
  %v2912 = vpop.f32.mrb[0].mxu0
  %2913 = vmatprep.mubr.f32.mxu0 0.0
  %2914 = vmatmul.mubr.f32.gmra.mrb[0].mxu0 %v2774
  %v2915 = vpop.f32.mrb[0].mxu0
  %v2916 = vadd.f32 %v2019, %v2915
  %v2917 = vpop.f32.mrb[0].mxu0
  %2918 = vmatprep.mubr.f32.mxu0 0.0
  %2919 = vmatmul.mubr.f32.gmra.mrb[0].mxu0 %v2777
  %v2920 = vpop.f32.mrb[0].mxu0
  %v2921 = vadd.f32 %v2019, %v2920
  %v2922 = vpop.f32.mrb[0].mxu0
  %2923 = vdwg.mxu0
  %v2924 = vmax.f32 %v2846, 0.0
  %v2925 = vmax.f32 %v2851, 0.0
  %v2926 = vmax.f32 %v2856, 0.0
  %v2927 = vmax.f32 %v2861, 0.0
  %v2928 = vmax.f32 %v2866, 0.0
  %v2929 = vmax.f32 %v2871, 0.0
  %v2930 = vmax.f32 %v2876, 0.0
  %v2931 = vmax.f32 %v2881, 0.0
  %v2932 = vmax.f32 %v2886, 0.0
  %v2933 = vmax.f32 %v2891, 0.0
  %v2934 = vmax.f32 %v2896, 0.0
  %v2935 = vmax.f32 %v2901, 0.0
  %v2936 = vmax.f32 %v2906, 0.0
  %v2937 = vmax.f32 %v2911, 0.0
  %v2938 = vmax.f32 %v2916, 0.0
  %v2939 = vmax.f32 %v2921, 0.0
  %v2940 = vmax.f32 %v2699, %v2924
  %v2941 = vmax.f32 %v2700, %v2925
  %v2942 = vmax.f32 %v2701, %v2926
  %v2943 = vmax.f32 %v2702, %v2927
  %v2944 = vmax.f32 %v2703, %v2928
  %v2945 = vmax.f32 %v2704, %v2929
  %v2946 = vmax.f32 %v2705, %v2930
  %v2947 = vmax.f32 %v2706, %v2931
  %v2948 = vmax.f32 %v2707, %v2932
  %v2949 = vmax.f32 %v2708, %v2933
  %v2950 = vmax.f32 %v2709, %v2934
  %v2951 = vmax.f32 %v2710, %v2935
  %v2952 = vmax.f32 %v2711, %v2936
  %v2953 = vmax.f32 %v2712, %v2937
  %v2954 = vmax.f32 %v2713, %v2938
  %v2955 = vmax.f32 %v2714, %v2939
  %2956 = vst.msk [vmem:[#allocation2 + $0x100] sm:$0xff] %vm997, %v2940
  %2957 = vst.msk [vmem:[#allocation2 + $0x108] sm:$0xff] %vm997, %v2941
  %2958 = vst.msk [vmem:[#allocation2 + $0x110] sm:$0xff] %vm997, %v2942
  %2959 = vst.msk [vmem:[#allocation2 + $0x118] sm:$0xff] %vm997, %v2943
  %2960 = vst.msk [vmem:[#allocation2 + $0x120] sm:$0xff] %vm997, %v2944
  %2961 = vst.msk [vmem:[#allocation2 + $0x128] sm:$0xff] %vm997, %v2945
  %2962 = vst.msk [vmem:[#allocation2 + $0x130] sm:$0xff] %vm997, %v2946
  %2963 = vst.msk [vmem:[#allocation2 + $0x138] sm:$0xff] %vm997, %v2947
  %2964 = vst.msk [vmem:[#allocation2 + $0x140] sm:$0xff] %vm997, %v2948
  %2965 = vst.msk [vmem:[#allocation2 + $0x148] sm:$0xff] %vm997, %v2949
  %2966 = vst.msk [vmem:[#allocation2 + $0x150] sm:$0xff] %vm997, %v2950
  %2967 = vst.msk [vmem:[#allocation2 + $0x158] sm:$0xff] %vm997, %v2951
  %2968 = vst.msk [vmem:[#allocation2 + $0x160] sm:$0xff] %vm997, %v2952
  %2969 = vst.msk [vmem:[#allocation2 + $0x168] sm:$0xff] %vm997, %v2953
  %2970 = vst.msk [vmem:[#allocation2 + $0x170] sm:$0xff] %vm997, %v2954
  %2971 = vst.msk [vmem:[#allocation2 + $0x178] sm:$0xff] %vm997, %v2955
  %v2972 = vld [vmem:[%s0 + $0x180] sm:$0xff]
  %v2973 = vld [vmem:[%s0 + $0x188] sm:$0xff]
  %v2974 = vld [vmem:[%s0 + $0x190] sm:$0xff]
  %v2975 = vld [vmem:[%s0 + $0x198] sm:$0xff]
  %v2976 = vld [vmem:[%s0 + $0x1a0] sm:$0xff]
  %v2977 = vld [vmem:[%s0 + $0x1a8] sm:$0xff]
  %v2978 = vld [vmem:[%s0 + $0x1b0] sm:$0xff]
  %v2979 = vld [vmem:[%s0 + $0x1b8] sm:$0xff]
  %v2980 = vld [vmem:[%s0 + $0x1c0] sm:$0xff]
  %v2981 = vld [vmem:[%s0 + $0x1c8] sm:$0xff]
  %v2982 = vld [vmem:[%s0 + $0x1d0] sm:$0xff]
  %v2983 = vld [vmem:[%s0 + $0x1d8] sm:$0xff]
  %v2984 = vld [vmem:[%s0 + $0x1e0] sm:$0xff]
  %v2985 = vld [vmem:[%s0 + $0x1e8] sm:$0xff]
  %v2986 = vld [vmem:[%s0 + $0x1f0] sm:$0xff]
  %v2987 = vld [vmem:[%s0 + $0x1f8] sm:$0xff]
  %v2988 = vld [vmem:[%s1] sm:$0xff]
  %v2989 = vld [vmem:[%s1 + $0x8] sm:$0xff]
  %v2990 = vld [vmem:[%s1 + $0x10] sm:$0xff]
  %v2991 = vld [vmem:[%s1 + $0x18] sm:$0xff]
  %v2992 = vld [vmem:[%s1 + $0x20] sm:$0x1f]
  %v2993 = vld [vmem:[%s2] sm:$0x1]
  %v2995 = vlaneseq
  %v2996 = vshrl.u32 %v2995, 7
  %v2997 = vsub.s32 0, %v2996
  %v2998 = vrot.slane %v2993, %v2997
  %v3001 = vsel %vm60, %v2972, 0
  %v3004 = vsel %vm60, %v2973, 0
  %v3007 = vsel %vm60, %v2974, 0
  %v3010 = vsel %vm60, %v2975, 0
  %v3013 = vsel %vm60, %v2976, 0
  %v3016 = vsel %vm60, %v2977, 0
  %v3019 = vsel %vm60, %v2978, 0
  %v3022 = vsel %vm60, %v2979, 0
  %v3025 = vsel %vm60, %v2980, 0
  %v3028 = vsel %vm60, %v2981, 0
  %v3031 = vsel %vm60, %v2982, 0
  %v3034 = vsel %vm60, %v2983, 0
  %v3037 = vsel %vm60, %v2984, 0
  %v3040 = vsel %vm60, %v2985, 0
  %v3043 = vsel %vm60, %v2986, 0
  %v3046 = vsel %vm60, %v2987, 0
  %v3049 = vsel %vm109, %v2992, 0
  %3051 = vmatprep.subr.mxu0 0.0
  %3052 = vmatpush1.msra.mxu0 %v2988
  %3053 = vmatprep.subr.mxu0 0.0
  %3054 = vmatpush1.msra.mxu0 %v2989
  %3055 = vmatprep.subr.mxu0 0.0
  %3056 = vmatpush1.msra.mxu0 %v2990
  %3057 = vmatprep.subr.mxu0 0.0
  %3058 = vmatpush1.msra.mxu0 %v2991
  %3059 = vmatprep.subr.mxu0 0.0
  %3060 = vmatpush1.msra.mxu0 %v3049
  %3061 = vmatprep.subr.mxu0 0.0
  %3062 = vmatpush1.msra.mxu0 0.0
  %3063 = vmatprep.subr.mxu0 0.0
  %3064 = vmatpush1.msra.mxu0 0.0
  %3065 = vmatprep.subr.mxu0 0.0
  %3066 = vmatpush1.msra.mxu0 0.0
  %3067 = vmatprep.subr.mxu0 0.0
  %3068 = vmatpush1.msra.mxu0 0.0
  %3069 = vmatprep.subr.mxu0 0.0
  %3070 = vmatpush1.msra.mxu0 0.0
  %3071 = vmatprep.subr.mxu0 0.0
  %3072 = vmatpush1.msra.mxu0 0.0
  %3073 = vmatprep.subr.mxu0 0.0
  %3074 = vmatpush1.msra.mxu0 0.0
  %3075 = vmatprep.subr.mxu0 0.0
  %3076 = vmatpush1.msra.mxu0 0.0
  %3077 = vmatprep.subr.mxu0 0.0
  %3078 = vmatpush1.msra.mxu0 0.0
  %3079 = vmatprep.subr.mxu0 0.0
  %3080 = vmatpush1.msra.mxu0 0.0
  %3081 = vmatprep.subr.mxu0 0.0
  %3082 = vmatpush1.msra.mxu0 0.0
  %3083 = vmatprep.subr.mxu0 0.0
  %3084 = vmatpush1.msra.mxu0 0.0
  %3085 = vmatprep.subr.mxu0 0.0
  %3086 = vmatpush1.msra.mxu0 0.0
  %3087 = vmatprep.subr.mxu0 0.0
  %3088 = vmatpush1.msra.mxu0 0.0
  %3089 = vmatprep.subr.mxu0 0.0
  %3090 = vmatpush1.msra.mxu0 0.0
  %3091 = vmatprep.subr.mxu0 0.0
  %3092 = vmatpush1.msra.mxu0 0.0
  %3093 = vmatprep.subr.mxu0 0.0
  %3094 = vmatpush1.msra.mxu0 0.0
  %3095 = vmatprep.subr.mxu0 0.0
  %3096 = vmatpush1.msra.mxu0 0.0
  %3097 = vmatprep.subr.mxu0 0.0
  %3098 = vmatpush1.msra.mxu0 0.0
  %3099 = vmatprep.subr.mxu0 0.0
  %3100 = vmatpush1.msra.mxu0 0.0
  %3101 = vmatprep.subr.mxu0 0.0
  %3102 = vmatpush1.msra.mxu0 0.0
  %3103 = vmatprep.subr.mxu0 0.0
  %3104 = vmatpush1.msra.mxu0 0.0
  %3105 = vmatprep.subr.mxu0 0.0
  %3106 = vmatpush1.msra.mxu0 0.0
  %3107 = vmatprep.subr.mxu0 0.0
  %3108 = vmatpush1.msra.mxu0 0.0
  %3109 = vmatprep.subr.mxu0 0.0
  %3110 = vmatpush1.msra.mxu0 0.0
  %3111 = vmatprep.subr.mxu0 0.0
  %3112 = vmatpush1.msra.mxu0 0.0
  %3113 = vmatprep.subr.mxu0 0.0
  %3114 = vmatpush1.msra.mxu0 0.0
  %3115 = vmatprep.mubr.f32.mxu0 0.0
  %3116 = vmatmul.mubr.f32.gmra.mrb[0].mxu0 %v3001
  %v3117 = vpop.f32.mrb[0].mxu0
  %v3118 = vadd.f32 %v2998, %v3117
  %v3119 = vpop.f32.mrb[0].mxu0
  %3120 = vmatprep.mubr.f32.mxu0 0.0
  %3121 = vmatmul.mubr.f32.gmra.mrb[0].mxu0 %v3004
  %v3122 = vpop.f32.mrb[0].mxu0
  %v3123 = vadd.f32 %v2998, %v3122
  %v3124 = vpop.f32.mrb[0].mxu0
  %3125 = vmatprep.mubr.f32.mxu0 0.0
  %3126 = vmatmul.mubr.f32.gmra.mrb[0].mxu0 %v3007
  %v3127 = vpop.f32.mrb[0].mxu0
  %v3128 = vadd.f32 %v2998, %v3127
  %v3129 = vpop.f32.mrb[0].mxu0
  %3130 = vmatprep.mubr.f32.mxu0 0.0
  %3131 = vmatmul.mubr.f32.gmra.mrb[0].mxu0 %v3010
  %v3132 = vpop.f32.mrb[0].mxu0
  %v3133 = vadd.f32 %v2998, %v3132
  %v3134 = vpop.f32.mrb[0].mxu0
  %3135 = vmatprep.mubr.f32.mxu0 0.0
  %3136 = vmatmul.mubr.f32.gmra.mrb[0].mxu0 %v3013
  %v3137 = vpop.f32.mrb[0].mxu0
  %v3138 = vadd.f32 %v2998, %v3137
  %v3139 = vpop.f32.mrb[0].mxu0
  %3140 = vmatprep.mubr.f32.mxu0 0.0
  %3141 = vmatmul.mubr.f32.gmra.mrb[0].mxu0 %v3016
  %v3142 = vpop.f32.mrb[0].mxu0
  %v3143 = vadd.f32 %v2998, %v3142
  %v3144 = vpop.f32.mrb[0].mxu0
  %3145 = vmatprep.mubr.f32.mxu0 0.0
  %3146 = vmatmul.mubr.f32.gmra.mrb[0].mxu0 %v3019
  %v3147 = vpop.f32.mrb[0].mxu0
  %v3148 = vadd.f32 %v2998, %v3147
  %v3149 = vpop.f32.mrb[0].mxu0
  %3150 = vmatprep.mubr.f32.mxu0 0.0
  %3151 = vmatmul.mubr.f32.gmra.mrb[0].mxu0 %v3022
  %v3152 = vpop.f32.mrb[0].mxu0
  %v3153 = vadd.f32 %v2998, %v3152
  %v3154 = vpop.f32.mrb[0].mxu0
  %3155 = vmatprep.mubr.f32.mxu0 0.0
  %3156 = vmatmul.mubr.f32.gmra.mrb[0].mxu0 %v3025
  %v3157 = vpop.f32.mrb[0].mxu0
  %v3158 = vadd.f32 %v2998, %v3157
  %v3159 = vpop.f32.mrb[0].mxu0
  %3160 = vmatprep.mubr.f32.mxu0 0.0
  %3161 = vmatmul.mubr.f32.gmra.mrb[0].mxu0 %v3028
  %v3162 = vpop.f32.mrb[0].mxu0
  %v3163 = vadd.f32 %v2998, %v3162
  %v3164 = vpop.f32.mrb[0].mxu0
  %3165 = vmatprep.mubr.f32.mxu0 0.0
  %3166 = vmatmul.mubr.f32.gmra.mrb[0].mxu0 %v3031
  %v3167 = vpop.f32.mrb[0].mxu0
  %v3168 = vadd.f32 %v2998, %v3167
  %v3169 = vpop.f32.mrb[0].mxu0
  %3170 = vmatprep.mubr.f32.mxu0 0.0
  %3171 = vmatmul.mubr.f32.gmra.mrb[0].mxu0 %v3034
  %v3172 = vpop.f32.mrb[0].mxu0
  %v3173 = vadd.f32 %v2998, %v3172
  %v3174 = vpop.f32.mrb[0].mxu0
  %3175 = vmatprep.mubr.f32.mxu0 0.0
  %3176 = vmatmul.mubr.f32.gmra.mrb[0].mxu0 %v3037
  %v3177 = vpop.f32.mrb[0].mxu0
  %v3178 = vadd.f32 %v2998, %v3177
  %v3179 = vpop.f32.mrb[0].mxu0
  %3180 = vmatprep.mubr.f32.mxu0 0.0
  %3181 = vmatmul.mubr.f32.gmra.mrb[0].mxu0 %v3040
  %v3182 = vpop.f32.mrb[0].mxu0
  %v3183 = vadd.f32 %v2998, %v3182
  %v3184 = vpop.f32.mrb[0].mxu0
  %3185 = vmatprep.mubr.f32.mxu0 0.0
  %3186 = vmatmul.mubr.f32.gmra.mrb[0].mxu0 %v3043
  %v3187 = vpop.f32.mrb[0].mxu0
  %v3188 = vadd.f32 %v2998, %v3187
  %v3189 = vpop.f32.mrb[0].mxu0
  %3190 = vmatprep.mubr.f32.mxu0 0.0
  %3191 = vmatmul.mubr.f32.gmra.mrb[0].mxu0 %v3046
  %v3192 = vpop.f32.mrb[0].mxu0
  %v3193 = vadd.f32 %v2998, %v3192
  %v3194 = vpop.f32.mrb[0].mxu0
  %3195 = vdwg.mxu0
  %v3196 = vmax.f32 %v3118, 0.0
  %v3197 = vmax.f32 %v3123, 0.0
  %v3198 = vmax.f32 %v3128, 0.0
  %v3199 = vmax.f32 %v3133, 0.0
  %v3200 = vmax.f32 %v3138, 0.0
  %v3201 = vmax.f32 %v3143, 0.0
  %v3202 = vmax.f32 %v3148, 0.0
  %v3203 = vmax.f32 %v3153, 0.0
  %v3204 = vmax.f32 %v3158, 0.0
  %v3205 = vmax.f32 %v3163, 0.0
  %v3206 = vmax.f32 %v3168, 0.0
  %v3207 = vmax.f32 %v3173, 0.0
  %v3208 = vmax.f32 %v3178, 0.0
  %v3209 = vmax.f32 %v3183, 0.0
  %v3210 = vmax.f32 %v3188, 0.0
  %v3211 = vmax.f32 %v3193, 0.0
  %v3212 = vld [vmem:[%s0 + $0x380] sm:$0xff]
  %v3213 = vld [vmem:[%s0 + $0x388] sm:$0xff]
  %v3214 = vld [vmem:[%s0 + $0x390] sm:$0xff]
  %v3215 = vld [vmem:[%s0 + $0x398] sm:$0xff]
  %v3216 = vld [vmem:[%s0 + $0x3a0] sm:$0xff]
  %v3217 = vld [vmem:[%s0 + $0x3a8] sm:$0xff]
  %v3218 = vld [vmem:[%s0 + $0x3b0] sm:$0xff]
  %v3219 = vld [vmem:[%s0 + $0x3b8] sm:$0xff]
  %v3220 = vld [vmem:[%s0 + $0x3c0] sm:$0xff]
  %v3221 = vld [vmem:[%s0 + $0x3c8] sm:$0xff]
  %v3222 = vld [vmem:[%s0 + $0x3d0] sm:$0xff]
  %v3223 = vld [vmem:[%s0 + $0x3d8] sm:$0xff]
  %v3224 = vld [vmem:[%s0 + $0x3e0] sm:$0xff]
  %v3225 = vld [vmem:[%s0 + $0x3e8] sm:$0xff]
  %v3226 = vld [vmem:[%s0 + $0x3f0] sm:$0xff]
  %v3227 = vld [vmem:[%s0 + $0x3f8] sm:$0xff]
  %v3229 = vsel %vm60, %v3212, 0
  %v3232 = vsel %vm60, %v3213, 0
  %v3235 = vsel %vm60, %v3214, 0
  %v3238 = vsel %vm60, %v3215, 0
  %v3241 = vsel %vm60, %v3216, 0
  %v3244 = vsel %vm60, %v3217, 0
  %v3247 = vsel %vm60, %v3218, 0
  %v3250 = vsel %vm60, %v3219, 0
  %v3253 = vsel %vm60, %v3220, 0
  %v3256 = vsel %vm60, %v3221, 0
  %v3259 = vsel %vm60, %v3222, 0
  %v3262 = vsel %vm60, %v3223, 0
  %v3265 = vsel %vm60, %v3224, 0
  %v3268 = vsel %vm60, %v3225, 0
  %v3271 = vsel %vm60, %v3226, 0
  %v3274 = vsel %vm60, %v3227, 0
  %3276 = vmatprep.subr.mxu0 0.0
  %3277 = vmatpush1.msra.mxu0 %v2988
  %3278 = vmatprep.subr.mxu0 0.0
  %3279 = vmatpush1.msra.mxu0 %v2989
  %3280 = vmatprep.subr.mxu0 0.0
  %3281 = vmatpush1.msra.mxu0 %v2990
  %3282 = vmatprep.subr.mxu0 0.0
  %3283 = vmatpush1.msra.mxu0 %v2991
  %3284 = vmatprep.subr.mxu0 0.0
  %3285 = vmatpush1.msra.mxu0 %v3049
  %3286 = vmatprep.subr.mxu0 0.0
  %3287 = vmatpush1.msra.mxu0 0.0
  %3288 = vmatprep.subr.mxu0 0.0
  %3289 = vmatpush1.msra.mxu0 0.0
  %3290 = vmatprep.subr.mxu0 0.0
  %3291 = vmatpush1.msra.mxu0 0.0
  %3292 = vmatprep.subr.mxu0 0.0
  %3293 = vmatpush1.msra.mxu0 0.0
  %3294 = vmatprep.subr.mxu0 0.0
  %3295 = vmatpush1.msra.mxu0 0.0
  %3296 = vmatprep.subr.mxu0 0.0
  %3297 = vmatpush1.msra.mxu0 0.0
  %3298 = vmatprep.subr.mxu0 0.0
  %3299 = vmatpush1.msra.mxu0 0.0
  %3300 = vmatprep.subr.mxu0 0.0
  %3301 = vmatpush1.msra.mxu0 0.0
  %3302 = vmatprep.subr.mxu0 0.0
  %3303 = vmatpush1.msra.mxu0 0.0
  %3304 = vmatprep.subr.mxu0 0.0
  %3305 = vmatpush1.msra.mxu0 0.0
  %3306 = vmatprep.subr.mxu0 0.0
  %3307 = vmatpush1.msra.mxu0 0.0
  %3308 = vmatprep.subr.mxu0 0.0
  %3309 = vmatpush1.msra.mxu0 0.0
  %3310 = vmatprep.subr.mxu0 0.0
  %3311 = vmatpush1.msra.mxu0 0.0
  %3312 = vmatprep.subr.mxu0 0.0
  %3313 = vmatpush1.msra.mxu0 0.0
  %3314 = vmatprep.subr.mxu0 0.0
  %3315 = vmatpush1.msra.mxu0 0.0
  %3316 = vmatprep.subr.mxu0 0.0
  %3317 = vmatpush1.msra.mxu0 0.0
  %3318 = vmatprep.subr.mxu0 0.0
  %3319 = vmatpush1.msra.mxu0 0.0
  %3320 = vmatprep.subr.mxu0 0.0
  %3321 = vmatpush1.msra.mxu0 0.0
  %3322 = vmatprep.subr.mxu0 0.0
  %3323 = vmatpush1.msra.mxu0 0.0
  %3324 = vmatprep.subr.mxu0 0.0
  %3325 = vmatpush1.msra.mxu0 0.0
  %3326 = vmatprep.subr.mxu0 0.0
  %3327 = vmatpush1.msra.mxu0 0.0
  %3328 = vmatprep.subr.mxu0 0.0
  %3329 = vmatpush1.msra.mxu0 0.0
  %3330 = vmatprep.subr.mxu0 0.0
  %3331 = vmatpush1.msra.mxu0 0.0
  %3332 = vmatprep.subr.mxu0 0.0
  %3333 = vmatpush1.msra.mxu0 0.0
  %3334 = vmatprep.subr.mxu0 0.0
  %3335 = vmatpush1.msra.mxu0 0.0
  %3336 = vmatprep.subr.mxu0 0.0
  %3337 = vmatpush1.msra.mxu0 0.0
  %3338 = vmatprep.subr.mxu0 0.0
  %3339 = vmatpush1.msra.mxu0 0.0
  %3340 = vmatprep.mubr.f32.mxu0 0.0
  %3341 = vmatmul.mubr.f32.gmra.mrb[0].mxu0 %v3229
  %v3342 = vpop.f32.mrb[0].mxu0
  %v3343 = vadd.f32 %v2998, %v3342
  %v3344 = vpop.f32.mrb[0].mxu0
  %3345 = vmatprep.mubr.f32.mxu0 0.0
  %3346 = vmatmul.mubr.f32.gmra.mrb[0].mxu0 %v3232
  %v3347 = vpop.f32.mrb[0].mxu0
  %v3348 = vadd.f32 %v2998, %v3347
  %v3349 = vpop.f32.mrb[0].mxu0
  %3350 = vmatprep.mubr.f32.mxu0 0.0
  %3351 = vmatmul.mubr.f32.gmra.mrb[0].mxu0 %v3235
  %v3352 = vpop.f32.mrb[0].mxu0
  %v3353 = vadd.f32 %v2998, %v3352
  %v3354 = vpop.f32.mrb[0].mxu0
  %3355 = vmatprep.mubr.f32.mxu0 0.0
  %3356 = vmatmul.mubr.f32.gmra.mrb[0].mxu0 %v3238
  %v3357 = vpop.f32.mrb[0].mxu0
  %v3358 = vadd.f32 %v2998, %v3357
  %v3359 = vpop.f32.mrb[0].mxu0
  %3360 = vmatprep.mubr.f32.mxu0 0.0
  %3361 = vmatmul.mubr.f32.gmra.mrb[0].mxu0 %v3241
  %v3362 = vpop.f32.mrb[0].mxu0
  %v3363 = vadd.f32 %v2998, %v3362
  %v3364 = vpop.f32.mrb[0].mxu0
  %3365 = vmatprep.mubr.f32.mxu0 0.0
  %3366 = vmatmul.mubr.f32.gmra.mrb[0].mxu0 %v3244
  %v3367 = vpop.f32.mrb[0].mxu0
  %v3368 = vadd.f32 %v2998, %v3367
  %v3369 = vpop.f32.mrb[0].mxu0
  %3370 = vmatprep.mubr.f32.mxu0 0.0
  %3371 = vmatmul.mubr.f32.gmra.mrb[0].mxu0 %v3247
  %v3372 = vpop.f32.mrb[0].mxu0
  %v3373 = vadd.f32 %v2998, %v3372
  %v3374 = vpop.f32.mrb[0].mxu0
  %3375 = vmatprep.mubr.f32.mxu0 0.0
  %3376 = vmatmul.mubr.f32.gmra.mrb[0].mxu0 %v3250
  %v3377 = vpop.f32.mrb[0].mxu0
  %v3378 = vadd.f32 %v2998, %v3377
  %v3379 = vpop.f32.mrb[0].mxu0
  %3380 = vmatprep.mubr.f32.mxu0 0.0
  %3381 = vmatmul.mubr.f32.gmra.mrb[0].mxu0 %v3253
  %v3382 = vpop.f32.mrb[0].mxu0
  %v3383 = vadd.f32 %v2998, %v3382
  %v3384 = vpop.f32.mrb[0].mxu0
  %3385 = vmatprep.mubr.f32.mxu0 0.0
  %3386 = vmatmul.mubr.f32.gmra.mrb[0].mxu0 %v3256
  %v3387 = vpop.f32.mrb[0].mxu0
  %v3388 = vadd.f32 %v2998, %v3387
  %v3389 = vpop.f32.mrb[0].mxu0
  %3390 = vmatprep.mubr.f32.mxu0 0.0
  %3391 = vmatmul.mubr.f32.gmra.mrb[0].mxu0 %v3259
  %v3392 = vpop.f32.mrb[0].mxu0
  %v3393 = vadd.f32 %v2998, %v3392
  %v3394 = vpop.f32.mrb[0].mxu0
  %3395 = vmatprep.mubr.f32.mxu0 0.0
  %3396 = vmatmul.mubr.f32.gmra.mrb[0].mxu0 %v3262
  %v3397 = vpop.f32.mrb[0].mxu0
  %v3398 = vadd.f32 %v2998, %v3397
  %v3399 = vpop.f32.mrb[0].mxu0
  %3400 = vmatprep.mubr.f32.mxu0 0.0
  %3401 = vmatmul.mubr.f32.gmra.mrb[0].mxu0 %v3265
  %v3402 = vpop.f32.mrb[0].mxu0
  %v3403 = vadd.f32 %v2998, %v3402
  %v3404 = vpop.f32.mrb[0].mxu0
  %3405 = vmatprep.mubr.f32.mxu0 0.0
  %3406 = vmatmul.mubr.f32.gmra.mrb[0].mxu0 %v3268
  %v3407 = vpop.f32.mrb[0].mxu0
  %v3408 = vadd.f32 %v2998, %v3407
  %v3409 = vpop.f32.mrb[0].mxu0
  %3410 = vmatprep.mubr.f32.mxu0 0.0
  %3411 = vmatmul.mubr.f32.gmra.mrb[0].mxu0 %v3271
  %v3412 = vpop.f32.mrb[0].mxu0
  %v3413 = vadd.f32 %v2998, %v3412
  %v3414 = vpop.f32.mrb[0].mxu0
  %3415 = vmatprep.mubr.f32.mxu0 0.0
  %3416 = vmatmul.mubr.f32.gmra.mrb[0].mxu0 %v3274
  %v3417 = vpop.f32.mrb[0].mxu0
  %v3418 = vadd.f32 %v2998, %v3417
  %v3419 = vpop.f32.mrb[0].mxu0
  %3420 = vdwg.mxu0
  %v3421 = vmax.f32 %v3343, 0.0
  %v3422 = vmax.f32 %v3348, 0.0
  %v3423 = vmax.f32 %v3353, 0.0
  %v3424 = vmax.f32 %v3358, 0.0
  %v3425 = vmax.f32 %v3363, 0.0
  %v3426 = vmax.f32 %v3368, 0.0
  %v3427 = vmax.f32 %v3373, 0.0
  %v3428 = vmax.f32 %v3378, 0.0
  %v3429 = vmax.f32 %v3383, 0.0
  %v3430 = vmax.f32 %v3388, 0.0
  %v3431 = vmax.f32 %v3393, 0.0
  %v3432 = vmax.f32 %v3398, 0.0
  %v3433 = vmax.f32 %v3403, 0.0
  %v3434 = vmax.f32 %v3408, 0.0
  %v3435 = vmax.f32 %v3413, 0.0
  %v3436 = vmax.f32 %v3418, 0.0
  %v3437 = vmax.f32 %v3196, %v3421
  %v3438 = vmax.f32 %v3197, %v3422
  %v3439 = vmax.f32 %v3198, %v3423
  %v3440 = vmax.f32 %v3199, %v3424
  %v3441 = vmax.f32 %v3200, %v3425
  %v3442 = vmax.f32 %v3201, %v3426
  %v3443 = vmax.f32 %v3202, %v3427
  %v3444 = vmax.f32 %v3203, %v3428
  %v3445 = vmax.f32 %v3204, %v3429
  %v3446 = vmax.f32 %v3205, %v3430
  %v3447 = vmax.f32 %v3206, %v3431
  %v3448 = vmax.f32 %v3207, %v3432
  %v3449 = vmax.f32 %v3208, %v3433
  %v3450 = vmax.f32 %v3209, %v3434
  %v3451 = vmax.f32 %v3210, %v3435
  %v3452 = vmax.f32 %v3211, %v3436
  %v3453 = vld [vmem:[%s0 + $0x580] sm:$0xff]
  %v3454 = vld [vmem:[%s0 + $0x588] sm:$0xff]
  %v3455 = vld [vmem:[%s0 + $0x590] sm:$0xff]
  %v3456 = vld [vmem:[%s0 + $0x598] sm:$0xff]
  %v3457 = vld [vmem:[%s0 + $0x5a0] sm:$0xff]
  %v3458 = vld [vmem:[%s0 + $0x5a8] sm:$0xff]
  %v3459 = vld [vmem:[%s0 + $0x5b0] sm:$0xff]
  %v3460 = vld [vmem:[%s0 + $0x5b8] sm:$0xff]
  %v3461 = vld [vmem:[%s0 + $0x5c0] sm:$0xff]
  %v3462 = vld [vmem:[%s0 + $0x5c8] sm:$0xff]
  %v3463 = vld [vmem:[%s0 + $0x5d0] sm:$0xff]
  %v3464 = vld [vmem:[%s0 + $0x5d8] sm:$0xff]
  %v3465 = vld [vmem:[%s0 + $0x5e0] sm:$0xff]
  %v3466 = vld [vmem:[%s0 + $0x5e8] sm:$0xff]
  %v3467 = vld [vmem:[%s0 + $0x5f0] sm:$0xff]
  %v3468 = vld [vmem:[%s0 + $0x5f8] sm:$0xff]
  %v3470 = vsel %vm60, %v3453, 0
  %v3473 = vsel %vm60, %v3454, 0
  %v3476 = vsel %vm60, %v3455, 0
  %v3479 = vsel %vm60, %v3456, 0
  %v3482 = vsel %vm60, %v3457, 0
  %v3485 = vsel %vm60, %v3458, 0
  %v3488 = vsel %vm60, %v3459, 0
  %v3491 = vsel %vm60, %v3460, 0
  %v3494 = vsel %vm60, %v3461, 0
  %v3497 = vsel %vm60, %v3462, 0
  %v3500 = vsel %vm60, %v3463, 0
  %v3503 = vsel %vm60, %v3464, 0
  %v3506 = vsel %vm60, %v3465, 0
  %v3509 = vsel %vm60, %v3466, 0
  %v3512 = vsel %vm60, %v3467, 0
  %v3515 = vsel %vm60, %v3468, 0
  %3517 = vmatprep.subr.mxu0 0.0
  %3518 = vmatpush1.msra.mxu0 %v2988
  %3519 = vmatprep.subr.mxu0 0.0
  %3520 = vmatpush1.msra.mxu0 %v2989
  %3521 = vmatprep.subr.mxu0 0.0
  %3522 = vmatpush1.msra.mxu0 %v2990
  %3523 = vmatprep.subr.mxu0 0.0
  %3524 = vmatpush1.msra.mxu0 %v2991
  %3525 = vmatprep.subr.mxu0 0.0
  %3526 = vmatpush1.msra.mxu0 %v3049
  %3527 = vmatprep.subr.mxu0 0.0
  %3528 = vmatpush1.msra.mxu0 0.0
  %3529 = vmatprep.subr.mxu0 0.0
  %3530 = vmatpush1.msra.mxu0 0.0
  %3531 = vmatprep.subr.mxu0 0.0
  %3532 = vmatpush1.msra.mxu0 0.0
  %3533 = vmatprep.subr.mxu0 0.0
  %3534 = vmatpush1.msra.mxu0 0.0
  %3535 = vmatprep.subr.mxu0 0.0
  %3536 = vmatpush1.msra.mxu0 0.0
  %3537 = vmatprep.subr.mxu0 0.0
  %3538 = vmatpush1.msra.mxu0 0.0
  %3539 = vmatprep.subr.mxu0 0.0
  %3540 = vmatpush1.msra.mxu0 0.0
  %3541 = vmatprep.subr.mxu0 0.0
  %3542 = vmatpush1.msra.mxu0 0.0
  %3543 = vmatprep.subr.mxu0 0.0
  %3544 = vmatpush1.msra.mxu0 0.0
  %3545 = vmatprep.subr.mxu0 0.0
  %3546 = vmatpush1.msra.mxu0 0.0
  %3547 = vmatprep.subr.mxu0 0.0
  %3548 = vmatpush1.msra.mxu0 0.0
  %3549 = vmatprep.subr.mxu0 0.0
  %3550 = vmatpush1.msra.mxu0 0.0
  %3551 = vmatprep.subr.mxu0 0.0
  %3552 = vmatpush1.msra.mxu0 0.0
  %3553 = vmatprep.subr.mxu0 0.0
  %3554 = vmatpush1.msra.mxu0 0.0
  %3555 = vmatprep.subr.mxu0 0.0
  %3556 = vmatpush1.msra.mxu0 0.0
  %3557 = vmatprep.subr.mxu0 0.0
  %3558 = vmatpush1.msra.mxu0 0.0
  %3559 = vmatprep.subr.mxu0 0.0
  %3560 = vmatpush1.msra.mxu0 0.0
  %3561 = vmatprep.subr.mxu0 0.0
  %3562 = vmatpush1.msra.mxu0 0.0
  %3563 = vmatprep.subr.mxu0 0.0
  %3564 = vmatpush1.msra.mxu0 0.0
  %3565 = vmatprep.subr.mxu0 0.0
  %3566 = vmatpush1.msra.mxu0 0.0
  %3567 = vmatprep.subr.mxu0 0.0
  %3568 = vmatpush1.msra.mxu0 0.0
  %3569 = vmatprep.subr.mxu0 0.0
  %3570 = vmatpush1.msra.mxu0 0.0
  %3571 = vmatprep.subr.mxu0 0.0
  %3572 = vmatpush1.msra.mxu0 0.0
  %3573 = vmatprep.subr.mxu0 0.0
  %3574 = vmatpush1.msra.mxu0 0.0
  %3575 = vmatprep.subr.mxu0 0.0
  %3576 = vmatpush1.msra.mxu0 0.0
  %3577 = vmatprep.subr.mxu0 0.0
  %3578 = vmatpush1.msra.mxu0 0.0
  %3579 = vmatprep.subr.mxu0 0.0
  %3580 = vmatpush1.msra.mxu0 0.0
  %3581 = vmatprep.mubr.f32.mxu0 0.0
  %3582 = vmatmul.mubr.f32.gmra.mrb[0].mxu0 %v3470
  %v3583 = vpop.f32.mrb[0].mxu0
  %v3584 = vadd.f32 %v2998, %v3583
  %v3585 = vpop.f32.mrb[0].mxu0
  %3586 = vmatprep.mubr.f32.mxu0 0.0
  %3587 = vmatmul.mubr.f32.gmra.mrb[0].mxu0 %v3473
  %v3588 = vpop.f32.mrb[0].mxu0
  %v3589 = vadd.f32 %v2998, %v3588
  %v3590 = vpop.f32.mrb[0].mxu0
  %3591 = vmatprep.mubr.f32.mxu0 0.0
  %3592 = vmatmul.mubr.f32.gmra.mrb[0].mxu0 %v3476
  %v3593 = vpop.f32.mrb[0].mxu0
  %v3594 = vadd.f32 %v2998, %v3593
  %v3595 = vpop.f32.mrb[0].mxu0
  %3596 = vmatprep.mubr.f32.mxu0 0.0
  %3597 = vmatmul.mubr.f32.gmra.mrb[0].mxu0 %v3479
  %v3598 = vpop.f32.mrb[0].mxu0
  %v3599 = vadd.f32 %v2998, %v3598
  %v3600 = vpop.f32.mrb[0].mxu0
  %3601 = vmatprep.mubr.f32.mxu0 0.0
  %3602 = vmatmul.mubr.f32.gmra.mrb[0].mxu0 %v3482
  %v3603 = vpop.f32.mrb[0].mxu0
  %v3604 = vadd.f32 %v2998, %v3603
  %v3605 = vpop.f32.mrb[0].mxu0
  %3606 = vmatprep.mubr.f32.mxu0 0.0
  %3607 = vmatmul.mubr.f32.gmra.mrb[0].mxu0 %v3485
  %v3608 = vpop.f32.mrb[0].mxu0
  %v3609 = vadd.f32 %v2998, %v3608
  %v3610 = vpop.f32.mrb[0].mxu0
  %3611 = vmatprep.mubr.f32.mxu0 0.0
  %3612 = vmatmul.mubr.f32.gmra.mrb[0].mxu0 %v3488
  %v3613 = vpop.f32.mrb[0].mxu0
  %v3614 = vadd.f32 %v2998, %v3613
  %v3615 = vpop.f32.mrb[0].mxu0
  %3616 = vmatprep.mubr.f32.mxu0 0.0
  %3617 = vmatmul.mubr.f32.gmra.mrb[0].mxu0 %v3491
  %v3618 = vpop.f32.mrb[0].mxu0
  %v3619 = vadd.f32 %v2998, %v3618
  %v3620 = vpop.f32.mrb[0].mxu0
  %3621 = vmatprep.mubr.f32.mxu0 0.0
  %3622 = vmatmul.mubr.f32.gmra.mrb[0].mxu0 %v3494
  %v3623 = vpop.f32.mrb[0].mxu0
  %v3624 = vadd.f32 %v2998, %v3623
  %v3625 = vpop.f32.mrb[0].mxu0
  %3626 = vmatprep.mubr.f32.mxu0 0.0
  %3627 = vmatmul.mubr.f32.gmra.mrb[0].mxu0 %v3497
  %v3628 = vpop.f32.mrb[0].mxu0
  %v3629 = vadd.f32 %v2998, %v3628
  %v3630 = vpop.f32.mrb[0].mxu0
  %3631 = vmatprep.mubr.f32.mxu0 0.0
  %3632 = vmatmul.mubr.f32.gmra.mrb[0].mxu0 %v3500
  %v3633 = vpop.f32.mrb[0].mxu0
  %v3634 = vadd.f32 %v2998, %v3633
  %v3635 = vpop.f32.mrb[0].mxu0
  %3636 = vmatprep.mubr.f32.mxu0 0.0
  %3637 = vmatmul.mubr.f32.gmra.mrb[0].mxu0 %v3503
  %v3638 = vpop.f32.mrb[0].mxu0
  %v3639 = vadd.f32 %v2998, %v3638
  %v3640 = vpop.f32.mrb[0].mxu0
  %3641 = vmatprep.mubr.f32.mxu0 0.0
  %3642 = vmatmul.mubr.f32.gmra.mrb[0].mxu0 %v3506
  %v3643 = vpop.f32.mrb[0].mxu0
  %v3644 = vadd.f32 %v2998, %v3643
  %v3645 = vpop.f32.mrb[0].mxu0
  %3646 = vmatprep.mubr.f32.mxu0 0.0
  %3647 = vmatmul.mubr.f32.gmra.mrb[0].mxu0 %v3509
  %v3648 = vpop.f32.mrb[0].mxu0
  %v3649 = vadd.f32 %v2998, %v3648
  %v3650 = vpop.f32.mrb[0].mxu0
  %3651 = vmatprep.mubr.f32.mxu0 0.0
  %3652 = vmatmul.mubr.f32.gmra.mrb[0].mxu0 %v3512
  %v3653 = vpop.f32.mrb[0].mxu0
  %v3654 = vadd.f32 %v2998, %v3653
  %v3655 = vpop.f32.mrb[0].mxu0
  %3656 = vmatprep.mubr.f32.mxu0 0.0
  %3657 = vmatmul.mubr.f32.gmra.mrb[0].mxu0 %v3515
  %v3658 = vpop.f32.mrb[0].mxu0
  %v3659 = vadd.f32 %v2998, %v3658
  %v3660 = vpop.f32.mrb[0].mxu0
  %3661 = vdwg.mxu0
  %v3662 = vmax.f32 %v3584, 0.0
  %v3663 = vmax.f32 %v3589, 0.0
  %v3664 = vmax.f32 %v3594, 0.0
  %v3665 = vmax.f32 %v3599, 0.0
  %v3666 = vmax.f32 %v3604, 0.0
  %v3667 = vmax.f32 %v3609, 0.0
  %v3668 = vmax.f32 %v3614, 0.0
  %v3669 = vmax.f32 %v3619, 0.0
  %v3670 = vmax.f32 %v3624, 0.0
  %v3671 = vmax.f32 %v3629, 0.0
  %v3672 = vmax.f32 %v3634, 0.0
  %v3673 = vmax.f32 %v3639, 0.0
  %v3674 = vmax.f32 %v3644, 0.0
  %v3675 = vmax.f32 %v3649, 0.0
  %v3676 = vmax.f32 %v3654, 0.0
  %v3677 = vmax.f32 %v3659, 0.0
  %v3678 = vmax.f32 %v3437, %v3662
  %v3679 = vmax.f32 %v3438, %v3663
  %v3680 = vmax.f32 %v3439, %v3664
  %v3681 = vmax.f32 %v3440, %v3665
  %v3682 = vmax.f32 %v3441, %v3666
  %v3683 = vmax.f32 %v3442, %v3667
  %v3684 = vmax.f32 %v3443, %v3668
  %v3685 = vmax.f32 %v3444, %v3669
  %v3686 = vmax.f32 %v3445, %v3670
  %v3687 = vmax.f32 %v3446, %v3671
  %v3688 = vmax.f32 %v3447, %v3672
  %v3689 = vmax.f32 %v3448, %v3673
  %v3690 = vmax.f32 %v3449, %v3674
  %v3691 = vmax.f32 %v3450, %v3675
  %v3692 = vmax.f32 %v3451, %v3676
  %v3693 = vmax.f32 %v3452, %v3677
  %v3694 = vld [vmem:[%s0 + $0x780] sm:$0xff]
  %v3695 = vld [vmem:[%s0 + $0x788] sm:$0xff]
  %v3696 = vld [vmem:[%s0 + $0x790] sm:$0xff]
  %v3697 = vld [vmem:[%s0 + $0x798] sm:$0xff]
  %v3698 = vld [vmem:[%s0 + $0x7a0] sm:$0xff]
  %v3699 = vld [vmem:[%s0 + $0x7a8] sm:$0xff]
  %v3700 = vld [vmem:[%s0 + $0x7b0] sm:$0xff]
  %v3701 = vld [vmem:[%s0 + $0x7b8] sm:$0xff]
  %v3702 = vld [vmem:[%s0 + $0x7c0] sm:$0xff]
  %v3703 = vld [vmem:[%s0 + $0x7c8] sm:$0xff]
  %v3704 = vld [vmem:[%s0 + $0x7d0] sm:$0xff]
  %v3705 = vld [vmem:[%s0 + $0x7d8] sm:$0xff]
  %v3706 = vld [vmem:[%s0 + $0x7e0] sm:$0xff]
  %v3707 = vld [vmem:[%s0 + $0x7e8] sm:$0xff]
  %v3708 = vld [vmem:[%s0 + $0x7f0] sm:$0xff]
  %v3709 = vld [vmem:[%s0 + $0x7f8] sm:$0xff]
  %v3711 = vsel %vm60, %v3694, 0
  %v3714 = vsel %vm60, %v3695, 0
  %v3717 = vsel %vm60, %v3696, 0
  %v3720 = vsel %vm60, %v3697, 0
  %v3723 = vsel %vm60, %v3698, 0
  %v3726 = vsel %vm60, %v3699, 0
  %v3729 = vsel %vm60, %v3700, 0
  %v3732 = vsel %vm60, %v3701, 0
  %v3735 = vsel %vm60, %v3702, 0
  %v3738 = vsel %vm60, %v3703, 0
  %v3741 = vsel %vm60, %v3704, 0
  %v3744 = vsel %vm60, %v3705, 0
  %v3747 = vsel %vm60, %v3706, 0
  %v3750 = vsel %vm60, %v3707, 0
  %v3753 = vsel %vm60, %v3708, 0
  %v3756 = vsel %vm60, %v3709, 0
  %3758 = vmatprep.subr.mxu0 0.0
  %3759 = vmatpush1.msra.mxu0 %v2988
  %3760 = vmatprep.subr.mxu0 0.0
  %3761 = vmatpush1.msra.mxu0 %v2989
  %3762 = vmatprep.subr.mxu0 0.0
  %3763 = vmatpush1.msra.mxu0 %v2990
  %3764 = vmatprep.subr.mxu0 0.0
  %3765 = vmatpush1.msra.mxu0 %v2991
  %3766 = vmatprep.subr.mxu0 0.0
  %3767 = vmatpush1.msra.mxu0 %v3049
  %3768 = vmatprep.subr.mxu0 0.0
  %3769 = vmatpush1.msra.mxu0 0.0
  %3770 = vmatprep.subr.mxu0 0.0
  %3771 = vmatpush1.msra.mxu0 0.0
  %3772 = vmatprep.subr.mxu0 0.0
  %3773 = vmatpush1.msra.mxu0 0.0
  %3774 = vmatprep.subr.mxu0 0.0
  %3775 = vmatpush1.msra.mxu0 0.0
  %3776 = vmatprep.subr.mxu0 0.0
  %3777 = vmatpush1.msra.mxu0 0.0
  %3778 = vmatprep.subr.mxu0 0.0
  %3779 = vmatpush1.msra.mxu0 0.0
  %3780 = vmatprep.subr.mxu0 0.0
  %3781 = vmatpush1.msra.mxu0 0.0
  %3782 = vmatprep.subr.mxu0 0.0
  %3783 = vmatpush1.msra.mxu0 0.0
  %3784 = vmatprep.subr.mxu0 0.0
  %3785 = vmatpush1.msra.mxu0 0.0
  %3786 = vmatprep.subr.mxu0 0.0
  %3787 = vmatpush1.msra.mxu0 0.0
  %3788 = vmatprep.subr.mxu0 0.0
  %3789 = vmatpush1.msra.mxu0 0.0
  %3790 = vmatprep.subr.mxu0 0.0
  %3791 = vmatpush1.msra.mxu0 0.0
  %3792 = vmatprep.subr.mxu0 0.0
  %3793 = vmatpush1.msra.mxu0 0.0
  %3794 = vmatprep.subr.mxu0 0.0
  %3795 = vmatpush1.msra.mxu0 0.0
  %3796 = vmatprep.subr.mxu0 0.0
  %3797 = vmatpush1.msra.mxu0 0.0
  %3798 = vmatprep.subr.mxu0 0.0
  %3799 = vmatpush1.msra.mxu0 0.0
  %3800 = vmatprep.subr.mxu0 0.0
  %3801 = vmatpush1.msra.mxu0 0.0
  %3802 = vmatprep.subr.mxu0 0.0
  %3803 = vmatpush1.msra.mxu0 0.0
  %3804 = vmatprep.subr.mxu0 0.0
  %3805 = vmatpush1.msra.mxu0 0.0
  %3806 = vmatprep.subr.mxu0 0.0
  %3807 = vmatpush1.msra.mxu0 0.0
  %3808 = vmatprep.subr.mxu0 0.0
  %3809 = vmatpush1.msra.mxu0 0.0
  %3810 = vmatprep.subr.mxu0 0.0
  %3811 = vmatpush1.msra.mxu0 0.0
  %3812 = vmatprep.subr.mxu0 0.0
  %3813 = vmatpush1.msra.mxu0 0.0
  %3814 = vmatprep.subr.mxu0 0.0
  %3815 = vmatpush1.msra.mxu0 0.0
  %3816 = vmatprep.subr.mxu0 0.0
  %3817 = vmatpush1.msra.mxu0 0.0
  %3818 = vmatprep.subr.mxu0 0.0
  %3819 = vmatpush1.msra.mxu0 0.0
  %3820 = vmatprep.subr.mxu0 0.0
  %3821 = vmatpush1.msra.mxu0 0.0
  %3822 = vmatprep.mubr.f32.mxu0 0.0
  %3823 = vmatmul.mubr.f32.gmra.mrb[0].mxu0 %v3711
  %v3824 = vpop.f32.mrb[0].mxu0
  %v3825 = vadd.f32 %v2998, %v3824
  %v3826 = vpop.f32.mrb[0].mxu0
  %3827 = vmatprep.mubr.f32.mxu0 0.0
  %3828 = vmatmul.mubr.f32.gmra.mrb[0].mxu0 %v3714
  %v3829 = vpop.f32.mrb[0].mxu0
  %v3830 = vadd.f32 %v2998, %v3829
  %v3831 = vpop.f32.mrb[0].mxu0
  %3832 = vmatprep.mubr.f32.mxu0 0.0
  %3833 = vmatmul.mubr.f32.gmra.mrb[0].mxu0 %v3717
  %v3834 = vpop.f32.mrb[0].mxu0
  %v3835 = vadd.f32 %v2998, %v3834
  %v3836 = vpop.f32.mrb[0].mxu0
  %3837 = vmatprep.mubr.f32.mxu0 0.0
  %3838 = vmatmul.mubr.f32.gmra.mrb[0].mxu0 %v3720
  %v3839 = vpop.f32.mrb[0].mxu0
  %v3840 = vadd.f32 %v2998, %v3839
  %v3841 = vpop.f32.mrb[0].mxu0
  %3842 = vmatprep.mubr.f32.mxu0 0.0
  %3843 = vmatmul.mubr.f32.gmra.mrb[0].mxu0 %v3723
  %v3844 = vpop.f32.mrb[0].mxu0
  %v3845 = vadd.f32 %v2998, %v3844
  %v3846 = vpop.f32.mrb[0].mxu0
  %3847 = vmatprep.mubr.f32.mxu0 0.0
  %3848 = vmatmul.mubr.f32.gmra.mrb[0].mxu0 %v3726
  %v3849 = vpop.f32.mrb[0].mxu0
  %v3850 = vadd.f32 %v2998, %v3849
  %v3851 = vpop.f32.mrb[0].mxu0
  %3852 = vmatprep.mubr.f32.mxu0 0.0
  %3853 = vmatmul.mubr.f32.gmra.mrb[0].mxu0 %v3729
  %v3854 = vpop.f32.mrb[0].mxu0
  %v3855 = vadd.f32 %v2998, %v3854
  %v3856 = vpop.f32.mrb[0].mxu0
  %3857 = vmatprep.mubr.f32.mxu0 0.0
  %3858 = vmatmul.mubr.f32.gmra.mrb[0].mxu0 %v3732
  %v3859 = vpop.f32.mrb[0].mxu0
  %v3860 = vadd.f32 %v2998, %v3859
  %v3861 = vpop.f32.mrb[0].mxu0
  %3862 = vmatprep.mubr.f32.mxu0 0.0
  %3863 = vmatmul.mubr.f32.gmra.mrb[0].mxu0 %v3735
  %v3864 = vpop.f32.mrb[0].mxu0
  %v3865 = vadd.f32 %v2998, %v3864
  %v3866 = vpop.f32.mrb[0].mxu0
  %3867 = vmatprep.mubr.f32.mxu0 0.0
  %3868 = vmatmul.mubr.f32.gmra.mrb[0].mxu0 %v3738
  %v3869 = vpop.f32.mrb[0].mxu0
  %v3870 = vadd.f32 %v2998, %v3869
  %v3871 = vpop.f32.mrb[0].mxu0
  %3872 = vmatprep.mubr.f32.mxu0 0.0
  %3873 = vmatmul.mubr.f32.gmra.mrb[0].mxu0 %v3741
  %v3874 = vpop.f32.mrb[0].mxu0
  %v3875 = vadd.f32 %v2998, %v3874
  %v3876 = vpop.f32.mrb[0].mxu0
  %3877 = vmatprep.mubr.f32.mxu0 0.0
  %3878 = vmatmul.mubr.f32.gmra.mrb[0].mxu0 %v3744
  %v3879 = vpop.f32.mrb[0].mxu0
  %v3880 = vadd.f32 %v2998, %v3879
  %v3881 = vpop.f32.mrb[0].mxu0
  %3882 = vmatprep.mubr.f32.mxu0 0.0
  %3883 = vmatmul.mubr.f32.gmra.mrb[0].mxu0 %v3747
  %v3884 = vpop.f32.mrb[0].mxu0
  %v3885 = vadd.f32 %v2998, %v3884
  %v3886 = vpop.f32.mrb[0].mxu0
  %3887 = vmatprep.mubr.f32.mxu0 0.0
  %3888 = vmatmul.mubr.f32.gmra.mrb[0].mxu0 %v3750
  %v3889 = vpop.f32.mrb[0].mxu0
  %v3890 = vadd.f32 %v2998, %v3889
  %v3891 = vpop.f32.mrb[0].mxu0
  %3892 = vmatprep.mubr.f32.mxu0 0.0
  %3893 = vmatmul.mubr.f32.gmra.mrb[0].mxu0 %v3753
  %v3894 = vpop.f32.mrb[0].mxu0
  %v3895 = vadd.f32 %v2998, %v3894
  %v3896 = vpop.f32.mrb[0].mxu0
  %3897 = vmatprep.mubr.f32.mxu0 0.0
  %3898 = vmatmul.mubr.f32.gmra.mrb[0].mxu0 %v3756
  %v3899 = vpop.f32.mrb[0].mxu0
  %v3900 = vadd.f32 %v2998, %v3899
  %v3901 = vpop.f32.mrb[0].mxu0
  %3902 = vdwg.mxu0
  %v3903 = vmax.f32 %v3825, 0.0
  %v3904 = vmax.f32 %v3830, 0.0
  %v3905 = vmax.f32 %v3835, 0.0
  %v3906 = vmax.f32 %v3840, 0.0
  %v3907 = vmax.f32 %v3845, 0.0
  %v3908 = vmax.f32 %v3850, 0.0
  %v3909 = vmax.f32 %v3855, 0.0
  %v3910 = vmax.f32 %v3860, 0.0
  %v3911 = vmax.f32 %v3865, 0.0
  %v3912 = vmax.f32 %v3870, 0.0
  %v3913 = vmax.f32 %v3875, 0.0
  %v3914 = vmax.f32 %v3880, 0.0
  %v3915 = vmax.f32 %v3885, 0.0
  %v3916 = vmax.f32 %v3890, 0.0
  %v3917 = vmax.f32 %v3895, 0.0
  %v3918 = vmax.f32 %v3900, 0.0
  %v3919 = vmax.f32 %v3678, %v3903
  %v3920 = vmax.f32 %v3679, %v3904
  %v3921 = vmax.f32 %v3680, %v3905
  %v3922 = vmax.f32 %v3681, %v3906
  %v3923 = vmax.f32 %v3682, %v3907
  %v3924 = vmax.f32 %v3683, %v3908
  %v3925 = vmax.f32 %v3684, %v3909
  %v3926 = vmax.f32 %v3685, %v3910
  %v3927 = vmax.f32 %v3686, %v3911
  %v3928 = vmax.f32 %v3687, %v3912
  %v3929 = vmax.f32 %v3688, %v3913
  %v3930 = vmax.f32 %v3689, %v3914
  %v3931 = vmax.f32 %v3690, %v3915
  %v3932 = vmax.f32 %v3691, %v3916
  %v3933 = vmax.f32 %v3692, %v3917
  %v3934 = vmax.f32 %v3693, %v3918
  %3935 = vst.msk [vmem:[#allocation2 + $0x180] sm:$0xff] %vm997, %v3919
  %3936 = vst.msk [vmem:[#allocation2 + $0x188] sm:$0xff] %vm997, %v3920
  %3937 = vst.msk [vmem:[#allocation2 + $0x190] sm:$0xff] %vm997, %v3921
  %3938 = vst.msk [vmem:[#allocation2 + $0x198] sm:$0xff] %vm997, %v3922
  %3939 = vst.msk [vmem:[#allocation2 + $0x1a0] sm:$0xff] %vm997, %v3923
  %3940 = vst.msk [vmem:[#allocation2 + $0x1a8] sm:$0xff] %vm997, %v3924
  %3941 = vst.msk [vmem:[#allocation2 + $0x1b0] sm:$0xff] %vm997, %v3925
  %3942 = vst.msk [vmem:[#allocation2 + $0x1b8] sm:$0xff] %vm997, %v3926
  %3943 = vst.msk [vmem:[#allocation2 + $0x1c0] sm:$0xff] %vm997, %v3927
  %3944 = vst.msk [vmem:[#allocation2 + $0x1c8] sm:$0xff] %vm997, %v3928
  %3945 = vst.msk [vmem:[#allocation2 + $0x1d0] sm:$0xff] %vm997, %v3929
  %3946 = vst.msk [vmem:[#allocation2 + $0x1d8] sm:$0xff] %vm997, %v3930
  %3947 = vst.msk [vmem:[#allocation2 + $0x1e0] sm:$0xff] %vm997, %v3931
  %3948 = vst.msk [vmem:[#allocation2 + $0x1e8] sm:$0xff] %vm997, %v3932
  %3949 = vst.msk [vmem:[#allocation2 + $0x1f0] sm:$0xff] %vm997, %v3933
  %3950 = vst.msk [vmem:[#allocation2 + $0x1f8] sm:$0xff] %vm997, %v3934
  %v3951 = vld [vmem:[#allocation2] sm:$0xff]
  %v3952 = vld [vmem:[#allocation2 + $0x8] sm:$0xff]
  %v3953 = vld [vmem:[#allocation2 + $0x10] sm:$0xff]
  %v3954 = vld [vmem:[#allocation2 + $0x18] sm:$0xff]
  %v3955 = vld [vmem:[#allocation2 + $0x20] sm:$0xff]
  %v3956 = vld [vmem:[#allocation2 + $0x28] sm:$0xff]
  %v3957 = vld [vmem:[#allocation2 + $0x30] sm:$0xff]
  %v3958 = vld [vmem:[#allocation2 + $0x38] sm:$0xff]
  %v3959 = vld [vmem:[#allocation2 + $0x40] sm:$0xff]
  %v3960 = vld [vmem:[#allocation2 + $0x48] sm:$0xff]
  %v3961 = vld [vmem:[#allocation2 + $0x50] sm:$0xff]
  %v3962 = vld [vmem:[#allocation2 + $0x58] sm:$0xff]
  %3963 = vst.msk [vmem:[#allocation3] sm:$0xff] %vm997, %v3951
  %3964 = vst.msk [vmem:[#allocation3 + $0x18] sm:$0xff] %vm997, %v3952
  %3965 = vst.msk [vmem:[#allocation3 + $0x30] sm:$0xff] %vm997, %v3953
  %3966 = vst.msk [vmem:[#allocation3 + $0x48] sm:$0xff] %vm997, %v3954
  %3967 = vst.msk [vmem:[#allocation3 + $0x60] sm:$0xff] %vm997, %v3955
  %3968 = vst.msk [vmem:[#allocation3 + $0x78] sm:$0xff] %vm997, %v3956
  %3969 = vst.msk [vmem:[#allocation3 + $0x90] sm:$0xff] %vm997, %v3957
  %3970 = vst.msk [vmem:[#allocation3 + $0xa8] sm:$0xff] %vm997, %v3958
  %3971 = vst.msk [vmem:[#allocation3 + $0xc0] sm:$0xff] %vm997, %v3959
  %3972 = vst.msk [vmem:[#allocation3 + $0xd8] sm:$0xff] %vm997, %v3960
  %3973 = vst.msk [vmem:[#allocation3 + $0xf0] sm:$0xff] %vm997, %v3961
  %3974 = vst.msk [vmem:[#allocation3 + $0x108] sm:$0xff] %vm997, %v3962
  %v3975 = vld [vmem:[#allocation2 + $0x8] sm:$0xff]
  %v3976 = vld [vmem:[#allocation2 + $0x10] sm:$0xff]
  %v3977 = vld [vmem:[#allocation2 + $0x18] sm:$0xff]
  %v3978 = vld [vmem:[#allocation2 + $0x20] sm:$0xff]
  %v3979 = vld [vmem:[#allocation2 + $0x28] sm:$0xff]
  %v3980 = vld [vmem:[#allocation2 + $0x30] sm:$0xff]
  %v3981 = vld [vmem:[#allocation2 + $0x38] sm:$0xff]
  %v3982 = vld [vmem:[#allocation2 + $0x40] sm:$0xff]
  %v3983 = vld [vmem:[#allocation2 + $0x48] sm:$0xff]
  %v3984 = vld [vmem:[#allocation2 + $0x50] sm:$0xff]
  %v3985 = vld [vmem:[#allocation2 + $0x58] sm:$0xff]
  %v3986 = vld [vmem:[#allocation2 + $0x60] sm:$0xff]
  %3999 = vrot.lane.b32.xlu0 %v3975, 32
  %v4000 = vpop.permute.xlu0 %3999
  %4001 = vrot.lane.b32.xlu0 %v3976, 32
  %v4002 = vpop.permute.xlu0 %4001
  %4003 = vrot.lane.b32.xlu0 %v3977, 32
  %v4004 = vpop.permute.xlu0 %4003
  %4005 = vrot.lane.b32.xlu0 %v3978, 32
  %v4006 = vpop.permute.xlu0 %4005
  %4007 = vrot.lane.b32.xlu0 %v3979, 32
  %v4008 = vpop.permute.xlu0 %4007
  %4009 = vrot.lane.b32.xlu0 %v3980, 32
  %v4010 = vpop.permute.xlu0 %4009
  %4011 = vrot.lane.b32.xlu0 %v3981, 32
  %v4012 = vpop.permute.xlu0 %4011
  %4013 = vrot.lane.b32.xlu0 %v3982, 32
  %v4014 = vpop.permute.xlu0 %4013
  %4015 = vrot.lane.b32.xlu0 %v3983, 32
  %v4016 = vpop.permute.xlu0 %4015
  %4017 = vrot.lane.b32.xlu0 %v3984, 32
  %v4018 = vpop.permute.xlu0 %4017
  %4019 = vrot.lane.b32.xlu0 %v3985, 32
  %v4020 = vpop.permute.xlu0 %4019
  %4021 = vrot.lane.b32.xlu0 %v3986, 32
  %v4022 = vpop.permute.xlu0 %4021
  %vm4035 = vcmask 523520
  %4036 = vst.msk [vmem:[#allocation3] sm:$0xff] %vm4035, %v4000
  %4037 = vst.msk [vmem:[#allocation3 + $0x18] sm:$0xff] %vm4035, %v4002
  %4038 = vst.msk [vmem:[#allocation3 + $0x30] sm:$0xff] %vm4035, %v4004
  %4039 = vst.msk [vmem:[#allocation3 + $0x48] sm:$0xff] %vm4035, %v4006
  %4040 = vst.msk [vmem:[#allocation3 + $0x60] sm:$0xff] %vm4035, %v4008
  %4041 = vst.msk [vmem:[#allocation3 + $0x78] sm:$0xff] %vm4035, %v4010
  %4042 = vst.msk [vmem:[#allocation3 + $0x90] sm:$0xff] %vm4035, %v4012
  %4043 = vst.msk [vmem:[#allocation3 + $0xa8] sm:$0xff] %vm4035, %v4014
  %4044 = vst.msk [vmem:[#allocation3 + $0xc0] sm:$0xff] %vm4035, %v4016
  %4045 = vst.msk [vmem:[#allocation3 + $0xd8] sm:$0xff] %vm4035, %v4018
  %4046 = vst.msk [vmem:[#allocation3 + $0xf0] sm:$0xff] %vm4035, %v4020
  %4047 = vst.msk [vmem:[#allocation3 + $0x108] sm:$0xff] %vm4035, %v4022
  %v4048 = vld [vmem:[#allocation2 + $0x10] sm:$0xff]
  %v4049 = vld [vmem:[#allocation2 + $0x18] sm:$0xff]
  %v4050 = vld [vmem:[#allocation2 + $0x20] sm:$0xff]
  %v4051 = vld [vmem:[#allocation2 + $0x28] sm:$0xff]
  %v4052 = vld [vmem:[#allocation2 + $0x30] sm:$0xff]
  %v4053 = vld [vmem:[#allocation2 + $0x38] sm:$0xff]
  %v4054 = vld [vmem:[#allocation2 + $0x40] sm:$0xff]
  %v4055 = vld [vmem:[#allocation2 + $0x48] sm:$0xff]
  %v4056 = vld [vmem:[#allocation2 + $0x50] sm:$0xff]
  %v4057 = vld [vmem:[#allocation2 + $0x58] sm:$0xff]
  %v4058 = vld [vmem:[#allocation2 + $0x60] sm:$0xff]
  %v4059 = vld [vmem:[#allocation2 + $0x68] sm:$0xff]
  %4072 = vrot.lane.b32.xlu0 %v4048, 64
  %v4073 = vpop.permute.xlu0 %4072
  %4074 = vrot.lane.b32.xlu0 %v4049, 64
  %v4075 = vpop.permute.xlu0 %4074
  %4076 = vrot.lane.b32.xlu0 %v4050, 64
  %v4077 = vpop.permute.xlu0 %4076
  %4078 = vrot.lane.b32.xlu0 %v4051, 64
  %v4079 = vpop.permute.xlu0 %4078
  %4080 = vrot.lane.b32.xlu0 %v4052, 64
  %v4081 = vpop.permute.xlu0 %4080
  %4082 = vrot.lane.b32.xlu0 %v4053, 64
  %v4083 = vpop.permute.xlu0 %4082
  %4084 = vrot.lane.b32.xlu0 %v4054, 64
  %v4085 = vpop.permute.xlu0 %4084
  %4086 = vrot.lane.b32.xlu0 %v4055, 64
  %v4087 = vpop.permute.xlu0 %4086
  %4088 = vrot.lane.b32.xlu0 %v4056, 64
  %v4089 = vpop.permute.xlu0 %4088
  %4090 = vrot.lane.b32.xlu0 %v4057, 64
  %v4091 = vpop.permute.xlu0 %4090
  %4092 = vrot.lane.b32.xlu0 %v4058, 64
  %v4093 = vpop.permute.xlu0 %4092
  %4094 = vrot.lane.b32.xlu0 %v4059, 64
  %v4095 = vpop.permute.xlu0 %4094
  %vm4108 = vcmask 785920
  %4109 = vst.msk [vmem:[#allocation3] sm:$0xff] %vm4108, %v4073
  %4110 = vst.msk [vmem:[#allocation3 + $0x18] sm:$0xff] %vm4108, %v4075
  %4111 = vst.msk [vmem:[#allocation3 + $0x30] sm:$0xff] %vm4108, %v4077
  %4112 = vst.msk [vmem:[#allocation3 + $0x48] sm:$0xff] %vm4108, %v4079
  %4113 = vst.msk [vmem:[#allocation3 + $0x60] sm:$0xff] %vm4108, %v4081
  %4114 = vst.msk [vmem:[#allocation3 + $0x78] sm:$0xff] %vm4108, %v4083
  %4115 = vst.msk [vmem:[#allocation3 + $0x90] sm:$0xff] %vm4108, %v4085
  %4116 = vst.msk [vmem:[#allocation3 + $0xa8] sm:$0xff] %vm4108, %v4087
  %4117 = vst.msk [vmem:[#allocation3 + $0xc0] sm:$0xff] %vm4108, %v4089
  %4118 = vst.msk [vmem:[#allocation3 + $0xd8] sm:$0xff] %vm4108, %v4091
  %4119 = vst.msk [vmem:[#allocation3 + $0xf0] sm:$0xff] %vm4108, %v4093
  %4120 = vst.msk [vmem:[#allocation3 + $0x108] sm:$0xff] %vm4108, %v4095
  %v4121 = vld [vmem:[#allocation2 + $0x40] sm:$0xff]
  %v4122 = vld [vmem:[#allocation2 + $0x48] sm:$0xff]
  %v4123 = vld [vmem:[#allocation2 + $0x50] sm:$0xff]
  %v4124 = vld [vmem:[#allocation2 + $0x58] sm:$0xff]
  %v4125 = vld [vmem:[#allocation2 + $0x60] sm:$0xff]
  %v4126 = vld [vmem:[#allocation2 + $0x68] sm:$0xff]
  %v4127 = vld [vmem:[#allocation2 + $0x70] sm:$0xff]
  %v4128 = vld [vmem:[#allocation2 + $0x78] sm:$0xff]
  %v4129 = vld [vmem:[#allocation2 + $0x80] sm:$0xff]
  %v4130 = vld [vmem:[#allocation2 + $0x88] sm:$0xff]
  %v4131 = vld [vmem:[#allocation2 + $0x90] sm:$0xff]
  %v4132 = vld [vmem:[#allocation2 + $0x98] sm:$0xff]
  %4145 = vrot.lane.b32.xlu0 %v4121, 96
  %v4146 = vpop.permute.xlu0 %4145
  %4147 = vrot.lane.b32.xlu0 %v4122, 96
  %v4148 = vpop.permute.xlu0 %4147
  %4149 = vrot.lane.b32.xlu0 %v4123, 96
  %v4150 = vpop.permute.xlu0 %4149
  %4151 = vrot.lane.b32.xlu0 %v4124, 96
  %v4152 = vpop.permute.xlu0 %4151
  %4153 = vrot.lane.b32.xlu0 %v4125, 96
  %v4154 = vpop.permute.xlu0 %4153
  %4155 = vrot.lane.b32.xlu0 %v4126, 96
  %v4156 = vpop.permute.xlu0 %4155
  %4157 = vrot.lane.b32.xlu0 %v4127, 96
  %v4158 = vpop.permute.xlu0 %4157
  %4159 = vrot.lane.b32.xlu0 %v4128, 96
  %v4160 = vpop.permute.xlu0 %4159
  %4161 = vrot.lane.b32.xlu0 %v4129, 96
  %v4162 = vpop.permute.xlu0 %4161
  %4163 = vrot.lane.b32.xlu0 %v4130, 96
  %v4164 = vpop.permute.xlu0 %4163
  %4165 = vrot.lane.b32.xlu0 %v4131, 96
  %v4166 = vpop.permute.xlu0 %4165
  %4167 = vrot.lane.b32.xlu0 %v4132, 96
  %v4168 = vpop.permute.xlu0 %4167
  %vm4181 = vcmask 1048320
  %4182 = vst.msk [vmem:[#allocation3] sm:$0xff] %vm4181, %v4146
  %4183 = vst.msk [vmem:[#allocation3 + $0x18] sm:$0xff] %vm4181, %v4148
  %4184 = vst.msk [vmem:[#allocation3 + $0x30] sm:$0xff] %vm4181, %v4150
  %4185 = vst.msk [vmem:[#allocation3 + $0x48] sm:$0xff] %vm4181, %v4152
  %4186 = vst.msk [vmem:[#allocation3 + $0x60] sm:$0xff] %vm4181, %v4154
  %4187 = vst.msk [vmem:[#allocation3 + $0x78] sm:$0xff] %vm4181, %v4156
  %4188 = vst.msk [vmem:[#allocation3 + $0x90] sm:$0xff] %vm4181, %v4158
  %4189 = vst.msk [vmem:[#allocation3 + $0xa8] sm:$0xff] %vm4181, %v4160
  %4190 = vst.msk [vmem:[#allocation3 + $0xc0] sm:$0xff] %vm4181, %v4162
  %4191 = vst.msk [vmem:[#allocation3 + $0xd8] sm:$0xff] %vm4181, %v4164
  %4192 = vst.msk [vmem:[#allocation3 + $0xf0] sm:$0xff] %vm4181, %v4166
  %4193 = vst.msk [vmem:[#allocation3 + $0x108] sm:$0xff] %vm4181, %v4168
  %v4194 = vld [vmem:[#allocation2 + $0x48] sm:$0xff]
  %v4195 = vld [vmem:[#allocation2 + $0x50] sm:$0xff]
  %v4196 = vld [vmem:[#allocation2 + $0x58] sm:$0xff]
  %v4197 = vld [vmem:[#allocation2 + $0x60] sm:$0xff]
  %v4198 = vld [vmem:[#allocation2 + $0x68] sm:$0xff]
  %v4199 = vld [vmem:[#allocation2 + $0x70] sm:$0xff]
  %v4200 = vld [vmem:[#allocation2 + $0x78] sm:$0xff]
  %v4201 = vld [vmem:[#allocation2 + $0x80] sm:$0xff]
  %v4202 = vld [vmem:[#allocation2 + $0x88] sm:$0xff]
  %v4203 = vld [vmem:[#allocation2 + $0x90] sm:$0xff]
  %v4204 = vld [vmem:[#allocation2 + $0x98] sm:$0xff]
  %v4205 = vld [vmem:[#allocation2 + $0xa0] sm:$0xff]
  %4206 = vst.msk [vmem:[#allocation3 + $0x8] sm:$0xff] %vm997, %v4194
  %4207 = vst.msk [vmem:[#allocation3 + $0x20] sm:$0xff] %vm997, %v4195
  %4208 = vst.msk [vmem:[#allocation3 + $0x38] sm:$0xff] %vm997, %v4196
  %4209 = vst.msk [vmem:[#allocation3 + $0x50] sm:$0xff] %vm997, %v4197
  %4210 = vst.msk [vmem:[#allocation3 + $0x68] sm:$0xff] %vm997, %v4198
  %4211 = vst.msk [vmem:[#allocation3 + $0x80] sm:$0xff] %vm997, %v4199
  %4212 = vst.msk [vmem:[#allocation3 + $0x98] sm:$0xff] %vm997, %v4200
  %4213 = vst.msk [vmem:[#allocation3 + $0xb0] sm:$0xff] %vm997, %v4201
  %4214 = vst.msk [vmem:[#allocation3 + $0xc8] sm:$0xff] %vm997, %v4202
  %4215 = vst.msk [vmem:[#allocation3 + $0xe0] sm:$0xff] %vm997, %v4203
  %4216 = vst.msk [vmem:[#allocation3 + $0xf8] sm:$0xff] %vm997, %v4204
  %4217 = vst.msk [vmem:[#allocation3 + $0x110] sm:$0xff] %vm997, %v4205
  %v4218 = vld [vmem:[#allocation2 + $0x50] sm:$0xff]
  %v4219 = vld [vmem:[#allocation2 + $0x58] sm:$0xff]
  %v4220 = vld [vmem:[#allocation2 + $0x60] sm:$0xff]
  %v4221 = vld [vmem:[#allocation2 + $0x68] sm:$0xff]
  %v4222 = vld [vmem:[#allocation2 + $0x70] sm:$0xff]
  %v4223 = vld [vmem:[#allocation2 + $0x78] sm:$0xff]
  %v4224 = vld [vmem:[#allocation2 + $0x80] sm:$0xff]
  %v4225 = vld [vmem:[#allocation2 + $0x88] sm:$0xff]
  %v4226 = vld [vmem:[#allocation2 + $0x90] sm:$0xff]
  %v4227 = vld [vmem:[#allocation2 + $0x98] sm:$0xff]
  %v4228 = vld [vmem:[#allocation2 + $0xa0] sm:$0xff]
  %v4229 = vld [vmem:[#allocation2 + $0xa8] sm:$0xff]
  %4242 = vrot.lane.b32.xlu0 %v4218, 32
  %v4243 = vpop.permute.xlu0 %4242
  %4244 = vrot.lane.b32.xlu0 %v4219, 32
  %v4245 = vpop.permute.xlu0 %4244
  %4246 = vrot.lane.b32.xlu0 %v4220, 32
  %v4247 = vpop.permute.xlu0 %4246
  %4248 = vrot.lane.b32.xlu0 %v4221, 32
  %v4249 = vpop.permute.xlu0 %4248
  %4250 = vrot.lane.b32.xlu0 %v4222, 32
  %v4251 = vpop.permute.xlu0 %4250
  %4252 = vrot.lane.b32.xlu0 %v4223, 32
  %v4253 = vpop.permute.xlu0 %4252
  %4254 = vrot.lane.b32.xlu0 %v4224, 32
  %v4255 = vpop.permute.xlu0 %4254
  %4256 = vrot.lane.b32.xlu0 %v4225, 32
  %v4257 = vpop.permute.xlu0 %4256
  %4258 = vrot.lane.b32.xlu0 %v4226, 32
  %v4259 = vpop.permute.xlu0 %4258
  %4260 = vrot.lane.b32.xlu0 %v4227, 32
  %v4261 = vpop.permute.xlu0 %4260
  %4262 = vrot.lane.b32.xlu0 %v4228, 32
  %v4263 = vpop.permute.xlu0 %4262
  %4264 = vrot.lane.b32.xlu0 %v4229, 32
  %v4265 = vpop.permute.xlu0 %4264
  %4278 = vst.msk [vmem:[#allocation3 + $0x8] sm:$0xff] %vm4035, %v4243
  %4279 = vst.msk [vmem:[#allocation3 + $0x20] sm:$0xff] %vm4035, %v4245
  %4280 = vst.msk [vmem:[#allocation3 + $0x38] sm:$0xff] %vm4035, %v4247
  %4281 = vst.msk [vmem:[#allocation3 + $0x50] sm:$0xff] %vm4035, %v4249
  %4282 = vst.msk [vmem:[#allocation3 + $0x68] sm:$0xff] %vm4035, %v4251
  %4283 = vst.msk [vmem:[#allocation3 + $0x80] sm:$0xff] %vm4035, %v4253
  %4284 = vst.msk [vmem:[#allocation3 + $0x98] sm:$0xff] %vm4035, %v4255
  %4285 = vst.msk [vmem:[#allocation3 + $0xb0] sm:$0xff] %vm4035, %v4257
  %4286 = vst.msk [vmem:[#allocation3 + $0xc8] sm:$0xff] %vm4035, %v4259
  %4287 = vst.msk [vmem:[#allocation3 + $0xe0] sm:$0xff] %vm4035, %v4261
  %4288 = vst.msk [vmem:[#allocation3 + $0xf8] sm:$0xff] %vm4035, %v4263
  %4289 = vst.msk [vmem:[#allocation3 + $0x110] sm:$0xff] %vm4035, %v4265
  %v4290 = vld [vmem:[#allocation2 + $0x80] sm:$0xff]
  %v4291 = vld [vmem:[#allocation2 + $0x88] sm:$0xff]
  %v4292 = vld [vmem:[#allocation2 + $0x90] sm:$0xff]
  %v4293 = vld [vmem:[#allocation2 + $0x98] sm:$0xff]
  %v4294 = vld [vmem:[#allocation2 + $0xa0] sm:$0xff]
  %v4295 = vld [vmem:[#allocation2 + $0xa8] sm:$0xff]
  %v4296 = vld [vmem:[#allocation2 + $0xb0] sm:$0xff]
  %v4297 = vld [vmem:[#allocation2 + $0xb8] sm:$0xff]
  %v4298 = vld [vmem:[#allocation2 + $0xc0] sm:$0xff]
  %v4299 = vld [vmem:[#allocation2 + $0xc8] sm:$0xff]
  %v4300 = vld [vmem:[#allocation2 + $0xd0] sm:$0xff]
  %v4301 = vld [vmem:[#allocation2 + $0xd8] sm:$0xff]
  %4314 = vrot.lane.b32.xlu0 %v4290, 64
  %v4315 = vpop.permute.xlu0 %4314
  %4316 = vrot.lane.b32.xlu0 %v4291, 64
  %v4317 = vpop.permute.xlu0 %4316
  %4318 = vrot.lane.b32.xlu0 %v4292, 64
  %v4319 = vpop.permute.xlu0 %4318
  %4320 = vrot.lane.b32.xlu0 %v4293, 64
  %v4321 = vpop.permute.xlu0 %4320
  %4322 = vrot.lane.b32.xlu0 %v4294, 64
  %v4323 = vpop.permute.xlu0 %4322
  %4324 = vrot.lane.b32.xlu0 %v4295, 64
  %v4325 = vpop.permute.xlu0 %4324
  %4326 = vrot.lane.b32.xlu0 %v4296, 64
  %v4327 = vpop.permute.xlu0 %4326
  %4328 = vrot.lane.b32.xlu0 %v4297, 64
  %v4329 = vpop.permute.xlu0 %4328
  %4330 = vrot.lane.b32.xlu0 %v4298, 64
  %v4331 = vpop.permute.xlu0 %4330
  %4332 = vrot.lane.b32.xlu0 %v4299, 64
  %v4333 = vpop.permute.xlu0 %4332
  %4334 = vrot.lane.b32.xlu0 %v4300, 64
  %v4335 = vpop.permute.xlu0 %4334
  %4336 = vrot.lane.b32.xlu0 %v4301, 64
  %v4337 = vpop.permute.xlu0 %4336
  %4350 = vst.msk [vmem:[#allocation3 + $0x8] sm:$0xff] %vm4108, %v4315
  %4351 = vst.msk [vmem:[#allocation3 + $0x20] sm:$0xff] %vm4108, %v4317
  %4352 = vst.msk [vmem:[#allocation3 + $0x38] sm:$0xff] %vm4108, %v4319
  %4353 = vst.msk [vmem:[#allocation3 + $0x50] sm:$0xff] %vm4108, %v4321
  %4354 = vst.msk [vmem:[#allocation3 + $0x68] sm:$0xff] %vm4108, %v4323
  %4355 = vst.msk [vmem:[#allocation3 + $0x80] sm:$0xff] %vm4108, %v4325
  %4356 = vst.msk [vmem:[#allocation3 + $0x98] sm:$0xff] %vm4108, %v4327
  %4357 = vst.msk [vmem:[#allocation3 + $0xb0] sm:$0xff] %vm4108, %v4329
  %4358 = vst.msk [vmem:[#allocation3 + $0xc8] sm:$0xff] %vm4108, %v4331
  %4359 = vst.msk [vmem:[#allocation3 + $0xe0] sm:$0xff] %vm4108, %v4333
  %4360 = vst.msk [vmem:[#allocation3 + $0xf8] sm:$0xff] %vm4108, %v4335
  %4361 = vst.msk [vmem:[#allocation3 + $0x110] sm:$0xff] %vm4108, %v4337
  %v4362 = vld [vmem:[#allocation2 + $0x88] sm:$0xff]
  %v4363 = vld [vmem:[#allocation2 + $0x90] sm:$0xff]
  %v4364 = vld [vmem:[#allocation2 + $0x98] sm:$0xff]
  %v4365 = vld [vmem:[#allocation2 + $0xa0] sm:$0xff]
  %v4366 = vld [vmem:[#allocation2 + $0xa8] sm:$0xff]
  %v4367 = vld [vmem:[#allocation2 + $0xb0] sm:$0xff]
  %v4368 = vld [vmem:[#allocation2 + $0xb8] sm:$0xff]
  %v4369 = vld [vmem:[#allocation2 + $0xc0] sm:$0xff]
  %v4370 = vld [vmem:[#allocation2 + $0xc8] sm:$0xff]
  %v4371 = vld [vmem:[#allocation2 + $0xd0] sm:$0xff]
  %v4372 = vld [vmem:[#allocation2 + $0xd8] sm:$0xff]
  %v4373 = vld [vmem:[#allocation2 + $0xe0] sm:$0xff]
  %4386 = vrot.lane.b32.xlu0 %v4362, 96
  %v4387 = vpop.permute.xlu0 %4386
  %4388 = vrot.lane.b32.xlu0 %v4363, 96
  %v4389 = vpop.permute.xlu0 %4388
  %4390 = vrot.lane.b32.xlu0 %v4364, 96
  %v4391 = vpop.permute.xlu0 %4390
  %4392 = vrot.lane.b32.xlu0 %v4365, 96
  %v4393 = vpop.permute.xlu0 %4392
  %4394 = vrot.lane.b32.xlu0 %v4366, 96
  %v4395 = vpop.permute.xlu0 %4394
  %4396 = vrot.lane.b32.xlu0 %v4367, 96
  %v4397 = vpop.permute.xlu0 %4396
  %4398 = vrot.lane.b32.xlu0 %v4368, 96
  %v4399 = vpop.permute.xlu0 %4398
  %4400 = vrot.lane.b32.xlu0 %v4369, 96
  %v4401 = vpop.permute.xlu0 %4400
  %4402 = vrot.lane.b32.xlu0 %v4370, 96
  %v4403 = vpop.permute.xlu0 %4402
  %4404 = vrot.lane.b32.xlu0 %v4371, 96
  %v4405 = vpop.permute.xlu0 %4404
  %4406 = vrot.lane.b32.xlu0 %v4372, 96
  %v4407 = vpop.permute.xlu0 %4406
  %4408 = vrot.lane.b32.xlu0 %v4373, 96
  %v4409 = vpop.permute.xlu0 %4408
  %4422 = vst.msk [vmem:[#allocation3 + $0x8] sm:$0xff] %vm4181, %v4387
  %4423 = vst.msk [vmem:[#allocation3 + $0x20] sm:$0xff] %vm4181, %v4389
  %4424 = vst.msk [vmem:[#allocation3 + $0x38] sm:$0xff] %vm4181, %v4391
  %4425 = vst.msk [vmem:[#allocation3 + $0x50] sm:$0xff] %vm4181, %v4393
  %4426 = vst.msk [vmem:[#allocation3 + $0x68] sm:$0xff] %vm4181, %v4395
  %4427 = vst.msk [vmem:[#allocation3 + $0x80] sm:$0xff] %vm4181, %v4397
  %4428 = vst.msk [vmem:[#allocation3 + $0x98] sm:$0xff] %vm4181, %v4399
  %4429 = vst.msk [vmem:[#allocation3 + $0xb0] sm:$0xff] %vm4181, %v4401
  %4430 = vst.msk [vmem:[#allocation3 + $0xc8] sm:$0xff] %vm4181, %v4403
  %4431 = vst.msk [vmem:[#allocation3 + $0xe0] sm:$0xff] %vm4181, %v4405
  %4432 = vst.msk [vmem:[#allocation3 + $0xf8] sm:$0xff] %vm4181, %v4407
  %4433 = vst.msk [vmem:[#allocation3 + $0x110] sm:$0xff] %vm4181, %v4409
  %v4434 = vld [vmem:[#allocation2 + $0x90] sm:$0xff]
  %v4435 = vld [vmem:[#allocation2 + $0x98] sm:$0xff]
  %v4436 = vld [vmem:[#allocation2 + $0xa0] sm:$0xff]
  %v4437 = vld [vmem:[#allocation2 + $0xa8] sm:$0xff]
  %v4438 = vld [vmem:[#allocation2 + $0xb0] sm:$0xff]
  %v4439 = vld [vmem:[#allocation2 + $0xb8] sm:$0xff]
  %v4440 = vld [vmem:[#allocation2 + $0xc0] sm:$0xff]
  %v4441 = vld [vmem:[#allocation2 + $0xc8] sm:$0xff]
  %v4442 = vld [vmem:[#allocation2 + $0xd0] sm:$0xff]
  %v4443 = vld [vmem:[#allocation2 + $0xd8] sm:$0xff]
  %v4444 = vld [vmem:[#allocation2 + $0xe0] sm:$0xff]
  %v4445 = vld [vmem:[#allocation2 + $0xe8] sm:$0xff]
  %4446 = vst.msk [vmem:[#allocation3 + $0x10] sm:$0xff] %vm997, %v4434
  %4447 = vst.msk [vmem:[#allocation3 + $0x28] sm:$0xff] %vm997, %v4435
  %4448 = vst.msk [vmem:[#allocation3 + $0x40] sm:$0xff] %vm997, %v4436
  %4449 = vst.msk [vmem:[#allocation3 + $0x58] sm:$0xff] %vm997, %v4437
  %4450 = vst.msk [vmem:[#allocation3 + $0x70] sm:$0xff] %vm997, %v4438
  %4451 = vst.msk [vmem:[#allocation3 + $0x88] sm:$0xff] %vm997, %v4439
  %4452 = vst.msk [vmem:[#allocation3 + $0xa0] sm:$0xff] %vm997, %v4440
  %4453 = vst.msk [vmem:[#allocation3 + $0xb8] sm:$0xff] %vm997, %v4441
  %4454 = vst.msk [vmem:[#allocation3 + $0xd0] sm:$0xff] %vm997, %v4442
  %4455 = vst.msk [vmem:[#allocation3 + $0xe8] sm:$0xff] %vm997, %v4443
  %4456 = vst.msk [vmem:[#allocation3 + $0x100] sm:$0xff] %vm997, %v4444
  %4457 = vst.msk [vmem:[#allocation3 + $0x118] sm:$0xff] %vm997, %v4445
  %v4458 = vld [vmem:[#allocation3] sm:$0xff]
  %v4459 = vld [vmem:[#allocation3 + $0x8] sm:$0xff]
  %v4460 = vld [vmem:[#allocation3 + $0x10] sm:$0xff]
  %v4461 = vld [vmem:[#allocation3 + $0x18] sm:$0xff]
  %v4462 = vld [vmem:[#allocation3 + $0x20] sm:$0xff]
  %v4463 = vld [vmem:[#allocation3 + $0x28] sm:$0xff]
  %v4464 = vld [vmem:[#allocation3 + $0x30] sm:$0xff]
  %v4465 = vld [vmem:[#allocation3 + $0x38] sm:$0xff]
  %v4466 = vld [vmem:[#allocation3 + $0x40] sm:$0xff]
  %v4467 = vld [vmem:[#allocation3 + $0x48] sm:$0xff]
  %v4468 = vld [vmem:[#allocation3 + $0x50] sm:$0xff]
  %v4469 = vld [vmem:[#allocation3 + $0x58] sm:$0xff]
  %v4470 = vld [vmem:[#allocation3 + $0x60] sm:$0xff]
  %v4471 = vld [vmem:[#allocation3 + $0x68] sm:$0xff]
  %v4472 = vld [vmem:[#allocation3 + $0x70] sm:$0xff]
  %v4473 = vld [vmem:[#allocation3 + $0x78] sm:$0xff]
  %v4474 = vld [vmem:[#allocation3 + $0x80] sm:$0xff]
  %v4475 = vld [vmem:[#allocation3 + $0x88] sm:$0xff]
  %v4476 = vld [vmem:[#allocation3 + $0x90] sm:$0xff]
  %v4477 = vld [vmem:[#allocation3 + $0x98] sm:$0xff]
  %v4478 = vld [vmem:[#allocation3 + $0xa0] sm:$0xff]
  %v4479 = vld [vmem:[#allocation3 + $0xa8] sm:$0xff]
  %v4480 = vld [vmem:[#allocation3 + $0xb0] sm:$0xff]
  %v4481 = vld [vmem:[#allocation3 + $0xb8] sm:$0xff]
  %v4482 = vld [vmem:[#allocation3 + $0xc0] sm:$0xff]
  %v4483 = vld [vmem:[#allocation3 + $0xc8] sm:$0xff]
  %v4484 = vld [vmem:[#allocation3 + $0xd0] sm:$0xff]
  %v4485 = vld [vmem:[#allocation3 + $0xd8] sm:$0xff]
  %v4486 = vld [vmem:[#allocation3 + $0xe0] sm:$0xff]
  %v4487 = vld [vmem:[#allocation3 + $0xe8] sm:$0xff]
  %v4488 = vld [vmem:[#allocation3 + $0xf0] sm:$0xff]
  %v4489 = vld [vmem:[#allocation3 + $0xf8] sm:$0xff]
  %v4490 = vld [vmem:[#allocation3 + $0x100] sm:$0xff]
  %v4491 = vld [vmem:[#allocation3 + $0x108] sm:$0xff]
  %v4492 = vld [vmem:[#allocation3 + $0x110] sm:$0xff]
  %v4493 = vld [vmem:[#allocation3 + $0x118] sm:$0xff]
  %v4494 = vld [vmem:[%s3] sm:$0xff]
  %v4495 = vld [vmem:[%s3 + $0x8] sm:$0xff]
  %v4496 = vld [vmem:[%s3 + $0x10] sm:$0xff]
  %v4497 = vld [vmem:[%s3 + $0x18] sm:$0xff]
  %v4498 = vld [vmem:[%s3 + $0x20] sm:$0xff]
  %v4499 = vld [vmem:[%s3 + $0x28] sm:$0xff]
  %v4500 = vld [vmem:[%s3 + $0x30] sm:$0xff]
  %v4501 = vld [vmem:[%s3 + $0x38] sm:$0xff]
  %v4502 = vld [vmem:[%s3 + $0x40] sm:$0xff]
  %v4503 = vld [vmem:[%s3 + $0x48] sm:$0xff]
  %v4504 = vld [vmem:[%s3 + $0x50] sm:$0xff]
  %v4505 = vld [vmem:[%s3 + $0x58] sm:$0xff]
  %v4506 = vld [vmem:[%s3 + $0x60] sm:$0xff]
  %v4507 = vld [vmem:[%s3 + $0x68] sm:$0xff]
  %v4508 = vld [vmem:[%s3 + $0x70] sm:$0xff]
  %v4509 = vld [vmem:[%s3 + $0x78] sm:$0xff]
  %v4510 = vld [vmem:[%s3 + $0x80] sm:$0xff]
  %v4511 = vld [vmem:[%s3 + $0x88] sm:$0xff]
  %v4512 = vld [vmem:[%s3 + $0x90] sm:$0xff]
  %v4513 = vld [vmem:[%s3 + $0x98] sm:$0xff]
  %v4514 = vld [vmem:[%s3 + $0xa0] sm:$0xff]
  %v4515 = vld [vmem:[%s3 + $0xa8] sm:$0xff]
  %v4516 = vld [vmem:[%s3 + $0xb0] sm:$0xff]
  %v4517 = vld [vmem:[%s3 + $0xb8] sm:$0xff]
  %v4518 = vld [vmem:[%s3 + $0xc0] sm:$0xff]
  %v4519 = vld [vmem:[%s3 + $0xc8] sm:$0xff]
  %v4520 = vld [vmem:[%s3 + $0xd0] sm:$0xff]
  %v4521 = vld [vmem:[%s3 + $0xd8] sm:$0xff]
  %v4522 = vld [vmem:[%s3 + $0xe0] sm:$0xff]
  %v4523 = vld [vmem:[%s3 + $0xe8] sm:$0xff]
  %v4524 = vld [vmem:[%s3 + $0xf0] sm:$0xff]
  %v4525 = vld [vmem:[%s3 + $0xf8] sm:$0xff]
  %v4526 = vld [vmem:[%s3 + $0x100] sm:$0xff]
  %v4527 = vld [vmem:[%s3 + $0x108] sm:$0xff]
  %v4528 = vld [vmem:[%s3 + $0x110] sm:$0xff]
  %v4529 = vld [vmem:[%s3 + $0x118] sm:$0xff]
  %v4530 = vld [vmem:[%s4] sm:$0x1]
  %v4532 = vlaneseq
  %v4533 = vshrl.u32 %v4532, 7
  %v4534 = vsub.s32 0, %v4533
  %v4535 = vrot.slane %v4530, %v4534
  %v4538 = vsel %vm997, %v4460, 0
  %v4541 = vsel %vm997, %v4463, 0
  %v4544 = vsel %vm997, %v4466, 0
  %v4547 = vsel %vm997, %v4469, 0
  %v4550 = vsel %vm997, %v4472, 0
  %v4553 = vsel %vm997, %v4475, 0
  %v4556 = vsel %vm997, %v4478, 0
  %v4559 = vsel %vm997, %v4481, 0
  %v4562 = vsel %vm997, %v4484, 0
  %v4565 = vsel %vm997, %v4487, 0
  %v4568 = vsel %vm997, %v4490, 0
  %v4571 = vsel %vm997, %v4493, 0
  %4573 = vmatprep.subr.mxu0 0.0
  %4574 = vmatpush1.msra.mxu0 %v4494
  %4575 = vmatprep.subr.mxu0 0.0
  %4576 = vmatpush1.msra.mxu0 %v4495
  %4577 = vmatprep.subr.mxu0 0.0
  %4578 = vmatpush1.msra.mxu0 %v4496
  %4579 = vmatprep.subr.mxu0 0.0
  %4580 = vmatpush1.msra.mxu0 %v4497
  %4581 = vmatprep.subr.mxu0 0.0
  %4582 = vmatpush1.msra.mxu0 %v4498
  %4583 = vmatprep.subr.mxu0 0.0
  %4584 = vmatpush1.msra.mxu0 %v4499
  %4585 = vmatprep.subr.mxu0 0.0
  %4586 = vmatpush1.msra.mxu0 %v4500
  %4587 = vmatprep.subr.mxu0 0.0
  %4588 = vmatpush1.msra.mxu0 %v4501
  %4589 = vmatprep.subr.mxu0 0.0
  %4590 = vmatpush1.msra.mxu0 %v4502
  %4591 = vmatprep.subr.mxu0 0.0
  %4592 = vmatpush1.msra.mxu0 %v4503
  %4593 = vmatprep.subr.mxu0 0.0
  %4594 = vmatpush1.msra.mxu0 %v4504
  %4595 = vmatprep.subr.mxu0 0.0
  %4596 = vmatpush1.msra.mxu0 %v4505
  %4597 = vmatprep.subr.mxu0 0.0
  %4598 = vmatpush1.msra.mxu0 %v4506
  %4599 = vmatprep.subr.mxu0 0.0
  %4600 = vmatpush1.msra.mxu0 %v4507
  %4601 = vmatprep.subr.mxu0 0.0
  %4602 = vmatpush1.msra.mxu0 %v4508
  %4603 = vmatprep.subr.mxu0 0.0
  %4604 = vmatpush1.msra.mxu0 %v4509
  %4605 = vmatprep.subr.mxu0 0.0
  %4606 = vmatpush1.msra.mxu0 %v4510
  %4607 = vmatprep.subr.mxu0 0.0
  %4608 = vmatpush1.msra.mxu0 %v4511
  %4609 = vmatprep.subr.mxu0 0.0
  %4610 = vmatpush1.msra.mxu0 %v4512
  %4611 = vmatprep.subr.mxu0 0.0
  %4612 = vmatpush1.msra.mxu0 %v4513
  %4613 = vmatprep.subr.mxu0 0.0
  %4614 = vmatpush1.msra.mxu0 %v4514
  %4615 = vmatprep.subr.mxu0 0.0
  %4616 = vmatpush1.msra.mxu0 %v4515
  %4617 = vmatprep.subr.mxu0 0.0
  %4618 = vmatpush1.msra.mxu0 %v4516
  %4619 = vmatprep.subr.mxu0 0.0
  %4620 = vmatpush1.msra.mxu0 %v4517
  %4621 = vmatprep.subr.mxu0 0.0
  %4622 = vmatpush1.msra.mxu0 %v4518
  %4623 = vmatprep.subr.mxu0 0.0
  %4624 = vmatpush1.msra.mxu0 %v4519
  %4625 = vmatprep.subr.mxu0 0.0
  %4626 = vmatpush1.msra.mxu0 %v4520
  %4627 = vmatprep.subr.mxu0 0.0
  %4628 = vmatpush1.msra.mxu0 %v4521
  %4629 = vmatprep.subr.mxu0 0.0
  %4630 = vmatpush1.msra.mxu0 %v4522
  %4631 = vmatprep.subr.mxu0 0.0
  %4632 = vmatpush1.msra.mxu0 %v4523
  %4633 = vmatprep.subr.mxu0 0.0
  %4634 = vmatpush1.msra.mxu0 %v4524
  %4635 = vmatprep.subr.mxu0 0.0
  %4636 = vmatpush1.msra.mxu0 %v4525
  %4637 = vmatprep.mubr.f32.mxu0 %v4459
  %4638 = vmatmul.mubr.f32.gmra.mrb[0].mxu0 %v4458
  %v4639 = vpop.f32.mrb[0].mxu0
  %v4640 = vadd.f32 %v4535, %v4639
  %v4641 = vpop.f32.mrb[0].mxu0
  %4642 = vmatprep.mubr.f32.mxu0 %v4462
  %4643 = vmatmul.mubr.f32.gmra.mrb[0].mxu0 %v4461
  %v4644 = vpop.f32.mrb[0].mxu0
  %v4645 = vadd.f32 %v4535, %v4644
  %v4646 = vpop.f32.mrb[0].mxu0
  %4647 = vmatprep.mubr.f32.mxu0 %v4465
  %4648 = vmatmul.mubr.f32.gmra.mrb[0].mxu0 %v4464
  %v4649 = vpop.f32.mrb[0].mxu0
  %v4650 = vadd.f32 %v4535, %v4649
  %v4651 = vpop.f32.mrb[0].mxu0
  %4652 = vmatprep.mubr.f32.mxu0 %v4468
  %4653 = vmatmul.mubr.f32.gmra.mrb[0].mxu0 %v4467
  %v4654 = vpop.f32.mrb[0].mxu0
  %v4655 = vadd.f32 %v4535, %v4654
  %v4656 = vpop.f32.mrb[0].mxu0
  %4657 = vmatprep.mubr.f32.mxu0 %v4471
  %4658 = vmatmul.mubr.f32.gmra.mrb[0].mxu0 %v4470
  %v4659 = vpop.f32.mrb[0].mxu0
  %v4660 = vadd.f32 %v4535, %v4659
  %v4661 = vpop.f32.mrb[0].mxu0
  %4662 = vmatprep.mubr.f32.mxu0 %v4474
  %4663 = vmatmul.mubr.f32.gmra.mrb[0].mxu0 %v4473
  %v4664 = vpop.f32.mrb[0].mxu0
  %v4665 = vadd.f32 %v4535, %v4664
  %v4666 = vpop.f32.mrb[0].mxu0
  %4667 = vmatprep.mubr.f32.mxu0 %v4477
  %4668 = vmatmul.mubr.f32.gmra.mrb[0].mxu0 %v4476
  %v4669 = vpop.f32.mrb[0].mxu0
  %v4670 = vadd.f32 %v4535, %v4669
  %v4671 = vpop.f32.mrb[0].mxu0
  %4672 = vmatprep.mubr.f32.mxu0 %v4480
  %4673 = vmatmul.mubr.f32.gmra.mrb[0].mxu0 %v4479
  %v4674 = vpop.f32.mrb[0].mxu0
  %v4675 = vadd.f32 %v4535, %v4674
  %v4676 = vpop.f32.mrb[0].mxu0
  %4677 = vmatprep.mubr.f32.mxu0 %v4483
  %4678 = vmatmul.mubr.f32.gmra.mrb[0].mxu0 %v4482
  %v4679 = vpop.f32.mrb[0].mxu0
  %v4680 = vadd.f32 %v4535, %v4679
  %v4681 = vpop.f32.mrb[0].mxu0
  %4682 = vmatprep.mubr.f32.mxu0 %v4486
  %4683 = vmatmul.mubr.f32.gmra.mrb[0].mxu0 %v4485
  %v4684 = vpop.f32.mrb[0].mxu0
  %v4685 = vadd.f32 %v4535, %v4684
  %v4686 = vpop.f32.mrb[0].mxu0
  %4687 = vmatprep.mubr.f32.mxu0 %v4489
  %4688 = vmatmul.mubr.f32.gmra.mrb[0].mxu0 %v4488
  %v4689 = vpop.f32.mrb[0].mxu0
  %v4690 = vadd.f32 %v4535, %v4689
  %v4691 = vpop.f32.mrb[0].mxu0
  %4692 = vmatprep.mubr.f32.mxu0 %v4492
  %4693 = vmatmul.mubr.f32.gmra.mrb[0].mxu0 %v4491
  %v4694 = vpop.f32.mrb[0].mxu0
  %v4695 = vadd.f32 %v4535, %v4694
  %v4696 = vpop.f32.mrb[0].mxu0
  %4697 = vdwg.mxu0
  %4698 = vmatprep.subr.mxu0 0.0
  %4699 = vmatpush1.msra.mxu0 %v4526
  %4700 = vmatprep.subr.mxu0 0.0
  %4701 = vmatpush1.msra.mxu0 %v4527
  %4702 = vmatprep.subr.mxu0 0.0
  %4703 = vmatpush1.msra.mxu0 %v4528
  %4704 = vmatprep.subr.mxu0 0.0
  %4705 = vmatpush1.msra.mxu0 %v4529
  %4706 = vmatprep.subr.mxu0 0.0
  %4707 = vmatpush1.msra.mxu0 0.0
  %4708 = vmatprep.subr.mxu0 0.0
  %4709 = vmatpush1.msra.mxu0 0.0
  %4710 = vmatprep.subr.mxu0 0.0
  %4711 = vmatpush1.msra.mxu0 0.0
  %4712 = vmatprep.subr.mxu0 0.0
  %4713 = vmatpush1.msra.mxu0 0.0
  %4714 = vmatprep.subr.mxu0 0.0
  %4715 = vmatpush1.msra.mxu0 0.0
  %4716 = vmatprep.subr.mxu0 0.0
  %4717 = vmatpush1.msra.mxu0 0.0
  %4718 = vmatprep.subr.mxu0 0.0
  %4719 = vmatpush1.msra.mxu0 0.0
  %4720 = vmatprep.subr.mxu0 0.0
  %4721 = vmatpush1.msra.mxu0 0.0
  %4722 = vmatprep.subr.mxu0 0.0
  %4723 = vmatpush1.msra.mxu0 0.0
  %4724 = vmatprep.subr.mxu0 0.0
  %4725 = vmatpush1.msra.mxu0 0.0
  %4726 = vmatprep.subr.mxu0 0.0
  %4727 = vmatpush1.msra.mxu0 0.0
  %4728 = vmatprep.subr.mxu0 0.0
  %4729 = vmatpush1.msra.mxu0 0.0
  %4730 = vmatprep.subr.mxu0 0.0
  %4731 = vmatpush1.msra.mxu0 0.0
  %4732 = vmatprep.subr.mxu0 0.0
  %4733 = vmatpush1.msra.mxu0 0.0
  %4734 = vmatprep.subr.mxu0 0.0
  %4735 = vmatpush1.msra.mxu0 0.0
  %4736 = vmatprep.subr.mxu0 0.0
  %4737 = vmatpush1.msra.mxu0 0.0
  %4738 = vmatprep.subr.mxu0 0.0
  %4739 = vmatpush1.msra.mxu0 0.0
  %4740 = vmatprep.subr.mxu0 0.0
  %4741 = vmatpush1.msra.mxu0 0.0
  %4742 = vmatprep.subr.mxu0 0.0
  %4743 = vmatpush1.msra.mxu0 0.0
  %4744 = vmatprep.subr.mxu0 0.0
  %4745 = vmatpush1.msra.mxu0 0.0
  %4746 = vmatprep.subr.mxu0 0.0
  %4747 = vmatpush1.msra.mxu0 0.0
  %4748 = vmatprep.subr.mxu0 0.0
  %4749 = vmatpush1.msra.mxu0 0.0
  %4750 = vmatprep.subr.mxu0 0.0
  %4751 = vmatpush1.msra.mxu0 0.0
  %4752 = vmatprep.subr.mxu0 0.0
  %4753 = vmatpush1.msra.mxu0 0.0
  %4754 = vmatprep.subr.mxu0 0.0
  %4755 = vmatpush1.msra.mxu0 0.0
  %4756 = vmatprep.subr.mxu0 0.0
  %4757 = vmatpush1.msra.mxu0 0.0
  %4758 = vmatprep.subr.mxu0 0.0
  %4759 = vmatpush1.msra.mxu0 0.0
  %4760 = vmatprep.subr.mxu0 0.0
  %4761 = vmatpush1.msra.mxu0 0.0
  %4762 = vmatprep.mubr.f32.mxu0 0.0
  %4763 = vmatmul.mubr.f32.gmra.mrb[0].mxu0 %v4538
  %v4764 = vpop.f32.mrb[0].mxu0
  %v4765 = vadd.f32 %v4640, %v4764
  %v4766 = vpop.f32.mrb[0].mxu0
  %4767 = vmatprep.mubr.f32.mxu0 0.0
  %4768 = vmatmul.mubr.f32.gmra.mrb[0].mxu0 %v4541
  %v4769 = vpop.f32.mrb[0].mxu0
  %v4770 = vadd.f32 %v4645, %v4769
  %v4771 = vpop.f32.mrb[0].mxu0
  %4772 = vmatprep.mubr.f32.mxu0 0.0
  %4773 = vmatmul.mubr.f32.gmra.mrb[0].mxu0 %v4544
  %v4774 = vpop.f32.mrb[0].mxu0
  %v4775 = vadd.f32 %v4650, %v4774
  %v4776 = vpop.f32.mrb[0].mxu0
  %4777 = vmatprep.mubr.f32.mxu0 0.0
  %4778 = vmatmul.mubr.f32.gmra.mrb[0].mxu0 %v4547
  %v4779 = vpop.f32.mrb[0].mxu0
  %v4780 = vadd.f32 %v4655, %v4779
  %v4781 = vpop.f32.mrb[0].mxu0
  %4782 = vmatprep.mubr.f32.mxu0 0.0
  %4783 = vmatmul.mubr.f32.gmra.mrb[0].mxu0 %v4550
  %v4784 = vpop.f32.mrb[0].mxu0
  %v4785 = vadd.f32 %v4660, %v4784
  %v4786 = vpop.f32.mrb[0].mxu0
  %4787 = vmatprep.mubr.f32.mxu0 0.0
  %4788 = vmatmul.mubr.f32.gmra.mrb[0].mxu0 %v4553
  %v4789 = vpop.f32.mrb[0].mxu0
  %v4790 = vadd.f32 %v4665, %v4789
  %v4791 = vpop.f32.mrb[0].mxu0
  %4792 = vmatprep.mubr.f32.mxu0 0.0
  %4793 = vmatmul.mubr.f32.gmra.mrb[0].mxu0 %v4556
  %v4794 = vpop.f32.mrb[0].mxu0
  %v4795 = vadd.f32 %v4670, %v4794
  %v4796 = vpop.f32.mrb[0].mxu0
  %4797 = vmatprep.mubr.f32.mxu0 0.0
  %4798 = vmatmul.mubr.f32.gmra.mrb[0].mxu0 %v4559
  %v4799 = vpop.f32.mrb[0].mxu0
  %v4800 = vadd.f32 %v4675, %v4799
  %v4801 = vpop.f32.mrb[0].mxu0
  %4802 = vmatprep.mubr.f32.mxu0 0.0
  %4803 = vmatmul.mubr.f32.gmra.mrb[0].mxu0 %v4562
  %v4804 = vpop.f32.mrb[0].mxu0
  %v4805 = vadd.f32 %v4680, %v4804
  %v4806 = vpop.f32.mrb[0].mxu0
  %4807 = vmatprep.mubr.f32.mxu0 0.0
  %4808 = vmatmul.mubr.f32.gmra.mrb[0].mxu0 %v4565
  %v4809 = vpop.f32.mrb[0].mxu0
  %v4810 = vadd.f32 %v4685, %v4809
  %v4811 = vpop.f32.mrb[0].mxu0
  %4812 = vmatprep.mubr.f32.mxu0 0.0
  %4813 = vmatmul.mubr.f32.gmra.mrb[0].mxu0 %v4568
  %v4814 = vpop.f32.mrb[0].mxu0
  %v4815 = vadd.f32 %v4690, %v4814
  %v4816 = vpop.f32.mrb[0].mxu0
  %4817 = vmatprep.mubr.f32.mxu0 0.0
  %4818 = vmatmul.mubr.f32.gmra.mrb[0].mxu0 %v4571
  %v4819 = vpop.f32.mrb[0].mxu0
  %v4820 = vadd.f32 %v4695, %v4819
  %v4821 = vpop.f32.mrb[0].mxu0
  %4822 = vdwg.mxu0
  %v4823 = vmax.f32 %v4765, 0.0
  %v4824 = vmax.f32 %v4770, 0.0
  %v4825 = vmax.f32 %v4775, 0.0
  %v4826 = vmax.f32 %v4780, 0.0
  %v4827 = vmax.f32 %v4785, 0.0
  %v4828 = vmax.f32 %v4790, 0.0
  %v4829 = vmax.f32 %v4795, 0.0
  %v4830 = vmax.f32 %v4800, 0.0
  %v4831 = vmax.f32 %v4805, 0.0
  %v4832 = vmax.f32 %v4810, 0.0
  %v4833 = vmax.f32 %v4815, 0.0
  %v4834 = vmax.f32 %v4820, 0.0
  %vm4835 = vcmask 523264
  %4836 = vst.msk [vmem:[#allocation4] sm:$0xff] %vm4835, %v4823
  %4837 = vst.msk [vmem:[#allocation4 + $0x8] sm:$0xff] %vm4835, %v4824
  %4838 = vst.msk [vmem:[#allocation4 + $0x10] sm:$0xff] %vm4835, %v4825
  %4839 = vst.msk [vmem:[#allocation4 + $0x18] sm:$0xff] %vm4835, %v4826
  %4840 = vst.msk [vmem:[#allocation4 + $0x20] sm:$0xff] %vm4835, %v4827
  %4841 = vst.msk [vmem:[#allocation4 + $0x28] sm:$0xff] %vm4835, %v4828
  %4842 = vst.msk [vmem:[#allocation4 + $0x30] sm:$0xff] %vm4835, %v4829
  %4843 = vst.msk [vmem:[#allocation4 + $0x38] sm:$0xff] %vm4835, %v4830
  %4844 = vst.msk [vmem:[#allocation4 + $0x40] sm:$0xff] %vm4835, %v4831
  %4845 = vst.msk [vmem:[#allocation4 + $0x48] sm:$0xff] %vm4835, %v4832
  %4846 = vst.msk [vmem:[#allocation4 + $0x50] sm:$0xff] %vm4835, %v4833
  %4847 = vst.msk [vmem:[#allocation4 + $0x58] sm:$0xff] %vm4835, %v4834
  %v4848 = vld [vmem:[#allocation2 + $0x60] sm:$0xff]
  %v4849 = vld [vmem:[#allocation2 + $0x68] sm:$0xff]
  %v4850 = vld [vmem:[#allocation2 + $0x70] sm:$0xff]
  %v4851 = vld [vmem:[#allocation2 + $0x78] sm:$0xff]
  %v4852 = vld [vmem:[#allocation2 + $0x80] sm:$0xff]
  %v4853 = vld [vmem:[#allocation2 + $0x88] sm:$0xff]
  %v4854 = vld [vmem:[#allocation2 + $0x90] sm:$0xff]
  %v4855 = vld [vmem:[#allocation2 + $0x98] sm:$0xff]
  %v4856 = vld [vmem:[#allocation2 + $0xa0] sm:$0xff]
  %v4857 = vld [vmem:[#allocation2 + $0xa8] sm:$0xff]
  %v4858 = vld [vmem:[#allocation2 + $0xb0] sm:$0xff]
  %v4859 = vld [vmem:[#allocation2 + $0xb8] sm:$0xff]
  %4860 = vst.msk [vmem:[#allocation3] sm:$0xff] %vm997, %v4848
  %4861 = vst.msk [vmem:[#allocation3 + $0x18] sm:$0xff] %vm997, %v4849
  %4862 = vst.msk [vmem:[#allocation3 + $0x30] sm:$0xff] %vm997, %v4850
  %4863 = vst.msk [vmem:[#allocation3 + $0x48] sm:$0xff] %vm997, %v4851
  %4864 = vst.msk [vmem:[#allocation3 + $0x60] sm:$0xff] %vm997, %v4852
  %4865 = vst.msk [vmem:[#allocation3 + $0x78] sm:$0xff] %vm997, %v4853
  %4866 = vst.msk [vmem:[#allocation3 + $0x90] sm:$0xff] %vm997, %v4854
  %4867 = vst.msk [vmem:[#allocation3 + $0xa8] sm:$0xff] %vm997, %v4855
  %4868 = vst.msk [vmem:[#allocation3 + $0xc0] sm:$0xff] %vm997, %v4856
  %4869 = vst.msk [vmem:[#allocation3 + $0xd8] sm:$0xff] %vm997, %v4857
  %4870 = vst.msk [vmem:[#allocation3 + $0xf0] sm:$0xff] %vm997, %v4858
  %4871 = vst.msk [vmem:[#allocation3 + $0x108] sm:$0xff] %vm997, %v4859
  %v4872 = vld [vmem:[#allocation2 + $0x68] sm:$0xff]
  %v4873 = vld [vmem:[#allocation2 + $0x70] sm:$0xff]
  %v4874 = vld [vmem:[#allocation2 + $0x78] sm:$0xff]
  %v4875 = vld [vmem:[#allocation2 + $0x80] sm:$0xff]
  %v4876 = vld [vmem:[#allocation2 + $0x88] sm:$0xff]
  %v4877 = vld [vmem:[#allocation2 + $0x90] sm:$0xff]
  %v4878 = vld [vmem:[#allocation2 + $0x98] sm:$0xff]
  %v4879 = vld [vmem:[#allocation2 + $0xa0] sm:$0xff]
  %v4880 = vld [vmem:[#allocation2 + $0xa8] sm:$0xff]
  %v4881 = vld [vmem:[#allocation2 + $0xb0] sm:$0xff]
  %v4882 = vld [vmem:[#allocation2 + $0xb8] sm:$0xff]
  %v4883 = vld [vmem:[#allocation2 + $0xc0] sm:$0xff]
  %4896 = vrot.lane.b32.xlu0 %v4872, 32
  %v4897 = vpop.permute.xlu0 %4896
  %4898 = vrot.lane.b32.xlu0 %v4873, 32
  %v4899 = vpop.permute.xlu0 %4898
  %4900 = vrot.lane.b32.xlu0 %v4874, 32
  %v4901 = vpop.permute.xlu0 %4900
  %4902 = vrot.lane.b32.xlu0 %v4875, 32
  %v4903 = vpop.permute.xlu0 %4902
  %4904 = vrot.lane.b32.xlu0 %v4876, 32
  %v4905 = vpop.permute.xlu0 %4904
  %4906 = vrot.lane.b32.xlu0 %v4877, 32
  %v4907 = vpop.permute.xlu0 %4906
  %4908 = vrot.lane.b32.xlu0 %v4878, 32
  %v4909 = vpop.permute.xlu0 %4908
  %4910 = vrot.lane.b32.xlu0 %v4879, 32
  %v4911 = vpop.permute.xlu0 %4910
  %4912 = vrot.lane.b32.xlu0 %v4880, 32
  %v4913 = vpop.permute.xlu0 %4912
  %4914 = vrot.lane.b32.xlu0 %v4881, 32
  %v4915 = vpop.permute.xlu0 %4914
  %4916 = vrot.lane.b32.xlu0 %v4882, 32
  %v4917 = vpop.permute.xlu0 %4916
  %4918 = vrot.lane.b32.xlu0 %v4883, 32
  %v4919 = vpop.permute.xlu0 %4918
  %4932 = vst.msk [vmem:[#allocation3] sm:$0xff] %vm4035, %v4897
  %4933 = vst.msk [vmem:[#allocation3 + $0x18] sm:$0xff] %vm4035, %v4899
  %4934 = vst.msk [vmem:[#allocation3 + $0x30] sm:$0xff] %vm4035, %v4901
  %4935 = vst.msk [vmem:[#allocation3 + $0x48] sm:$0xff] %vm4035, %v4903
  %4936 = vst.msk [vmem:[#allocation3 + $0x60] sm:$0xff] %vm4035, %v4905
  %4937 = vst.msk [vmem:[#allocation3 + $0x78] sm:$0xff] %vm4035, %v4907
  %4938 = vst.msk [vmem:[#allocation3 + $0x90] sm:$0xff] %vm4035, %v4909
  %4939 = vst.msk [vmem:[#allocation3 + $0xa8] sm:$0xff] %vm4035, %v4911
  %4940 = vst.msk [vmem:[#allocation3 + $0xc0] sm:$0xff] %vm4035, %v4913
  %4941 = vst.msk [vmem:[#allocation3 + $0xd8] sm:$0xff] %vm4035, %v4915
  %4942 = vst.msk [vmem:[#allocation3 + $0xf0] sm:$0xff] %vm4035, %v4917
  %4943 = vst.msk [vmem:[#allocation3 + $0x108] sm:$0xff] %vm4035, %v4919
  %v4944 = vld [vmem:[#allocation2 + $0x70] sm:$0xff]
  %v4945 = vld [vmem:[#allocation2 + $0x78] sm:$0xff]
  %v4946 = vld [vmem:[#allocation2 + $0x80] sm:$0xff]
  %v4947 = vld [vmem:[#allocation2 + $0x88] sm:$0xff]
  %v4948 = vld [vmem:[#allocation2 + $0x90] sm:$0xff]
  %v4949 = vld [vmem:[#allocation2 + $0x98] sm:$0xff]
  %v4950 = vld [vmem:[#allocation2 + $0xa0] sm:$0xff]
  %v4951 = vld [vmem:[#allocation2 + $0xa8] sm:$0xff]
  %v4952 = vld [vmem:[#allocation2 + $0xb0] sm:$0xff]
  %v4953 = vld [vmem:[#allocation2 + $0xb8] sm:$0xff]
  %v4954 = vld [vmem:[#allocation2 + $0xc0] sm:$0xff]
  %v4955 = vld [vmem:[#allocation2 + $0xc8] sm:$0xff]
  %4968 = vrot.lane.b32.xlu0 %v4944, 64
  %v4969 = vpop.permute.xlu0 %4968
  %4970 = vrot.lane.b32.xlu0 %v4945, 64
  %v4971 = vpop.permute.xlu0 %4970
  %4972 = vrot.lane.b32.xlu0 %v4946, 64
  %v4973 = vpop.permute.xlu0 %4972
  %4974 = vrot.lane.b32.xlu0 %v4947, 64
  %v4975 = vpop.permute.xlu0 %4974
  %4976 = vrot.lane.b32.xlu0 %v4948, 64
  %v4977 = vpop.permute.xlu0 %4976
  %4978 = vrot.lane.b32.xlu0 %v4949, 64
  %v4979 = vpop.permute.xlu0 %4978
  %4980 = vrot.lane.b32.xlu0 %v4950, 64
  %v4981 = vpop.permute.xlu0 %4980
  %4982 = vrot.lane.b32.xlu0 %v4951, 64
  %v4983 = vpop.permute.xlu0 %4982
  %4984 = vrot.lane.b32.xlu0 %v4952, 64
  %v4985 = vpop.permute.xlu0 %4984
  %4986 = vrot.lane.b32.xlu0 %v4953, 64
  %v4987 = vpop.permute.xlu0 %4986
  %4988 = vrot.lane.b32.xlu0 %v4954, 64
  %v4989 = vpop.permute.xlu0 %4988
  %4990 = vrot.lane.b32.xlu0 %v4955, 64
  %v4991 = vpop.permute.xlu0 %4990
  %5004 = vst.msk [vmem:[#allocation3] sm:$0xff] %vm4108, %v4969
  %5005 = vst.msk [vmem:[#allocation3 + $0x18] sm:$0xff] %vm4108, %v4971
  %5006 = vst.msk [vmem:[#allocation3 + $0x30] sm:$0xff] %vm4108, %v4973
  %5007 = vst.msk [vmem:[#allocation3 + $0x48] sm:$0xff] %vm4108, %v4975
  %5008 = vst.msk [vmem:[#allocation3 + $0x60] sm:$0xff] %vm4108, %v4977
  %5009 = vst.msk [vmem:[#allocation3 + $0x78] sm:$0xff] %vm4108, %v4979
  %5010 = vst.msk [vmem:[#allocation3 + $0x90] sm:$0xff] %vm4108, %v4981
  %5011 = vst.msk [vmem:[#allocation3 + $0xa8] sm:$0xff] %vm4108, %v4983
  %5012 = vst.msk [vmem:[#allocation3 + $0xc0] sm:$0xff] %vm4108, %v4985
  %5013 = vst.msk [vmem:[#allocation3 + $0xd8] sm:$0xff] %vm4108, %v4987
  %5014 = vst.msk [vmem:[#allocation3 + $0xf0] sm:$0xff] %vm4108, %v4989
  %5015 = vst.msk [vmem:[#allocation3 + $0x108] sm:$0xff] %vm4108, %v4991
  %v5016 = vld [vmem:[#allocation2 + $0xa0] sm:$0xff]
  %v5017 = vld [vmem:[#allocation2 + $0xa8] sm:$0xff]
  %v5018 = vld [vmem:[#allocation2 + $0xb0] sm:$0xff]
  %v5019 = vld [vmem:[#allocation2 + $0xb8] sm:$0xff]
  %v5020 = vld [vmem:[#allocation2 + $0xc0] sm:$0xff]
  %v5021 = vld [vmem:[#allocation2 + $0xc8] sm:$0xff]
  %v5022 = vld [vmem:[#allocation2 + $0xd0] sm:$0xff]
  %v5023 = vld [vmem:[#allocation2 + $0xd8] sm:$0xff]
  %v5024 = vld [vmem:[#allocation2 + $0xe0] sm:$0xff]
  %v5025 = vld [vmem:[#allocation2 + $0xe8] sm:$0xff]
  %v5026 = vld [vmem:[#allocation2 + $0xf0] sm:$0xff]
  %v5027 = vld [vmem:[#allocation2 + $0xf8] sm:$0xff]
  %5040 = vrot.lane.b32.xlu0 %v5016, 96
  %v5041 = vpop.permute.xlu0 %5040
  %5042 = vrot.lane.b32.xlu0 %v5017, 96
  %v5043 = vpop.permute.xlu0 %5042
  %5044 = vrot.lane.b32.xlu0 %v5018, 96
  %v5045 = vpop.permute.xlu0 %5044
  %5046 = vrot.lane.b32.xlu0 %v5019, 96
  %v5047 = vpop.permute.xlu0 %5046
  %5048 = vrot.lane.b32.xlu0 %v5020, 96
  %v5049 = vpop.permute.xlu0 %5048
  %5050 = vrot.lane.b32.xlu0 %v5021, 96
  %v5051 = vpop.permute.xlu0 %5050
  %5052 = vrot.lane.b32.xlu0 %v5022, 96
  %v5053 = vpop.permute.xlu0 %5052
  %5054 = vrot.lane.b32.xlu0 %v5023, 96
  %v5055 = vpop.permute.xlu0 %5054
  %5056 = vrot.lane.b32.xlu0 %v5024, 96
  %v5057 = vpop.permute.xlu0 %5056
  %5058 = vrot.lane.b32.xlu0 %v5025, 96
  %v5059 = vpop.permute.xlu0 %5058
  %5060 = vrot.lane.b32.xlu0 %v5026, 96
  %v5061 = vpop.permute.xlu0 %5060
  %5062 = vrot.lane.b32.xlu0 %v5027, 96
  %v5063 = vpop.permute.xlu0 %5062
  %5076 = vst.msk [vmem:[#allocation3] sm:$0xff] %vm4181, %v5041
  %5077 = vst.msk [vmem:[#allocation3 + $0x18] sm:$0xff] %vm4181, %v5043
  %5078 = vst.msk [vmem:[#allocation3 + $0x30] sm:$0xff] %vm4181, %v5045
  %5079 = vst.msk [vmem:[#allocation3 + $0x48] sm:$0xff] %vm4181, %v5047
  %5080 = vst.msk [vmem:[#allocation3 + $0x60] sm:$0xff] %vm4181, %v5049
  %5081 = vst.msk [vmem:[#allocation3 + $0x78] sm:$0xff] %vm4181, %v5051
  %5082 = vst.msk [vmem:[#allocation3 + $0x90] sm:$0xff] %vm4181, %v5053
  %5083 = vst.msk [vmem:[#allocation3 + $0xa8] sm:$0xff] %vm4181, %v5055
  %5084 = vst.msk [vmem:[#allocation3 + $0xc0] sm:$0xff] %vm4181, %v5057
  %5085 = vst.msk [vmem:[#allocation3 + $0xd8] sm:$0xff] %vm4181, %v5059
  %5086 = vst.msk [vmem:[#allocation3 + $0xf0] sm:$0xff] %vm4181, %v5061
  %5087 = vst.msk [vmem:[#allocation3 + $0x108] sm:$0xff] %vm4181, %v5063
  %v5088 = vld [vmem:[#allocation2 + $0xa8] sm:$0xff]
  %v5089 = vld [vmem:[#allocation2 + $0xb0] sm:$0xff]
  %v5090 = vld [vmem:[#allocation2 + $0xb8] sm:$0xff]
  %v5091 = vld [vmem:[#allocation2 + $0xc0] sm:$0xff]
  %v5092 = vld [vmem:[#allocation2 + $0xc8] sm:$0xff]
  %v5093 = vld [vmem:[#allocation2 + $0xd0] sm:$0xff]
  %v5094 = vld [vmem:[#allocation2 + $0xd8] sm:$0xff]
  %v5095 = vld [vmem:[#allocation2 + $0xe0] sm:$0xff]
  %v5096 = vld [vmem:[#allocation2 + $0xe8] sm:$0xff]
  %v5097 = vld [vmem:[#allocation2 + $0xf0] sm:$0xff]
  %v5098 = vld [vmem:[#allocation2 + $0xf8] sm:$0xff]
  %v5099 = vld [vmem:[#allocation2 + $0x100] sm:$0xff]
  %5100 = vst.msk [vmem:[#allocation3 + $0x8] sm:$0xff] %vm997, %v5088
  %5101 = vst.msk [vmem:[#allocation3 + $0x20] sm:$0xff] %vm997, %v5089
  %5102 = vst.msk [vmem:[#allocation3 + $0x38] sm:$0xff] %vm997, %v5090
  %5103 = vst.msk [vmem:[#allocation3 + $0x50] sm:$0xff] %vm997, %v5091
  %5104 = vst.msk [vmem:[#allocation3 + $0x68] sm:$0xff] %vm997, %v5092
  %5105 = vst.msk [vmem:[#allocation3 + $0x80] sm:$0xff] %vm997, %v5093
  %5106 = vst.msk [vmem:[#allocation3 + $0x98] sm:$0xff] %vm997, %v5094
  %5107 = vst.msk [vmem:[#allocation3 + $0xb0] sm:$0xff] %vm997, %v5095
  %5108 = vst.msk [vmem:[#allocation3 + $0xc8] sm:$0xff] %vm997, %v5096
  %5109 = vst.msk [vmem:[#allocation3 + $0xe0] sm:$0xff] %vm997, %v5097
  %5110 = vst.msk [vmem:[#allocation3 + $0xf8] sm:$0xff] %vm997, %v5098
  %5111 = vst.msk [vmem:[#allocation3 + $0x110] sm:$0xff] %vm997, %v5099
  %v5112 = vld [vmem:[#allocation2 + $0xb0] sm:$0xff]
  %v5113 = vld [vmem:[#allocation2 + $0xb8] sm:$0xff]
  %v5114 = vld [vmem:[#allocation2 + $0xc0] sm:$0xff]
  %v5115 = vld [vmem:[#allocation2 + $0xc8] sm:$0xff]
  %v5116 = vld [vmem:[#allocation2 + $0xd0] sm:$0xff]
  %v5117 = vld [vmem:[#allocation2 + $0xd8] sm:$0xff]
  %v5118 = vld [vmem:[#allocation2 + $0xe0] sm:$0xff]
  %v5119 = vld [vmem:[#allocation2 + $0xe8] sm:$0xff]
  %v5120 = vld [vmem:[#allocation2 + $0xf0] sm:$0xff]
  %v5121 = vld [vmem:[#allocation2 + $0xf8] sm:$0xff]
  %v5122 = vld [vmem:[#allocation2 + $0x100] sm:$0xff]
  %v5123 = vld [vmem:[#allocation2 + $0x108] sm:$0xff]
  %5136 = vrot.lane.b32.xlu0 %v5112, 32
  %v5137 = vpop.permute.xlu0 %5136
  %5138 = vrot.lane.b32.xlu0 %v5113, 32
  %v5139 = vpop.permute.xlu0 %5138
  %5140 = vrot.lane.b32.xlu0 %v5114, 32
  %v5141 = vpop.permute.xlu0 %5140
  %5142 = vrot.lane.b32.xlu0 %v5115, 32
  %v5143 = vpop.permute.xlu0 %5142
  %5144 = vrot.lane.b32.xlu0 %v5116, 32
  %v5145 = vpop.permute.xlu0 %5144
  %5146 = vrot.lane.b32.xlu0 %v5117, 32
  %v5147 = vpop.permute.xlu0 %5146
  %5148 = vrot.lane.b32.xlu0 %v5118, 32
  %v5149 = vpop.permute.xlu0 %5148
  %5150 = vrot.lane.b32.xlu0 %v5119, 32
  %v5151 = vpop.permute.xlu0 %5150
  %5152 = vrot.lane.b32.xlu0 %v5120, 32
  %v5153 = vpop.permute.xlu0 %5152
  %5154 = vrot.lane.b32.xlu0 %v5121, 32
  %v5155 = vpop.permute.xlu0 %5154
  %5156 = vrot.lane.b32.xlu0 %v5122, 32
  %v5157 = vpop.permute.xlu0 %5156
  %5158 = vrot.lane.b32.xlu0 %v5123, 32
  %v5159 = vpop.permute.xlu0 %5158
  %5172 = vst.msk [vmem:[#allocation3 + $0x8] sm:$0xff] %vm4035, %v5137
  %5173 = vst.msk [vmem:[#allocation3 + $0x20] sm:$0xff] %vm4035, %v5139
  %5174 = vst.msk [vmem:[#allocation3 + $0x38] sm:$0xff] %vm4035, %v5141
  %5175 = vst.msk [vmem:[#allocation3 + $0x50] sm:$0xff] %vm4035, %v5143
  %5176 = vst.msk [vmem:[#allocation3 + $0x68] sm:$0xff] %vm4035, %v5145
  %5177 = vst.msk [vmem:[#allocation3 + $0x80] sm:$0xff] %vm4035, %v5147
  %5178 = vst.msk [vmem:[#allocation3 + $0x98] sm:$0xff] %vm4035, %v5149
  %5179 = vst.msk [vmem:[#allocation3 + $0xb0] sm:$0xff] %vm4035, %v5151
  %5180 = vst.msk [vmem:[#allocation3 + $0xc8] sm:$0xff] %vm4035, %v5153
  %5181 = vst.msk [vmem:[#allocation3 + $0xe0] sm:$0xff] %vm4035, %v5155
  %5182 = vst.msk [vmem:[#allocation3 + $0xf8] sm:$0xff] %vm4035, %v5157
  %5183 = vst.msk [vmem:[#allocation3 + $0x110] sm:$0xff] %vm4035, %v5159
  %v5184 = vld [vmem:[#allocation2 + $0xe0] sm:$0xff]
  %v5185 = vld [vmem:[#allocation2 + $0xe8] sm:$0xff]
  %v5186 = vld [vmem:[#allocation2 + $0xf0] sm:$0xff]
  %v5187 = vld [vmem:[#allocation2 + $0xf8] sm:$0xff]
  %v5188 = vld [vmem:[#allocation2 + $0x100] sm:$0xff]
  %v5189 = vld [vmem:[#allocation2 + $0x108] sm:$0xff]
  %v5190 = vld [vmem:[#allocation2 + $0x110] sm:$0xff]
  %v5191 = vld [vmem:[#allocation2 + $0x118] sm:$0xff]
  %v5192 = vld [vmem:[#allocation2 + $0x120] sm:$0xff]
  %v5193 = vld [vmem:[#allocation2 + $0x128] sm:$0xff]
  %v5194 = vld [vmem:[#allocation2 + $0x130] sm:$0xff]
  %v5195 = vld [vmem:[#allocation2 + $0x138] sm:$0xff]
  %5208 = vrot.lane.b32.xlu0 %v5184, 64
  %v5209 = vpop.permute.xlu0 %5208
  %5210 = vrot.lane.b32.xlu0 %v5185, 64
  %v5211 = vpop.permute.xlu0 %5210
  %5212 = vrot.lane.b32.xlu0 %v5186, 64
  %v5213 = vpop.permute.xlu0 %5212
  %5214 = vrot.lane.b32.xlu0 %v5187, 64
  %v5215 = vpop.permute.xlu0 %5214
  %5216 = vrot.lane.b32.xlu0 %v5188, 64
  %v5217 = vpop.permute.xlu0 %5216
  %5218 = vrot.lane.b32.xlu0 %v5189, 64
  %v5219 = vpop.permute.xlu0 %5218
  %5220 = vrot.lane.b32.xlu0 %v5190, 64
  %v5221 = vpop.permute.xlu0 %5220
  %5222 = vrot.lane.b32.xlu0 %v5191, 64
  %v5223 = vpop.permute.xlu0 %5222
  %5224 = vrot.lane.b32.xlu0 %v5192, 64
  %v5225 = vpop.permute.xlu0 %5224
  %5226 = vrot.lane.b32.xlu0 %v5193, 64
  %v5227 = vpop.permute.xlu0 %5226
  %5228 = vrot.lane.b32.xlu0 %v5194, 64
  %v5229 = vpop.permute.xlu0 %5228
  %5230 = vrot.lane.b32.xlu0 %v5195, 64
  %v5231 = vpop.permute.xlu0 %5230
  %5244 = vst.msk [vmem:[#allocation3 + $0x8] sm:$0xff] %vm4108, %v5209
  %5245 = vst.msk [vmem:[#allocation3 + $0x20] sm:$0xff] %vm4108, %v5211
  %5246 = vst.msk [vmem:[#allocation3 + $0x38] sm:$0xff] %vm4108, %v5213
  %5247 = vst.msk [vmem:[#allocation3 + $0x50] sm:$0xff] %vm4108, %v5215
  %5248 = vst.msk [vmem:[#allocation3 + $0x68] sm:$0xff] %vm4108, %v5217
  %5249 = vst.msk [vmem:[#allocation3 + $0x80] sm:$0xff] %vm4108, %v5219
  %5250 = vst.msk [vmem:[#allocation3 + $0x98] sm:$0xff] %vm4108, %v5221
  %5251 = vst.msk [vmem:[#allocation3 + $0xb0] sm:$0xff] %vm4108, %v5223
  %5252 = vst.msk [vmem:[#allocation3 + $0xc8] sm:$0xff] %vm4108, %v5225
  %5253 = vst.msk [vmem:[#allocation3 + $0xe0] sm:$0xff] %vm4108, %v5227
  %5254 = vst.msk [vmem:[#allocation3 + $0xf8] sm:$0xff] %vm4108, %v5229
  %5255 = vst.msk [vmem:[#allocation3 + $0x110] sm:$0xff] %vm4108, %v5231
  %v5256 = vld [vmem:[#allocation2 + $0xe8] sm:$0xff]
  %v5257 = vld [vmem:[#allocation2 + $0xf0] sm:$0xff]
  %v5258 = vld [vmem:[#allocation2 + $0xf8] sm:$0xff]
  %v5259 = vld [vmem:[#allocation2 + $0x100] sm:$0xff]
  %v5260 = vld [vmem:[#allocation2 + $0x108] sm:$0xff]
  %v5261 = vld [vmem:[#allocation2 + $0x110] sm:$0xff]
  %v5262 = vld [vmem:[#allocation2 + $0x118] sm:$0xff]
  %v5263 = vld [vmem:[#allocation2 + $0x120] sm:$0xff]
  %v5264 = vld [vmem:[#allocation2 + $0x128] sm:$0xff]
  %v5265 = vld [vmem:[#allocation2 + $0x130] sm:$0xff]
  %v5266 = vld [vmem:[#allocation2 + $0x138] sm:$0xff]
  %v5267 = vld [vmem:[#allocation2 + $0x140] sm:$0xff]
  %5280 = vrot.lane.b32.xlu0 %v5256, 96
  %v5281 = vpop.permute.xlu0 %5280
  %5282 = vrot.lane.b32.xlu0 %v5257, 96
  %v5283 = vpop.permute.xlu0 %5282
  %5284 = vrot.lane.b32.xlu0 %v5258, 96
  %v5285 = vpop.permute.xlu0 %5284
  %5286 = vrot.lane.b32.xlu0 %v5259, 96
  %v5287 = vpop.permute.xlu0 %5286
  %5288 = vrot.lane.b32.xlu0 %v5260, 96
  %v5289 = vpop.permute.xlu0 %5288
  %5290 = vrot.lane.b32.xlu0 %v5261, 96
  %v5291 = vpop.permute.xlu0 %5290
  %5292 = vrot.lane.b32.xlu0 %v5262, 96
  %v5293 = vpop.permute.xlu0 %5292
  %5294 = vrot.lane.b32.xlu0 %v5263, 96
  %v5295 = vpop.permute.xlu0 %5294
  %5296 = vrot.lane.b32.xlu0 %v5264, 96
  %v5297 = vpop.permute.xlu0 %5296
  %5298 = vrot.lane.b32.xlu0 %v5265, 96
  %v5299 = vpop.permute.xlu0 %5298
  %5300 = vrot.lane.b32.xlu0 %v5266, 96
  %v5301 = vpop.permute.xlu0 %5300
  %5302 = vrot.lane.b32.xlu0 %v5267, 96
  %v5303 = vpop.permute.xlu0 %5302
  %5316 = vst.msk [vmem:[#allocation3 + $0x8] sm:$0xff] %vm4181, %v5281
  %5317 = vst.msk [vmem:[#allocation3 + $0x20] sm:$0xff] %vm4181, %v5283
  %5318 = vst.msk [vmem:[#allocation3 + $0x38] sm:$0xff] %vm4181, %v5285
  %5319 = vst.msk [vmem:[#allocation3 + $0x50] sm:$0xff] %vm4181, %v5287
  %5320 = vst.msk [vmem:[#allocation3 + $0x68] sm:$0xff] %vm4181, %v5289
  %5321 = vst.msk [vmem:[#allocation3 + $0x80] sm:$0xff] %vm4181, %v5291
  %5322 = vst.msk [vmem:[#allocation3 + $0x98] sm:$0xff] %vm4181, %v5293
  %5323 = vst.msk [vmem:[#allocation3 + $0xb0] sm:$0xff] %vm4181, %v5295
  %5324 = vst.msk [vmem:[#allocation3 + $0xc8] sm:$0xff] %vm4181, %v5297
  %5325 = vst.msk [vmem:[#allocation3 + $0xe0] sm:$0xff] %vm4181, %v5299
  %5326 = vst.msk [vmem:[#allocation3 + $0xf8] sm:$0xff] %vm4181, %v5301
  %5327 = vst.msk [vmem:[#allocation3 + $0x110] sm:$0xff] %vm4181, %v5303
  %v5328 = vld [vmem:[#allocation2 + $0xf0] sm:$0xff]
  %v5329 = vld [vmem:[#allocation2 + $0xf8] sm:$0xff]
  %v5330 = vld [vmem:[#allocation2 + $0x100] sm:$0xff]
  %v5331 = vld [vmem:[#allocation2 + $0x108] sm:$0xff]
  %v5332 = vld [vmem:[#allocation2 + $0x110] sm:$0xff]
  %v5333 = vld [vmem:[#allocation2 + $0x118] sm:$0xff]
  %v5334 = vld [vmem:[#allocation2 + $0x120] sm:$0xff]
  %v5335 = vld [vmem:[#allocation2 + $0x128] sm:$0xff]
  %v5336 = vld [vmem:[#allocation2 + $0x130] sm:$0xff]
  %v5337 = vld [vmem:[#allocation2 + $0x138] sm:$0xff]
  %v5338 = vld [vmem:[#allocation2 + $0x140] sm:$0xff]
  %v5339 = vld [vmem:[#allocation2 + $0x148] sm:$0xff]
  %5340 = vst.msk [vmem:[#allocation3 + $0x10] sm:$0xff] %vm997, %v5328
  %5341 = vst.msk [vmem:[#allocation3 + $0x28] sm:$0xff] %vm997, %v5329
  %5342 = vst.msk [vmem:[#allocation3 + $0x40] sm:$0xff] %vm997, %v5330
  %5343 = vst.msk [vmem:[#allocation3 + $0x58] sm:$0xff] %vm997, %v5331
  %5344 = vst.msk [vmem:[#allocation3 + $0x70] sm:$0xff] %vm997, %v5332
  %5345 = vst.msk [vmem:[#allocation3 + $0x88] sm:$0xff] %vm997, %v5333
  %5346 = vst.msk [vmem:[#allocation3 + $0xa0] sm:$0xff] %vm997, %v5334
  %5347 = vst.msk [vmem:[#allocation3 + $0xb8] sm:$0xff] %vm997, %v5335
  %5348 = vst.msk [vmem:[#allocation3 + $0xd0] sm:$0xff] %vm997, %v5336
  %5349 = vst.msk [vmem:[#allocation3 + $0xe8] sm:$0xff] %vm997, %v5337
  %5350 = vst.msk [vmem:[#allocation3 + $0x100] sm:$0xff] %vm997, %v5338
  %5351 = vst.msk [vmem:[#allocation3 + $0x118] sm:$0xff] %vm997, %v5339
  %v5352 = vld [vmem:[#allocation3] sm:$0xff]
  %v5353 = vld [vmem:[#allocation3 + $0x8] sm:$0xff]
  %v5354 = vld [vmem:[#allocation3 + $0x10] sm:$0xff]
  %v5355 = vld [vmem:[#allocation3 + $0x18] sm:$0xff]
  %v5356 = vld [vmem:[#allocation3 + $0x20] sm:$0xff]
  %v5357 = vld [vmem:[#allocation3 + $0x28] sm:$0xff]
  %v5358 = vld [vmem:[#allocation3 + $0x30] sm:$0xff]
  %v5359 = vld [vmem:[#allocation3 + $0x38] sm:$0xff]
  %v5360 = vld [vmem:[#allocation3 + $0x40] sm:$0xff]
  %v5361 = vld [vmem:[#allocation3 + $0x48] sm:$0xff]
  %v5362 = vld [vmem:[#allocation3 + $0x50] sm:$0xff]
  %v5363 = vld [vmem:[#allocation3 + $0x58] sm:$0xff]
  %v5364 = vld [vmem:[#allocation3 + $0x60] sm:$0xff]
  %v5365 = vld [vmem:[#allocation3 + $0x68] sm:$0xff]
  %v5366 = vld [vmem:[#allocation3 + $0x70] sm:$0xff]
  %v5367 = vld [vmem:[#allocation3 + $0x78] sm:$0xff]
  %v5368 = vld [vmem:[#allocation3 + $0x80] sm:$0xff]
  %v5369 = vld [vmem:[#allocation3 + $0x88] sm:$0xff]
  %v5370 = vld [vmem:[#allocation3 + $0x90] sm:$0xff]
  %v5371 = vld [vmem:[#allocation3 + $0x98] sm:$0xff]
  %v5372 = vld [vmem:[#allocation3 + $0xa0] sm:$0xff]
  %v5373 = vld [vmem:[#allocation3 + $0xa8] sm:$0xff]
  %v5374 = vld [vmem:[#allocation3 + $0xb0] sm:$0xff]
  %v5375 = vld [vmem:[#allocation3 + $0xb8] sm:$0xff]
  %v5376 = vld [vmem:[#allocation3 + $0xc0] sm:$0xff]
  %v5377 = vld [vmem:[#allocation3 + $0xc8] sm:$0xff]
  %v5378 = vld [vmem:[#allocation3 + $0xd0] sm:$0xff]
  %v5379 = vld [vmem:[#allocation3 + $0xd8] sm:$0xff]
  %v5380 = vld [vmem:[#allocation3 + $0xe0] sm:$0xff]
  %v5381 = vld [vmem:[#allocation3 + $0xe8] sm:$0xff]
  %v5382 = vld [vmem:[#allocation3 + $0xf0] sm:$0xff]
  %v5383 = vld [vmem:[#allocation3 + $0xf8] sm:$0xff]
  %v5384 = vld [vmem:[#allocation3 + $0x100] sm:$0xff]
  %v5385 = vld [vmem:[#allocation3 + $0x108] sm:$0xff]
  %v5386 = vld [vmem:[#allocation3 + $0x110] sm:$0xff]
  %v5387 = vld [vmem:[#allocation3 + $0x118] sm:$0xff]
  %v5388 = vld [vmem:[%s3] sm:$0xff]
  %v5389 = vld [vmem:[%s3 + $0x8] sm:$0xff]
  %v5390 = vld [vmem:[%s3 + $0x10] sm:$0xff]
  %v5391 = vld [vmem:[%s3 + $0x18] sm:$0xff]
  %v5392 = vld [vmem:[%s3 + $0x20] sm:$0xff]
  %v5393 = vld [vmem:[%s3 + $0x28] sm:$0xff]
  %v5394 = vld [vmem:[%s3 + $0x30] sm:$0xff]
  %v5395 = vld [vmem:[%s3 + $0x38] sm:$0xff]
  %v5396 = vld [vmem:[%s3 + $0x40] sm:$0xff]
  %v5397 = vld [vmem:[%s3 + $0x48] sm:$0xff]
  %v5398 = vld [vmem:[%s3 + $0x50] sm:$0xff]
  %v5399 = vld [vmem:[%s3 + $0x58] sm:$0xff]
  %v5400 = vld [vmem:[%s3 + $0x60] sm:$0xff]
  %v5401 = vld [vmem:[%s3 + $0x68] sm:$0xff]
  %v5402 = vld [vmem:[%s3 + $0x70] sm:$0xff]
  %v5403 = vld [vmem:[%s3 + $0x78] sm:$0xff]
  %v5404 = vld [vmem:[%s3 + $0x80] sm:$0xff]
  %v5405 = vld [vmem:[%s3 + $0x88] sm:$0xff]
  %v5406 = vld [vmem:[%s3 + $0x90] sm:$0xff]
  %v5407 = vld [vmem:[%s3 + $0x98] sm:$0xff]
  %v5408 = vld [vmem:[%s3 + $0xa0] sm:$0xff]
  %v5409 = vld [vmem:[%s3 + $0xa8] sm:$0xff]
  %v5410 = vld [vmem:[%s3 + $0xb0] sm:$0xff]
  %v5411 = vld [vmem:[%s3 + $0xb8] sm:$0xff]
  %v5412 = vld [vmem:[%s3 + $0xc0] sm:$0xff]
  %v5413 = vld [vmem:[%s3 + $0xc8] sm:$0xff]
  %v5414 = vld [vmem:[%s3 + $0xd0] sm:$0xff]
  %v5415 = vld [vmem:[%s3 + $0xd8] sm:$0xff]
  %v5416 = vld [vmem:[%s3 + $0xe0] sm:$0xff]
  %v5417 = vld [vmem:[%s3 + $0xe8] sm:$0xff]
  %v5418 = vld [vmem:[%s3 + $0xf0] sm:$0xff]
  %v5419 = vld [vmem:[%s3 + $0xf8] sm:$0xff]
  %v5420 = vld [vmem:[%s3 + $0x100] sm:$0xff]
  %v5421 = vld [vmem:[%s3 + $0x108] sm:$0xff]
  %v5422 = vld [vmem:[%s3 + $0x110] sm:$0xff]
  %v5423 = vld [vmem:[%s3 + $0x118] sm:$0xff]
  %v5424 = vld [vmem:[%s4] sm:$0x1]
  %v5426 = vlaneseq
  %v5427 = vshrl.u32 %v5426, 7
  %v5428 = vsub.s32 0, %v5427
  %v5429 = vrot.slane %v5424, %v5428
  %v5432 = vsel %vm997, %v5354, 0
  %v5435 = vsel %vm997, %v5357, 0
  %v5438 = vsel %vm997, %v5360, 0
  %v5441 = vsel %vm997, %v5363, 0
  %v5444 = vsel %vm997, %v5366, 0
  %v5447 = vsel %vm997, %v5369, 0
  %v5450 = vsel %vm997, %v5372, 0
  %v5453 = vsel %vm997, %v5375, 0
  %v5456 = vsel %vm997, %v5378, 0
  %v5459 = vsel %vm997, %v5381, 0
  %v5462 = vsel %vm997, %v5384, 0
  %v5465 = vsel %vm997, %v5387, 0
  %5467 = vmatprep.subr.mxu0 0.0
  %5468 = vmatpush1.msra.mxu0 %v5388
  %5469 = vmatprep.subr.mxu0 0.0
  %5470 = vmatpush1.msra.mxu0 %v5389
  %5471 = vmatprep.subr.mxu0 0.0
  %5472 = vmatpush1.msra.mxu0 %v5390
  %5473 = vmatprep.subr.mxu0 0.0
  %5474 = vmatpush1.msra.mxu0 %v5391
  %5475 = vmatprep.subr.mxu0 0.0
  %5476 = vmatpush1.msra.mxu0 %v5392
  %5477 = vmatprep.subr.mxu0 0.0
  %5478 = vmatpush1.msra.mxu0 %v5393
  %5479 = vmatprep.subr.mxu0 0.0
  %5480 = vmatpush1.msra.mxu0 %v5394
  %5481 = vmatprep.subr.mxu0 0.0
  %5482 = vmatpush1.msra.mxu0 %v5395
  %5483 = vmatprep.subr.mxu0 0.0
  %5484 = vmatpush1.msra.mxu0 %v5396
  %5485 = vmatprep.subr.mxu0 0.0
  %5486 = vmatpush1.msra.mxu0 %v5397
  %5487 = vmatprep.subr.mxu0 0.0
  %5488 = vmatpush1.msra.mxu0 %v5398
  %5489 = vmatprep.subr.mxu0 0.0
  %5490 = vmatpush1.msra.mxu0 %v5399
  %5491 = vmatprep.subr.mxu0 0.0
  %5492 = vmatpush1.msra.mxu0 %v5400
  %5493 = vmatprep.subr.mxu0 0.0
  %5494 = vmatpush1.msra.mxu0 %v5401
  %5495 = vmatprep.subr.mxu0 0.0
  %5496 = vmatpush1.msra.mxu0 %v5402
  %5497 = vmatprep.subr.mxu0 0.0
  %5498 = vmatpush1.msra.mxu0 %v5403
  %5499 = vmatprep.subr.mxu0 0.0
  %5500 = vmatpush1.msra.mxu0 %v5404
  %5501 = vmatprep.subr.mxu0 0.0
  %5502 = vmatpush1.msra.mxu0 %v5405
  %5503 = vmatprep.subr.mxu0 0.0
  %5504 = vmatpush1.msra.mxu0 %v5406
  %5505 = vmatprep.subr.mxu0 0.0
  %5506 = vmatpush1.msra.mxu0 %v5407
  %5507 = vmatprep.subr.mxu0 0.0
  %5508 = vmatpush1.msra.mxu0 %v5408
  %5509 = vmatprep.subr.mxu0 0.0
  %5510 = vmatpush1.msra.mxu0 %v5409
  %5511 = vmatprep.subr.mxu0 0.0
  %5512 = vmatpush1.msra.mxu0 %v5410
  %5513 = vmatprep.subr.mxu0 0.0
  %5514 = vmatpush1.msra.mxu0 %v5411
  %5515 = vmatprep.subr.mxu0 0.0
  %5516 = vmatpush1.msra.mxu0 %v5412
  %5517 = vmatprep.subr.mxu0 0.0
  %5518 = vmatpush1.msra.mxu0 %v5413
  %5519 = vmatprep.subr.mxu0 0.0
  %5520 = vmatpush1.msra.mxu0 %v5414
  %5521 = vmatprep.subr.mxu0 0.0
  %5522 = vmatpush1.msra.mxu0 %v5415
  %5523 = vmatprep.subr.mxu0 0.0
  %5524 = vmatpush1.msra.mxu0 %v5416
  %5525 = vmatprep.subr.mxu0 0.0
  %5526 = vmatpush1.msra.mxu0 %v5417
  %5527 = vmatprep.subr.mxu0 0.0
  %5528 = vmatpush1.msra.mxu0 %v5418
  %5529 = vmatprep.subr.mxu0 0.0
  %5530 = vmatpush1.msra.mxu0 %v5419
  %5531 = vmatprep.mubr.f32.mxu0 %v5353
  %5532 = vmatmul.mubr.f32.gmra.mrb[0].mxu0 %v5352
  %v5533 = vpop.f32.mrb[0].mxu0
  %v5534 = vadd.f32 %v5429, %v5533
  %v5535 = vpop.f32.mrb[0].mxu0
  %5536 = vmatprep.mubr.f32.mxu0 %v5356
  %5537 = vmatmul.mubr.f32.gmra.mrb[0].mxu0 %v5355
  %v5538 = vpop.f32.mrb[0].mxu0
  %v5539 = vadd.f32 %v5429, %v5538
  %v5540 = vpop.f32.mrb[0].mxu0
  %5541 = vmatprep.mubr.f32.mxu0 %v5359
  %5542 = vmatmul.mubr.f32.gmra.mrb[0].mxu0 %v5358
  %v5543 = vpop.f32.mrb[0].mxu0
  %v5544 = vadd.f32 %v5429, %v5543
  %v5545 = vpop.f32.mrb[0].mxu0
  %5546 = vmatprep.mubr.f32.mxu0 %v5362
  %5547 = vmatmul.mubr.f32.gmra.mrb[0].mxu0 %v5361
  %v5548 = vpop.f32.mrb[0].mxu0
  %v5549 = vadd.f32 %v5429, %v5548
  %v5550 = vpop.f32.mrb[0].mxu0
  %5551 = vmatprep.mubr.f32.mxu0 %v5365
  %5552 = vmatmul.mubr.f32.gmra.mrb[0].mxu0 %v5364
  %v5553 = vpop.f32.mrb[0].mxu0
  %v5554 = vadd.f32 %v5429, %v5553
  %v5555 = vpop.f32.mrb[0].mxu0
  %5556 = vmatprep.mubr.f32.mxu0 %v5368
  %5557 = vmatmul.mubr.f32.gmra.mrb[0].mxu0 %v5367
  %v5558 = vpop.f32.mrb[0].mxu0
  %v5559 = vadd.f32 %v5429, %v5558
  %v5560 = vpop.f32.mrb[0].mxu0
  %5561 = vmatprep.mubr.f32.mxu0 %v5371
  %5562 = vmatmul.mubr.f32.gmra.mrb[0].mxu0 %v5370
  %v5563 = vpop.f32.mrb[0].mxu0
  %v5564 = vadd.f32 %v5429, %v5563
  %v5565 = vpop.f32.mrb[0].mxu0
  %5566 = vmatprep.mubr.f32.mxu0 %v5374
  %5567 = vmatmul.mubr.f32.gmra.mrb[0].mxu0 %v5373
  %v5568 = vpop.f32.mrb[0].mxu0
  %v5569 = vadd.f32 %v5429, %v5568
  %v5570 = vpop.f32.mrb[0].mxu0
  %5571 = vmatprep.mubr.f32.mxu0 %v5377
  %5572 = vmatmul.mubr.f32.gmra.mrb[0].mxu0 %v5376
  %v5573 = vpop.f32.mrb[0].mxu0
  %v5574 = vadd.f32 %v5429, %v5573
  %v5575 = vpop.f32.mrb[0].mxu0
  %5576 = vmatprep.mubr.f32.mxu0 %v5380
  %5577 = vmatmul.mubr.f32.gmra.mrb[0].mxu0 %v5379
  %v5578 = vpop.f32.mrb[0].mxu0
  %v5579 = vadd.f32 %v5429, %v5578
  %v5580 = vpop.f32.mrb[0].mxu0
  %5581 = vmatprep.mubr.f32.mxu0 %v5383
  %5582 = vmatmul.mubr.f32.gmra.mrb[0].mxu0 %v5382
  %v5583 = vpop.f32.mrb[0].mxu0
  %v5584 = vadd.f32 %v5429, %v5583
  %v5585 = vpop.f32.mrb[0].mxu0
  %5586 = vmatprep.mubr.f32.mxu0 %v5386
  %5587 = vmatmul.mubr.f32.gmra.mrb[0].mxu0 %v5385
  %v5588 = vpop.f32.mrb[0].mxu0
  %v5589 = vadd.f32 %v5429, %v5588
  %v5590 = vpop.f32.mrb[0].mxu0
  %5591 = vdwg.mxu0
  %5592 = vmatprep.subr.mxu0 0.0
  %5593 = vmatpush1.msra.mxu0 %v5420
  %5594 = vmatprep.subr.mxu0 0.0
  %5595 = vmatpush1.msra.mxu0 %v5421
  %5596 = vmatprep.subr.mxu0 0.0
  %5597 = vmatpush1.msra.mxu0 %v5422
  %5598 = vmatprep.subr.mxu0 0.0
  %5599 = vmatpush1.msra.mxu0 %v5423
  %5600 = vmatprep.subr.mxu0 0.0
  %5601 = vmatpush1.msra.mxu0 0.0
  %5602 = vmatprep.subr.mxu0 0.0
  %5603 = vmatpush1.msra.mxu0 0.0
  %5604 = vmatprep.subr.mxu0 0.0
  %5605 = vmatpush1.msra.mxu0 0.0
  %5606 = vmatprep.subr.mxu0 0.0
  %5607 = vmatpush1.msra.mxu0 0.0
  %5608 = vmatprep.subr.mxu0 0.0
  %5609 = vmatpush1.msra.mxu0 0.0
  %5610 = vmatprep.subr.mxu0 0.0
  %5611 = vmatpush1.msra.mxu0 0.0
  %5612 = vmatprep.subr.mxu0 0.0
  %5613 = vmatpush1.msra.mxu0 0.0
  %5614 = vmatprep.subr.mxu0 0.0
  %5615 = vmatpush1.msra.mxu0 0.0
  %5616 = vmatprep.subr.mxu0 0.0
  %5617 = vmatpush1.msra.mxu0 0.0
  %5618 = vmatprep.subr.mxu0 0.0
  %5619 = vmatpush1.msra.mxu0 0.0
  %5620 = vmatprep.subr.mxu0 0.0
  %5621 = vmatpush1.msra.mxu0 0.0
  %5622 = vmatprep.subr.mxu0 0.0
  %5623 = vmatpush1.msra.mxu0 0.0
  %5624 = vmatprep.subr.mxu0 0.0
  %5625 = vmatpush1.msra.mxu0 0.0
  %5626 = vmatprep.subr.mxu0 0.0
  %5627 = vmatpush1.msra.mxu0 0.0
  %5628 = vmatprep.subr.mxu0 0.0
  %5629 = vmatpush1.msra.mxu0 0.0
  %5630 = vmatprep.subr.mxu0 0.0
  %5631 = vmatpush1.msra.mxu0 0.0
  %5632 = vmatprep.subr.mxu0 0.0
  %5633 = vmatpush1.msra.mxu0 0.0
  %5634 = vmatprep.subr.mxu0 0.0
  %5635 = vmatpush1.msra.mxu0 0.0
  %5636 = vmatprep.subr.mxu0 0.0
  %5637 = vmatpush1.msra.mxu0 0.0
  %5638 = vmatprep.subr.mxu0 0.0
  %5639 = vmatpush1.msra.mxu0 0.0
  %5640 = vmatprep.subr.mxu0 0.0
  %5641 = vmatpush1.msra.mxu0 0.0
  %5642 = vmatprep.subr.mxu0 0.0
  %5643 = vmatpush1.msra.mxu0 0.0
  %5644 = vmatprep.subr.mxu0 0.0
  %5645 = vmatpush1.msra.mxu0 0.0
  %5646 = vmatprep.subr.mxu0 0.0
  %5647 = vmatpush1.msra.mxu0 0.0
  %5648 = vmatprep.subr.mxu0 0.0
  %5649 = vmatpush1.msra.mxu0 0.0
  %5650 = vmatprep.subr.mxu0 0.0
  %5651 = vmatpush1.msra.mxu0 0.0
  %5652 = vmatprep.subr.mxu0 0.0
  %5653 = vmatpush1.msra.mxu0 0.0
  %5654 = vmatprep.subr.mxu0 0.0
  %5655 = vmatpush1.msra.mxu0 0.0
  %5656 = vmatprep.mubr.f32.mxu0 0.0
  %5657 = vmatmul.mubr.f32.gmra.mrb[0].mxu0 %v5432
  %v5658 = vpop.f32.mrb[0].mxu0
  %v5659 = vadd.f32 %v5534, %v5658
  %v5660 = vpop.f32.mrb[0].mxu0
  %5661 = vmatprep.mubr.f32.mxu0 0.0
  %5662 = vmatmul.mubr.f32.gmra.mrb[0].mxu0 %v5435
  %v5663 = vpop.f32.mrb[0].mxu0
  %v5664 = vadd.f32 %v5539, %v5663
  %v5665 = vpop.f32.mrb[0].mxu0
  %5666 = vmatprep.mubr.f32.mxu0 0.0
  %5667 = vmatmul.mubr.f32.gmra.mrb[0].mxu0 %v5438
  %v5668 = vpop.f32.mrb[0].mxu0
  %v5669 = vadd.f32 %v5544, %v5668
  %v5670 = vpop.f32.mrb[0].mxu0
  %5671 = vmatprep.mubr.f32.mxu0 0.0
  %5672 = vmatmul.mubr.f32.gmra.mrb[0].mxu0 %v5441
  %v5673 = vpop.f32.mrb[0].mxu0
  %v5674 = vadd.f32 %v5549, %v5673
  %v5675 = vpop.f32.mrb[0].mxu0
  %5676 = vmatprep.mubr.f32.mxu0 0.0
  %5677 = vmatmul.mubr.f32.gmra.mrb[0].mxu0 %v5444
  %v5678 = vpop.f32.mrb[0].mxu0
  %v5679 = vadd.f32 %v5554, %v5678
  %v5680 = vpop.f32.mrb[0].mxu0
  %5681 = vmatprep.mubr.f32.mxu0 0.0
  %5682 = vmatmul.mubr.f32.gmra.mrb[0].mxu0 %v5447
  %v5683 = vpop.f32.mrb[0].mxu0
  %v5684 = vadd.f32 %v5559, %v5683
  %v5685 = vpop.f32.mrb[0].mxu0
  %5686 = vmatprep.mubr.f32.mxu0 0.0
  %5687 = vmatmul.mubr.f32.gmra.mrb[0].mxu0 %v5450
  %v5688 = vpop.f32.mrb[0].mxu0
  %v5689 = vadd.f32 %v5564, %v5688
  %v5690 = vpop.f32.mrb[0].mxu0
  %5691 = vmatprep.mubr.f32.mxu0 0.0
  %5692 = vmatmul.mubr.f32.gmra.mrb[0].mxu0 %v5453
  %v5693 = vpop.f32.mrb[0].mxu0
  %v5694 = vadd.f32 %v5569, %v5693
  %v5695 = vpop.f32.mrb[0].mxu0
  %5696 = vmatprep.mubr.f32.mxu0 0.0
  %5697 = vmatmul.mubr.f32.gmra.mrb[0].mxu0 %v5456
  %v5698 = vpop.f32.mrb[0].mxu0
  %v5699 = vadd.f32 %v5574, %v5698
  %v5700 = vpop.f32.mrb[0].mxu0
  %5701 = vmatprep.mubr.f32.mxu0 0.0
  %5702 = vmatmul.mubr.f32.gmra.mrb[0].mxu0 %v5459
  %v5703 = vpop.f32.mrb[0].mxu0
  %v5704 = vadd.f32 %v5579, %v5703
  %v5705 = vpop.f32.mrb[0].mxu0
  %5706 = vmatprep.mubr.f32.mxu0 0.0
  %5707 = vmatmul.mubr.f32.gmra.mrb[0].mxu0 %v5462
  %v5708 = vpop.f32.mrb[0].mxu0
  %v5709 = vadd.f32 %v5584, %v5708
  %v5710 = vpop.f32.mrb[0].mxu0
  %5711 = vmatprep.mubr.f32.mxu0 0.0
  %5712 = vmatmul.mubr.f32.gmra.mrb[0].mxu0 %v5465
  %v5713 = vpop.f32.mrb[0].mxu0
  %v5714 = vadd.f32 %v5589, %v5713
  %v5715 = vpop.f32.mrb[0].mxu0
  %5716 = vdwg.mxu0
  %v5717 = vmax.f32 %v5659, 0.0
  %v5718 = vmax.f32 %v5664, 0.0
  %v5719 = vmax.f32 %v5669, 0.0
  %v5720 = vmax.f32 %v5674, 0.0
  %v5721 = vmax.f32 %v5679, 0.0
  %v5722 = vmax.f32 %v5684, 0.0
  %v5723 = vmax.f32 %v5689, 0.0
  %v5724 = vmax.f32 %v5694, 0.0
  %v5725 = vmax.f32 %v5699, 0.0
  %v5726 = vmax.f32 %v5704, 0.0
  %v5727 = vmax.f32 %v5709, 0.0
  %v5728 = vmax.f32 %v5714, 0.0
  %5729 = vst.msk [vmem:[#allocation4 + $0x60] sm:$0xff] %vm4835, %v5717
  %5730 = vst.msk [vmem:[#allocation4 + $0x68] sm:$0xff] %vm4835, %v5718
  %5731 = vst.msk [vmem:[#allocation4 + $0x70] sm:$0xff] %vm4835, %v5719
  %5732 = vst.msk [vmem:[#allocation4 + $0x78] sm:$0xff] %vm4835, %v5720
  %5733 = vst.msk [vmem:[#allocation4 + $0x80] sm:$0xff] %vm4835, %v5721
  %5734 = vst.msk [vmem:[#allocation4 + $0x88] sm:$0xff] %vm4835, %v5722
  %5735 = vst.msk [vmem:[#allocation4 + $0x90] sm:$0xff] %vm4835, %v5723
  %5736 = vst.msk [vmem:[#allocation4 + $0x98] sm:$0xff] %vm4835, %v5724
  %5737 = vst.msk [vmem:[#allocation4 + $0xa0] sm:$0xff] %vm4835, %v5725
  %5738 = vst.msk [vmem:[#allocation4 + $0xa8] sm:$0xff] %vm4835, %v5726
  %5739 = vst.msk [vmem:[#allocation4 + $0xb0] sm:$0xff] %vm4835, %v5727
  %5740 = vst.msk [vmem:[#allocation4 + $0xb8] sm:$0xff] %vm4835, %v5728
  %v5741 = vld [vmem:[#allocation2 + $0xc0] sm:$0xff]
  %v5742 = vld [vmem:[#allocation2 + $0xc8] sm:$0xff]
  %v5743 = vld [vmem:[#allocation2 + $0xd0] sm:$0xff]
  %v5744 = vld [vmem:[#allocation2 + $0xd8] sm:$0xff]
  %v5745 = vld [vmem:[#allocation2 + $0xe0] sm:$0xff]
  %v5746 = vld [vmem:[#allocation2 + $0xe8] sm:$0xff]
  %v5747 = vld [vmem:[#allocation2 + $0xf0] sm:$0xff]
  %v5748 = vld [vmem:[#allocation2 + $0xf8] sm:$0xff]
  %v5749 = vld [vmem:[#allocation2 + $0x100] sm:$0xff]
  %v5750 = vld [vmem:[#allocation2 + $0x108] sm:$0xff]
  %v5751 = vld [vmem:[#allocation2 + $0x110] sm:$0xff]
  %v5752 = vld [vmem:[#allocation2 + $0x118] sm:$0xff]
  %5753 = vst.msk [vmem:[#allocation3] sm:$0xff] %vm997, %v5741
  %5754 = vst.msk [vmem:[#allocation3 + $0x18] sm:$0xff] %vm997, %v5742
  %5755 = vst.msk [vmem:[#allocation3 + $0x30] sm:$0xff] %vm997, %v5743
  %5756 = vst.msk [vmem:[#allocation3 + $0x48] sm:$0xff] %vm997, %v5744
  %5757 = vst.msk [vmem:[#allocation3 + $0x60] sm:$0xff] %vm997, %v5745
  %5758 = vst.msk [vmem:[#allocation3 + $0x78] sm:$0xff] %vm997, %v5746
  %5759 = vst.msk [vmem:[#allocation3 + $0x90] sm:$0xff] %vm997, %v5747
  %5760 = vst.msk [vmem:[#allocation3 + $0xa8] sm:$0xff] %vm997, %v5748
  %5761 = vst.msk [vmem:[#allocation3 + $0xc0] sm:$0xff] %vm997, %v5749
  %5762 = vst.msk [vmem:[#allocation3 + $0xd8] sm:$0xff] %vm997, %v5750
  %5763 = vst.msk [vmem:[#allocation3 + $0xf0] sm:$0xff] %vm997, %v5751
  %5764 = vst.msk [vmem:[#allocation3 + $0x108] sm:$0xff] %vm997, %v5752
  %v5765 = vld [vmem:[#allocation2 + $0xc8] sm:$0xff]
  %v5766 = vld [vmem:[#allocation2 + $0xd0] sm:$0xff]
  %v5767 = vld [vmem:[#allocation2 + $0xd8] sm:$0xff]
  %v5768 = vld [vmem:[#allocation2 + $0xe0] sm:$0xff]
  %v5769 = vld [vmem:[#allocation2 + $0xe8] sm:$0xff]
  %v5770 = vld [vmem:[#allocation2 + $0xf0] sm:$0xff]
  %v5771 = vld [vmem:[#allocation2 + $0xf8] sm:$0xff]
  %v5772 = vld [vmem:[#allocation2 + $0x100] sm:$0xff]
  %v5773 = vld [vmem:[#allocation2 + $0x108] sm:$0xff]
  %v5774 = vld [vmem:[#allocation2 + $0x110] sm:$0xff]
  %v5775 = vld [vmem:[#allocation2 + $0x118] sm:$0xff]
  %v5776 = vld [vmem:[#allocation2 + $0x120] sm:$0xff]
  %5789 = vrot.lane.b32.xlu0 %v5765, 32
  %v5790 = vpop.permute.xlu0 %5789
  %5791 = vrot.lane.b32.xlu0 %v5766, 32
  %v5792 = vpop.permute.xlu0 %5791
  %5793 = vrot.lane.b32.xlu0 %v5767, 32
  %v5794 = vpop.permute.xlu0 %5793
  %5795 = vrot.lane.b32.xlu0 %v5768, 32
  %v5796 = vpop.permute.xlu0 %5795
  %5797 = vrot.lane.b32.xlu0 %v5769, 32
  %v5798 = vpop.permute.xlu0 %5797
  %5799 = vrot.lane.b32.xlu0 %v5770, 32
  %v5800 = vpop.permute.xlu0 %5799
  %5801 = vrot.lane.b32.xlu0 %v5771, 32
  %v5802 = vpop.permute.xlu0 %5801
  %5803 = vrot.lane.b32.xlu0 %v5772, 32
  %v5804 = vpop.permute.xlu0 %5803
  %5805 = vrot.lane.b32.xlu0 %v5773, 32
  %v5806 = vpop.permute.xlu0 %5805
  %5807 = vrot.lane.b32.xlu0 %v5774, 32
  %v5808 = vpop.permute.xlu0 %5807
  %5809 = vrot.lane.b32.xlu0 %v5775, 32
  %v5810 = vpop.permute.xlu0 %5809
  %5811 = vrot.lane.b32.xlu0 %v5776, 32
  %v5812 = vpop.permute.xlu0 %5811
  %5825 = vst.msk [vmem:[#allocation3] sm:$0xff] %vm4035, %v5790
  %5826 = vst.msk [vmem:[#allocation3 + $0x18] sm:$0xff] %vm4035, %v5792
  %5827 = vst.msk [vmem:[#allocation3 + $0x30] sm:$0xff] %vm4035, %v5794
  %5828 = vst.msk [vmem:[#allocation3 + $0x48] sm:$0xff] %vm4035, %v5796
  %5829 = vst.msk [vmem:[#allocation3 + $0x60] sm:$0xff] %vm4035, %v5798
  %5830 = vst.msk [vmem:[#allocation3 + $0x78] sm:$0xff] %vm4035, %v5800
  %5831 = vst.msk [vmem:[#allocation3 + $0x90] sm:$0xff] %vm4035, %v5802
  %5832 = vst.msk [vmem:[#allocation3 + $0xa8] sm:$0xff] %vm4035, %v5804
  %5833 = vst.msk [vmem:[#allocation3 + $0xc0] sm:$0xff] %vm4035, %v5806
  %5834 = vst.msk [vmem:[#allocation3 + $0xd8] sm:$0xff] %vm4035, %v5808
  %5835 = vst.msk [vmem:[#allocation3 + $0xf0] sm:$0xff] %vm4035, %v5810
  %5836 = vst.msk [vmem:[#allocation3 + $0x108] sm:$0xff] %vm4035, %v5812
  %v5837 = vld [vmem:[#allocation2 + $0xd0] sm:$0xff]
  %v5838 = vld [vmem:[#allocation2 + $0xd8] sm:$0xff]
  %v5839 = vld [vmem:[#allocation2 + $0xe0] sm:$0xff]
  %v5840 = vld [vmem:[#allocation2 + $0xe8] sm:$0xff]
  %v5841 = vld [vmem:[#allocation2 + $0xf0] sm:$0xff]
  %v5842 = vld [vmem:[#allocation2 + $0xf8] sm:$0xff]
  %v5843 = vld [vmem:[#allocation2 + $0x100] sm:$0xff]
  %v5844 = vld [vmem:[#allocation2 + $0x108] sm:$0xff]
  %v5845 = vld [vmem:[#allocation2 + $0x110] sm:$0xff]
  %v5846 = vld [vmem:[#allocation2 + $0x118] sm:$0xff]
  %v5847 = vld [vmem:[#allocation2 + $0x120] sm:$0xff]
  %v5848 = vld [vmem:[#allocation2 + $0x128] sm:$0xff]
  %5861 = vrot.lane.b32.xlu0 %v5837, 64
  %v5862 = vpop.permute.xlu0 %5861
  %5863 = vrot.lane.b32.xlu0 %v5838, 64
  %v5864 = vpop.permute.xlu0 %5863
  %5865 = vrot.lane.b32.xlu0 %v5839, 64
  %v5866 = vpop.permute.xlu0 %5865
  %5867 = vrot.lane.b32.xlu0 %v5840, 64
  %v5868 = vpop.permute.xlu0 %5867
  %5869 = vrot.lane.b32.xlu0 %v5841, 64
  %v5870 = vpop.permute.xlu0 %5869
  %5871 = vrot.lane.b32.xlu0 %v5842, 64
  %v5872 = vpop.permute.xlu0 %5871
  %5873 = vrot.lane.b32.xlu0 %v5843, 64
  %v5874 = vpop.permute.xlu0 %5873
  %5875 = vrot.lane.b32.xlu0 %v5844, 64
  %v5876 = vpop.permute.xlu0 %5875
  %5877 = vrot.lane.b32.xlu0 %v5845, 64
  %v5878 = vpop.permute.xlu0 %5877
  %5879 = vrot.lane.b32.xlu0 %v5846, 64
  %v5880 = vpop.permute.xlu0 %5879
  %5881 = vrot.lane.b32.xlu0 %v5847, 64
  %v5882 = vpop.permute.xlu0 %5881
  %5883 = vrot.lane.b32.xlu0 %v5848, 64
  %v5884 = vpop.permute.xlu0 %5883
  %5897 = vst.msk [vmem:[#allocation3] sm:$0xff] %vm4108, %v5862
  %5898 = vst.msk [vmem:[#allocation3 + $0x18] sm:$0xff] %vm4108, %v5864
  %5899 = vst.msk [vmem:[#allocation3 + $0x30] sm:$0xff] %vm4108, %v5866
  %5900 = vst.msk [vmem:[#allocation3 + $0x48] sm:$0xff] %vm4108, %v5868
  %5901 = vst.msk [vmem:[#allocation3 + $0x60] sm:$0xff] %vm4108, %v5870
  %5902 = vst.msk [vmem:[#allocation3 + $0x78] sm:$0xff] %vm4108, %v5872
  %5903 = vst.msk [vmem:[#allocation3 + $0x90] sm:$0xff] %vm4108, %v5874
  %5904 = vst.msk [vmem:[#allocation3 + $0xa8] sm:$0xff] %vm4108, %v5876
  %5905 = vst.msk [vmem:[#allocation3 + $0xc0] sm:$0xff] %vm4108, %v5878
  %5906 = vst.msk [vmem:[#allocation3 + $0xd8] sm:$0xff] %vm4108, %v5880
  %5907 = vst.msk [vmem:[#allocation3 + $0xf0] sm:$0xff] %vm4108, %v5882
  %5908 = vst.msk [vmem:[#allocation3 + $0x108] sm:$0xff] %vm4108, %v5884
  %v5909 = vld [vmem:[#allocation2 + $0x100] sm:$0xff]
  %v5910 = vld [vmem:[#allocation2 + $0x108] sm:$0xff]
  %v5911 = vld [vmem:[#allocation2 + $0x110] sm:$0xff]
  %v5912 = vld [vmem:[#allocation2 + $0x118] sm:$0xff]
  %v5913 = vld [vmem:[#allocation2 + $0x120] sm:$0xff]
  %v5914 = vld [vmem:[#allocation2 + $0x128] sm:$0xff]
  %v5915 = vld [vmem:[#allocation2 + $0x130] sm:$0xff]
  %v5916 = vld [vmem:[#allocation2 + $0x138] sm:$0xff]
  %v5917 = vld [vmem:[#allocation2 + $0x140] sm:$0xff]
  %v5918 = vld [vmem:[#allocation2 + $0x148] sm:$0xff]
  %v5919 = vld [vmem:[#allocation2 + $0x150] sm:$0xff]
  %v5920 = vld [vmem:[#allocation2 + $0x158] sm:$0xff]
  %5933 = vrot.lane.b32.xlu0 %v5909, 96
  %v5934 = vpop.permute.xlu0 %5933
  %5935 = vrot.lane.b32.xlu0 %v5910, 96
  %v5936 = vpop.permute.xlu0 %5935
  %5937 = vrot.lane.b32.xlu0 %v5911, 96
  %v5938 = vpop.permute.xlu0 %5937
  %5939 = vrot.lane.b32.xlu0 %v5912, 96
  %v5940 = vpop.permute.xlu0 %5939
  %5941 = vrot.lane.b32.xlu0 %v5913, 96
  %v5942 = vpop.permute.xlu0 %5941
  %5943 = vrot.lane.b32.xlu0 %v5914, 96
  %v5944 = vpop.permute.xlu0 %5943
  %5945 = vrot.lane.b32.xlu0 %v5915, 96
  %v5946 = vpop.permute.xlu0 %5945
  %5947 = vrot.lane.b32.xlu0 %v5916, 96
  %v5948 = vpop.permute.xlu0 %5947
  %5949 = vrot.lane.b32.xlu0 %v5917, 96
  %v5950 = vpop.permute.xlu0 %5949
  %5951 = vrot.lane.b32.xlu0 %v5918, 96
  %v5952 = vpop.permute.xlu0 %5951
  %5953 = vrot.lane.b32.xlu0 %v5919, 96
  %v5954 = vpop.permute.xlu0 %5953
  %5955 = vrot.lane.b32.xlu0 %v5920, 96
  %v5956 = vpop.permute.xlu0 %5955
  %5969 = vst.msk [vmem:[#allocation3] sm:$0xff] %vm4181, %v5934
  %5970 = vst.msk [vmem:[#allocation3 + $0x18] sm:$0xff] %vm4181, %v5936
  %5971 = vst.msk [vmem:[#allocation3 + $0x30] sm:$0xff] %vm4181, %v5938
  %5972 = vst.msk [vmem:[#allocation3 + $0x48] sm:$0xff] %vm4181, %v5940
  %5973 = vst.msk [vmem:[#allocation3 + $0x60] sm:$0xff] %vm4181, %v5942
  %5974 = vst.msk [vmem:[#allocation3 + $0x78] sm:$0xff] %vm4181, %v5944
  %5975 = vst.msk [vmem:[#allocation3 + $0x90] sm:$0xff] %vm4181, %v5946
  %5976 = vst.msk [vmem:[#allocation3 + $0xa8] sm:$0xff] %vm4181, %v5948
  %5977 = vst.msk [vmem:[#allocation3 + $0xc0] sm:$0xff] %vm4181, %v5950
  %5978 = vst.msk [vmem:[#allocation3 + $0xd8] sm:$0xff] %vm4181, %v5952
  %5979 = vst.msk [vmem:[#allocation3 + $0xf0] sm:$0xff] %vm4181, %v5954
  %5980 = vst.msk [vmem:[#allocation3 + $0x108] sm:$0xff] %vm4181, %v5956
  %v5981 = vld [vmem:[#allocation2 + $0x108] sm:$0xff]
  %v5982 = vld [vmem:[#allocation2 + $0x110] sm:$0xff]
  %v5983 = vld [vmem:[#allocation2 + $0x118] sm:$0xff]
  %v5984 = vld [vmem:[#allocation2 + $0x120] sm:$0xff]
  %v5985 = vld [vmem:[#allocation2 + $0x128] sm:$0xff]
  %v5986 = vld [vmem:[#allocation2 + $0x130] sm:$0xff]
  %v5987 = vld [vmem:[#allocation2 + $0x138] sm:$0xff]
  %v5988 = vld [vmem:[#allocation2 + $0x140] sm:$0xff]
  %v5989 = vld [vmem:[#allocation2 + $0x148] sm:$0xff]
  %v5990 = vld [vmem:[#allocation2 + $0x150] sm:$0xff]
  %v5991 = vld [vmem:[#allocation2 + $0x158] sm:$0xff]
  %v5992 = vld [vmem:[#allocation2 + $0x160] sm:$0xff]
  %5993 = vst.msk [vmem:[#allocation3 + $0x8] sm:$0xff] %vm997, %v5981
  %5994 = vst.msk [vmem:[#allocation3 + $0x20] sm:$0xff] %vm997, %v5982
  %5995 = vst.msk [vmem:[#allocation3 + $0x38] sm:$0xff] %vm997, %v5983
  %5996 = vst.msk [vmem:[#allocation3 + $0x50] sm:$0xff] %vm997, %v5984
  %5997 = vst.msk [vmem:[#allocation3 + $0x68] sm:$0xff] %vm997, %v5985
  %5998 = vst.msk [vmem:[#allocation3 + $0x80] sm:$0xff] %vm997, %v5986
  %5999 = vst.msk [vmem:[#allocation3 + $0x98] sm:$0xff] %vm997, %v5987
  %6000 = vst.msk [vmem:[#allocation3 + $0xb0] sm:$0xff] %vm997, %v5988
  %6001 = vst.msk [vmem:[#allocation3 + $0xc8] sm:$0xff] %vm997, %v5989
  %6002 = vst.msk [vmem:[#allocation3 + $0xe0] sm:$0xff] %vm997, %v5990
  %6003 = vst.msk [vmem:[#allocation3 + $0xf8] sm:$0xff] %vm997, %v5991
  %6004 = vst.msk [vmem:[#allocation3 + $0x110] sm:$0xff] %vm997, %v5992
  %v6005 = vld [vmem:[#allocation2 + $0x110] sm:$0xff]
  %v6006 = vld [vmem:[#allocation2 + $0x118] sm:$0xff]
  %v6007 = vld [vmem:[#allocation2 + $0x120] sm:$0xff]
  %v6008 = vld [vmem:[#allocation2 + $0x128] sm:$0xff]
  %v6009 = vld [vmem:[#allocation2 + $0x130] sm:$0xff]
  %v6010 = vld [vmem:[#allocation2 + $0x138] sm:$0xff]
  %v6011 = vld [vmem:[#allocation2 + $0x140] sm:$0xff]
  %v6012 = vld [vmem:[#allocation2 + $0x148] sm:$0xff]
  %v6013 = vld [vmem:[#allocation2 + $0x150] sm:$0xff]
  %v6014 = vld [vmem:[#allocation2 + $0x158] sm:$0xff]
  %v6015 = vld [vmem:[#allocation2 + $0x160] sm:$0xff]
  %v6016 = vld [vmem:[#allocation2 + $0x168] sm:$0xff]
  %6029 = vrot.lane.b32.xlu0 %v6005, 32
  %v6030 = vpop.permute.xlu0 %6029
  %6031 = vrot.lane.b32.xlu0 %v6006, 32
  %v6032 = vpop.permute.xlu0 %6031
  %6033 = vrot.lane.b32.xlu0 %v6007, 32
  %v6034 = vpop.permute.xlu0 %6033
  %6035 = vrot.lane.b32.xlu0 %v6008, 32
  %v6036 = vpop.permute.xlu0 %6035
  %6037 = vrot.lane.b32.xlu0 %v6009, 32
  %v6038 = vpop.permute.xlu0 %6037
  %6039 = vrot.lane.b32.xlu0 %v6010, 32
  %v6040 = vpop.permute.xlu0 %6039
  %6041 = vrot.lane.b32.xlu0 %v6011, 32
  %v6042 = vpop.permute.xlu0 %6041
  %6043 = vrot.lane.b32.xlu0 %v6012, 32
  %v6044 = vpop.permute.xlu0 %6043
  %6045 = vrot.lane.b32.xlu0 %v6013, 32
  %v6046 = vpop.permute.xlu0 %6045
  %6047 = vrot.lane.b32.xlu0 %v6014, 32
  %v6048 = vpop.permute.xlu0 %6047
  %6049 = vrot.lane.b32.xlu0 %v6015, 32
  %v6050 = vpop.permute.xlu0 %6049
  %6051 = vrot.lane.b32.xlu0 %v6016, 32
  %v6052 = vpop.permute.xlu0 %6051
  %6065 = vst.msk [vmem:[#allocation3 + $0x8] sm:$0xff] %vm4035, %v6030
  %6066 = vst.msk [vmem:[#allocation3 + $0x20] sm:$0xff] %vm4035, %v6032
  %6067 = vst.msk [vmem:[#allocation3 + $0x38] sm:$0xff] %vm4035, %v6034
  %6068 = vst.msk [vmem:[#allocation3 + $0x50] sm:$0xff] %vm4035, %v6036
  %6069 = vst.msk [vmem:[#allocation3 + $0x68] sm:$0xff] %vm4035, %v6038
  %6070 = vst.msk [vmem:[#allocation3 + $0x80] sm:$0xff] %vm4035, %v6040
  %6071 = vst.msk [vmem:[#allocation3 + $0x98] sm:$0xff] %vm4035, %v6042
  %6072 = vst.msk [vmem:[#allocation3 + $0xb0] sm:$0xff] %vm4035, %v6044
  %6073 = vst.msk [vmem:[#allocation3 + $0xc8] sm:$0xff] %vm4035, %v6046
  %6074 = vst.msk [vmem:[#allocation3 + $0xe0] sm:$0xff] %vm4035, %v6048
  %6075 = vst.msk [vmem:[#allocation3 + $0xf8] sm:$0xff] %vm4035, %v6050
  %6076 = vst.msk [vmem:[#allocation3 + $0x110] sm:$0xff] %vm4035, %v6052
  %v6077 = vld [vmem:[#allocation2 + $0x140] sm:$0xff]
  %v6078 = vld [vmem:[#allocation2 + $0x148] sm:$0xff]
  %v6079 = vld [vmem:[#allocation2 + $0x150] sm:$0xff]
  %v6080 = vld [vmem:[#allocation2 + $0x158] sm:$0xff]
  %v6081 = vld [vmem:[#allocation2 + $0x160] sm:$0xff]
  %v6082 = vld [vmem:[#allocation2 + $0x168] sm:$0xff]
  %v6083 = vld [vmem:[#allocation2 + $0x170] sm:$0xff]
  %v6084 = vld [vmem:[#allocation2 + $0x178] sm:$0xff]
  %v6085 = vld [vmem:[#allocation2 + $0x180] sm:$0xff]
  %v6086 = vld [vmem:[#allocation2 + $0x188] sm:$0xff]
  %v6087 = vld [vmem:[#allocation2 + $0x190] sm:$0xff]
  %v6088 = vld [vmem:[#allocation2 + $0x198] sm:$0xff]
  %6101 = vrot.lane.b32.xlu0 %v6077, 64
  %v6102 = vpop.permute.xlu0 %6101
  %6103 = vrot.lane.b32.xlu0 %v6078, 64
  %v6104 = vpop.permute.xlu0 %6103
  %6105 = vrot.lane.b32.xlu0 %v6079, 64
  %v6106 = vpop.permute.xlu0 %6105
  %6107 = vrot.lane.b32.xlu0 %v6080, 64
  %v6108 = vpop.permute.xlu0 %6107
  %6109 = vrot.lane.b32.xlu0 %v6081, 64
  %v6110 = vpop.permute.xlu0 %6109
  %6111 = vrot.lane.b32.xlu0 %v6082, 64
  %v6112 = vpop.permute.xlu0 %6111
  %6113 = vrot.lane.b32.xlu0 %v6083, 64
  %v6114 = vpop.permute.xlu0 %6113
  %6115 = vrot.lane.b32.xlu0 %v6084, 64
  %v6116 = vpop.permute.xlu0 %6115
  %6117 = vrot.lane.b32.xlu0 %v6085, 64
  %v6118 = vpop.permute.xlu0 %6117
  %6119 = vrot.lane.b32.xlu0 %v6086, 64
  %v6120 = vpop.permute.xlu0 %6119
  %6121 = vrot.lane.b32.xlu0 %v6087, 64
  %v6122 = vpop.permute.xlu0 %6121
  %6123 = vrot.lane.b32.xlu0 %v6088, 64
  %v6124 = vpop.permute.xlu0 %6123
  %6137 = vst.msk [vmem:[#allocation3 + $0x8] sm:$0xff] %vm4108, %v6102
  %6138 = vst.msk [vmem:[#allocation3 + $0x20] sm:$0xff] %vm4108, %v6104
  %6139 = vst.msk [vmem:[#allocation3 + $0x38] sm:$0xff] %vm4108, %v6106
  %6140 = vst.msk [vmem:[#allocation3 + $0x50] sm:$0xff] %vm4108, %v6108
  %6141 = vst.msk [vmem:[#allocation3 + $0x68] sm:$0xff] %vm4108, %v6110
  %6142 = vst.msk [vmem:[#allocation3 + $0x80] sm:$0xff] %vm4108, %v6112
  %6143 = vst.msk [vmem:[#allocation3 + $0x98] sm:$0xff] %vm4108, %v6114
  %6144 = vst.msk [vmem:[#allocation3 + $0xb0] sm:$0xff] %vm4108, %v6116
  %6145 = vst.msk [vmem:[#allocation3 + $0xc8] sm:$0xff] %vm4108, %v6118
  %6146 = vst.msk [vmem:[#allocation3 + $0xe0] sm:$0xff] %vm4108, %v6120
  %6147 = vst.msk [vmem:[#allocation3 + $0xf8] sm:$0xff] %vm4108, %v6122
  %6148 = vst.msk [vmem:[#allocation3 + $0x110] sm:$0xff] %vm4108, %v6124
  %v6149 = vld [vmem:[#allocation2 + $0x148] sm:$0xff]
  %v6150 = vld [vmem:[#allocation2 + $0x150] sm:$0xff]
  %v6151 = vld [vmem:[#allocation2 + $0x158] sm:$0xff]
  %v6152 = vld [vmem:[#allocation2 + $0x160] sm:$0xff]
  %v6153 = vld [vmem:[#allocation2 + $0x168] sm:$0xff]
  %v6154 = vld [vmem:[#allocation2 + $0x170] sm:$0xff]
  %v6155 = vld [vmem:[#allocation2 + $0x178] sm:$0xff]
  %v6156 = vld [vmem:[#allocation2 + $0x180] sm:$0xff]
  %v6157 = vld [vmem:[#allocation2 + $0x188] sm:$0xff]
  %v6158 = vld [vmem:[#allocation2 + $0x190] sm:$0xff]
  %v6159 = vld [vmem:[#allocation2 + $0x198] sm:$0xff]
  %v6160 = vld [vmem:[#allocation2 + $0x1a0] sm:$0xff]
  %6173 = vrot.lane.b32.xlu0 %v6149, 96
  %v6174 = vpop.permute.xlu0 %6173
  %6175 = vrot.lane.b32.xlu0 %v6150, 96
  %v6176 = vpop.permute.xlu0 %6175
  %6177 = vrot.lane.b32.xlu0 %v6151, 96
  %v6178 = vpop.permute.xlu0 %6177
  %6179 = vrot.lane.b32.xlu0 %v6152, 96
  %v6180 = vpop.permute.xlu0 %6179
  %6181 = vrot.lane.b32.xlu0 %v6153, 96
  %v6182 = vpop.permute.xlu0 %6181
  %6183 = vrot.lane.b32.xlu0 %v6154, 96
  %v6184 = vpop.permute.xlu0 %6183
  %6185 = vrot.lane.b32.xlu0 %v6155, 96
  %v6186 = vpop.permute.xlu0 %6185
  %6187 = vrot.lane.b32.xlu0 %v6156, 96
  %v6188 = vpop.permute.xlu0 %6187
  %6189 = vrot.lane.b32.xlu0 %v6157, 96
  %v6190 = vpop.permute.xlu0 %6189
  %6191 = vrot.lane.b32.xlu0 %v6158, 96
  %v6192 = vpop.permute.xlu0 %6191
  %6193 = vrot.lane.b32.xlu0 %v6159, 96
  %v6194 = vpop.permute.xlu0 %6193
  %6195 = vrot.lane.b32.xlu0 %v6160, 96
  %v6196 = vpop.permute.xlu0 %6195
  %6209 = vst.msk [vmem:[#allocation3 + $0x8] sm:$0xff] %vm4181, %v6174
  %6210 = vst.msk [vmem:[#allocation3 + $0x20] sm:$0xff] %vm4181, %v6176
  %6211 = vst.msk [vmem:[#allocation3 + $0x38] sm:$0xff] %vm4181, %v6178
  %6212 = vst.msk [vmem:[#allocation3 + $0x50] sm:$0xff] %vm4181, %v6180
  %6213 = vst.msk [vmem:[#allocation3 + $0x68] sm:$0xff] %vm4181, %v6182
  %6214 = vst.msk [vmem:[#allocation3 + $0x80] sm:$0xff] %vm4181, %v6184
  %6215 = vst.msk [vmem:[#allocation3 + $0x98] sm:$0xff] %vm4181, %v6186
  %6216 = vst.msk [vmem:[#allocation3 + $0xb0] sm:$0xff] %vm4181, %v6188
  %6217 = vst.msk [vmem:[#allocation3 + $0xc8] sm:$0xff] %vm4181, %v6190
  %6218 = vst.msk [vmem:[#allocation3 + $0xe0] sm:$0xff] %vm4181, %v6192
  %6219 = vst.msk [vmem:[#allocation3 + $0xf8] sm:$0xff] %vm4181, %v6194
  %6220 = vst.msk [vmem:[#allocation3 + $0x110] sm:$0xff] %vm4181, %v6196
  %v6221 = vld [vmem:[#allocation2 + $0x150] sm:$0xff]
  %v6222 = vld [vmem:[#allocation2 + $0x158] sm:$0xff]
  %v6223 = vld [vmem:[#allocation2 + $0x160] sm:$0xff]
  %v6224 = vld [vmem:[#allocation2 + $0x168] sm:$0xff]
  %v6225 = vld [vmem:[#allocation2 + $0x170] sm:$0xff]
  %v6226 = vld [vmem:[#allocation2 + $0x178] sm:$0xff]
  %v6227 = vld [vmem:[#allocation2 + $0x180] sm:$0xff]
  %v6228 = vld [vmem:[#allocation2 + $0x188] sm:$0xff]
  %v6229 = vld [vmem:[#allocation2 + $0x190] sm:$0xff]
  %v6230 = vld [vmem:[#allocation2 + $0x198] sm:$0xff]
  %v6231 = vld [vmem:[#allocation2 + $0x1a0] sm:$0xff]
  %v6232 = vld [vmem:[#allocation2 + $0x1a8] sm:$0xff]
  %6233 = vst.msk [vmem:[#allocation3 + $0x10] sm:$0xff] %vm997, %v6221
  %6234 = vst.msk [vmem:[#allocation3 + $0x28] sm:$0xff] %vm997, %v6222
  %6235 = vst.msk [vmem:[#allocation3 + $0x40] sm:$0xff] %vm997, %v6223
  %6236 = vst.msk [vmem:[#allocation3 + $0x58] sm:$0xff] %vm997, %v6224
  %6237 = vst.msk [vmem:[#allocation3 + $0x70] sm:$0xff] %vm997, %v6225
  %6238 = vst.msk [vmem:[#allocation3 + $0x88] sm:$0xff] %vm997, %v6226
  %6239 = vst.msk [vmem:[#allocation3 + $0xa0] sm:$0xff] %vm997, %v6227
  %6240 = vst.msk [vmem:[#allocation3 + $0xb8] sm:$0xff] %vm997, %v6228
  %6241 = vst.msk [vmem:[#allocation3 + $0xd0] sm:$0xff] %vm997, %v6229
  %6242 = vst.msk [vmem:[#allocation3 + $0xe8] sm:$0xff] %vm997, %v6230
  %6243 = vst.msk [vmem:[#allocation3 + $0x100] sm:$0xff] %vm997, %v6231
  %6244 = vst.msk [vmem:[#allocation3 + $0x118] sm:$0xff] %vm997, %v6232
  %v6245 = vld [vmem:[#allocation3] sm:$0xff]
  %v6246 = vld [vmem:[#allocation3 + $0x8] sm:$0xff]
  %v6247 = vld [vmem:[#allocation3 + $0x10] sm:$0xff]
  %v6248 = vld [vmem:[#allocation3 + $0x18] sm:$0xff]
  %v6249 = vld [vmem:[#allocation3 + $0x20] sm:$0xff]
  %v6250 = vld [vmem:[#allocation3 + $0x28] sm:$0xff]
  %v6251 = vld [vmem:[#allocation3 + $0x30] sm:$0xff]
  %v6252 = vld [vmem:[#allocation3 + $0x38] sm:$0xff]
  %v6253 = vld [vmem:[#allocation3 + $0x40] sm:$0xff]
  %v6254 = vld [vmem:[#allocation3 + $0x48] sm:$0xff]
  %v6255 = vld [vmem:[#allocation3 + $0x50] sm:$0xff]
  %v6256 = vld [vmem:[#allocation3 + $0x58] sm:$0xff]
  %v6257 = vld [vmem:[#allocation3 + $0x60] sm:$0xff]
  %v6258 = vld [vmem:[#allocation3 + $0x68] sm:$0xff]
  %v6259 = vld [vmem:[#allocation3 + $0x70] sm:$0xff]
  %v6260 = vld [vmem:[#allocation3 + $0x78] sm:$0xff]
  %v6261 = vld [vmem:[#allocation3 + $0x80] sm:$0xff]
  %v6262 = vld [vmem:[#allocation3 + $0x88] sm:$0xff]
  %v6263 = vld [vmem:[#allocation3 + $0x90] sm:$0xff]
  %v6264 = vld [vmem:[#allocation3 + $0x98] sm:$0xff]
  %v6265 = vld [vmem:[#allocation3 + $0xa0] sm:$0xff]
  %v6266 = vld [vmem:[#allocation3 + $0xa8] sm:$0xff]
  %v6267 = vld [vmem:[#allocation3 + $0xb0] sm:$0xff]
  %v6268 = vld [vmem:[#allocation3 + $0xb8] sm:$0xff]
  %v6269 = vld [vmem:[#allocation3 + $0xc0] sm:$0xff]
  %v6270 = vld [vmem:[#allocation3 + $0xc8] sm:$0xff]
  %v6271 = vld [vmem:[#allocation3 + $0xd0] sm:$0xff]
  %v6272 = vld [vmem:[#allocation3 + $0xd8] sm:$0xff]
  %v6273 = vld [vmem:[#allocation3 + $0xe0] sm:$0xff]
  %v6274 = vld [vmem:[#allocation3 + $0xe8] sm:$0xff]
  %v6275 = vld [vmem:[#allocation3 + $0xf0] sm:$0xff]
  %v6276 = vld [vmem:[#allocation3 + $0xf8] sm:$0xff]
  %v6277 = vld [vmem:[#allocation3 + $0x100] sm:$0xff]
  %v6278 = vld [vmem:[#allocation3 + $0x108] sm:$0xff]
  %v6279 = vld [vmem:[#allocation3 + $0x110] sm:$0xff]
  %v6280 = vld [vmem:[#allocation3 + $0x118] sm:$0xff]
  %v6281 = vld [vmem:[%s3] sm:$0xff]
  %v6282 = vld [vmem:[%s3 + $0x8] sm:$0xff]
  %v6283 = vld [vmem:[%s3 + $0x10] sm:$0xff]
  %v6284 = vld [vmem:[%s3 + $0x18] sm:$0xff]
  %v6285 = vld [vmem:[%s3 + $0x20] sm:$0xff]
  %v6286 = vld [vmem:[%s3 + $0x28] sm:$0xff]
  %v6287 = vld [vmem:[%s3 + $0x30] sm:$0xff]
  %v6288 = vld [vmem:[%s3 + $0x38] sm:$0xff]
  %v6289 = vld [vmem:[%s3 + $0x40] sm:$0xff]
  %v6290 = vld [vmem:[%s3 + $0x48] sm:$0xff]
  %v6291 = vld [vmem:[%s3 + $0x50] sm:$0xff]
  %v6292 = vld [vmem:[%s3 + $0x58] sm:$0xff]
  %v6293 = vld [vmem:[%s3 + $0x60] sm:$0xff]
  %v6294 = vld [vmem:[%s3 + $0x68] sm:$0xff]
  %v6295 = vld [vmem:[%s3 + $0x70] sm:$0xff]
  %v6296 = vld [vmem:[%s3 + $0x78] sm:$0xff]
  %v6297 = vld [vmem:[%s3 + $0x80] sm:$0xff]
  %v6298 = vld [vmem:[%s3 + $0x88] sm:$0xff]
  %v6299 = vld [vmem:[%s3 + $0x90] sm:$0xff]
  %v6300 = vld [vmem:[%s3 + $0x98] sm:$0xff]
  %v6301 = vld [vmem:[%s3 + $0xa0] sm:$0xff]
  %v6302 = vld [vmem:[%s3 + $0xa8] sm:$0xff]
  %v6303 = vld [vmem:[%s3 + $0xb0] sm:$0xff]
  %v6304 = vld [vmem:[%s3 + $0xb8] sm:$0xff]
  %v6305 = vld [vmem:[%s3 + $0xc0] sm:$0xff]
  %v6306 = vld [vmem:[%s3 + $0xc8] sm:$0xff]
  %v6307 = vld [vmem:[%s3 + $0xd0] sm:$0xff]
  %v6308 = vld [vmem:[%s3 + $0xd8] sm:$0xff]
  %v6309 = vld [vmem:[%s3 + $0xe0] sm:$0xff]
  %v6310 = vld [vmem:[%s3 + $0xe8] sm:$0xff]
  %v6311 = vld [vmem:[%s3 + $0xf0] sm:$0xff]
  %v6312 = vld [vmem:[%s3 + $0xf8] sm:$0xff]
  %v6313 = vld [vmem:[%s3 + $0x100] sm:$0xff]
  %v6314 = vld [vmem:[%s3 + $0x108] sm:$0xff]
  %v6315 = vld [vmem:[%s3 + $0x110] sm:$0xff]
  %v6316 = vld [vmem:[%s3 + $0x118] sm:$0xff]
  %v6317 = vld [vmem:[%s4] sm:$0x1]
  %v6319 = vlaneseq
  %v6320 = vshrl.u32 %v6319, 7
  %v6321 = vsub.s32 0, %v6320
  %v6322 = vrot.slane %v6317, %v6321
  %v6325 = vsel %vm997, %v6247, 0
  %v6328 = vsel %vm997, %v6250, 0
  %v6331 = vsel %vm997, %v6253, 0
  %v6334 = vsel %vm997, %v6256, 0
  %v6337 = vsel %vm997, %v6259, 0
  %v6340 = vsel %vm997, %v6262, 0
  %v6343 = vsel %vm997, %v6265, 0
  %v6346 = vsel %vm997, %v6268, 0
  %v6349 = vsel %vm997, %v6271, 0
  %v6352 = vsel %vm997, %v6274, 0
  %v6355 = vsel %vm997, %v6277, 0
  %v6358 = vsel %vm997, %v6280, 0
  %6360 = vmatprep.subr.mxu0 0.0
  %6361 = vmatpush1.msra.mxu0 %v6281
  %6362 = vmatprep.subr.mxu0 0.0
  %6363 = vmatpush1.msra.mxu0 %v6282
  %6364 = vmatprep.subr.mxu0 0.0
  %6365 = vmatpush1.msra.mxu0 %v6283
  %6366 = vmatprep.subr.mxu0 0.0
  %6367 = vmatpush1.msra.mxu0 %v6284
  %6368 = vmatprep.subr.mxu0 0.0
  %6369 = vmatpush1.msra.mxu0 %v6285
  %6370 = vmatprep.subr.mxu0 0.0
  %6371 = vmatpush1.msra.mxu0 %v6286
  %6372 = vmatprep.subr.mxu0 0.0
  %6373 = vmatpush1.msra.mxu0 %v6287
  %6374 = vmatprep.subr.mxu0 0.0
  %6375 = vmatpush1.msra.mxu0 %v6288
  %6376 = vmatprep.subr.mxu0 0.0
  %6377 = vmatpush1.msra.mxu0 %v6289
  %6378 = vmatprep.subr.mxu0 0.0
  %6379 = vmatpush1.msra.mxu0 %v6290
  %6380 = vmatprep.subr.mxu0 0.0
  %6381 = vmatpush1.msra.mxu0 %v6291
  %6382 = vmatprep.subr.mxu0 0.0
  %6383 = vmatpush1.msra.mxu0 %v6292
  %6384 = vmatprep.subr.mxu0 0.0
  %6385 = vmatpush1.msra.mxu0 %v6293
  %6386 = vmatprep.subr.mxu0 0.0
  %6387 = vmatpush1.msra.mxu0 %v6294
  %6388 = vmatprep.subr.mxu0 0.0
  %6389 = vmatpush1.msra.mxu0 %v6295
  %6390 = vmatprep.subr.mxu0 0.0
  %6391 = vmatpush1.msra.mxu0 %v6296
  %6392 = vmatprep.subr.mxu0 0.0
  %6393 = vmatpush1.msra.mxu0 %v6297
  %6394 = vmatprep.subr.mxu0 0.0
  %6395 = vmatpush1.msra.mxu0 %v6298
  %6396 = vmatprep.subr.mxu0 0.0
  %6397 = vmatpush1.msra.mxu0 %v6299
  %6398 = vmatprep.subr.mxu0 0.0
  %6399 = vmatpush1.msra.mxu0 %v6300
  %6400 = vmatprep.subr.mxu0 0.0
  %6401 = vmatpush1.msra.mxu0 %v6301
  %6402 = vmatprep.subr.mxu0 0.0
  %6403 = vmatpush1.msra.mxu0 %v6302
  %6404 = vmatprep.subr.mxu0 0.0
  %6405 = vmatpush1.msra.mxu0 %v6303
  %6406 = vmatprep.subr.mxu0 0.0
  %6407 = vmatpush1.msra.mxu0 %v6304
  %6408 = vmatprep.subr.mxu0 0.0
  %6409 = vmatpush1.msra.mxu0 %v6305
  %6410 = vmatprep.subr.mxu0 0.0
  %6411 = vmatpush1.msra.mxu0 %v6306
  %6412 = vmatprep.subr.mxu0 0.0
  %6413 = vmatpush1.msra.mxu0 %v6307
  %6414 = vmatprep.subr.mxu0 0.0
  %6415 = vmatpush1.msra.mxu0 %v6308
  %6416 = vmatprep.subr.mxu0 0.0
  %6417 = vmatpush1.msra.mxu0 %v6309
  %6418 = vmatprep.subr.mxu0 0.0
  %6419 = vmatpush1.msra.mxu0 %v6310
  %6420 = vmatprep.subr.mxu0 0.0
  %6421 = vmatpush1.msra.mxu0 %v6311
  %6422 = vmatprep.subr.mxu0 0.0
  %6423 = vmatpush1.msra.mxu0 %v6312
  %6424 = vmatprep.mubr.f32.mxu0 %v6246
  %6425 = vmatmul.mubr.f32.gmra.mrb[0].mxu0 %v6245
  %v6426 = vpop.f32.mrb[0].mxu0
  %v6427 = vadd.f32 %v6322, %v6426
  %v6428 = vpop.f32.mrb[0].mxu0
  %6429 = vmatprep.mubr.f32.mxu0 %v6249
  %6430 = vmatmul.mubr.f32.gmra.mrb[0].mxu0 %v6248
  %v6431 = vpop.f32.mrb[0].mxu0
  %v6432 = vadd.f32 %v6322, %v6431
  %v6433 = vpop.f32.mrb[0].mxu0
  %6434 = vmatprep.mubr.f32.mxu0 %v6252
  %6435 = vmatmul.mubr.f32.gmra.mrb[0].mxu0 %v6251
  %v6436 = vpop.f32.mrb[0].mxu0
  %v6437 = vadd.f32 %v6322, %v6436
  %v6438 = vpop.f32.mrb[0].mxu0
  %6439 = vmatprep.mubr.f32.mxu0 %v6255
  %6440 = vmatmul.mubr.f32.gmra.mrb[0].mxu0 %v6254
  %v6441 = vpop.f32.mrb[0].mxu0
  %v6442 = vadd.f32 %v6322, %v6441
  %v6443 = vpop.f32.mrb[0].mxu0
  %6444 = vmatprep.mubr.f32.mxu0 %v6258
  %6445 = vmatmul.mubr.f32.gmra.mrb[0].mxu0 %v6257
  %v6446 = vpop.f32.mrb[0].mxu0
  %v6447 = vadd.f32 %v6322, %v6446
  %v6448 = vpop.f32.mrb[0].mxu0
  %6449 = vmatprep.mubr.f32.mxu0 %v6261
  %6450 = vmatmul.mubr.f32.gmra.mrb[0].mxu0 %v6260
  %v6451 = vpop.f32.mrb[0].mxu0
  %v6452 = vadd.f32 %v6322, %v6451
  %v6453 = vpop.f32.mrb[0].mxu0
  %6454 = vmatprep.mubr.f32.mxu0 %v6264
  %6455 = vmatmul.mubr.f32.gmra.mrb[0].mxu0 %v6263
  %v6456 = vpop.f32.mrb[0].mxu0
  %v6457 = vadd.f32 %v6322, %v6456
  %v6458 = vpop.f32.mrb[0].mxu0
  %6459 = vmatprep.mubr.f32.mxu0 %v6267
  %6460 = vmatmul.mubr.f32.gmra.mrb[0].mxu0 %v6266
  %v6461 = vpop.f32.mrb[0].mxu0
  %v6462 = vadd.f32 %v6322, %v6461
  %v6463 = vpop.f32.mrb[0].mxu0
  %6464 = vmatprep.mubr.f32.mxu0 %v6270
  %6465 = vmatmul.mubr.f32.gmra.mrb[0].mxu0 %v6269
  %v6466 = vpop.f32.mrb[0].mxu0
  %v6467 = vadd.f32 %v6322, %v6466
  %v6468 = vpop.f32.mrb[0].mxu0
  %6469 = vmatprep.mubr.f32.mxu0 %v6273
  %6470 = vmatmul.mubr.f32.gmra.mrb[0].mxu0 %v6272
  %v6471 = vpop.f32.mrb[0].mxu0
  %v6472 = vadd.f32 %v6322, %v6471
  %v6473 = vpop.f32.mrb[0].mxu0
  %6474 = vmatprep.mubr.f32.mxu0 %v6276
  %6475 = vmatmul.mubr.f32.gmra.mrb[0].mxu0 %v6275
  %v6476 = vpop.f32.mrb[0].mxu0
  %v6477 = vadd.f32 %v6322, %v6476
  %v6478 = vpop.f32.mrb[0].mxu0
  %6479 = vmatprep.mubr.f32.mxu0 %v6279
  %6480 = vmatmul.mubr.f32.gmra.mrb[0].mxu0 %v6278
  %v6481 = vpop.f32.mrb[0].mxu0
  %v6482 = vadd.f32 %v6322, %v6481
  %v6483 = vpop.f32.mrb[0].mxu0
  %6484 = vdwg.mxu0
  %6485 = vmatprep.subr.mxu0 0.0
  %6486 = vmatpush1.msra.mxu0 %v6313
  %6487 = vmatprep.subr.mxu0 0.0
  %6488 = vmatpush1.msra.mxu0 %v6314
  %6489 = vmatprep.subr.mxu0 0.0
  %6490 = vmatpush1.msra.mxu0 %v6315
  %6491 = vmatprep.subr.mxu0 0.0
  %6492 = vmatpush1.msra.mxu0 %v6316
  %6493 = vmatprep.subr.mxu0 0.0
  %6494 = vmatpush1.msra.mxu0 0.0
  %6495 = vmatprep.subr.mxu0 0.0
  %6496 = vmatpush1.msra.mxu0 0.0
  %6497 = vmatprep.subr.mxu0 0.0
  %6498 = vmatpush1.msra.mxu0 0.0
  %6499 = vmatprep.subr.mxu0 0.0
  %6500 = vmatpush1.msra.mxu0 0.0
  %6501 = vmatprep.subr.mxu0 0.0
  %6502 = vmatpush1.msra.mxu0 0.0
  %6503 = vmatprep.subr.mxu0 0.0
  %6504 = vmatpush1.msra.mxu0 0.0
  %6505 = vmatprep.subr.mxu0 0.0
  %6506 = vmatpush1.msra.mxu0 0.0
  %6507 = vmatprep.subr.mxu0 0.0
  %6508 = vmatpush1.msra.mxu0 0.0
  %6509 = vmatprep.subr.mxu0 0.0
  %6510 = vmatpush1.msra.mxu0 0.0
  %6511 = vmatprep.subr.mxu0 0.0
  %6512 = vmatpush1.msra.mxu0 0.0
  %6513 = vmatprep.subr.mxu0 0.0
  %6514 = vmatpush1.msra.mxu0 0.0
  %6515 = vmatprep.subr.mxu0 0.0
  %6516 = vmatpush1.msra.mxu0 0.0
  %6517 = vmatprep.subr.mxu0 0.0
  %6518 = vmatpush1.msra.mxu0 0.0
  %6519 = vmatprep.subr.mxu0 0.0
  %6520 = vmatpush1.msra.mxu0 0.0
  %6521 = vmatprep.subr.mxu0 0.0
  %6522 = vmatpush1.msra.mxu0 0.0
  %6523 = vmatprep.subr.mxu0 0.0
  %6524 = vmatpush1.msra.mxu0 0.0
  %6525 = vmatprep.subr.mxu0 0.0
  %6526 = vmatpush1.msra.mxu0 0.0
  %6527 = vmatprep.subr.mxu0 0.0
  %6528 = vmatpush1.msra.mxu0 0.0
  %6529 = vmatprep.subr.mxu0 0.0
  %6530 = vmatpush1.msra.mxu0 0.0
  %6531 = vmatprep.subr.mxu0 0.0
  %6532 = vmatpush1.msra.mxu0 0.0
  %6533 = vmatprep.subr.mxu0 0.0
  %6534 = vmatpush1.msra.mxu0 0.0
  %6535 = vmatprep.subr.mxu0 0.0
  %6536 = vmatpush1.msra.mxu0 0.0
  %6537 = vmatprep.subr.mxu0 0.0
  %6538 = vmatpush1.msra.mxu0 0.0
  %6539 = vmatprep.subr.mxu0 0.0
  %6540 = vmatpush1.msra.mxu0 0.0
  %6541 = vmatprep.subr.mxu0 0.0
  %6542 = vmatpush1.msra.mxu0 0.0
  %6543 = vmatprep.subr.mxu0 0.0
  %6544 = vmatpush1.msra.mxu0 0.0
  %6545 = vmatprep.subr.mxu0 0.0
  %6546 = vmatpush1.msra.mxu0 0.0
  %6547 = vmatprep.subr.mxu0 0.0
  %6548 = vmatpush1.msra.mxu0 0.0
  %6549 = vmatprep.mubr.f32.mxu0 0.0
  %6550 = vmatmul.mubr.f32.gmra.mrb[0].mxu0 %v6325
  %v6551 = vpop.f32.mrb[0].mxu0
  %v6552 = vadd.f32 %v6427, %v6551
  %v6553 = vpop.f32.mrb[0].mxu0
  %6554 = vmatprep.mubr.f32.mxu0 0.0
  %6555 = vmatmul.mubr.f32.gmra.mrb[0].mxu0 %v6328
  %v6556 = vpop.f32.mrb[0].mxu0
  %v6557 = vadd.f32 %v6432, %v6556
  %v6558 = vpop.f32.mrb[0].mxu0
  %6559 = vmatprep.mubr.f32.mxu0 0.0
  %6560 = vmatmul.mubr.f32.gmra.mrb[0].mxu0 %v6331
  %v6561 = vpop.f32.mrb[0].mxu0
  %v6562 = vadd.f32 %v6437, %v6561
  %v6563 = vpop.f32.mrb[0].mxu0
  %6564 = vmatprep.mubr.f32.mxu0 0.0
  %6565 = vmatmul.mubr.f32.gmra.mrb[0].mxu0 %v6334
  %v6566 = vpop.f32.mrb[0].mxu0
  %v6567 = vadd.f32 %v6442, %v6566
  %v6568 = vpop.f32.mrb[0].mxu0
  %6569 = vmatprep.mubr.f32.mxu0 0.0
  %6570 = vmatmul.mubr.f32.gmra.mrb[0].mxu0 %v6337
  %v6571 = vpop.f32.mrb[0].mxu0
  %v6572 = vadd.f32 %v6447, %v6571
  %v6573 = vpop.f32.mrb[0].mxu0
  %6574 = vmatprep.mubr.f32.mxu0 0.0
  %6575 = vmatmul.mubr.f32.gmra.mrb[0].mxu0 %v6340
  %v6576 = vpop.f32.mrb[0].mxu0
  %v6577 = vadd.f32 %v6452, %v6576
  %v6578 = vpop.f32.mrb[0].mxu0
  %6579 = vmatprep.mubr.f32.mxu0 0.0
  %6580 = vmatmul.mubr.f32.gmra.mrb[0].mxu0 %v6343
  %v6581 = vpop.f32.mrb[0].mxu0
  %v6582 = vadd.f32 %v6457, %v6581
  %v6583 = vpop.f32.mrb[0].mxu0
  %6584 = vmatprep.mubr.f32.mxu0 0.0
  %6585 = vmatmul.mubr.f32.gmra.mrb[0].mxu0 %v6346
  %v6586 = vpop.f32.mrb[0].mxu0
  %v6587 = vadd.f32 %v6462, %v6586
  %v6588 = vpop.f32.mrb[0].mxu0
  %6589 = vmatprep.mubr.f32.mxu0 0.0
  %6590 = vmatmul.mubr.f32.gmra.mrb[0].mxu0 %v6349
  %v6591 = vpop.f32.mrb[0].mxu0
  %v6592 = vadd.f32 %v6467, %v6591
  %v6593 = vpop.f32.mrb[0].mxu0
  %6594 = vmatprep.mubr.f32.mxu0 0.0
  %6595 = vmatmul.mubr.f32.gmra.mrb[0].mxu0 %v6352
  %v6596 = vpop.f32.mrb[0].mxu0
  %v6597 = vadd.f32 %v6472, %v6596
  %v6598 = vpop.f32.mrb[0].mxu0
  %6599 = vmatprep.mubr.f32.mxu0 0.0
  %6600 = vmatmul.mubr.f32.gmra.mrb[0].mxu0 %v6355
  %v6601 = vpop.f32.mrb[0].mxu0
  %v6602 = vadd.f32 %v6477, %v6601
  %v6603 = vpop.f32.mrb[0].mxu0
  %6604 = vmatprep.mubr.f32.mxu0 0.0
  %6605 = vmatmul.mubr.f32.gmra.mrb[0].mxu0 %v6358
  %v6606 = vpop.f32.mrb[0].mxu0
  %v6607 = vadd.f32 %v6482, %v6606
  %v6608 = vpop.f32.mrb[0].mxu0
  %6609 = vdwg.mxu0
  %v6610 = vmax.f32 %v6552, 0.0
  %v6611 = vmax.f32 %v6557, 0.0
  %v6612 = vmax.f32 %v6562, 0.0
  %v6613 = vmax.f32 %v6567, 0.0
  %v6614 = vmax.f32 %v6572, 0.0
  %v6615 = vmax.f32 %v6577, 0.0
  %v6616 = vmax.f32 %v6582, 0.0
  %v6617 = vmax.f32 %v6587, 0.0
  %v6618 = vmax.f32 %v6592, 0.0
  %v6619 = vmax.f32 %v6597, 0.0
  %v6620 = vmax.f32 %v6602, 0.0
  %v6621 = vmax.f32 %v6607, 0.0
  %6622 = vst.msk [vmem:[#allocation4 + $0xc0] sm:$0xff] %vm4835, %v6610
  %6623 = vst.msk [vmem:[#allocation4 + $0xc8] sm:$0xff] %vm4835, %v6611
  %6624 = vst.msk [vmem:[#allocation4 + $0xd0] sm:$0xff] %vm4835, %v6612
  %6625 = vst.msk [vmem:[#allocation4 + $0xd8] sm:$0xff] %vm4835, %v6613
  %6626 = vst.msk [vmem:[#allocation4 + $0xe0] sm:$0xff] %vm4835, %v6614
  %6627 = vst.msk [vmem:[#allocation4 + $0xe8] sm:$0xff] %vm4835, %v6615
  %6628 = vst.msk [vmem:[#allocation4 + $0xf0] sm:$0xff] %vm4835, %v6616
  %6629 = vst.msk [vmem:[#allocation4 + $0xf8] sm:$0xff] %vm4835, %v6617
  %6630 = vst.msk [vmem:[#allocation4 + $0x100] sm:$0xff] %vm4835, %v6618
  %6631 = vst.msk [vmem:[#allocation4 + $0x108] sm:$0xff] %vm4835, %v6619
  %6632 = vst.msk [vmem:[#allocation4 + $0x110] sm:$0xff] %vm4835, %v6620
  %6633 = vst.msk [vmem:[#allocation4 + $0x118] sm:$0xff] %vm4835, %v6621
  %v6634 = vld [vmem:[#allocation2 + $0x120] sm:$0xff]
  %v6635 = vld [vmem:[#allocation2 + $0x128] sm:$0xff]
  %v6636 = vld [vmem:[#allocation2 + $0x130] sm:$0xff]
  %v6637 = vld [vmem:[#allocation2 + $0x138] sm:$0xff]
  %v6638 = vld [vmem:[#allocation2 + $0x140] sm:$0xff]
  %v6639 = vld [vmem:[#allocation2 + $0x148] sm:$0xff]
  %v6640 = vld [vmem:[#allocation2 + $0x150] sm:$0xff]
  %v6641 = vld [vmem:[#allocation2 + $0x158] sm:$0xff]
  %v6642 = vld [vmem:[#allocation2 + $0x160] sm:$0xff]
  %v6643 = vld [vmem:[#allocation2 + $0x168] sm:$0xff]
  %6644 = vst.msk [vmem:[#allocation3] sm:$0xff] %vm997, %v6634
  %6645 = vst.msk [vmem:[#allocation3 + $0x18] sm:$0xff] %vm997, %v6635
  %6646 = vst.msk [vmem:[#allocation3 + $0x30] sm:$0xff] %vm997, %v6636
  %6647 = vst.msk [vmem:[#allocation3 + $0x48] sm:$0xff] %vm997, %v6637
  %6648 = vst.msk [vmem:[#allocation3 + $0x60] sm:$0xff] %vm997, %v6638
  %6649 = vst.msk [vmem:[#allocation3 + $0x78] sm:$0xff] %vm997, %v6639
  %6650 = vst.msk [vmem:[#allocation3 + $0x90] sm:$0xff] %vm997, %v6640
  %6651 = vst.msk [vmem:[#allocation3 + $0xa8] sm:$0xff] %vm997, %v6641
  %6652 = vst.msk [vmem:[#allocation3 + $0xc0] sm:$0xff] %vm997, %v6642
  %6653 = vst.msk [vmem:[#allocation3 + $0xd8] sm:$0xff] %vm997, %v6643
  %v6654 = vld [vmem:[#allocation2 + $0x128] sm:$0xff]
  %v6655 = vld [vmem:[#allocation2 + $0x130] sm:$0xff]
  %v6656 = vld [vmem:[#allocation2 + $0x138] sm:$0xff]
  %v6657 = vld [vmem:[#allocation2 + $0x140] sm:$0xff]
  %v6658 = vld [vmem:[#allocation2 + $0x148] sm:$0xff]
  %v6659 = vld [vmem:[#allocation2 + $0x150] sm:$0xff]
  %v6660 = vld [vmem:[#allocation2 + $0x158] sm:$0xff]
  %v6661 = vld [vmem:[#allocation2 + $0x160] sm:$0xff]
  %v6662 = vld [vmem:[#allocation2 + $0x168] sm:$0xff]
  %v6663 = vld [vmem:[#allocation2 + $0x170] sm:$0xff]
  %6674 = vrot.lane.b32.xlu0 %v6654, 32
  %v6675 = vpop.permute.xlu0 %6674
  %6676 = vrot.lane.b32.xlu0 %v6655, 32
  %v6677 = vpop.permute.xlu0 %6676
  %6678 = vrot.lane.b32.xlu0 %v6656, 32
  %v6679 = vpop.permute.xlu0 %6678
  %6680 = vrot.lane.b32.xlu0 %v6657, 32
  %v6681 = vpop.permute.xlu0 %6680
  %6682 = vrot.lane.b32.xlu0 %v6658, 32
  %v6683 = vpop.permute.xlu0 %6682
  %6684 = vrot.lane.b32.xlu0 %v6659, 32
  %v6685 = vpop.permute.xlu0 %6684
  %6686 = vrot.lane.b32.xlu0 %v6660, 32
  %v6687 = vpop.permute.xlu0 %6686
  %6688 = vrot.lane.b32.xlu0 %v6661, 32
  %v6689 = vpop.permute.xlu0 %6688
  %6690 = vrot.lane.b32.xlu0 %v6662, 32
  %v6691 = vpop.permute.xlu0 %6690
  %6692 = vrot.lane.b32.xlu0 %v6663, 32
  %v6693 = vpop.permute.xlu0 %6692
  %6704 = vst.msk [vmem:[#allocation3] sm:$0xff] %vm4035, %v6675
  %6705 = vst.msk [vmem:[#allocation3 + $0x18] sm:$0xff] %vm4035, %v6677
  %6706 = vst.msk [vmem:[#allocation3 + $0x30] sm:$0xff] %vm4035, %v6679
  %6707 = vst.msk [vmem:[#allocation3 + $0x48] sm:$0xff] %vm4035, %v6681
  %6708 = vst.msk [vmem:[#allocation3 + $0x60] sm:$0xff] %vm4035, %v6683
  %6709 = vst.msk [vmem:[#allocation3 + $0x78] sm:$0xff] %vm4035, %v6685
  %6710 = vst.msk [vmem:[#allocation3 + $0x90] sm:$0xff] %vm4035, %v6687
  %6711 = vst.msk [vmem:[#allocation3 + $0xa8] sm:$0xff] %vm4035, %v6689
  %6712 = vst.msk [vmem:[#allocation3 + $0xc0] sm:$0xff] %vm4035, %v6691
  %6713 = vst.msk [vmem:[#allocation3 + $0xd8] sm:$0xff] %vm4035, %v6693
  %v6714 = vld [vmem:[#allocation2 + $0x130] sm:$0xff]
  %v6715 = vld [vmem:[#allocation2 + $0x138] sm:$0xff]
  %v6716 = vld [vmem:[#allocation2 + $0x140] sm:$0xff]
  %v6717 = vld [vmem:[#allocation2 + $0x148] sm:$0xff]
  %v6718 = vld [vmem:[#allocation2 + $0x150] sm:$0xff]
  %v6719 = vld [vmem:[#allocation2 + $0x158] sm:$0xff]
  %v6720 = vld [vmem:[#allocation2 + $0x160] sm:$0xff]
  %v6721 = vld [vmem:[#allocation2 + $0x168] sm:$0xff]
  %v6722 = vld [vmem:[#allocation2 + $0x170] sm:$0xff]
  %v6723 = vld [vmem:[#allocation2 + $0x178] sm:$0xff]
  %6734 = vrot.lane.b32.xlu0 %v6714, 64
  %v6735 = vpop.permute.xlu0 %6734
  %6736 = vrot.lane.b32.xlu0 %v6715, 64
  %v6737 = vpop.permute.xlu0 %6736
  %6738 = vrot.lane.b32.xlu0 %v6716, 64
  %v6739 = vpop.permute.xlu0 %6738
  %6740 = vrot.lane.b32.xlu0 %v6717, 64
  %v6741 = vpop.permute.xlu0 %6740
  %6742 = vrot.lane.b32.xlu0 %v6718, 64
  %v6743 = vpop.permute.xlu0 %6742
  %6744 = vrot.lane.b32.xlu0 %v6719, 64
  %v6745 = vpop.permute.xlu0 %6744
  %6746 = vrot.lane.b32.xlu0 %v6720, 64
  %v6747 = vpop.permute.xlu0 %6746
  %6748 = vrot.lane.b32.xlu0 %v6721, 64
  %v6749 = vpop.permute.xlu0 %6748
  %6750 = vrot.lane.b32.xlu0 %v6722, 64
  %v6751 = vpop.permute.xlu0 %6750
  %6752 = vrot.lane.b32.xlu0 %v6723, 64
  %v6753 = vpop.permute.xlu0 %6752
  %6764 = vst.msk [vmem:[#allocation3] sm:$0xff] %vm4108, %v6735
  %6765 = vst.msk [vmem:[#allocation3 + $0x18] sm:$0xff] %vm4108, %v6737
  %6766 = vst.msk [vmem:[#allocation3 + $0x30] sm:$0xff] %vm4108, %v6739
  %6767 = vst.msk [vmem:[#allocation3 + $0x48] sm:$0xff] %vm4108, %v6741
  %6768 = vst.msk [vmem:[#allocation3 + $0x60] sm:$0xff] %vm4108, %v6743
  %6769 = vst.msk [vmem:[#allocation3 + $0x78] sm:$0xff] %vm4108, %v6745
  %6770 = vst.msk [vmem:[#allocation3 + $0x90] sm:$0xff] %vm4108, %v6747
  %6771 = vst.msk [vmem:[#allocation3 + $0xa8] sm:$0xff] %vm4108, %v6749
  %6772 = vst.msk [vmem:[#allocation3 + $0xc0] sm:$0xff] %vm4108, %v6751
  %6773 = vst.msk [vmem:[#allocation3 + $0xd8] sm:$0xff] %vm4108, %v6753
  %v6774 = vld [vmem:[#allocation2 + $0x160] sm:$0xff]
  %v6775 = vld [vmem:[#allocation2 + $0x168] sm:$0xff]
  %v6776 = vld [vmem:[#allocation2 + $0x170] sm:$0xff]
  %v6777 = vld [vmem:[#allocation2 + $0x178] sm:$0xff]
  %v6778 = vld [vmem:[#allocation2 + $0x180] sm:$0xff]
  %v6779 = vld [vmem:[#allocation2 + $0x188] sm:$0xff]
  %v6780 = vld [vmem:[#allocation2 + $0x190] sm:$0xff]
  %v6781 = vld [vmem:[#allocation2 + $0x198] sm:$0xff]
  %v6782 = vld [vmem:[#allocation2 + $0x1a0] sm:$0xff]
  %v6783 = vld [vmem:[#allocation2 + $0x1a8] sm:$0xff]
  %6794 = vrot.lane.b32.xlu0 %v6774, 96
  %v6795 = vpop.permute.xlu0 %6794
  %6796 = vrot.lane.b32.xlu0 %v6775, 96
  %v6797 = vpop.permute.xlu0 %6796
  %6798 = vrot.lane.b32.xlu0 %v6776, 96
  %v6799 = vpop.permute.xlu0 %6798
  %6800 = vrot.lane.b32.xlu0 %v6777, 96
  %v6801 = vpop.permute.xlu0 %6800
  %6802 = vrot.lane.b32.xlu0 %v6778, 96
  %v6803 = vpop.permute.xlu0 %6802
  %6804 = vrot.lane.b32.xlu0 %v6779, 96
  %v6805 = vpop.permute.xlu0 %6804
  %6806 = vrot.lane.b32.xlu0 %v6780, 96
  %v6807 = vpop.permute.xlu0 %6806
  %6808 = vrot.lane.b32.xlu0 %v6781, 96
  %v6809 = vpop.permute.xlu0 %6808
  %6810 = vrot.lane.b32.xlu0 %v6782, 96
  %v6811 = vpop.permute.xlu0 %6810
  %6812 = vrot.lane.b32.xlu0 %v6783, 96
  %v6813 = vpop.permute.xlu0 %6812
  %6824 = vst.msk [vmem:[#allocation3] sm:$0xff] %vm4181, %v6795
  %6825 = vst.msk [vmem:[#allocation3 + $0x18] sm:$0xff] %vm4181, %v6797
  %6826 = vst.msk [vmem:[#allocation3 + $0x30] sm:$0xff] %vm4181, %v6799
  %6827 = vst.msk [vmem:[#allocation3 + $0x48] sm:$0xff] %vm4181, %v6801
  %6828 = vst.msk [vmem:[#allocation3 + $0x60] sm:$0xff] %vm4181, %v6803
  %6829 = vst.msk [vmem:[#allocation3 + $0x78] sm:$0xff] %vm4181, %v6805
  %6830 = vst.msk [vmem:[#allocation3 + $0x90] sm:$0xff] %vm4181, %v6807
  %6831 = vst.msk [vmem:[#allocation3 + $0xa8] sm:$0xff] %vm4181, %v6809
  %6832 = vst.msk [vmem:[#allocation3 + $0xc0] sm:$0xff] %vm4181, %v6811
  %6833 = vst.msk [vmem:[#allocation3 + $0xd8] sm:$0xff] %vm4181, %v6813
  %v6834 = vld [vmem:[#allocation2 + $0x168] sm:$0xff]
  %v6835 = vld [vmem:[#allocation2 + $0x170] sm:$0xff]
  %v6836 = vld [vmem:[#allocation2 + $0x178] sm:$0xff]
  %v6837 = vld [vmem:[#allocation2 + $0x180] sm:$0xff]
  %v6838 = vld [vmem:[#allocation2 + $0x188] sm:$0xff]
  %v6839 = vld [vmem:[#allocation2 + $0x190] sm:$0xff]
  %v6840 = vld [vmem:[#allocation2 + $0x198] sm:$0xff]
  %v6841 = vld [vmem:[#allocation2 + $0x1a0] sm:$0xff]
  %v6842 = vld [vmem:[#allocation2 + $0x1a8] sm:$0xff]
  %v6843 = vld [vmem:[#allocation2 + $0x1b0] sm:$0xff]
  %6844 = vst.msk [vmem:[#allocation3 + $0x8] sm:$0xff] %vm997, %v6834
  %6845 = vst.msk [vmem:[#allocation3 + $0x20] sm:$0xff] %vm997, %v6835
  %6846 = vst.msk [vmem:[#allocation3 + $0x38] sm:$0xff] %vm997, %v6836
  %6847 = vst.msk [vmem:[#allocation3 + $0x50] sm:$0xff] %vm997, %v6837
  %6848 = vst.msk [vmem:[#allocation3 + $0x68] sm:$0xff] %vm997, %v6838
  %6849 = vst.msk [vmem:[#allocation3 + $0x80] sm:$0xff] %vm997, %v6839
  %6850 = vst.msk [vmem:[#allocation3 + $0x98] sm:$0xff] %vm997, %v6840
  %6851 = vst.msk [vmem:[#allocation3 + $0xb0] sm:$0xff] %vm997, %v6841
  %6852 = vst.msk [vmem:[#allocation3 + $0xc8] sm:$0xff] %vm997, %v6842
  %6853 = vst.msk [vmem:[#allocation3 + $0xe0] sm:$0xff] %vm997, %v6843
  %v6854 = vld [vmem:[#allocation2 + $0x170] sm:$0xff]
  %v6855 = vld [vmem:[#allocation2 + $0x178] sm:$0xff]
  %v6856 = vld [vmem:[#allocation2 + $0x180] sm:$0xff]
  %v6857 = vld [vmem:[#allocation2 + $0x188] sm:$0xff]
  %v6858 = vld [vmem:[#allocation2 + $0x190] sm:$0xff]
  %v6859 = vld [vmem:[#allocation2 + $0x198] sm:$0xff]
  %v6860 = vld [vmem:[#allocation2 + $0x1a0] sm:$0xff]
  %v6861 = vld [vmem:[#allocation2 + $0x1a8] sm:$0xff]
  %v6862 = vld [vmem:[#allocation2 + $0x1b0] sm:$0xff]
  %v6863 = vld [vmem:[#allocation2 + $0x1b8] sm:$0xff]
  %6874 = vrot.lane.b32.xlu0 %v6854, 32
  %v6875 = vpop.permute.xlu0 %6874
  %6876 = vrot.lane.b32.xlu0 %v6855, 32
  %v6877 = vpop.permute.xlu0 %6876
  %6878 = vrot.lane.b32.xlu0 %v6856, 32
  %v6879 = vpop.permute.xlu0 %6878
  %6880 = vrot.lane.b32.xlu0 %v6857, 32
  %v6881 = vpop.permute.xlu0 %6880
  %6882 = vrot.lane.b32.xlu0 %v6858, 32
  %v6883 = vpop.permute.xlu0 %6882
  %6884 = vrot.lane.b32.xlu0 %v6859, 32
  %v6885 = vpop.permute.xlu0 %6884
  %6886 = vrot.lane.b32.xlu0 %v6860, 32
  %v6887 = vpop.permute.xlu0 %6886
  %6888 = vrot.lane.b32.xlu0 %v6861, 32
  %v6889 = vpop.permute.xlu0 %6888
  %6890 = vrot.lane.b32.xlu0 %v6862, 32
  %v6891 = vpop.permute.xlu0 %6890
  %6892 = vrot.lane.b32.xlu0 %v6863, 32
  %v6893 = vpop.permute.xlu0 %6892
  %6904 = vst.msk [vmem:[#allocation3 + $0x8] sm:$0xff] %vm4035, %v6875
  %6905 = vst.msk [vmem:[#allocation3 + $0x20] sm:$0xff] %vm4035, %v6877
  %6906 = vst.msk [vmem:[#allocation3 + $0x38] sm:$0xff] %vm4035, %v6879
  %6907 = vst.msk [vmem:[#allocation3 + $0x50] sm:$0xff] %vm4035, %v6881
  %6908 = vst.msk [vmem:[#allocation3 + $0x68] sm:$0xff] %vm4035, %v6883
  %6909 = vst.msk [vmem:[#allocation3 + $0x80] sm:$0xff] %vm4035, %v6885
  %6910 = vst.msk [vmem:[#allocation3 + $0x98] sm:$0xff] %vm4035, %v6887
  %6911 = vst.msk [vmem:[#allocation3 + $0xb0] sm:$0xff] %vm4035, %v6889
  %6912 = vst.msk [vmem:[#allocation3 + $0xc8] sm:$0xff] %vm4035, %v6891
  %6913 = vst.msk [vmem:[#allocation3 + $0xe0] sm:$0xff] %vm4035, %v6893
  %v6914 = vld [vmem:[#allocation2 + $0x1a0] sm:$0xff]
  %v6915 = vld [vmem:[#allocation2 + $0x1a8] sm:$0xff]
  %v6916 = vld [vmem:[#allocation2 + $0x1b0] sm:$0xff]
  %v6917 = vld [vmem:[#allocation2 + $0x1b8] sm:$0xff]
  %v6918 = vld [vmem:[#allocation2 + $0x1c0] sm:$0xff]
  %v6919 = vld [vmem:[#allocation2 + $0x1c8] sm:$0xff]
  %v6920 = vld [vmem:[#allocation2 + $0x1d0] sm:$0xff]
  %v6921 = vld [vmem:[#allocation2 + $0x1d8] sm:$0xff]
  %v6922 = vld [vmem:[#allocation2 + $0x1e0] sm:$0xff]
  %v6923 = vld [vmem:[#allocation2 + $0x1e8] sm:$0xff]
  %6934 = vrot.lane.b32.xlu0 %v6914, 64
  %v6935 = vpop.permute.xlu0 %6934
  %6936 = vrot.lane.b32.xlu0 %v6915, 64
  %v6937 = vpop.permute.xlu0 %6936
  %6938 = vrot.lane.b32.xlu0 %v6916, 64
  %v6939 = vpop.permute.xlu0 %6938
  %6940 = vrot.lane.b32.xlu0 %v6917, 64
  %v6941 = vpop.permute.xlu0 %6940
  %6942 = vrot.lane.b32.xlu0 %v6918, 64
  %v6943 = vpop.permute.xlu0 %6942
  %6944 = vrot.lane.b32.xlu0 %v6919, 64
  %v6945 = vpop.permute.xlu0 %6944
  %6946 = vrot.lane.b32.xlu0 %v6920, 64
  %v6947 = vpop.permute.xlu0 %6946
  %6948 = vrot.lane.b32.xlu0 %v6921, 64
  %v6949 = vpop.permute.xlu0 %6948
  %6950 = vrot.lane.b32.xlu0 %v6922, 64
  %v6951 = vpop.permute.xlu0 %6950
  %6952 = vrot.lane.b32.xlu0 %v6923, 64
  %v6953 = vpop.permute.xlu0 %6952
  %6964 = vst.msk [vmem:[#allocation3 + $0x8] sm:$0xff] %vm4108, %v6935
  %6965 = vst.msk [vmem:[#allocation3 + $0x20] sm:$0xff] %vm4108, %v6937
  %6966 = vst.msk [vmem:[#allocation3 + $0x38] sm:$0xff] %vm4108, %v6939
  %6967 = vst.msk [vmem:[#allocation3 + $0x50] sm:$0xff] %vm4108, %v6941
  %6968 = vst.msk [vmem:[#allocation3 + $0x68] sm:$0xff] %vm4108, %v6943
  %6969 = vst.msk [vmem:[#allocation3 + $0x80] sm:$0xff] %vm4108, %v6945
  %6970 = vst.msk [vmem:[#allocation3 + $0x98] sm:$0xff] %vm4108, %v6947
  %6971 = vst.msk [vmem:[#allocation3 + $0xb0] sm:$0xff] %vm4108, %v6949
  %6972 = vst.msk [vmem:[#allocation3 + $0xc8] sm:$0xff] %vm4108, %v6951
  %6973 = vst.msk [vmem:[#allocation3 + $0xe0] sm:$0xff] %vm4108, %v6953
  %v6974 = vld [vmem:[#allocation2 + $0x1a8] sm:$0xff]
  %v6975 = vld [vmem:[#allocation2 + $0x1b0] sm:$0xff]
  %v6976 = vld [vmem:[#allocation2 + $0x1b8] sm:$0xff]
  %v6977 = vld [vmem:[#allocation2 + $0x1c0] sm:$0xff]
  %v6978 = vld [vmem:[#allocation2 + $0x1c8] sm:$0xff]
  %v6979 = vld [vmem:[#allocation2 + $0x1d0] sm:$0xff]
  %v6980 = vld [vmem:[#allocation2 + $0x1d8] sm:$0xff]
  %v6981 = vld [vmem:[#allocation2 + $0x1e0] sm:$0xff]
  %v6982 = vld [vmem:[#allocation2 + $0x1e8] sm:$0xff]
  %v6983 = vld [vmem:[#allocation2 + $0x1f0] sm:$0xff]
  %6994 = vrot.lane.b32.xlu0 %v6974, 96
  %v6995 = vpop.permute.xlu0 %6994
  %6996 = vrot.lane.b32.xlu0 %v6975, 96
  %v6997 = vpop.permute.xlu0 %6996
  %6998 = vrot.lane.b32.xlu0 %v6976, 96
  %v6999 = vpop.permute.xlu0 %6998
  %7000 = vrot.lane.b32.xlu0 %v6977, 96
  %v7001 = vpop.permute.xlu0 %7000
  %7002 = vrot.lane.b32.xlu0 %v6978, 96
  %v7003 = vpop.permute.xlu0 %7002
  %7004 = vrot.lane.b32.xlu0 %v6979, 96
  %v7005 = vpop.permute.xlu0 %7004
  %7006 = vrot.lane.b32.xlu0 %v6980, 96
  %v7007 = vpop.permute.xlu0 %7006
  %7008 = vrot.lane.b32.xlu0 %v6981, 96
  %v7009 = vpop.permute.xlu0 %7008
  %7010 = vrot.lane.b32.xlu0 %v6982, 96
  %v7011 = vpop.permute.xlu0 %7010
  %7012 = vrot.lane.b32.xlu0 %v6983, 96
  %v7013 = vpop.permute.xlu0 %7012
  %7024 = vst.msk [vmem:[#allocation3 + $0x8] sm:$0xff] %vm4181, %v6995
  %7025 = vst.msk [vmem:[#allocation3 + $0x20] sm:$0xff] %vm4181, %v6997
  %7026 = vst.msk [vmem:[#allocation3 + $0x38] sm:$0xff] %vm4181, %v6999
  %7027 = vst.msk [vmem:[#allocation3 + $0x50] sm:$0xff] %vm4181, %v7001
  %7028 = vst.msk [vmem:[#allocation3 + $0x68] sm:$0xff] %vm4181, %v7003
  %7029 = vst.msk [vmem:[#allocation3 + $0x80] sm:$0xff] %vm4181, %v7005
  %7030 = vst.msk [vmem:[#allocation3 + $0x98] sm:$0xff] %vm4181, %v7007
  %7031 = vst.msk [vmem:[#allocation3 + $0xb0] sm:$0xff] %vm4181, %v7009
  %7032 = vst.msk [vmem:[#allocation3 + $0xc8] sm:$0xff] %vm4181, %v7011
  %7033 = vst.msk [vmem:[#allocation3 + $0xe0] sm:$0xff] %vm4181, %v7013
  %v7034 = vld [vmem:[#allocation2 + $0x1b0] sm:$0xff]
  %v7035 = vld [vmem:[#allocation2 + $0x1b8] sm:$0xff]
  %v7036 = vld [vmem:[#allocation2 + $0x1c0] sm:$0xff]
  %v7037 = vld [vmem:[#allocation2 + $0x1c8] sm:$0xff]
  %v7038 = vld [vmem:[#allocation2 + $0x1d0] sm:$0xff]
  %v7039 = vld [vmem:[#allocation2 + $0x1d8] sm:$0xff]
  %v7040 = vld [vmem:[#allocation2 + $0x1e0] sm:$0xff]
  %v7041 = vld [vmem:[#allocation2 + $0x1e8] sm:$0xff]
  %v7042 = vld [vmem:[#allocation2 + $0x1f0] sm:$0xff]
  %v7043 = vld [vmem:[#allocation2 + $0x1f8] sm:$0xff]
  %7044 = vst.msk [vmem:[#allocation3 + $0x10] sm:$0xff] %vm997, %v7034
  %7045 = vst.msk [vmem:[#allocation3 + $0x28] sm:$0xff] %vm997, %v7035
  %7046 = vst.msk [vmem:[#allocation3 + $0x40] sm:$0xff] %vm997, %v7036
  %7047 = vst.msk [vmem:[#allocation3 + $0x58] sm:$0xff] %vm997, %v7037
  %7048 = vst.msk [vmem:[#allocation3 + $0x70] sm:$0xff] %vm997, %v7038
  %7049 = vst.msk [vmem:[#allocation3 + $0x88] sm:$0xff] %vm997, %v7039
  %7050 = vst.msk [vmem:[#allocation3 + $0xa0] sm:$0xff] %vm997, %v7040
  %7051 = vst.msk [vmem:[#allocation3 + $0xb8] sm:$0xff] %vm997, %v7041
  %7052 = vst.msk [vmem:[#allocation3 + $0xd0] sm:$0xff] %vm997, %v7042
  %7053 = vst.msk [vmem:[#allocation3 + $0xe8] sm:$0xff] %vm997, %v7043
  %v7054 = vld [vmem:[#allocation3] sm:$0xff]
  %v7055 = vld [vmem:[#allocation3 + $0x8] sm:$0xff]
  %v7056 = vld [vmem:[#allocation3 + $0x10] sm:$0xff]
  %v7057 = vld [vmem:[#allocation3 + $0x18] sm:$0xff]
  %v7058 = vld [vmem:[#allocation3 + $0x20] sm:$0xff]
  %v7059 = vld [vmem:[#allocation3 + $0x28] sm:$0xff]
  %v7060 = vld [vmem:[#allocation3 + $0x30] sm:$0xff]
  %v7061 = vld [vmem:[#allocation3 + $0x38] sm:$0xff]
  %v7062 = vld [vmem:[#allocation3 + $0x40] sm:$0xff]
  %v7063 = vld [vmem:[#allocation3 + $0x48] sm:$0xff]
  %v7064 = vld [vmem:[#allocation3 + $0x50] sm:$0xff]
  %v7065 = vld [vmem:[#allocation3 + $0x58] sm:$0xff]
  %v7066 = vld [vmem:[#allocation3 + $0x60] sm:$0xff]
  %v7067 = vld [vmem:[#allocation3 + $0x68] sm:$0xff]
  %v7068 = vld [vmem:[#allocation3 + $0x70] sm:$0xff]
  %v7069 = vld [vmem:[#allocation3 + $0x78] sm:$0xff]
  %v7070 = vld [vmem:[#allocation3 + $0x80] sm:$0xff]
  %v7071 = vld [vmem:[#allocation3 + $0x88] sm:$0xff]
  %v7072 = vld [vmem:[#allocation3 + $0x90] sm:$0xff]
  %v7073 = vld [vmem:[#allocation3 + $0x98] sm:$0xff]
  %v7074 = vld [vmem:[#allocation3 + $0xa0] sm:$0xff]
  %v7075 = vld [vmem:[#allocation3 + $0xa8] sm:$0xff]
  %v7076 = vld [vmem:[#allocation3 + $0xb0] sm:$0xff]
  %v7077 = vld [vmem:[#allocation3 + $0xb8] sm:$0xff]
  %v7078 = vld [vmem:[#allocation3 + $0xc0] sm:$0xff]
  %v7079 = vld [vmem:[#allocation3 + $0xc8] sm:$0xff]
  %v7080 = vld [vmem:[#allocation3 + $0xd0] sm:$0xff]
  %v7081 = vld [vmem:[#allocation3 + $0xd8] sm:$0xff]
  %v7082 = vld [vmem:[#allocation3 + $0xe0] sm:$0xff]
  %v7083 = vld [vmem:[#allocation3 + $0xe8] sm:$0xff]
  %v7084 = vld [vmem:[%s3] sm:$0xff]
  %v7085 = vld [vmem:[%s3 + $0x8] sm:$0xff]
  %v7086 = vld [vmem:[%s3 + $0x10] sm:$0xff]
  %v7087 = vld [vmem:[%s3 + $0x18] sm:$0xff]
  %v7088 = vld [vmem:[%s3 + $0x20] sm:$0xff]
  %v7089 = vld [vmem:[%s3 + $0x28] sm:$0xff]
  %v7090 = vld [vmem:[%s3 + $0x30] sm:$0xff]
  %v7091 = vld [vmem:[%s3 + $0x38] sm:$0xff]
  %v7092 = vld [vmem:[%s3 + $0x40] sm:$0xff]
  %v7093 = vld [vmem:[%s3 + $0x48] sm:$0xff]
  %v7094 = vld [vmem:[%s3 + $0x50] sm:$0xff]
  %v7095 = vld [vmem:[%s3 + $0x58] sm:$0xff]
  %v7096 = vld [vmem:[%s3 + $0x60] sm:$0xff]
  %v7097 = vld [vmem:[%s3 + $0x68] sm:$0xff]
  %v7098 = vld [vmem:[%s3 + $0x70] sm:$0xff]
  %v7099 = vld [vmem:[%s3 + $0x78] sm:$0xff]
  %v7100 = vld [vmem:[%s3 + $0x80] sm:$0xff]
  %v7101 = vld [vmem:[%s3 + $0x88] sm:$0xff]
  %v7102 = vld [vmem:[%s3 + $0x90] sm:$0xff]
  %v7103 = vld [vmem:[%s3 + $0x98] sm:$0xff]
  %v7104 = vld [vmem:[%s3 + $0xa0] sm:$0xff]
  %v7105 = vld [vmem:[%s3 + $0xa8] sm:$0xff]
  %v7106 = vld [vmem:[%s3 + $0xb0] sm:$0xff]
  %v7107 = vld [vmem:[%s3 + $0xb8] sm:$0xff]
  %v7108 = vld [vmem:[%s3 + $0xc0] sm:$0xff]
  %v7109 = vld [vmem:[%s3 + $0xc8] sm:$0xff]
  %v7110 = vld [vmem:[%s3 + $0xd0] sm:$0xff]
  %v7111 = vld [vmem:[%s3 + $0xd8] sm:$0xff]
  %v7112 = vld [vmem:[%s3 + $0xe0] sm:$0xff]
  %v7113 = vld [vmem:[%s3 + $0xe8] sm:$0xff]
  %v7114 = vld [vmem:[%s3 + $0xf0] sm:$0xff]
  %v7115 = vld [vmem:[%s3 + $0xf8] sm:$0xff]
  %v7116 = vld [vmem:[%s3 + $0x100] sm:$0xff]
  %v7117 = vld [vmem:[%s3 + $0x108] sm:$0xff]
  %v7118 = vld [vmem:[%s3 + $0x110] sm:$0xff]
  %v7119 = vld [vmem:[%s3 + $0x118] sm:$0xff]
  %v7120 = vld [vmem:[%s4] sm:$0x1]
  %v7122 = vlaneseq
  %v7123 = vshrl.u32 %v7122, 7
  %v7124 = vsub.s32 0, %v7123
  %v7125 = vrot.slane %v7120, %v7124
  %v7128 = vsel %vm997, %v7056, 0
  %v7131 = vsel %vm997, %v7059, 0
  %v7134 = vsel %vm997, %v7062, 0
  %v7137 = vsel %vm997, %v7065, 0
  %v7140 = vsel %vm997, %v7068, 0
  %v7143 = vsel %vm997, %v7071, 0
  %v7146 = vsel %vm997, %v7074, 0
  %v7149 = vsel %vm997, %v7077, 0
  %v7152 = vsel %vm997, %v7080, 0
  %v7155 = vsel %vm997, %v7083, 0
  %7157 = vmatprep.subr.mxu0 0.0
  %7158 = vmatpush1.msra.mxu0 %v7084
  %7159 = vmatprep.subr.mxu0 0.0
  %7160 = vmatpush1.msra.mxu0 %v7085
  %7161 = vmatprep.subr.mxu0 0.0
  %7162 = vmatpush1.msra.mxu0 %v7086
  %7163 = vmatprep.subr.mxu0 0.0
  %7164 = vmatpush1.msra.mxu0 %v7087
  %7165 = vmatprep.subr.mxu0 0.0
  %7166 = vmatpush1.msra.mxu0 %v7088
  %7167 = vmatprep.subr.mxu0 0.0
  %7168 = vmatpush1.msra.mxu0 %v7089
  %7169 = vmatprep.subr.mxu0 0.0
  %7170 = vmatpush1.msra.mxu0 %v7090
  %7171 = vmatprep.subr.mxu0 0.0
  %7172 = vmatpush1.msra.mxu0 %v7091
  %7173 = vmatprep.subr.mxu0 0.0
  %7174 = vmatpush1.msra.mxu0 %v7092
  %7175 = vmatprep.subr.mxu0 0.0
  %7176 = vmatpush1.msra.mxu0 %v7093
  %7177 = vmatprep.subr.mxu0 0.0
  %7178 = vmatpush1.msra.mxu0 %v7094
  %7179 = vmatprep.subr.mxu0 0.0
  %7180 = vmatpush1.msra.mxu0 %v7095
  %7181 = vmatprep.subr.mxu0 0.0
  %7182 = vmatpush1.msra.mxu0 %v7096
  %7183 = vmatprep.subr.mxu0 0.0
  %7184 = vmatpush1.msra.mxu0 %v7097
  %7185 = vmatprep.subr.mxu0 0.0
  %7186 = vmatpush1.msra.mxu0 %v7098
  %7187 = vmatprep.subr.mxu0 0.0
  %7188 = vmatpush1.msra.mxu0 %v7099
  %7189 = vmatprep.subr.mxu0 0.0
  %7190 = vmatpush1.msra.mxu0 %v7100
  %7191 = vmatprep.subr.mxu0 0.0
  %7192 = vmatpush1.msra.mxu0 %v7101
  %7193 = vmatprep.subr.mxu0 0.0
  %7194 = vmatpush1.msra.mxu0 %v7102
  %7195 = vmatprep.subr.mxu0 0.0
  %7196 = vmatpush1.msra.mxu0 %v7103
  %7197 = vmatprep.subr.mxu0 0.0
  %7198 = vmatpush1.msra.mxu0 %v7104
  %7199 = vmatprep.subr.mxu0 0.0
  %7200 = vmatpush1.msra.mxu0 %v7105
  %7201 = vmatprep.subr.mxu0 0.0
  %7202 = vmatpush1.msra.mxu0 %v7106
  %7203 = vmatprep.subr.mxu0 0.0
  %7204 = vmatpush1.msra.mxu0 %v7107
  %7205 = vmatprep.subr.mxu0 0.0
  %7206 = vmatpush1.msra.mxu0 %v7108
  %7207 = vmatprep.subr.mxu0 0.0
  %7208 = vmatpush1.msra.mxu0 %v7109
  %7209 = vmatprep.subr.mxu0 0.0
  %7210 = vmatpush1.msra.mxu0 %v7110
  %7211 = vmatprep.subr.mxu0 0.0
  %7212 = vmatpush1.msra.mxu0 %v7111
  %7213 = vmatprep.subr.mxu0 0.0
  %7214 = vmatpush1.msra.mxu0 %v7112
  %7215 = vmatprep.subr.mxu0 0.0
  %7216 = vmatpush1.msra.mxu0 %v7113
  %7217 = vmatprep.subr.mxu0 0.0
  %7218 = vmatpush1.msra.mxu0 %v7114
  %7219 = vmatprep.subr.mxu0 0.0
  %7220 = vmatpush1.msra.mxu0 %v7115
  %7221 = vmatprep.mubr.f32.mxu0 %v7055
  %7222 = vmatmul.mubr.f32.gmra.mrb[0].mxu0 %v7054
  %v7223 = vpop.f32.mrb[0].mxu0
  %v7224 = vadd.f32 %v7125, %v7223
  %v7225 = vpop.f32.mrb[0].mxu0
  %7226 = vmatprep.mubr.f32.mxu0 %v7058
  %7227 = vmatmul.mubr.f32.gmra.mrb[0].mxu0 %v7057
  %v7228 = vpop.f32.mrb[0].mxu0
  %v7229 = vadd.f32 %v7125, %v7228
  %v7230 = vpop.f32.mrb[0].mxu0
  %7231 = vmatprep.mubr.f32.mxu0 %v7061
  %7232 = vmatmul.mubr.f32.gmra.mrb[0].mxu0 %v7060
  %v7233 = vpop.f32.mrb[0].mxu0
  %v7234 = vadd.f32 %v7125, %v7233
  %v7235 = vpop.f32.mrb[0].mxu0
  %7236 = vmatprep.mubr.f32.mxu0 %v7064
  %7237 = vmatmul.mubr.f32.gmra.mrb[0].mxu0 %v7063
  %v7238 = vpop.f32.mrb[0].mxu0
  %v7239 = vadd.f32 %v7125, %v7238
  %v7240 = vpop.f32.mrb[0].mxu0
  %7241 = vmatprep.mubr.f32.mxu0 %v7067
  %7242 = vmatmul.mubr.f32.gmra.mrb[0].mxu0 %v7066
  %v7243 = vpop.f32.mrb[0].mxu0
  %v7244 = vadd.f32 %v7125, %v7243
  %v7245 = vpop.f32.mrb[0].mxu0
  %7246 = vmatprep.mubr.f32.mxu0 %v7070
  %7247 = vmatmul.mubr.f32.gmra.mrb[0].mxu0 %v7069
  %v7248 = vpop.f32.mrb[0].mxu0
  %v7249 = vadd.f32 %v7125, %v7248
  %v7250 = vpop.f32.mrb[0].mxu0
  %7251 = vmatprep.mubr.f32.mxu0 %v7073
  %7252 = vmatmul.mubr.f32.gmra.mrb[0].mxu0 %v7072
  %v7253 = vpop.f32.mrb[0].mxu0
  %v7254 = vadd.f32 %v7125, %v7253
  %v7255 = vpop.f32.mrb[0].mxu0
  %7256 = vmatprep.mubr.f32.mxu0 %v7076
  %7257 = vmatmul.mubr.f32.gmra.mrb[0].mxu0 %v7075
  %v7258 = vpop.f32.mrb[0].mxu0
  %v7259 = vadd.f32 %v7125, %v7258
  %v7260 = vpop.f32.mrb[0].mxu0
  %7261 = vmatprep.mubr.f32.mxu0 %v7079
  %7262 = vmatmul.mubr.f32.gmra.mrb[0].mxu0 %v7078
  %v7263 = vpop.f32.mrb[0].mxu0
  %v7264 = vadd.f32 %v7125, %v7263
  %v7265 = vpop.f32.mrb[0].mxu0
  %7266 = vmatprep.mubr.f32.mxu0 %v7082
  %7267 = vmatmul.mubr.f32.gmra.mrb[0].mxu0 %v7081
  %v7268 = vpop.f32.mrb[0].mxu0
  %v7269 = vadd.f32 %v7125, %v7268
  %v7270 = vpop.f32.mrb[0].mxu0
  %7271 = vdwg.mxu0
  %7272 = vmatprep.subr.mxu0 0.0
  %7273 = vmatpush1.msra.mxu0 %v7116
  %7274 = vmatprep.subr.mxu0 0.0
  %7275 = vmatpush1.msra.mxu0 %v7117
  %7276 = vmatprep.subr.mxu0 0.0
  %7277 = vmatpush1.msra.mxu0 %v7118
  %7278 = vmatprep.subr.mxu0 0.0
  %7279 = vmatpush1.msra.mxu0 %v7119
  %7280 = vmatprep.subr.mxu0 0.0
  %7281 = vmatpush1.msra.mxu0 0.0
  %7282 = vmatprep.subr.mxu0 0.0
  %7283 = vmatpush1.msra.mxu0 0.0
  %7284 = vmatprep.subr.mxu0 0.0
  %7285 = vmatpush1.msra.mxu0 0.0
  %7286 = vmatprep.subr.mxu0 0.0
  %7287 = vmatpush1.msra.mxu0 0.0
  %7288 = vmatprep.subr.mxu0 0.0
  %7289 = vmatpush1.msra.mxu0 0.0
  %7290 = vmatprep.subr.mxu0 0.0
  %7291 = vmatpush1.msra.mxu0 0.0
  %7292 = vmatprep.subr.mxu0 0.0
  %7293 = vmatpush1.msra.mxu0 0.0
  %7294 = vmatprep.subr.mxu0 0.0
  %7295 = vmatpush1.msra.mxu0 0.0
  %7296 = vmatprep.subr.mxu0 0.0
  %7297 = vmatpush1.msra.mxu0 0.0
  %7298 = vmatprep.subr.mxu0 0.0
  %7299 = vmatpush1.msra.mxu0 0.0
  %7300 = vmatprep.subr.mxu0 0.0
  %7301 = vmatpush1.msra.mxu0 0.0
  %7302 = vmatprep.subr.mxu0 0.0
  %7303 = vmatpush1.msra.mxu0 0.0
  %7304 = vmatprep.subr.mxu0 0.0
  %7305 = vmatpush1.msra.mxu0 0.0
  %7306 = vmatprep.subr.mxu0 0.0
  %7307 = vmatpush1.msra.mxu0 0.0
  %7308 = vmatprep.subr.mxu0 0.0
  %7309 = vmatpush1.msra.mxu0 0.0
  %7310 = vmatprep.subr.mxu0 0.0
  %7311 = vmatpush1.msra.mxu0 0.0
  %7312 = vmatprep.subr.mxu0 0.0
  %7313 = vmatpush1.msra.mxu0 0.0
  %7314 = vmatprep.subr.mxu0 0.0
  %7315 = vmatpush1.msra.mxu0 0.0
  %7316 = vmatprep.subr.mxu0 0.0
  %7317 = vmatpush1.msra.mxu0 0.0
  %7318 = vmatprep.subr.mxu0 0.0
  %7319 = vmatpush1.msra.mxu0 0.0
  %7320 = vmatprep.subr.mxu0 0.0
  %7321 = vmatpush1.msra.mxu0 0.0
  %7322 = vmatprep.subr.mxu0 0.0
  %7323 = vmatpush1.msra.mxu0 0.0
  %7324 = vmatprep.subr.mxu0 0.0
  %7325 = vmatpush1.msra.mxu0 0.0
  %7326 = vmatprep.subr.mxu0 0.0
  %7327 = vmatpush1.msra.mxu0 0.0
  %7328 = vmatprep.subr.mxu0 0.0
  %7329 = vmatpush1.msra.mxu0 0.0
  %7330 = vmatprep.subr.mxu0 0.0
  %7331 = vmatpush1.msra.mxu0 0.0
  %7332 = vmatprep.subr.mxu0 0.0
  %7333 = vmatpush1.msra.mxu0 0.0
  %7334 = vmatprep.subr.mxu0 0.0
  %7335 = vmatpush1.msra.mxu0 0.0
  %7336 = vmatprep.mubr.f32.mxu0 0.0
  %7337 = vmatmul.mubr.f32.gmra.mrb[0].mxu0 %v7128
  %v7338 = vpop.f32.mrb[0].mxu0
  %v7339 = vadd.f32 %v7224, %v7338
  %v7340 = vpop.f32.mrb[0].mxu0
  %7341 = vmatprep.mubr.f32.mxu0 0.0
  %7342 = vmatmul.mubr.f32.gmra.mrb[0].mxu0 %v7131
  %v7343 = vpop.f32.mrb[0].mxu0
  %v7344 = vadd.f32 %v7229, %v7343
  %v7345 = vpop.f32.mrb[0].mxu0
  %7346 = vmatprep.mubr.f32.mxu0 0.0
  %7347 = vmatmul.mubr.f32.gmra.mrb[0].mxu0 %v7134
  %v7348 = vpop.f32.mrb[0].mxu0
  %v7349 = vadd.f32 %v7234, %v7348
  %v7350 = vpop.f32.mrb[0].mxu0
  %7351 = vmatprep.mubr.f32.mxu0 0.0
  %7352 = vmatmul.mubr.f32.gmra.mrb[0].mxu0 %v7137
  %v7353 = vpop.f32.mrb[0].mxu0
  %v7354 = vadd.f32 %v7239, %v7353
  %v7355 = vpop.f32.mrb[0].mxu0
  %7356 = vmatprep.mubr.f32.mxu0 0.0
  %7357 = vmatmul.mubr.f32.gmra.mrb[0].mxu0 %v7140
  %v7358 = vpop.f32.mrb[0].mxu0
  %v7359 = vadd.f32 %v7244, %v7358
  %v7360 = vpop.f32.mrb[0].mxu0
  %7361 = vmatprep.mubr.f32.mxu0 0.0
  %7362 = vmatmul.mubr.f32.gmra.mrb[0].mxu0 %v7143
  %v7363 = vpop.f32.mrb[0].mxu0
  %v7364 = vadd.f32 %v7249, %v7363
  %v7365 = vpop.f32.mrb[0].mxu0
  %7366 = vmatprep.mubr.f32.mxu0 0.0
  %7367 = vmatmul.mubr.f32.gmra.mrb[0].mxu0 %v7146
  %v7368 = vpop.f32.mrb[0].mxu0
  %v7369 = vadd.f32 %v7254, %v7368
  %v7370 = vpop.f32.mrb[0].mxu0
  %7371 = vmatprep.mubr.f32.mxu0 0.0
  %7372 = vmatmul.mubr.f32.gmra.mrb[0].mxu0 %v7149
  %v7373 = vpop.f32.mrb[0].mxu0
  %v7374 = vadd.f32 %v7259, %v7373
  %v7375 = vpop.f32.mrb[0].mxu0
  %7376 = vmatprep.mubr.f32.mxu0 0.0
  %7377 = vmatmul.mubr.f32.gmra.mrb[0].mxu0 %v7152
  %v7378 = vpop.f32.mrb[0].mxu0
  %v7379 = vadd.f32 %v7264, %v7378
  %v7380 = vpop.f32.mrb[0].mxu0
  %7381 = vmatprep.mubr.f32.mxu0 0.0
  %7382 = vmatmul.mubr.f32.gmra.mrb[0].mxu0 %v7155
  %v7383 = vpop.f32.mrb[0].mxu0
  %v7384 = vadd.f32 %v7269, %v7383
  %v7385 = vpop.f32.mrb[0].mxu0
  %7386 = vdwg.mxu0
  %v7387 = vmax.f32 %v7339, 0.0
  %v7388 = vmax.f32 %v7344, 0.0
  %v7389 = vmax.f32 %v7349, 0.0
  %v7390 = vmax.f32 %v7354, 0.0
  %v7391 = vmax.f32 %v7359, 0.0
  %v7392 = vmax.f32 %v7364, 0.0
  %v7393 = vmax.f32 %v7369, 0.0
  %v7394 = vmax.f32 %v7374, 0.0
  %v7395 = vmax.f32 %v7379, 0.0
  %v7396 = vmax.f32 %v7384, 0.0
  %7397 = vst.msk [vmem:[#allocation4 + $0x120] sm:$0xff] %vm4835, %v7387
  %7398 = vst.msk [vmem:[#allocation4 + $0x128] sm:$0xff] %vm4835, %v7388
  %7399 = vst.msk [vmem:[#allocation4 + $0x130] sm:$0xff] %vm4835, %v7389
  %7400 = vst.msk [vmem:[#allocation4 + $0x138] sm:$0xff] %vm4835, %v7390
  %7401 = vst.msk [vmem:[#allocation4 + $0x140] sm:$0xff] %vm4835, %v7391
  %7402 = vst.msk [vmem:[#allocation4 + $0x148] sm:$0xff] %vm4835, %v7392
  %7403 = vst.msk [vmem:[#allocation4 + $0x150] sm:$0xff] %vm4835, %v7393
  %7404 = vst.msk [vmem:[#allocation4 + $0x158] sm:$0xff] %vm4835, %v7394
  %7405 = vst.msk [vmem:[#allocation4 + $0x160] sm:$0xff] %vm4835, %v7395
  %7406 = vst.msk [vmem:[#allocation4 + $0x168] sm:$0xff] %vm4835, %v7396
  %v7407 = vld [vmem:[#allocation4] sm:$0xff]
  %v7408 = vld [vmem:[#allocation4 + $0x8] sm:$0xff]
  %v7409 = vld [vmem:[#allocation4 + $0x40] sm:$0xff]
  %v7410 = vld [vmem:[#allocation4 + $0x48] sm:$0xff]
  %v7411 = vmax.f32 %v7407, %v7408
  %v7412 = vmax.f32 %v7409, %v7410
  %v7413 = vmax.f32 %v7411, %v7412
  %7414 = vst.msk [vmem:[#allocation5] sm:$0xff] %vm4835, %v7413
  %v7415 = vld [vmem:[#allocation4 + $0x10] sm:$0xff]
  %v7416 = vld [vmem:[#allocation4 + $0x18] sm:$0xff]
  %v7417 = vld [vmem:[#allocation4 + $0x50] sm:$0xff]
  %v7418 = vld [vmem:[#allocation4 + $0x58] sm:$0xff]
  %v7419 = vmax.f32 %v7415, %v7416
  %v7420 = vmax.f32 %v7417, %v7418
  %v7421 = vmax.f32 %v7419, %v7420
  %7423 = vrot.lane.b32.xlu0 %v7421, 64
  %v7424 = vpop.permute.xlu0 %7423
  %vm7426 = vcmask 1048064
  %7427 = vst.msk [vmem:[#allocation5] sm:$0xff] %vm7426, %v7424
  %v7428 = vld [vmem:[#allocation4 + $0x20] sm:$0xff]
  %v7429 = vld [vmem:[#allocation4 + $0x28] sm:$0xff]
  %v7430 = vld [vmem:[#allocation4 + $0x60] sm:$0xff]
  %v7431 = vld [vmem:[#allocation4 + $0x68] sm:$0xff]
  %v7432 = vmax.f32 %v7428, %v7429
  %v7433 = vmax.f32 %v7430, %v7431
  %v7434 = vmax.f32 %v7432, %v7433
  %7435 = vst.msk [vmem:[#allocation5 + $0x8] sm:$0xff] %vm4835, %v7434
  %v7436 = vld [vmem:[#allocation4 + $0x80] sm:$0xff]
  %v7437 = vld [vmem:[#allocation4 + $0x88] sm:$0xff]
  %v7438 = vld [vmem:[#allocation4 + $0xc0] sm:$0xff]
  %v7439 = vld [vmem:[#allocation4 + $0xc8] sm:$0xff]
  %v7440 = vmax.f32 %v7436, %v7437
  %v7441 = vmax.f32 %v7438, %v7439
  %v7442 = vmax.f32 %v7440, %v7441
  %7444 = vrot.lane.b32.xlu0 %v7442, 64
  %v7445 = vpop.permute.xlu0 %7444
  %7447 = vst.msk [vmem:[#allocation5 + $0x8] sm:$0xff] %vm7426, %v7445
  %v7448 = vld [vmem:[#allocation4 + $0x90] sm:$0xff]
  %v7449 = vld [vmem:[#allocation4 + $0x98] sm:$0xff]
  %v7450 = vld [vmem:[#allocation4 + $0xd0] sm:$0xff]
  %v7451 = vld [vmem:[#allocation4 + $0xd8] sm:$0xff]
  %v7452 = vmax.f32 %v7448, %v7449
  %v7453 = vmax.f32 %v7450, %v7451
  %v7454 = vmax.f32 %v7452, %v7453
  %7455 = vst.msk [vmem:[#allocation5 + $0x10] sm:$0xff] %vm4835, %v7454
  %v7456 = vld [vmem:[#allocation4 + $0xa0] sm:$0xff]
  %v7457 = vld [vmem:[#allocation4 + $0xa8] sm:$0xff]
  %v7458 = vld [vmem:[#allocation4 + $0xe0] sm:$0xff]
  %v7459 = vld [vmem:[#allocation4 + $0xe8] sm:$0xff]
  %v7460 = vmax.f32 %v7456, %v7457
  %v7461 = vmax.f32 %v7458, %v7459
  %v7462 = vmax.f32 %v7460, %v7461
  %7464 = vrot.lane.b32.xlu0 %v7462, 64
  %v7465 = vpop.permute.xlu0 %7464
  %7467 = vst.msk [vmem:[#allocation5 + $0x10] sm:$0xff] %vm7426, %v7465
  %v7468 = vld [vmem:[#allocation4 + $0x100] sm:$0xff]
  %v7469 = vld [vmem:[#allocation4 + $0x108] sm:$0xff]
  %v7470 = vld [vmem:[#allocation4 + $0x140] sm:$0xff]
  %v7471 = vld [vmem:[#allocation4 + $0x148] sm:$0xff]
  %v7472 = vmax.f32 %v7468, %v7469
  %v7473 = vmax.f32 %v7470, %v7471
  %v7474 = vmax.f32 %v7472, %v7473
  %7475 = vst.msk [vmem:[#allocation5 + $0x18] sm:$0xff] %vm4835, %v7474
  %v7476 = vld [vmem:[#allocation4 + $0x110] sm:$0xff]
  %v7477 = vld [vmem:[#allocation4 + $0x118] sm:$0xff]
  %v7478 = vld [vmem:[#allocation4 + $0x150] sm:$0xff]
  %v7479 = vld [vmem:[#allocation4 + $0x158] sm:$0xff]
  %v7480 = vmax.f32 %v7476, %v7477
  %v7481 = vmax.f32 %v7478, %v7479
  %v7482 = vmax.f32 %v7480, %v7481
  %7484 = vrot.lane.b32.xlu0 %v7482, 64
  %v7485 = vpop.permute.xlu0 %7484
  %7487 = vst.msk [vmem:[#allocation5 + $0x18] sm:$0xff] %vm7426, %v7485
  %v7488 = vld [vmem:[#allocation4 + $0x120] sm:$0xff]
  %v7489 = vld [vmem:[#allocation4 + $0x128] sm:$0xff]
  %v7490 = vld [vmem:[#allocation4 + $0x160] sm:$0xff]
  %v7491 = vld [vmem:[#allocation4 + $0x168] sm:$0xff]
  %v7492 = vmax.f32 %v7488, %v7489
  %v7493 = vmax.f32 %v7490, %v7491
  %v7494 = vmax.f32 %v7492, %v7493
  %7495 = vst.msk [vmem:[#allocation5 + $0x20] sm:$0xff] %vm4835, %v7494
  %v7496 = vld [vmem:[#allocation5] sm:$0xff]
  %v7497 = vld [vmem:[#allocation5 + $0x8] sm:$0xff]
  %v7498 = vld [vmem:[#allocation5 + $0x10] sm:$0xff]
  %v7499 = vld [vmem:[#allocation5 + $0x18] sm:$0xff]
  %v7500 = vld [vmem:[#allocation5 + $0x20] sm:$0xff]
  %v7501 = vld [vmem:[%s5] sm:$0xff]
  %v7502 = vld [vmem:[%s5 + $0x8] sm:$0xff]
  %v7503 = vld [vmem:[%s5 + $0x10] sm:$0xff]
  %v7504 = vld [vmem:[%s5 + $0x18] sm:$0xff]
  %v7505 = vld [vmem:[%s5 + $0x20] sm:$0xff]
  %v7506 = vld [vmem:[%s5 + $0x28] sm:$0xff]
  %v7507 = vld [vmem:[%s5 + $0x30] sm:$0xff]
  %v7508 = vld [vmem:[%s5 + $0x38] sm:$0xff]
  %v7509 = vld [vmem:[%s5 + $0x40] sm:$0xff]
  %v7510 = vld [vmem:[%s5 + $0x48] sm:$0xff]
  %v7511 = vld [vmem:[%s5 + $0x50] sm:$0xff]
  %v7512 = vld [vmem:[%s5 + $0x58] sm:$0xff]
  %v7513 = vld [vmem:[%s5 + $0x60] sm:$0xff]
  %v7514 = vld [vmem:[%s5 + $0x68] sm:$0xff]
  %v7515 = vld [vmem:[%s5 + $0x70] sm:$0xff]
  %v7516 = vld [vmem:[%s5 + $0x78] sm:$0xff]
  %v7517 = vld [vmem:[%s5 + $0x80] sm:$0xff]
  %v7518 = vld [vmem:[%s5 + $0x88] sm:$0xff]
  %v7519 = vld [vmem:[%s5 + $0x90] sm:$0xff]
  %v7520 = vld [vmem:[%s5 + $0x98] sm:$0xff]
  %v7521 = vld [vmem:[%s5 + $0xa0] sm:$0xff]
  %v7522 = vld [vmem:[%s5 + $0xa8] sm:$0xff]
  %v7523 = vld [vmem:[%s5 + $0xb0] sm:$0xff]
  %v7524 = vld [vmem:[%s5 + $0xb8] sm:$0xff]
  %v7525 = vld [vmem:[%s5 + $0xc0] sm:$0xff]
  %v7526 = vld [vmem:[%s5 + $0xc8] sm:$0xff]
  %v7527 = vld [vmem:[%s5 + $0xd0] sm:$0xff]
  %v7528 = vld [vmem:[%s5 + $0xd8] sm:$0xff]
  %v7529 = vld [vmem:[%s5 + $0xe0] sm:$0xff]
  %v7530 = vld [vmem:[%s5 + $0xe8] sm:$0xff]
  %v7531 = vld [vmem:[%s5 + $0xf0] sm:$0xff]
  %v7532 = vld [vmem:[%s5 + $0xf8] sm:$0xff]
  %v7533 = vld [vmem:[%s5 + $0x100] sm:$0xff]
  %v7534 = vld [vmem:[%s5 + $0x108] sm:$0xff]
  %v7535 = vld [vmem:[%s5 + $0x110] sm:$0xff]
  %v7536 = vld [vmem:[%s5 + $0x118] sm:$0xff]
  %v7537 = vld [vmem:[%s5 + $0x120] sm:$0xff]
  %v7538 = vld [vmem:[%s5 + $0x128] sm:$0xff]
  %v7539 = vld [vmem:[%s5 + $0x130] sm:$0xff]
  %v7540 = vld [vmem:[%s5 + $0x138] sm:$0xff]
  %v7541 = vld [vmem:[%s5 + $0x140] sm:$0xff]
  %v7542 = vld [vmem:[%s5 + $0x148] sm:$0xff]
  %v7543 = vld [vmem:[%s5 + $0x150] sm:$0xff]
  %v7544 = vld [vmem:[%s5 + $0x158] sm:$0xff]
  %v7545 = vld [vmem:[%s5 + $0x160] sm:$0xff]
  %v7546 = vld [vmem:[%s5 + $0x168] sm:$0xff]
  %v7547 = vld [vmem:[%s5 + $0x170] sm:$0xff]
  %v7548 = vld [vmem:[%s5 + $0x178] sm:$0xff]
  %v7549 = vld [vmem:[%s5 + $0x180] sm:$0xff]
  %v7550 = vld [vmem:[%s5 + $0x188] sm:$0xff]
  %v7551 = vld [vmem:[%s5 + $0x190] sm:$0xff]
  %v7552 = vld [vmem:[%s5 + $0x198] sm:$0xff]
  %v7553 = vld [vmem:[%s5 + $0x1a0] sm:$0xff]
  %v7554 = vld [vmem:[%s5 + $0x1a8] sm:$0xff]
  %v7555 = vld [vmem:[%s5 + $0x1b0] sm:$0xff]
  %v7556 = vld [vmem:[%s5 + $0x1b8] sm:$0xff]
  %v7557 = vld [vmem:[%s5 + $0x1c0] sm:$0xff]
  %v7558 = vld [vmem:[%s5 + $0x1c8] sm:$0xff]
  %v7559 = vld [vmem:[%s5 + $0x1d0] sm:$0xff]
  %v7560 = vld [vmem:[%s5 + $0x1d8] sm:$0xff]
  %v7561 = vld [vmem:[%s5 + $0x1e0] sm:$0xff]
  %v7562 = vld [vmem:[%s5 + $0x1e8] sm:$0xff]
  %v7563 = vld [vmem:[%s5 + $0x1f0] sm:$0xff]
  %v7564 = vld [vmem:[%s5 + $0x1f8] sm:$0xff]
  %v7565 = vld [vmem:[%s5 + $0x200] sm:$0xff]
  %v7566 = vld [vmem:[%s5 + $0x208] sm:$0xff]
  %v7567 = vld [vmem:[%s5 + $0x210] sm:$0xff]
  %v7568 = vld [vmem:[%s5 + $0x218] sm:$0xff]
  %v7569 = vld [vmem:[%s5 + $0x220] sm:$0xff]
  %v7570 = vld [vmem:[%s5 + $0x228] sm:$0xff]
  %v7571 = vld [vmem:[%s5 + $0x230] sm:$0xff]
  %v7572 = vld [vmem:[%s5 + $0x238] sm:$0xff]
  %v7573 = vld [vmem:[%s5 + $0x240] sm:$0xff]
  %v7574 = vld [vmem:[%s5 + $0x248] sm:$0xff]
  %v7575 = vld [vmem:[%s5 + $0x250] sm:$0xff]
  %v7576 = vld [vmem:[%s5 + $0x258] sm:$0xff]
  %v7577 = vld [vmem:[%s5 + $0x260] sm:$0xff]
  %v7578 = vld [vmem:[%s5 + $0x268] sm:$0xff]
  %v7579 = vld [vmem:[%s5 + $0x270] sm:$0xff]
  %v7580 = vld [vmem:[%s5 + $0x278] sm:$0xff]
  %v7581 = vld [vmem:[%s5 + $0x280] sm:$0xff]
  %v7582 = vld [vmem:[%s5 + $0x288] sm:$0xff]
  %v7583 = vld [vmem:[%s5 + $0x290] sm:$0xff]
  %v7584 = vld [vmem:[%s5 + $0x298] sm:$0xff]
  %v7585 = vld [vmem:[%s5 + $0x2a0] sm:$0xff]
  %v7586 = vld [vmem:[%s5 + $0x2a8] sm:$0xff]
  %v7587 = vld [vmem:[%s5 + $0x2b0] sm:$0xff]
  %v7588 = vld [vmem:[%s5 + $0x2b8] sm:$0xff]
  %v7589 = vld [vmem:[%s5 + $0x2c0] sm:$0xff]
  %v7590 = vld [vmem:[%s5 + $0x2c8] sm:$0xff]
  %v7591 = vld [vmem:[%s5 + $0x2d0] sm:$0xff]
  %v7592 = vld [vmem:[%s5 + $0x2d8] sm:$0xff]
  %v7593 = vld [vmem:[%s5 + $0x2e0] sm:$0xff]
  %v7594 = vld [vmem:[%s5 + $0x2e8] sm:$0xff]
  %v7595 = vld [vmem:[%s5 + $0x2f0] sm:$0xff]
  %v7596 = vld [vmem:[%s5 + $0x2f8] sm:$0xff]
  %v7597 = vld [vmem:[%s5 + $0x300] sm:$0xff]
  %v7598 = vld [vmem:[%s5 + $0x308] sm:$0xff]
  %v7599 = vld [vmem:[%s5 + $0x310] sm:$0xff]
  %v7600 = vld [vmem:[%s5 + $0x318] sm:$0xff]
  %v7601 = vld [vmem:[%s5 + $0x320] sm:$0xff]
  %v7602 = vld [vmem:[%s5 + $0x328] sm:$0xff]
  %v7603 = vld [vmem:[%s5 + $0x330] sm:$0xff]
  %v7604 = vld [vmem:[%s5 + $0x338] sm:$0xff]
  %v7605 = vld [vmem:[%s5 + $0x340] sm:$0xff]
  %v7606 = vld [vmem:[%s5 + $0x348] sm:$0xff]
  %v7607 = vld [vmem:[%s5 + $0x350] sm:$0xff]
  %v7608 = vld [vmem:[%s5 + $0x358] sm:$0xff]
  %v7609 = vld [vmem:[%s5 + $0x360] sm:$0xff]
  %v7610 = vld [vmem:[%s5 + $0x368] sm:$0xff]
  %v7611 = vld [vmem:[%s5 + $0x370] sm:$0xff]
  %v7612 = vld [vmem:[%s5 + $0x378] sm:$0xff]
  %v7613 = vld [vmem:[%s5 + $0x380] sm:$0xff]
  %v7614 = vld [vmem:[%s5 + $0x388] sm:$0xff]
  %v7615 = vld [vmem:[%s5 + $0x390] sm:$0xff]
  %v7616 = vld [vmem:[%s5 + $0x398] sm:$0xff]
  %v7617 = vld [vmem:[%s5 + $0x3a0] sm:$0xff]
  %v7618 = vld [vmem:[%s5 + $0x3a8] sm:$0xff]
  %v7619 = vld [vmem:[%s5 + $0x3b0] sm:$0xff]
  %v7620 = vld [vmem:[%s5 + $0x3b8] sm:$0xff]
  %v7621 = vld [vmem:[%s5 + $0x3c0] sm:$0xff]
  %v7622 = vld [vmem:[%s5 + $0x3c8] sm:$0xff]
  %v7623 = vld [vmem:[%s5 + $0x3d0] sm:$0xff]
  %v7624 = vld [vmem:[%s5 + $0x3d8] sm:$0xff]
  %v7625 = vld [vmem:[%s5 + $0x3e0] sm:$0xff]
  %v7626 = vld [vmem:[%s5 + $0x3e8] sm:$0xff]
  %v7627 = vld [vmem:[%s5 + $0x3f0] sm:$0xff]
  %v7628 = vld [vmem:[%s5 + $0x3f8] sm:$0xff]
  %v7629 = vld [vmem:[%s5 + $0x400] sm:$0xff]
  %v7630 = vld [vmem:[%s5 + $0x408] sm:$0xff]
  %v7631 = vld [vmem:[%s5 + $0x410] sm:$0xff]
  %v7632 = vld [vmem:[%s5 + $0x418] sm:$0xff]
  %v7633 = vld [vmem:[%s5 + $0x420] sm:$0xff]
  %v7634 = vld [vmem:[%s5 + $0x428] sm:$0xff]
  %v7635 = vld [vmem:[%s5 + $0x430] sm:$0xff]
  %v7636 = vld [vmem:[%s5 + $0x438] sm:$0xff]
  %v7637 = vld [vmem:[%s5 + $0x440] sm:$0xff]
  %v7638 = vld [vmem:[%s5 + $0x448] sm:$0xff]
  %v7639 = vld [vmem:[%s5 + $0x450] sm:$0xff]
  %v7640 = vld [vmem:[%s5 + $0x458] sm:$0xff]
  %v7641 = vld [vmem:[%s5 + $0x460] sm:$0xff]
  %v7642 = vld [vmem:[%s5 + $0x468] sm:$0xff]
  %v7643 = vld [vmem:[%s5 + $0x470] sm:$0xff]
  %v7644 = vld [vmem:[%s5 + $0x478] sm:$0xff]
  %v7645 = vld [vmem:[%s5 + $0x480] sm:$0xff]
  %v7646 = vld [vmem:[%s5 + $0x488] sm:$0xff]
  %v7647 = vld [vmem:[%s5 + $0x490] sm:$0xff]
  %v7648 = vld [vmem:[%s5 + $0x498] sm:$0xff]
  %v7649 = vld [vmem:[%s5 + $0x4a0] sm:$0xff]
  %v7650 = vld [vmem:[%s5 + $0x4a8] sm:$0xff]
  %v7651 = vld [vmem:[%s5 + $0x4b0] sm:$0xff]
  %v7652 = vld [vmem:[%s5 + $0x4b8] sm:$0xff]
  %v7653 = vld [vmem:[%s5 + $0x4c0] sm:$0xff]
  %v7654 = vld [vmem:[%s5 + $0x4c8] sm:$0xff]
  %v7655 = vld [vmem:[%s5 + $0x4d0] sm:$0xff]
  %v7656 = vld [vmem:[%s5 + $0x4d8] sm:$0xff]
  %v7657 = vld [vmem:[%s5 + $0x4e0] sm:$0xff]
  %v7658 = vld [vmem:[%s5 + $0x4e8] sm:$0xff]
  %v7659 = vld [vmem:[%s5 + $0x4f0] sm:$0xff]
  %v7660 = vld [vmem:[%s5 + $0x4f8] sm:$0xff]
  %v7661 = vld [vmem:[%s5 + $0x500] sm:$0xff]
  %v7662 = vld [vmem:[%s5 + $0x508] sm:$0xff]
  %v7663 = vld [vmem:[%s5 + $0x510] sm:$0xff]
  %v7664 = vld [vmem:[%s5 + $0x518] sm:$0xff]
  %v7665 = vld [vmem:[%s5 + $0x520] sm:$0xff]
  %v7666 = vld [vmem:[%s5 + $0x528] sm:$0xff]
  %v7667 = vld [vmem:[%s5 + $0x530] sm:$0xff]
  %v7668 = vld [vmem:[%s5 + $0x538] sm:$0xff]
  %v7669 = vld [vmem:[%s5 + $0x540] sm:$0xff]
  %v7670 = vld [vmem:[%s5 + $0x548] sm:$0xff]
  %v7671 = vld [vmem:[%s5 + $0x550] sm:$0xff]
  %v7672 = vld [vmem:[%s5 + $0x558] sm:$0xff]
  %v7673 = vld [vmem:[%s5 + $0x560] sm:$0xff]
  %v7674 = vld [vmem:[%s5 + $0x568] sm:$0xff]
  %v7675 = vld [vmem:[%s5 + $0x570] sm:$0xff]
  %v7676 = vld [vmem:[%s5 + $0x578] sm:$0xff]
  %v7677 = vld [vmem:[%s5 + $0x580] sm:$0xff]
  %v7678 = vld [vmem:[%s5 + $0x588] sm:$0xff]
  %v7679 = vld [vmem:[%s5 + $0x590] sm:$0xff]
  %v7680 = vld [vmem:[%s5 + $0x598] sm:$0xff]
  %v7681 = vld [vmem:[%s5 + $0x5a0] sm:$0xff]
  %v7682 = vld [vmem:[%s5 + $0x5a8] sm:$0xff]
  %v7683 = vld [vmem:[%s5 + $0x5b0] sm:$0xff]
  %v7684 = vld [vmem:[%s5 + $0x5b8] sm:$0xff]
  %v7685 = vld [vmem:[%s5 + $0x5c0] sm:$0xff]
  %v7686 = vld [vmem:[%s5 + $0x5c8] sm:$0xff]
  %v7687 = vld [vmem:[%s5 + $0x5d0] sm:$0xff]
  %v7688 = vld [vmem:[%s5 + $0x5d8] sm:$0xff]
  %v7689 = vld [vmem:[%s5 + $0x5e0] sm:$0xff]
  %v7690 = vld [vmem:[%s5 + $0x5e8] sm:$0xff]
  %v7691 = vld [vmem:[%s5 + $0x5f0] sm:$0xff]
  %v7692 = vld [vmem:[%s5 + $0x5f8] sm:$0xff]
  %v7693 = vld [vmem:[%s5 + $0x600] sm:$0xff]
  %v7694 = vld [vmem:[%s5 + $0x608] sm:$0xff]
  %v7695 = vld [vmem:[%s5 + $0x610] sm:$0xff]
  %v7696 = vld [vmem:[%s5 + $0x618] sm:$0xff]
  %v7697 = vld [vmem:[%s5 + $0x620] sm:$0xff]
  %v7698 = vld [vmem:[%s5 + $0x628] sm:$0xff]
  %v7699 = vld [vmem:[%s5 + $0x630] sm:$0xff]
  %v7700 = vld [vmem:[%s5 + $0x638] sm:$0xff]
  %v7701 = vld [vmem:[%s5 + $0x640] sm:$0xff]
  %v7702 = vld [vmem:[%s5 + $0x648] sm:$0xff]
  %v7703 = vld [vmem:[%s5 + $0x650] sm:$0xff]
  %v7704 = vld [vmem:[%s5 + $0x658] sm:$0xff]
  %v7705 = vld [vmem:[%s5 + $0x660] sm:$0xff]
  %v7706 = vld [vmem:[%s5 + $0x668] sm:$0xff]
  %v7707 = vld [vmem:[%s5 + $0x670] sm:$0xff]
  %v7708 = vld [vmem:[%s5 + $0x678] sm:$0xff]
  %v7709 = vld [vmem:[%s5 + $0x680] sm:$0xff]
  %v7710 = vld [vmem:[%s5 + $0x688] sm:$0xff]
  %v7711 = vld [vmem:[%s5 + $0x690] sm:$0xff]
  %v7712 = vld [vmem:[%s5 + $0x698] sm:$0xff]
  %v7713 = vld [vmem:[%s5 + $0x6a0] sm:$0xff]
  %v7714 = vld [vmem:[%s5 + $0x6a8] sm:$0xff]
  %v7715 = vld [vmem:[%s5 + $0x6b0] sm:$0xff]
  %v7716 = vld [vmem:[%s5 + $0x6b8] sm:$0xff]
  %v7717 = vld [vmem:[%s5 + $0x6c0] sm:$0xff]
  %v7718 = vld [vmem:[%s5 + $0x6c8] sm:$0xff]
  %v7719 = vld [vmem:[%s5 + $0x6d0] sm:$0xff]
  %v7720 = vld [vmem:[%s5 + $0x6d8] sm:$0xff]
  %v7721 = vld [vmem:[%s5 + $0x6e0] sm:$0xff]
  %v7722 = vld [vmem:[%s5 + $0x6e8] sm:$0xff]
  %v7723 = vld [vmem:[%s5 + $0x6f0] sm:$0xff]
  %v7724 = vld [vmem:[%s5 + $0x6f8] sm:$0xff]
  %v7725 = vld [vmem:[%s5 + $0x700] sm:$0xff]
  %v7726 = vld [vmem:[%s5 + $0x708] sm:$0xff]
  %v7727 = vld [vmem:[%s5 + $0x710] sm:$0xff]
  %v7728 = vld [vmem:[%s5 + $0x718] sm:$0xff]
  %v7729 = vld [vmem:[%s5 + $0x720] sm:$0xff]
  %v7730 = vld [vmem:[%s5 + $0x728] sm:$0xff]
  %v7731 = vld [vmem:[%s5 + $0x730] sm:$0xff]
  %v7732 = vld [vmem:[%s5 + $0x738] sm:$0xff]
  %v7733 = vld [vmem:[%s5 + $0x740] sm:$0xff]
  %v7734 = vld [vmem:[%s5 + $0x748] sm:$0xff]
  %v7735 = vld [vmem:[%s5 + $0x750] sm:$0xff]
  %v7736 = vld [vmem:[%s5 + $0x758] sm:$0xff]
  %v7737 = vld [vmem:[%s5 + $0x760] sm:$0xff]
  %v7738 = vld [vmem:[%s5 + $0x768] sm:$0xff]
  %v7739 = vld [vmem:[%s5 + $0x770] sm:$0xff]
  %v7740 = vld [vmem:[%s5 + $0x778] sm:$0xff]
  %v7741 = vld [vmem:[%s5 + $0x780] sm:$0xff]
  %v7742 = vld [vmem:[%s5 + $0x788] sm:$0xff]
  %v7743 = vld [vmem:[%s5 + $0x790] sm:$0xff]
  %v7744 = vld [vmem:[%s5 + $0x798] sm:$0xff]
  %v7745 = vld [vmem:[%s5 + $0x7a0] sm:$0xff]
  %v7746 = vld [vmem:[%s5 + $0x7a8] sm:$0xff]
  %v7747 = vld [vmem:[%s5 + $0x7b0] sm:$0xff]
  %v7748 = vld [vmem:[%s5 + $0x7b8] sm:$0xff]
  %v7749 = vld [vmem:[%s5 + $0x7c0] sm:$0xff]
  %v7750 = vld [vmem:[%s5 + $0x7c8] sm:$0xff]
  %v7751 = vld [vmem:[%s5 + $0x7d0] sm:$0xff]
  %v7752 = vld [vmem:[%s5 + $0x7d8] sm:$0xff]
  %v7753 = vld [vmem:[%s5 + $0x7e0] sm:$0xff]
  %v7754 = vld [vmem:[%s5 + $0x7e8] sm:$0xff]
  %v7755 = vld [vmem:[%s5 + $0x7f0] sm:$0xff]
  %v7756 = vld [vmem:[%s5 + $0x7f8] sm:$0xff]
  %v7757 = vld [vmem:[%s5 + $0x800] sm:$0xff]
  %v7758 = vld [vmem:[%s5 + $0x808] sm:$0xff]
  %v7759 = vld [vmem:[%s5 + $0x810] sm:$0xff]
  %v7760 = vld [vmem:[%s5 + $0x818] sm:$0xff]
  %v7761 = vld [vmem:[%s5 + $0x820] sm:$0xff]
  %v7762 = vld [vmem:[%s5 + $0x828] sm:$0xff]
  %v7763 = vld [vmem:[%s5 + $0x830] sm:$0xff]
  %v7764 = vld [vmem:[%s5 + $0x838] sm:$0xff]
  %v7765 = vld [vmem:[%s5 + $0x840] sm:$0xff]
  %v7766 = vld [vmem:[%s5 + $0x848] sm:$0xff]
  %v7767 = vld [vmem:[%s5 + $0x850] sm:$0xff]
  %v7768 = vld [vmem:[%s5 + $0x858] sm:$0xff]
  %v7769 = vld [vmem:[%s5 + $0x860] sm:$0xff]
  %v7770 = vld [vmem:[%s5 + $0x868] sm:$0xff]
  %v7771 = vld [vmem:[%s5 + $0x870] sm:$0xff]
  %v7772 = vld [vmem:[%s5 + $0x878] sm:$0xff]
  %v7773 = vld [vmem:[%s5 + $0x880] sm:$0xff]
  %v7774 = vld [vmem:[%s5 + $0x888] sm:$0xff]
  %v7775 = vld [vmem:[%s5 + $0x890] sm:$0xff]
  %v7776 = vld [vmem:[%s5 + $0x898] sm:$0xff]
  %v7777 = vld [vmem:[%s5 + $0x8a0] sm:$0xff]
  %v7778 = vld [vmem:[%s5 + $0x8a8] sm:$0xff]
  %v7779 = vld [vmem:[%s5 + $0x8b0] sm:$0xff]
  %v7780 = vld [vmem:[%s5 + $0x8b8] sm:$0xff]
  %v7781 = vld [vmem:[%s5 + $0x8c0] sm:$0xff]
  %v7782 = vld [vmem:[%s5 + $0x8c8] sm:$0xff]
  %v7783 = vld [vmem:[%s5 + $0x8d0] sm:$0xff]
  %v7784 = vld [vmem:[%s5 + $0x8d8] sm:$0xff]
  %v7785 = vld [vmem:[%s5 + $0x8e0] sm:$0xff]
  %v7786 = vld [vmem:[%s5 + $0x8e8] sm:$0xff]
  %v7787 = vld [vmem:[%s5 + $0x8f0] sm:$0xff]
  %v7788 = vld [vmem:[%s5 + $0x8f8] sm:$0xff]
  %v7789 = vld [vmem:[%s6] sm:$0xf]
  %v7791 = vlaneseq
  %v7792 = vshrl.u32 %v7791, 7
  %v7793 = vsub.s32 0, %v7792
  %v7794 = vrot.slane %v7789, %v7793
  %v7795 = vlaneseq
  %v7796 = vshrl.u32 %v7795, 7
  %v7797 = vsub.s32 1, %v7796
  %v7798 = vrot.slane %v7789, %v7797
  %v7799 = vlaneseq
  %v7800 = vshrl.u32 %v7799, 7
  %v7801 = vsub.s32 2, %v7800
  %v7802 = vrot.slane %v7789, %v7801
  %v7803 = vlaneseq
  %v7804 = vshrl.u32 %v7803, 7
  %v7805 = vsub.s32 3, %v7804
  %v7806 = vrot.slane %v7789, %v7805
  %v7812 = vsel %vm4835, %v7500, 0
  %7814 = vmatprep.subr.mxu0 %v7502
  %7815 = vmatpush1.msra.mxu0 %v7501
  %7816 = vmatprep.subr.mxu0 %v7506
  %7817 = vmatpush1.msra.mxu0 %v7505
  %7818 = vmatprep.subr.mxu0 %v7510
  %7819 = vmatpush1.msra.mxu0 %v7509
  %7820 = vmatprep.subr.mxu0 %v7514
  %7821 = vmatpush1.msra.mxu0 %v7513
  %7822 = vmatprep.subr.mxu0 %v7518
  %7823 = vmatpush1.msra.mxu0 %v7517
  %7824 = vmatprep.subr.mxu0 %v7522
  %7825 = vmatpush1.msra.mxu0 %v7521
  %7826 = vmatprep.subr.mxu0 %v7526
  %7827 = vmatpush1.msra.mxu0 %v7525
  %7828 = vmatprep.subr.mxu0 %v7530
  %7829 = vmatpush1.msra.mxu0 %v7529
  %7830 = vmatprep.subr.mxu0 %v7534
  %7831 = vmatpush1.msra.mxu0 %v7533
  %7832 = vmatprep.subr.mxu0 %v7538
  %7833 = vmatpush1.msra.mxu0 %v7537
  %7834 = vmatprep.subr.mxu0 %v7542
  %7835 = vmatpush1.msra.mxu0 %v7541
  %7836 = vmatprep.subr.mxu0 %v7546
  %7837 = vmatpush1.msra.mxu0 %v7545
  %7838 = vmatprep.subr.mxu0 %v7550
  %7839 = vmatpush1.msra.mxu0 %v7549
  %7840 = vmatprep.subr.mxu0 %v7554
  %7841 = vmatpush1.msra.mxu0 %v7553
  %7842 = vmatprep.subr.mxu0 %v7558
  %7843 = vmatpush1.msra.mxu0 %v7557
  %7844 = vmatprep.subr.mxu0 %v7562
  %7845 = vmatpush1.msra.mxu0 %v7561
  %7846 = vmatprep.subr.mxu0 %v7566
  %7847 = vmatpush1.msra.mxu0 %v7565
  %7848 = vmatprep.subr.mxu0 %v7570
  %7849 = vmatpush1.msra.mxu0 %v7569
  %7850 = vmatprep.subr.mxu0 %v7574
  %7851 = vmatpush1.msra.mxu0 %v7573
  %7852 = vmatprep.subr.mxu0 %v7578
  %7853 = vmatpush1.msra.mxu0 %v7577
  %7854 = vmatprep.subr.mxu0 %v7582
  %7855 = vmatpush1.msra.mxu0 %v7581
  %7856 = vmatprep.subr.mxu0 %v7586
  %7857 = vmatpush1.msra.mxu0 %v7585
  %7858 = vmatprep.subr.mxu0 %v7590
  %7859 = vmatpush1.msra.mxu0 %v7589
  %7860 = vmatprep.subr.mxu0 %v7594
  %7861 = vmatpush1.msra.mxu0 %v7593
  %7862 = vmatprep.subr.mxu0 %v7598
  %7863 = vmatpush1.msra.mxu0 %v7597
  %7864 = vmatprep.subr.mxu0 %v7602
  %7865 = vmatpush1.msra.mxu0 %v7601
  %7866 = vmatprep.subr.mxu0 %v7606
  %7867 = vmatpush1.msra.mxu0 %v7605
  %7868 = vmatprep.subr.mxu0 %v7610
  %7869 = vmatpush1.msra.mxu0 %v7609
  %7870 = vmatprep.subr.mxu0 %v7614
  %7871 = vmatpush1.msra.mxu0 %v7613
  %7872 = vmatprep.subr.mxu0 %v7618
  %7873 = vmatpush1.msra.mxu0 %v7617
  %7874 = vmatprep.subr.mxu0 %v7622
  %7875 = vmatpush1.msra.mxu0 %v7621
  %7876 = vmatprep.subr.mxu0 %v7626
  %7877 = vmatpush1.msra.mxu0 %v7625
  %7878 = vmatprep.mubr.f32.mxu0 %v7497
  %7879 = vmatmul.mubr.f32.gmra.mrb[0].mxu0 %v7496
  %v7880 = vpop.f32.mrb[0].mxu0
  %v7881 = vadd.f32 %v7794, %v7880
  %v7882 = vpop.f32.mrb[0].mxu0
  %v7883 = vadd.f32 %v7798, %v7882
  %7884 = vdwg.mxu0
  %7885 = vmatprep.subr.mxu0 %v7630
  %7886 = vmatpush1.msra.mxu0 %v7629
  %7887 = vmatprep.subr.mxu0 %v7634
  %7888 = vmatpush1.msra.mxu0 %v7633
  %7889 = vmatprep.subr.mxu0 %v7638
  %7890 = vmatpush1.msra.mxu0 %v7637
  %7891 = vmatprep.subr.mxu0 %v7642
  %7892 = vmatpush1.msra.mxu0 %v7641
  %7893 = vmatprep.subr.mxu0 %v7646
  %7894 = vmatpush1.msra.mxu0 %v7645
  %7895 = vmatprep.subr.mxu0 %v7650
  %7896 = vmatpush1.msra.mxu0 %v7649
  %7897 = vmatprep.subr.mxu0 %v7654
  %7898 = vmatpush1.msra.mxu0 %v7653
  %7899 = vmatprep.subr.mxu0 %v7658
  %7900 = vmatpush1.msra.mxu0 %v7657
  %7901 = vmatprep.subr.mxu0 %v7662
  %7902 = vmatpush1.msra.mxu0 %v7661
  %7903 = vmatprep.subr.mxu0 %v7666
  %7904 = vmatpush1.msra.mxu0 %v7665
  %7905 = vmatprep.subr.mxu0 %v7670
  %7906 = vmatpush1.msra.mxu0 %v7669
  %7907 = vmatprep.subr.mxu0 %v7674
  %7908 = vmatpush1.msra.mxu0 %v7673
  %7909 = vmatprep.subr.mxu0 %v7678
  %7910 = vmatpush1.msra.mxu0 %v7677
  %7911 = vmatprep.subr.mxu0 %v7682
  %7912 = vmatpush1.msra.mxu0 %v7681
  %7913 = vmatprep.subr.mxu0 %v7686
  %7914 = vmatpush1.msra.mxu0 %v7685
  %7915 = vmatprep.subr.mxu0 %v7690
  %7916 = vmatpush1.msra.mxu0 %v7689
  %7917 = vmatprep.subr.mxu0 %v7694
  %7918 = vmatpush1.msra.mxu0 %v7693
  %7919 = vmatprep.subr.mxu0 %v7698
  %7920 = vmatpush1.msra.mxu0 %v7697
  %7921 = vmatprep.subr.mxu0 %v7702
  %7922 = vmatpush1.msra.mxu0 %v7701
  %7923 = vmatprep.subr.mxu0 %v7706
  %7924 = vmatpush1.msra.mxu0 %v7705
  %7925 = vmatprep.subr.mxu0 %v7710
  %7926 = vmatpush1.msra.mxu0 %v7709
  %7927 = vmatprep.subr.mxu0 %v7714
  %7928 = vmatpush1.msra.mxu0 %v7713
  %7929 = vmatprep.subr.mxu0 %v7718
  %7930 = vmatpush1.msra.mxu0 %v7717
  %7931 = vmatprep.subr.mxu0 %v7722
  %7932 = vmatpush1.msra.mxu0 %v7721
  %7933 = vmatprep.subr.mxu0 %v7726
  %7934 = vmatpush1.msra.mxu0 %v7725
  %7935 = vmatprep.subr.mxu0 %v7730
  %7936 = vmatpush1.msra.mxu0 %v7729
  %7937 = vmatprep.subr.mxu0 %v7734
  %7938 = vmatpush1.msra.mxu0 %v7733
  %7939 = vmatprep.subr.mxu0 %v7738
  %7940 = vmatpush1.msra.mxu0 %v7737
  %7941 = vmatprep.subr.mxu0 %v7742
  %7942 = vmatpush1.msra.mxu0 %v7741
  %7943 = vmatprep.subr.mxu0 %v7746
  %7944 = vmatpush1.msra.mxu0 %v7745
  %7945 = vmatprep.subr.mxu0 %v7750
  %7946 = vmatpush1.msra.mxu0 %v7749
  %7947 = vmatprep.subr.mxu0 %v7754
  %7948 = vmatpush1.msra.mxu0 %v7753
  %7949 = vmatprep.mubr.f32.mxu0 %v7499
  %7950 = vmatmul.mubr.f32.gmra.mrb[0].mxu0 %v7498
  %v7951 = vpop.f32.mrb[0].mxu0
  %v7952 = vadd.f32 %v7881, %v7951
  %v7953 = vpop.f32.mrb[0].mxu0
  %v7954 = vadd.f32 %v7883, %v7953
  %7955 = vdwg.mxu0
  %7956 = vmatprep.subr.mxu0 %v7758
  %7957 = vmatpush1.msra.mxu0 %v7757
  %7958 = vmatprep.subr.mxu0 %v7762
  %7959 = vmatpush1.msra.mxu0 %v7761
  %7960 = vmatprep.subr.mxu0 %v7766
  %7961 = vmatpush1.msra.mxu0 %v7765
  %7962 = vmatprep.subr.mxu0 %v7770
  %7963 = vmatpush1.msra.mxu0 %v7769
  %7964 = vmatprep.subr.mxu0 %v7774
  %7965 = vmatpush1.msra.mxu0 %v7773
  %7966 = vmatprep.subr.mxu0 %v7778
  %7967 = vmatpush1.msra.mxu0 %v7777
  %7968 = vmatprep.subr.mxu0 %v7782
  %7969 = vmatpush1.msra.mxu0 %v7781
  %7970 = vmatprep.subr.mxu0 %v7786
  %7971 = vmatpush1.msra.mxu0 %v7785
  %7972 = vmatprep.subr.mxu0 0.0
  %7973 = vmatpush1.msra.mxu0 0.0
  %7974 = vmatprep.subr.mxu0 0.0
  %7975 = vmatpush1.msra.mxu0 0.0
  %7976 = vmatprep.subr.mxu0 0.0
  %7977 = vmatpush1.msra.mxu0 0.0
  %7978 = vmatprep.subr.mxu0 0.0
  %7979 = vmatpush1.msra.mxu0 0.0
  %7980 = vmatprep.subr.mxu0 0.0
  %7981 = vmatpush1.msra.mxu0 0.0
  %7982 = vmatprep.subr.mxu0 0.0
  %7983 = vmatpush1.msra.mxu0 0.0
  %7984 = vmatprep.subr.mxu0 0.0
  %7985 = vmatpush1.msra.mxu0 0.0
  %7986 = vmatprep.subr.mxu0 0.0
  %7987 = vmatpush1.msra.mxu0 0.0
  %7988 = vmatprep.subr.mxu0 0.0
  %7989 = vmatpush1.msra.mxu0 0.0
  %7990 = vmatprep.subr.mxu0 0.0
  %7991 = vmatpush1.msra.mxu0 0.0
  %7992 = vmatprep.subr.mxu0 0.0
  %7993 = vmatpush1.msra.mxu0 0.0
  %7994 = vmatprep.subr.mxu0 0.0
  %7995 = vmatpush1.msra.mxu0 0.0
  %7996 = vmatprep.subr.mxu0 0.0
  %7997 = vmatpush1.msra.mxu0 0.0
  %7998 = vmatprep.subr.mxu0 0.0
  %7999 = vmatpush1.msra.mxu0 0.0
  %8000 = vmatprep.subr.mxu0 0.0
  %8001 = vmatpush1.msra.mxu0 0.0
  %8002 = vmatprep.subr.mxu0 0.0
  %8003 = vmatpush1.msra.mxu0 0.0
  %8004 = vmatprep.subr.mxu0 0.0
  %8005 = vmatpush1.msra.mxu0 0.0
  %8006 = vmatprep.subr.mxu0 0.0
  %8007 = vmatpush1.msra.mxu0 0.0
  %8008 = vmatprep.subr.mxu0 0.0
  %8009 = vmatpush1.msra.mxu0 0.0
  %8010 = vmatprep.subr.mxu0 0.0
  %8011 = vmatpush1.msra.mxu0 0.0
  %8012 = vmatprep.subr.mxu0 0.0
  %8013 = vmatpush1.msra.mxu0 0.0
  %8014 = vmatprep.subr.mxu0 0.0
  %8015 = vmatpush1.msra.mxu0 0.0
  %8016 = vmatprep.subr.mxu0 0.0
  %8017 = vmatpush1.msra.mxu0 0.0
  %8018 = vmatprep.subr.mxu0 0.0
  %8019 = vmatpush1.msra.mxu0 0.0
  %8020 = vmatprep.mubr.f32.mxu0 0.0
  %8021 = vmatmul.mubr.f32.gmra.mrb[0].mxu0 %v7812
  %v8022 = vpop.f32.mrb[0].mxu0
  %v8023 = vadd.f32 %v7952, %v8022
  %v8024 = vpop.f32.mrb[0].mxu0
  %v8025 = vadd.f32 %v7954, %v8024
  %8026 = vdwg.mxu0
  %8027 = vmatprep.subr.mxu0 %v7504
  %8028 = vmatpush1.msra.mxu0 %v7503
  %8029 = vmatprep.subr.mxu0 %v7508
  %8030 = vmatpush1.msra.mxu0 %v7507
  %8031 = vmatprep.subr.mxu0 %v7512
  %8032 = vmatpush1.msra.mxu0 %v7511
  %8033 = vmatprep.subr.mxu0 %v7516
  %8034 = vmatpush1.msra.mxu0 %v7515
  %8035 = vmatprep.subr.mxu0 %v7520
  %8036 = vmatpush1.msra.mxu0 %v7519
  %8037 = vmatprep.subr.mxu0 %v7524
  %8038 = vmatpush1.msra.mxu0 %v7523
  %8039 = vmatprep.subr.mxu0 %v7528
  %8040 = vmatpush1.msra.mxu0 %v7527
  %8041 = vmatprep.subr.mxu0 %v7532
  %8042 = vmatpush1.msra.mxu0 %v7531
  %8043 = vmatprep.subr.mxu0 %v7536
  %8044 = vmatpush1.msra.mxu0 %v7535
  %8045 = vmatprep.subr.mxu0 %v7540
  %8046 = vmatpush1.msra.mxu0 %v7539
  %8047 = vmatprep.subr.mxu0 %v7544
  %8048 = vmatpush1.msra.mxu0 %v7543
  %8049 = vmatprep.subr.mxu0 %v7548
  %8050 = vmatpush1.msra.mxu0 %v7547
  %8051 = vmatprep.subr.mxu0 %v7552
  %8052 = vmatpush1.msra.mxu0 %v7551
  %8053 = vmatprep.subr.mxu0 %v7556
  %8054 = vmatpush1.msra.mxu0 %v7555
  %8055 = vmatprep.subr.mxu0 %v7560
  %8056 = vmatpush1.msra.mxu0 %v7559
  %8057 = vmatprep.subr.mxu0 %v7564
  %8058 = vmatpush1.msra.mxu0 %v7563
  %8059 = vmatprep.subr.mxu0 %v7568
  %8060 = vmatpush1.msra.mxu0 %v7567
  %8061 = vmatprep.subr.mxu0 %v7572
  %8062 = vmatpush1.msra.mxu0 %v7571
  %8063 = vmatprep.subr.mxu0 %v7576
  %8064 = vmatpush1.msra.mxu0 %v7575
  %8065 = vmatprep.subr.mxu0 %v7580
  %8066 = vmatpush1.msra.mxu0 %v7579
  %8067 = vmatprep.subr.mxu0 %v7584
  %8068 = vmatpush1.msra.mxu0 %v7583
  %8069 = vmatprep.subr.mxu0 %v7588
  %8070 = vmatpush1.msra.mxu0 %v7587
  %8071 = vmatprep.subr.mxu0 %v7592
  %8072 = vmatpush1.msra.mxu0 %v7591
  %8073 = vmatprep.subr.mxu0 %v7596
  %8074 = vmatpush1.msra.mxu0 %v7595
  %8075 = vmatprep.subr.mxu0 %v7600
  %8076 = vmatpush1.msra.mxu0 %v7599
  %8077 = vmatprep.subr.mxu0 %v7604
  %8078 = vmatpush1.msra.mxu0 %v7603
  %8079 = vmatprep.subr.mxu0 %v7608
  %8080 = vmatpush1.msra.mxu0 %v7607
  %8081 = vmatprep.subr.mxu0 %v7612
  %8082 = vmatpush1.msra.mxu0 %v7611
  %8083 = vmatprep.subr.mxu0 %v7616
  %8084 = vmatpush1.msra.mxu0 %v7615
  %8085 = vmatprep.subr.mxu0 %v7620
  %8086 = vmatpush1.msra.mxu0 %v7619
  %8087 = vmatprep.subr.mxu0 %v7624
  %8088 = vmatpush1.msra.mxu0 %v7623
  %8089 = vmatprep.subr.mxu0 %v7628
  %8090 = vmatpush1.msra.mxu0 %v7627
  %8091 = vmatprep.mubr.f32.mxu0 %v7497
  %8092 = vmatmul.mubr.f32.gmra.mrb[0].mxu0 %v7496
  %v8093 = vpop.f32.mrb[0].mxu0
  %v8094 = vadd.f32 %v7802, %v8093
  %v8095 = vpop.f32.mrb[0].mxu0
  %v8096 = vadd.f32 %v7806, %v8095
  %8097 = vdwg.mxu0
  %8098 = vmatprep.subr.mxu0 %v7632
  %8099 = vmatpush1.msra.mxu0 %v7631
  %8100 = vmatprep.subr.mxu0 %v7636
  %8101 = vmatpush1.msra.mxu0 %v7635
  %8102 = vmatprep.subr.mxu0 %v7640
  %8103 = vmatpush1.msra.mxu0 %v7639
  %8104 = vmatprep.subr.mxu0 %v7644
  %8105 = vmatpush1.msra.mxu0 %v7643
  %8106 = vmatprep.subr.mxu0 %v7648
  %8107 = vmatpush1.msra.mxu0 %v7647
  %8108 = vmatprep.subr.mxu0 %v7652
  %8109 = vmatpush1.msra.mxu0 %v7651
  %8110 = vmatprep.subr.mxu0 %v7656
  %8111 = vmatpush1.msra.mxu0 %v7655
  %8112 = vmatprep.subr.mxu0 %v7660
  %8113 = vmatpush1.msra.mxu0 %v7659
  %8114 = vmatprep.subr.mxu0 %v7664
  %8115 = vmatpush1.msra.mxu0 %v7663
  %8116 = vmatprep.subr.mxu0 %v7668
  %8117 = vmatpush1.msra.mxu0 %v7667
  %8118 = vmatprep.subr.mxu0 %v7672
  %8119 = vmatpush1.msra.mxu0 %v7671
  %8120 = vmatprep.subr.mxu0 %v7676
  %8121 = vmatpush1.msra.mxu0 %v7675
  %8122 = vmatprep.subr.mxu0 %v7680
  %8123 = vmatpush1.msra.mxu0 %v7679
  %8124 = vmatprep.subr.mxu0 %v7684
  %8125 = vmatpush1.msra.mxu0 %v7683
  %8126 = vmatprep.subr.mxu0 %v7688
  %8127 = vmatpush1.msra.mxu0 %v7687
  %8128 = vmatprep.subr.mxu0 %v7692
  %8129 = vmatpush1.msra.mxu0 %v7691
  %8130 = vmatprep.subr.mxu0 %v7696
  %8131 = vmatpush1.msra.mxu0 %v7695
  %8132 = vmatprep.subr.mxu0 %v7700
  %8133 = vmatpush1.msra.mxu0 %v7699
  %8134 = vmatprep.subr.mxu0 %v7704
  %8135 = vmatpush1.msra.mxu0 %v7703
  %8136 = vmatprep.subr.mxu0 %v7708
  %8137 = vmatpush1.msra.mxu0 %v7707
  %8138 = vmatprep.subr.mxu0 %v7712
  %8139 = vmatpush1.msra.mxu0 %v7711
  %8140 = vmatprep.subr.mxu0 %v7716
  %8141 = vmatpush1.msra.mxu0 %v7715
  %8142 = vmatprep.subr.mxu0 %v7720
  %8143 = vmatpush1.msra.mxu0 %v7719
  %8144 = vmatprep.subr.mxu0 %v7724
  %8145 = vmatpush1.msra.mxu0 %v7723
  %8146 = vmatprep.subr.mxu0 %v7728
  %8147 = vmatpush1.msra.mxu0 %v7727
  %8148 = vmatprep.subr.mxu0 %v7732
  %8149 = vmatpush1.msra.mxu0 %v7731
  %8150 = vmatprep.subr.mxu0 %v7736
  %8151 = vmatpush1.msra.mxu0 %v7735
  %8152 = vmatprep.subr.mxu0 %v7740
  %8153 = vmatpush1.msra.mxu0 %v7739
  %8154 = vmatprep.subr.mxu0 %v7744
  %8155 = vmatpush1.msra.mxu0 %v7743
  %8156 = vmatprep.subr.mxu0 %v7748
  %8157 = vmatpush1.msra.mxu0 %v7747
  %8158 = vmatprep.subr.mxu0 %v7752
  %8159 = vmatpush1.msra.mxu0 %v7751
  %8160 = vmatprep.subr.mxu0 %v7756
  %8161 = vmatpush1.msra.mxu0 %v7755
  %8162 = vmatprep.mubr.f32.mxu0 %v7499
  %8163 = vmatmul.mubr.f32.gmra.mrb[0].mxu0 %v7498
  %v8164 = vpop.f32.mrb[0].mxu0
  %v8165 = vadd.f32 %v8094, %v8164
  %v8166 = vpop.f32.mrb[0].mxu0
  %v8167 = vadd.f32 %v8096, %v8166
  %8168 = vdwg.mxu0
  %8169 = vmatprep.subr.mxu0 %v7760
  %8170 = vmatpush1.msra.mxu0 %v7759
  %8171 = vmatprep.subr.mxu0 %v7764
  %8172 = vmatpush1.msra.mxu0 %v7763
  %8173 = vmatprep.subr.mxu0 %v7768
  %8174 = vmatpush1.msra.mxu0 %v7767
  %8175 = vmatprep.subr.mxu0 %v7772
  %8176 = vmatpush1.msra.mxu0 %v7771
  %8177 = vmatprep.subr.mxu0 %v7776
  %8178 = vmatpush1.msra.mxu0 %v7775
  %8179 = vmatprep.subr.mxu0 %v7780
  %8180 = vmatpush1.msra.mxu0 %v7779
  %8181 = vmatprep.subr.mxu0 %v7784
  %8182 = vmatpush1.msra.mxu0 %v7783
  %8183 = vmatprep.subr.mxu0 %v7788
  %8184 = vmatpush1.msra.mxu0 %v7787
  %8185 = vmatprep.subr.mxu0 0.0
  %8186 = vmatpush1.msra.mxu0 0.0
  %8187 = vmatprep.subr.mxu0 0.0
  %8188 = vmatpush1.msra.mxu0 0.0
  %8189 = vmatprep.subr.mxu0 0.0
  %8190 = vmatpush1.msra.mxu0 0.0
  %8191 = vmatprep.subr.mxu0 0.0
  %8192 = vmatpush1.msra.mxu0 0.0
  %8193 = vmatprep.subr.mxu0 0.0
  %8194 = vmatpush1.msra.mxu0 0.0
  %8195 = vmatprep.subr.mxu0 0.0
  %8196 = vmatpush1.msra.mxu0 0.0
  %8197 = vmatprep.subr.mxu0 0.0
  %8198 = vmatpush1.msra.mxu0 0.0
  %8199 = vmatprep.subr.mxu0 0.0
  %8200 = vmatpush1.msra.mxu0 0.0
  %8201 = vmatprep.subr.mxu0 0.0
  %8202 = vmatpush1.msra.mxu0 0.0
  %8203 = vmatprep.subr.mxu0 0.0
  %8204 = vmatpush1.msra.mxu0 0.0
  %8205 = vmatprep.subr.mxu0 0.0
  %8206 = vmatpush1.msra.mxu0 0.0
  %8207 = vmatprep.subr.mxu0 0.0
  %8208 = vmatpush1.msra.mxu0 0.0
  %8209 = vmatprep.subr.mxu0 0.0
  %8210 = vmatpush1.msra.mxu0 0.0
  %8211 = vmatprep.subr.mxu0 0.0
  %8212 = vmatpush1.msra.mxu0 0.0
  %8213 = vmatprep.subr.mxu0 0.0
  %8214 = vmatpush1.msra.mxu0 0.0
  %8215 = vmatprep.subr.mxu0 0.0
  %8216 = vmatpush1.msra.mxu0 0.0
  %8217 = vmatprep.subr.mxu0 0.0
  %8218 = vmatpush1.msra.mxu0 0.0
  %8219 = vmatprep.subr.mxu0 0.0
  %8220 = vmatpush1.msra.mxu0 0.0
  %8221 = vmatprep.subr.mxu0 0.0
  %8222 = vmatpush1.msra.mxu0 0.0
  %8223 = vmatprep.subr.mxu0 0.0
  %8224 = vmatpush1.msra.mxu0 0.0
  %8225 = vmatprep.subr.mxu0 0.0
  %8226 = vmatpush1.msra.mxu0 0.0
  %8227 = vmatprep.subr.mxu0 0.0
  %8228 = vmatpush1.msra.mxu0 0.0
  %8229 = vmatprep.subr.mxu0 0.0
  %8230 = vmatpush1.msra.mxu0 0.0
  %8231 = vmatprep.subr.mxu0 0.0
  %8232 = vmatpush1.msra.mxu0 0.0
  %8233 = vmatprep.mubr.f32.mxu0 0.0
  %8234 = vmatmul.mubr.f32.gmra.mrb[0].mxu0 %v7812
  %v8235 = vpop.f32.mrb[0].mxu0
  %v8236 = vadd.f32 %v8165, %v8235
  %v8237 = vpop.f32.mrb[0].mxu0
  %v8238 = vadd.f32 %v8167, %v8237
  %8239 = vdwg.mxu0
  %v8240 = vmax.f32 %v8023, 0.0
  %v8241 = vmax.f32 %v8025, 0.0
  %v8242 = vmax.f32 %v8236, 0.0
  %v8243 = vmax.f32 %v8238, 0.0
  %v8244 = vld [vmem:[%s7] sm:$0xff]
  %v8245 = vld [vmem:[%s7 + $0x8] sm:$0xff]
  %v8246 = vld [vmem:[%s7 + $0x10] sm:$0xff]
  %v8247 = vld [vmem:[%s7 + $0x18] sm:$0xff]
  %v8248 = vld [vmem:[%s7 + $0x20] sm:$0xff]
  %v8249 = vld [vmem:[%s7 + $0x28] sm:$0xff]
  %v8250 = vld [vmem:[%s7 + $0x30] sm:$0xff]
  %v8251 = vld [vmem:[%s7 + $0x38] sm:$0xff]
  %v8252 = vld [vmem:[%s7 + $0x40] sm:$0xff]
  %v8253 = vld [vmem:[%s7 + $0x48] sm:$0xff]
  %v8254 = vld [vmem:[%s7 + $0x50] sm:$0xff]
  %v8255 = vld [vmem:[%s7 + $0x58] sm:$0xff]
  %v8256 = vld [vmem:[%s7 + $0x60] sm:$0xff]
  %v8257 = vld [vmem:[%s7 + $0x68] sm:$0xff]
  %v8258 = vld [vmem:[%s7 + $0x70] sm:$0xff]
  %v8259 = vld [vmem:[%s7 + $0x78] sm:$0xff]
  %v8260 = vld [vmem:[%s7 + $0x80] sm:$0xff]
  %v8261 = vld [vmem:[%s7 + $0x88] sm:$0xff]
  %v8262 = vld [vmem:[%s7 + $0x90] sm:$0xff]
  %v8263 = vld [vmem:[%s7 + $0x98] sm:$0xff]
  %v8264 = vld [vmem:[%s7 + $0xa0] sm:$0xff]
  %v8265 = vld [vmem:[%s7 + $0xa8] sm:$0xff]
  %v8266 = vld [vmem:[%s7 + $0xb0] sm:$0xff]
  %v8267 = vld [vmem:[%s7 + $0xb8] sm:$0xff]
  %v8268 = vld [vmem:[%s7 + $0xc0] sm:$0xff]
  %v8269 = vld [vmem:[%s7 + $0xc8] sm:$0xff]
  %v8270 = vld [vmem:[%s7 + $0xd0] sm:$0xff]
  %v8271 = vld [vmem:[%s7 + $0xd8] sm:$0xff]
  %v8272 = vld [vmem:[%s7 + $0xe0] sm:$0xff]
  %v8273 = vld [vmem:[%s7 + $0xe8] sm:$0xff]
  %v8274 = vld [vmem:[%s7 + $0xf0] sm:$0xff]
  %v8275 = vld [vmem:[%s7 + $0xf8] sm:$0xff]
  %v8276 = vld [vmem:[%s7 + $0x100] sm:$0xff]
  %v8277 = vld [vmem:[%s7 + $0x108] sm:$0xff]
  %v8278 = vld [vmem:[%s7 + $0x110] sm:$0xff]
  %v8279 = vld [vmem:[%s7 + $0x118] sm:$0xff]
  %v8280 = vld [vmem:[%s7 + $0x120] sm:$0xff]
  %v8281 = vld [vmem:[%s7 + $0x128] sm:$0xff]
  %v8282 = vld [vmem:[%s7 + $0x130] sm:$0xff]
  %v8283 = vld [vmem:[%s7 + $0x138] sm:$0xff]
  %v8284 = vld [vmem:[%s7 + $0x140] sm:$0xff]
  %v8285 = vld [vmem:[%s7 + $0x148] sm:$0xff]
  %v8286 = vld [vmem:[%s7 + $0x150] sm:$0xff]
  %v8287 = vld [vmem:[%s7 + $0x158] sm:$0xff]
  %v8288 = vld [vmem:[%s7 + $0x160] sm:$0xff]
  %v8289 = vld [vmem:[%s7 + $0x168] sm:$0xff]
  %v8290 = vld [vmem:[%s7 + $0x170] sm:$0xff]
  %v8291 = vld [vmem:[%s7 + $0x178] sm:$0xff]
  %v8292 = vld [vmem:[%s7 + $0x180] sm:$0xff]
  %v8293 = vld [vmem:[%s7 + $0x188] sm:$0xff]
  %v8294 = vld [vmem:[%s7 + $0x190] sm:$0xff]
  %v8295 = vld [vmem:[%s7 + $0x198] sm:$0xff]
  %v8296 = vld [vmem:[%s7 + $0x1a0] sm:$0xff]
  %v8297 = vld [vmem:[%s7 + $0x1a8] sm:$0xff]
  %v8298 = vld [vmem:[%s7 + $0x1b0] sm:$0xff]
  %v8299 = vld [vmem:[%s7 + $0x1b8] sm:$0xff]
  %v8300 = vld [vmem:[%s7 + $0x1c0] sm:$0xff]
  %v8301 = vld [vmem:[%s7 + $0x1c8] sm:$0xff]
  %v8302 = vld [vmem:[%s7 + $0x1d0] sm:$0xff]
  %v8303 = vld [vmem:[%s7 + $0x1d8] sm:$0xff]
  %v8304 = vld [vmem:[%s7 + $0x1e0] sm:$0xff]
  %v8305 = vld [vmem:[%s7 + $0x1e8] sm:$0xff]
  %v8306 = vld [vmem:[%s7 + $0x1f0] sm:$0xff]
  %v8307 = vld [vmem:[%s7 + $0x1f8] sm:$0xff]
  %v8308 = vld [vmem:[%s8] sm:$0x1]
  %v8310 = vlaneseq
  %v8311 = vshrl.u32 %v8310, 7
  %v8312 = vsub.s32 0, %v8311
  %v8313 = vrot.slane %v8308, %v8312
  %8315 = vmatprep.subr.mxu0 0.0
  %8316 = vmatpush1.msra.mxu0 %v8244
  %8317 = vmatprep.subr.mxu0 0.0
  %8318 = vmatpush1.msra.mxu0 %v8245
  %8319 = vmatprep.subr.mxu0 0.0
  %8320 = vmatpush1.msra.mxu0 %v8246
  %8321 = vmatprep.subr.mxu0 0.0
  %8322 = vmatpush1.msra.mxu0 %v8247
  %8323 = vmatprep.subr.mxu0 0.0
  %8324 = vmatpush1.msra.mxu0 %v8248
  %8325 = vmatprep.subr.mxu0 0.0
  %8326 = vmatpush1.msra.mxu0 %v8249
  %8327 = vmatprep.subr.mxu0 0.0
  %8328 = vmatpush1.msra.mxu0 %v8250
  %8329 = vmatprep.subr.mxu0 0.0
  %8330 = vmatpush1.msra.mxu0 %v8251
  %8331 = vmatprep.subr.mxu0 0.0
  %8332 = vmatpush1.msra.mxu0 %v8252
  %8333 = vmatprep.subr.mxu0 0.0
  %8334 = vmatpush1.msra.mxu0 %v8253
  %8335 = vmatprep.subr.mxu0 0.0
  %8336 = vmatpush1.msra.mxu0 %v8254
  %8337 = vmatprep.subr.mxu0 0.0
  %8338 = vmatpush1.msra.mxu0 %v8255
  %8339 = vmatprep.subr.mxu0 0.0
  %8340 = vmatpush1.msra.mxu0 %v8256
  %8341 = vmatprep.subr.mxu0 0.0
  %8342 = vmatpush1.msra.mxu0 %v8257
  %8343 = vmatprep.subr.mxu0 0.0
  %8344 = vmatpush1.msra.mxu0 %v8258
  %8345 = vmatprep.subr.mxu0 0.0
  %8346 = vmatpush1.msra.mxu0 %v8259
  %8347 = vmatprep.subr.mxu0 0.0
  %8348 = vmatpush1.msra.mxu0 %v8260
  %8349 = vmatprep.subr.mxu0 0.0
  %8350 = vmatpush1.msra.mxu0 %v8261
  %8351 = vmatprep.subr.mxu0 0.0
  %8352 = vmatpush1.msra.mxu0 %v8262
  %8353 = vmatprep.subr.mxu0 0.0
  %8354 = vmatpush1.msra.mxu0 %v8263
  %8355 = vmatprep.subr.mxu0 0.0
  %8356 = vmatpush1.msra.mxu0 %v8264
  %8357 = vmatprep.subr.mxu0 0.0
  %8358 = vmatpush1.msra.mxu0 %v8265
  %8359 = vmatprep.subr.mxu0 0.0
  %8360 = vmatpush1.msra.mxu0 %v8266
  %8361 = vmatprep.subr.mxu0 0.0
  %8362 = vmatpush1.msra.mxu0 %v8267
  %8363 = vmatprep.subr.mxu0 0.0
  %8364 = vmatpush1.msra.mxu0 %v8268
  %8365 = vmatprep.subr.mxu0 0.0
  %8366 = vmatpush1.msra.mxu0 %v8269
  %8367 = vmatprep.subr.mxu0 0.0
  %8368 = vmatpush1.msra.mxu0 %v8270
  %8369 = vmatprep.subr.mxu0 0.0
  %8370 = vmatpush1.msra.mxu0 %v8271
  %8371 = vmatprep.subr.mxu0 0.0
  %8372 = vmatpush1.msra.mxu0 %v8272
  %8373 = vmatprep.subr.mxu0 0.0
  %8374 = vmatpush1.msra.mxu0 %v8273
  %8375 = vmatprep.subr.mxu0 0.0
  %8376 = vmatpush1.msra.mxu0 %v8274
  %8377 = vmatprep.subr.mxu0 0.0
  %8378 = vmatpush1.msra.mxu0 %v8275
  %8379 = vmatprep.mubr.f32.mxu0 %v8241
  %8380 = vmatmul.mubr.f32.gmra.mrb[0].mxu0 %v8240
  %v8381 = vpop.f32.mrb[0].mxu0
  %v8382 = vadd.f32 %v8313, %v8381
  %v8383 = vpop.f32.mrb[0].mxu0
  %8384 = vdwg.mxu0
  %8385 = vmatprep.subr.mxu0 0.0
  %8386 = vmatpush1.msra.mxu0 %v8276
  %8387 = vmatprep.subr.mxu0 0.0
  %8388 = vmatpush1.msra.mxu0 %v8277
  %8389 = vmatprep.subr.mxu0 0.0
  %8390 = vmatpush1.msra.mxu0 %v8278
  %8391 = vmatprep.subr.mxu0 0.0
  %8392 = vmatpush1.msra.mxu0 %v8279
  %8393 = vmatprep.subr.mxu0 0.0
  %8394 = vmatpush1.msra.mxu0 %v8280
  %8395 = vmatprep.subr.mxu0 0.0
  %8396 = vmatpush1.msra.mxu0 %v8281
  %8397 = vmatprep.subr.mxu0 0.0
  %8398 = vmatpush1.msra.mxu0 %v8282
  %8399 = vmatprep.subr.mxu0 0.0
  %8400 = vmatpush1.msra.mxu0 %v8283
  %8401 = vmatprep.subr.mxu0 0.0
  %8402 = vmatpush1.msra.mxu0 %v8284
  %8403 = vmatprep.subr.mxu0 0.0
  %8404 = vmatpush1.msra.mxu0 %v8285
  %8405 = vmatprep.subr.mxu0 0.0
  %8406 = vmatpush1.msra.mxu0 %v8286
  %8407 = vmatprep.subr.mxu0 0.0
  %8408 = vmatpush1.msra.mxu0 %v8287
  %8409 = vmatprep.subr.mxu0 0.0
  %8410 = vmatpush1.msra.mxu0 %v8288
  %8411 = vmatprep.subr.mxu0 0.0
  %8412 = vmatpush1.msra.mxu0 %v8289
  %8413 = vmatprep.subr.mxu0 0.0
  %8414 = vmatpush1.msra.mxu0 %v8290
  %8415 = vmatprep.subr.mxu0 0.0
  %8416 = vmatpush1.msra.mxu0 %v8291
  %8417 = vmatprep.subr.mxu0 0.0
  %8418 = vmatpush1.msra.mxu0 %v8292
  %8419 = vmatprep.subr.mxu0 0.0
  %8420 = vmatpush1.msra.mxu0 %v8293
  %8421 = vmatprep.subr.mxu0 0.0
  %8422 = vmatpush1.msra.mxu0 %v8294
  %8423 = vmatprep.subr.mxu0 0.0
  %8424 = vmatpush1.msra.mxu0 %v8295
  %8425 = vmatprep.subr.mxu0 0.0
  %8426 = vmatpush1.msra.mxu0 %v8296
  %8427 = vmatprep.subr.mxu0 0.0
  %8428 = vmatpush1.msra.mxu0 %v8297
  %8429 = vmatprep.subr.mxu0 0.0
  %8430 = vmatpush1.msra.mxu0 %v8298
  %8431 = vmatprep.subr.mxu0 0.0
  %8432 = vmatpush1.msra.mxu0 %v8299
  %8433 = vmatprep.subr.mxu0 0.0
  %8434 = vmatpush1.msra.mxu0 %v8300
  %8435 = vmatprep.subr.mxu0 0.0
  %8436 = vmatpush1.msra.mxu0 %v8301
  %8437 = vmatprep.subr.mxu0 0.0
  %8438 = vmatpush1.msra.mxu0 %v8302
  %8439 = vmatprep.subr.mxu0 0.0
  %8440 = vmatpush1.msra.mxu0 %v8303
  %8441 = vmatprep.subr.mxu0 0.0
  %8442 = vmatpush1.msra.mxu0 %v8304
  %8443 = vmatprep.subr.mxu0 0.0
  %8444 = vmatpush1.msra.mxu0 %v8305
  %8445 = vmatprep.subr.mxu0 0.0
  %8446 = vmatpush1.msra.mxu0 %v8306
  %8447 = vmatprep.subr.mxu0 0.0
  %8448 = vmatpush1.msra.mxu0 %v8307
  %8449 = vmatprep.mubr.f32.mxu0 %v8243
  %8450 = vmatmul.mubr.f32.gmra.mrb[0].mxu0 %v8242
  %v8451 = vpop.f32.mrb[0].mxu0
  %v8452 = vadd.f32 %v8382, %v8451
  %v8453 = vpop.f32.mrb[0].mxu0
  %8454 = vdwg.mxu0
  %8455 = vst [vmem:[%s9] sm:$0xff] %v8452
  // Predicated region
  $region38: #{convnet_forward.1} parent=0 // pred_check
    _
  $region39: #{convnet_forward.1} parent=0 // pred_check_branch
    %8457 = sbr.rel (0) target = $region41
  $region40: #{convnet_forward.1} parent=0 // pred_region
    _
  $region41: #{convnet_forward.1} parent=0 // pred_fallthru
    _
  // Predicated region
  $region42: #{convnet_forward.1} parent=0 // pred_check
    _
  $region43: #{convnet_forward.1} parent=0 // pred_check_branch
    %8459 = sbr.rel (0) target = $region45
  $region44: #{convnet_forward.1} parent=0 // pred_region
    _
  $region45: #{convnet_forward.1} parent=0 // pred_fallthru
    _

</llo_original>
